<compile_context>
chip_gen: v6e
topology: v6e:2x2x1
jax: 0.10.0
libtpu: 0.0.40
codegen_flags: <defaults>
</compile_context>

<pallas_src>
import functools

import numpy as np
import jax
import jax.numpy as jnp
from jax import lax
from jax.experimental import pallas as pl
from jax.experimental.pallas import tpu as pltpu

LANE = 128     # vreg lane width: channel / embedding dims are zero-padded to this
SUBLANE = 8    # sublane granule: batch tiles are padded to this


# --------------------------------------------------------------------------
# helpers (match the PyTorch conv_out / conv_out_shape semantics)
# --------------------------------------------------------------------------
def conv_out(h_in, padding, kernel_size, stride):
    return int((h_in + 2.0 * padding - (kernel_size - 1.0) - 1.0) / stride + 1.0)


def conv_out_shape(h_in, padding, kernel_size, stride):
    return tuple(conv_out(x, padding, kernel_size, stride) for x in h_in)


def _round_up(x, m):
    return ((x + m - 1) // m) * m


def _activation(name, x):
    if name == "relu":
        return jnp.maximum(x, 0.0)
    if name == "elu":
        return jnp.where(x > 0.0, x, jnp.exp(jnp.minimum(x, 0.0)) - 1.0)
    if name == "tanh":
        return jnp.tanh(x)
    if name == "leakyrelu":
        return jnp.where(x > 0.0, x, 0.01 * x)
    return x  # 'none'


# --------------------------------------------------------------------------
# in-kernel stride-2 conv: K*K shifted-matmul (phase) decomposition
# --------------------------------------------------------------------------
def _conv_stride2_taps(x, w_ref, b_ref, K, OH, OW, activation):
    """x: (H, W, TILE_B, Cin_pad) f32 value; w_ref: (K*K, Cin_pad, Cout_pad) bf16 ref;
    b_ref: (1, Cout_pad) f32 ref.  Returns (OH, OW, TILE_B, Cout_pad) f32."""
    H, W, TB, Cin = x.shape
    Cout = w_ref.shape[-1]
    rows = OH * OW * TB
    nph = min(2, K)

    # Gather the stride-2 row/col phases ONCE (leading-dim slices + concat only);
    # every tap then reads a contiguous static window of a phase slab.
    row_ph = []
    for r in range(nph):
        qmax = max(k // 2 for k in range(K) if k % 2 == r)
        row_ph.append(jnp.concatenate(
            [lax.slice_in_dim(x, r + 2 * i, r + 2 * i + 1, axis=0)
             for i in range(OH + qmax)], axis=0))
    phase = {}
    for r in range(nph):
        for s in range(nph):
            qmax = max(k // 2 for k in range(K) if k % 2 == s)
            phase[(r, s)] = jnp.concatenate(
                [lax.slice_in_dim(row_ph[r], s + 2 * j, s + 2 * j + 1, axis=1)
                 for j in range(OW + qmax)], axis=1)

    acc = jnp.zeros((rows, Cout), jnp.float32)
    for kh in range(K):
        qh, rh = kh // 2, kh % 2
        for kw in range(K):
            qw, rw = kw // 2, kw % 2
            sub = phase[(rh, rw)][qh:qh + OH, qw:qw + OW]        # (OH, OW, TB, Cin)
            sub = sub.reshape(rows, Cin).astype(jnp.bfloat16)    # tile-aligned reshape
            acc = acc + jnp.dot(sub, w_ref[kh * K + kw],
                                preferred_element_type=jnp.float32)
    out = _activation(activation, acc + b_ref[...])
    return out.reshape(OH, OW, TB, Cout)


# --------------------------------------------------------------------------
# the fused encoder kernel
# --------------------------------------------------------------------------
def _encoder_kernel(*refs, conv_meta, activation):
    # refs = (x_patches, W1, b1, [tapW_i, tapB_i]*, fcW, fcB, out)
    x_ref = refs[0]
    out_ref = refs[-1]
    params = refs[1:-1]

    # ---- conv 1: input already im2col'd on the host -> one lane-dense matmul ----
    OH1, OW1, TB, CKK = x_ref.shape
    w1_ref, b1_ref = params[0], params[1]
    x = x_ref[...].reshape(OH1 * OW1 * TB, CKK).astype(jnp.bfloat16)
    h = jnp.dot(x, w1_ref[...], preferred_element_type=jnp.float32) + b1_ref[...]
    h = _activation(activation, h).reshape(OH1, OW1, TB, w1_ref.shape[-1])

    # ---- conv 2..n: stride-2 conv via K*K tap matmuls ----
    pi = 2
    for (K, OH, OW) in conv_meta:
        h = _conv_stride2_taps(h, params[pi], params[pi + 1], K, OH, OW, activation)
        pi += 2

    # ---- fc_1 (Linear, or Identity lowered to a permutation): per-pixel matmuls ----
    wf_ref, bf_ref = params[pi], params[pi + 1]
    OHf, OWf = h.shape[0], h.shape[1]
    acc = jnp.zeros((TB, wf_ref.shape[-1]), jnp.float32)
    for hh in range(OHf):
        for ww in range(OWf):
            pix = h[hh, ww].astype(jnp.bfloat16)                 # (TILE_B, C_pad)
            acc = acc + jnp.dot(pix, wf_ref[hh * OWf + ww],
                                preferred_element_type=jnp.float32)
    out_ref[...] = acc + bf_ref[...]


# --------------------------------------------------------------------------
# ObsEncoder (parameters + forward), matching the PyTorch module semantics
# --------------------------------------------------------------------------
class ObsEncoderPallas:
    def __init__(self, input_shape, embedding_size, depth, kernels, activation, key):
        c0, h0, w0 = input_shape
        self.shape = tuple(input_shape)
        self.activation = activation
        self.kernels = tuple(kernels)

        keys = jax.random.split(key, 2 * len(self.kernels) + 2)

        # ---- torch-layout parameters (kept for the pure-JAX reference check) ----
        self.conv_params = []
        chans = [c0]
        d = depth
        for i, k in enumerate(self.kernels):
            if i == 0:
                cin, cout = c0, d
            else:
                cin, cout = d, 2 * d
                d = 2 * d
            wk = 0.1 * jax.random.normal(keys[2 * i], (cout, cin, k, k), jnp.float32)
            bk = 0.1 * jax.random.normal(keys[2 * i + 1], (cout,), jnp.float32)
            self.conv_params.append((wk, bk))
            chans.append(cout)

        self.spatial = [(h0, w0)]
        for k in self.kernels:
            self.spatial.append(conv_out_shape(self.spatial[-1], 0, k, 2))
        self.embed_size = int(chans[-1] * int(np.prod(self.spatial[-1])))

        if embedding_size == self.embed_size:
            self.fc_params = None                      # nn.Identity()
            self.out_dim = self.embed_size
        else:
            fw = 0.1 * jax.random.normal(keys[-2], (embedding_size, self.embed_size), jnp.float32)
            fb = 0.1 * jax.random.normal(keys[-1], (embedding_size,), jnp.float32)
            self.fc_params = (fw, fb)                  # torch Linear layout: y = x @ W.T + b
            self.out_dim = embedding_size

        # ---- hoisted kernel-layout weights (bf16, zero-padded to 128 lanes) ----
        # conv 1: im2col weight (Cin*K*K -> pad128, Cout -> pad128)
        w1, b1 = self.conv_params[0]
        k0 = self.kernels[0]
        ckk = c0 * k0 * k0
        self._ckk_pad = _round_up(ckk, LANE)
        c1_pad = _round_up(chans[1], LANE)
        w1_np = np.zeros((self._ckk_pad, c1_pad), np.float32)
        w1_np[:ckk, :chans[1]] = np.transpose(np.asarray(w1), (1, 2, 3, 0)).reshape(ckk, chans[1])
        b1_np = np.zeros((1, c1_pad), np.float32)
        b1_np[0, :chans[1]] = np.asarray(b1)
        self._w1 = jnp.asarray(w1_np, jnp.bfloat16)
        self._b1 = jnp.asarray(b1_np, jnp.float32)

        # conv 2..n: per-tap (K*K, Cin_pad, Cout_pad) weights
        self._tap_w, self._tap_b = [], []
        conv_meta = []
        for i in range(1, len(self.kernels)):
            wk, bk = self.conv_params[i]
            k = self.kernels[i]
            cin, cout = chans[i], chans[i + 1]
            cin_pad, cout_pad = _round_up(cin, LANE), _round_up(cout, LANE)
            taps = np.zeros((k * k, cin_pad, cout_pad), np.float32)
            wnp = np.asarray(wk)
            for kh in range(k):
                for kw in range(k):
                    taps[kh * k + kw, :cin, :cout] = wnp[:, :, kh, kw].T
            bnp = np.zeros((1, cout_pad), np.float32)
            bnp[0, :cout] = np.asarray(bk)
            self._tap_w.append(jnp.asarray(taps, jnp.bfloat16))
            self._tap_b.append(jnp.asarray(bnp, jnp.float32))
            oh, ow = self.spatial[i + 1]
            conv_meta.append((k, oh, ow))
        self.conv_meta = tuple(conv_meta)

        # fc_1 stage: per-final-pixel (C_last_pad, E_pad) matrices; Identity becomes a
        # 0/1 permutation so the kernel output stays lane-dense (>=128 wide).
        ohf, owf = self.spatial[-1]
        c_last = chans[-1]
        c_last_pad = _round_up(c_last, LANE)
        e_true = self.out_dim
        e_pad = _round_up(e_true, LANE)
        fcmat = np.zeros((ohf * owf, c_last_pad, e_pad), np.float32)
        fcb = np.zeros((1, e_pad), np.float32)
        for hh in range(ohf):
            for ww in range(owf):
                idx = np.arange(c_last) * (ohf * owf) + hh * owf + ww   # NCHW flatten order
                if self.fc_params is not None:
                    fw = np.asarray(self.fc_params[0])                  # (E, embed_size)
                    fcmat[hh * owf + ww, :c_last, :e_true] = fw[:, idx].T
                else:
                    fcmat[hh * owf + ww, np.arange(c_last), idx] = 1.0
        if self.fc_params is not None:
            fcb[0, :e_true] = np.asarray(self.fc_params[1])
        self._fc_mat = jnp.asarray(fcmat, jnp.bfloat16)
        self._fc_b = jnp.asarray(fcb, jnp.float32)
        self._e_pad = e_pad

        # per-sample footprint bookkeeping (for batch-tile choice & VMEM budget)
        oh1, ow1 = self.spatial[1]
        self._in_feat = oh1 * ow1 * self._ckk_pad
        act_feats = [self.spatial[i][0] * self.spatial[i][1] * _round_up(chans[i], LANE)
                     for i in range(1, len(chans))]
        self._per_sample_f32 = self._in_feat + sum(act_feats) + e_pad
        self._weight_bytes = int(sum(int(a.size) * a.dtype.itemsize for a in
                                     [self._w1, self._b1, self._fc_mat, self._fc_b]
                                     + self._tap_w + self._tap_b))

    # ---------------- batch tiling ----------------
    def _choose_tile_b(self, batch):
        b8 = _round_up(max(int(batch), 1), SUBLANE)
        # VMEM cap on the batch tile (double-buffered in/out blocks + in-kernel values)
        per_sample_bytes = 4 * (2 * self._in_feat + 2 * self._e_pad + 4 * self._per_sample_f32)
        cap = max(SUBLANE, ((24 * 2 ** 20) // max(per_sample_bytes, 1)) // SUBLANE * SUBLANE)
        if b8 <= 128:
            tile = b8                                        # toy batches: single grid step
        else:
            # >=2 grid steps so the "parallel" batch axis spans both v7x TensorCores;
            # tiles up to 512 rows to amortize the ~0.35us per-grid-step overhead.
            tile = min(512, _round_up((b8 + 1) // 2, SUBLANE))
        return max(SUBLANE, min(tile, cap))

    # ---------------- forward ----------------
    def __call__(self, obs):
        batch_shape = obs.shape[:-3]
        img = obs.reshape((-1,) + self.shape).astype(jnp.float32)
        out = self._forward(img)
        return out.reshape(*batch_shape, self.out_dim)

    def _forward(self, img):
        b = img.shape[0]
        tile_b = self._choose_tile_b(b)
        b_pad = _round_up(b, tile_b)
        if b_pad != b:
            img = jnp.pad(img, ((0, b_pad - b), (0, 0), (0, 0), (0, 0)))

        # Host-side im2col of conv 1 (pure layout plumbing: gather + transpose + pad).
        k0 = self.kernels[0]
        oh1, ow1 = self.spatial[1]
        patches = []
        for kh in range(k0):
            for kw in range(k0):
                patches.append(img[:, :, kh:kh + 2 * oh1:2, kw:kw + 2 * ow1:2])
        p = jnp.stack(patches, axis=2)                       # (B, C0, K*K, OH1, OW1)
        p = p.reshape(b_pad, self.shape[0] * k0 * k0, oh1, ow1)
        p = jnp.transpose(p, (2, 3, 0, 1))                   # (OH1, OW1, B, C0*K*K)
        pad_f = self._ckk_pad - p.shape[-1]
        if pad_f:
            p = jnp.pad(p, ((0, 0), (0, 0), (0, 0), (0, pad_f)))

        params = [self._w1, self._b1]
        for tw, tb_ in zip(self._tap_w, self._tap_b):
            params += [tw, tb_]
        params += [self._fc_mat, self._fc_b]

        try:
            out = self._pallas_forward(p, params, tile_b, b_pad, use_buffered=True)
        except Exception:
            # pl.Buffered(1) single-buffering of the resident weights is a pure
            # optimization; fall back to default specs if this build rejects it.
            out = self._pallas_forward(p, params, tile_b, b_pad, use_buffered=False)
        return out[:b, :self.out_dim]

    def _pallas_forward(self, p, params, tile_b, b_pad, use_buffered):
        oh1, ow1 = self.spatial[1]
        e_pad = self._e_pad
        grid = (b_pad // tile_b,)

        def const_spec(arr):
            idx = lambda i, _nd=arr.ndim: (0,) * _nd
            if use_buffered:
                return pl.BlockSpec(arr.shape, idx, pipeline_mode=pl.Buffered(1))
            return pl.BlockSpec(arr.shape, idx)

        in_specs = [pl.BlockSpec((oh1, ow1, tile_b, self._ckk_pad),
                                 lambda i: (0, 0, i, 0))]
        in_specs += [const_spec(a) for a in params]
        out_specs = pl.BlockSpec((tile_b, e_pad), lambda i: (i, 0))

        # explicit VMEM budget (v7x has only 64 MiB physical / 32 MiB default scoped)
        block_bytes = 4 * tile_b * (2 * self._in_feat + 2 * e_pad + 4 * self._per_sample_f32)
        est = self._weight_bytes * (1 if use_buffered else 2) + block_bytes
        if est > 56 * 2 ** 20:
            raise ValueError(
                "ObsEncoderPallas: estimated VMEM footprint %.1f MiB exceeds the 64 MiB "
                "budget of TPU v7x; reduce the batch tile or spatial dims." % (est / 2 ** 20))
        vmem_limit = int(min(60 * 2 ** 20, max(32 * 2 ** 20, 2 * est)))

        kern = functools.partial(_encoder_kernel,
                                 conv_meta=self.conv_meta,
                                 activation=self.activation)
        return pl.pallas_call(
            kern,
            out_shape=jax.ShapeDtypeStruct((b_pad, e_pad), jnp.float32),
            grid=grid,
            in_specs=in_specs,
            out_specs=out_specs,
            compiler_params=pltpu.CompilerParams(
                dimension_semantics=("parallel",),
                vmem_limit_bytes=vmem_limit),
        )(p, *params)


# --------------------------------------------------------------------------
# Pure-JAX reference (lax.conv, NCHW) with the same bf16 weight/activation
# rounding as the kernel's MXU path, for correctness checking.
# --------------------------------------------------------------------------
def reference_forward(enc, obs):
    batch_shape = obs.shape[:-3]
    q = lambda a: a.astype(jnp.bfloat16).astype(jnp.float32)
    h = obs.reshape((-1,) + tuple(enc.shape)).astype(jnp.float32)
    for wk, bk in enc.conv_params:
        h = lax.conv_general_dilated(
            q(h), q(wk), window_strides=(2, 2), padding="VALID",
            dimension_numbers=("NCHW", "OIHW", "NCHW"))
        h = _activation(enc.activation, h + bk[None, :, None, None])
    h = q(h.reshape(h.shape[0], -1))
    if enc.fc_params is not None:
        fw, fb = enc.fc_params
        h = h @ q(fw).T + fb
    return h.reshape(*batch_shape, -1)


if __name__ == "__main__":
    key = jax.random.PRNGKey(0)
    k_param, k_x = jax.random.split(key)

    # Small config: image (4, 16, 16) -> 7x7 -> 2x2, channels 4 -> 4 -> 8,
    # embed_size = 8*2*2 = 32, fc_1 = Linear(32, 128).
    input_shape = (4, 16, 16)
    embedding_size = 128
    depth = 4
    kernels = (4, 4)
    activation = "elu"

    enc = ObsEncoderPallas(input_shape, embedding_size, depth, kernels, activation, k_param)
    obs = jax.random.normal(k_x, (2, *input_shape), jnp.float32)   # batch_shape = (2,)

    out = jax.block_until_ready(enc(obs))
    assert out.shape == (2, embedding_size), out.shape
    assert out.dtype == jnp.float32

    ref = jax.block_until_ready(reference_forward(enc, obs))
    err = float(jnp.max(jnp.abs(out - ref)))
    assert jnp.allclose(out, ref, rtol=1e-2, atol=1e-2), err

    print("KERNEL_OK")
</pallas_src>

<mosaic_0001>
module attributes {stable_mosaic.version = 11 : i64} {
  func.func @_encoder_kernel(%arg0: i32, %arg1: memref<7x7x8x128xf32, #tpu.memory_space<vmem>>, %arg2: memref<128x128xbf16, #tpu.memory_space<vmem>>, %arg3: memref<1x128xf32, #tpu.memory_space<vmem>>, %arg4: memref<16x128x128xbf16, #tpu.memory_space<vmem>>, %arg5: memref<1x128xf32, #tpu.memory_space<vmem>>, %arg6: memref<4x128x128xbf16, #tpu.memory_space<vmem>>, %arg7: memref<1x128xf32, #tpu.memory_space<vmem>>, %arg8: memref<8x128xf32, #tpu.memory_space<vmem>>) attributes {dimension_semantics = [#tpu.dimension_semantics<parallel>], iteration_bounds = array<i64: 1>, scalar_prefetch = 0 : i64, scratch_operands = 0 : i64, tpu.core_type = #tpu.core_type<tc>, window_params = [{transform_indices = @transform_0, window_bounds = array<i64: 7, 7, 8, 128>}, {pipeline_mode = #tpu.pipeline_mode<synchronous>, transform_indices = @transform_1, window_bounds = array<i64: 128, 128>}, {pipeline_mode = #tpu.pipeline_mode<synchronous>, transform_indices = @transform_2, window_bounds = array<i64: 1, 128>}, {pipeline_mode = #tpu.pipeline_mode<synchronous>, transform_indices = @transform_3, window_bounds = array<i64: 16, 128, 128>}, {pipeline_mode = #tpu.pipeline_mode<synchronous>, transform_indices = @transform_4, window_bounds = array<i64: 1, 128>}, {pipeline_mode = #tpu.pipeline_mode<synchronous>, transform_indices = @transform_5, window_bounds = array<i64: 4, 128, 128>}, {pipeline_mode = #tpu.pipeline_mode<synchronous>, transform_indices = @transform_6, window_bounds = array<i64: 1, 128>}, {transform_indices = @transform_7, window_bounds = array<i64: 8, 128>}]} {
    %c0 = arith.constant 0 : index
    %c0_0 = arith.constant 0 : index
    %c0_1 = arith.constant 0 : index
    %c0_2 = arith.constant 0 : index
    %0 = vector.load %arg1[%c0, %c0_0, %c0_1, %c0_2] : memref<7x7x8x128xf32, #tpu.memory_space<vmem>>, vector<7x7x8x128xf32>
    %1 = vector.shape_cast %0 : vector<7x7x8x128xf32> to vector<392x128xf32>
    %2 = arith.truncf %1 : vector<392x128xf32> to vector<392x128xbf16>
    %c0_3 = arith.constant 0 : index
    %c0_4 = arith.constant 0 : index
    %3 = vector.load %arg2[%c0_3, %c0_4] : memref<128x128xbf16, #tpu.memory_space<vmem>>, vector<128x128xbf16>
    %cst = arith.constant dense<0.000000e+00> : vector<392x128xf32>
    %4 = tpu.matmul %2, %3, %cst {dimension_numbers = #tpu.dot_dimension_numbers<[1], [0], [0], [1], [0, 0, 1, 1], [], []>} : vector<392x128xbf16>, vector<128x128xbf16>, vector<392x128xf32> -> vector<392x128xf32>
    %c0_5 = arith.constant 0 : index
    %c0_6 = arith.constant 0 : index
    %5 = vector.load %arg3[%c0_5, %c0_6] : memref<1x128xf32, #tpu.memory_space<vmem>>, vector<1x128xf32>
    %6 = vector.broadcast %5 : vector<1x128xf32> to vector<392x128xf32>
    %7 = arith.addf %4, %6 : vector<392x128xf32>
    %cst_7 = arith.constant 0.000000e+00 : f32
    %8 = vector.broadcast %cst_7 : f32 to vector<392x128xf32>
    %9 = arith.cmpf ogt, %7, %8 : vector<392x128xf32>
    %cst_8 = arith.constant 0.000000e+00 : f32
    %10 = vector.broadcast %cst_8 : f32 to vector<392x128xf32>
    %11 = arith.minimumf %7, %10 : vector<392x128xf32>
    %12 = math.exp %11 : vector<392x128xf32>
    %cst_9 = arith.constant 1.000000e+00 : f32
    %13 = vector.broadcast %cst_9 : f32 to vector<392x128xf32>
    %14 = arith.subf %12, %13 : vector<392x128xf32>
    %15 = arith.select %9, %7, %14 : vector<392x128xi1>, vector<392x128xf32>
    %16 = vector.shape_cast %15 : vector<392x128xf32> to vector<7x7x8x128xf32>
    %17 = vector.extract_strided_slice %16 {offsets = [0, 0, 0, 0], sizes = [1, 7, 8, 128], strides = [1, 1, 1, 1]} : vector<7x7x8x128xf32> to vector<1x7x8x128xf32>
    %18 = vector.extract_strided_slice %16 {offsets = [2, 0, 0, 0], sizes = [1, 7, 8, 128], strides = [1, 1, 1, 1]} : vector<7x7x8x128xf32> to vector<1x7x8x128xf32>
    %19 = vector.extract_strided_slice %16 {offsets = [4, 0, 0, 0], sizes = [1, 7, 8, 128], strides = [1, 1, 1, 1]} : vector<7x7x8x128xf32> to vector<1x7x8x128xf32>
    %20 = tpu.concatenate %17, %18, %19 in 0 : vector<1x7x8x128xf32>, vector<1x7x8x128xf32>, vector<1x7x8x128xf32> -> vector<3x7x8x128xf32>
    %21 = vector.extract_strided_slice %16 {offsets = [1, 0, 0, 0], sizes = [1, 7, 8, 128], strides = [1, 1, 1, 1]} : vector<7x7x8x128xf32> to vector<1x7x8x128xf32>
    %22 = vector.extract_strided_slice %16 {offsets = [3, 0, 0, 0], sizes = [1, 7, 8, 128], strides = [1, 1, 1, 1]} : vector<7x7x8x128xf32> to vector<1x7x8x128xf32>
    %23 = vector.extract_strided_slice %16 {offsets = [5, 0, 0, 0], sizes = [1, 7, 8, 128], strides = [1, 1, 1, 1]} : vector<7x7x8x128xf32> to vector<1x7x8x128xf32>
    %24 = tpu.concatenate %21, %22, %23 in 0 : vector<1x7x8x128xf32>, vector<1x7x8x128xf32>, vector<1x7x8x128xf32> -> vector<3x7x8x128xf32>
    %25 = vector.extract_strided_slice %20 {offsets = [0, 0, 0, 0], sizes = [3, 1, 8, 128], strides = [1, 1, 1, 1]} : vector<3x7x8x128xf32> to vector<3x1x8x128xf32>
    %26 = vector.extract_strided_slice %20 {offsets = [0, 2, 0, 0], sizes = [3, 1, 8, 128], strides = [1, 1, 1, 1]} : vector<3x7x8x128xf32> to vector<3x1x8x128xf32>
    %27 = vector.extract_strided_slice %20 {offsets = [0, 4, 0, 0], sizes = [3, 1, 8, 128], strides = [1, 1, 1, 1]} : vector<3x7x8x128xf32> to vector<3x1x8x128xf32>
    %28 = tpu.concatenate %25, %26, %27 in 1 : vector<3x1x8x128xf32>, vector<3x1x8x128xf32>, vector<3x1x8x128xf32> -> vector<3x3x8x128xf32>
    %29 = vector.extract_strided_slice %20 {offsets = [0, 1, 0, 0], sizes = [3, 1, 8, 128], strides = [1, 1, 1, 1]} : vector<3x7x8x128xf32> to vector<3x1x8x128xf32>
    %30 = vector.extract_strided_slice %20 {offsets = [0, 3, 0, 0], sizes = [3, 1, 8, 128], strides = [1, 1, 1, 1]} : vector<3x7x8x128xf32> to vector<3x1x8x128xf32>
    %31 = vector.extract_strided_slice %20 {offsets = [0, 5, 0, 0], sizes = [3, 1, 8, 128], strides = [1, 1, 1, 1]} : vector<3x7x8x128xf32> to vector<3x1x8x128xf32>
    %32 = tpu.concatenate %29, %30, %31 in 1 : vector<3x1x8x128xf32>, vector<3x1x8x128xf32>, vector<3x1x8x128xf32> -> vector<3x3x8x128xf32>
    %33 = vector.extract_strided_slice %24 {offsets = [0, 0, 0, 0], sizes = [3, 1, 8, 128], strides = [1, 1, 1, 1]} : vector<3x7x8x128xf32> to vector<3x1x8x128xf32>
    %34 = vector.extract_strided_slice %24 {offsets = [0, 2, 0, 0], sizes = [3, 1, 8, 128], strides = [1, 1, 1, 1]} : vector<3x7x8x128xf32> to vector<3x1x8x128xf32>
    %35 = vector.extract_strided_slice %24 {offsets = [0, 4, 0, 0], sizes = [3, 1, 8, 128], strides = [1, 1, 1, 1]} : vector<3x7x8x128xf32> to vector<3x1x8x128xf32>
    %36 = tpu.concatenate %33, %34, %35 in 1 : vector<3x1x8x128xf32>, vector<3x1x8x128xf32>, vector<3x1x8x128xf32> -> vector<3x3x8x128xf32>
    %37 = vector.extract_strided_slice %24 {offsets = [0, 1, 0, 0], sizes = [3, 1, 8, 128], strides = [1, 1, 1, 1]} : vector<3x7x8x128xf32> to vector<3x1x8x128xf32>
    %38 = vector.extract_strided_slice %24 {offsets = [0, 3, 0, 0], sizes = [3, 1, 8, 128], strides = [1, 1, 1, 1]} : vector<3x7x8x128xf32> to vector<3x1x8x128xf32>
    %39 = vector.extract_strided_slice %24 {offsets = [0, 5, 0, 0], sizes = [3, 1, 8, 128], strides = [1, 1, 1, 1]} : vector<3x7x8x128xf32> to vector<3x1x8x128xf32>
    %40 = tpu.concatenate %37, %38, %39 in 1 : vector<3x1x8x128xf32>, vector<3x1x8x128xf32>, vector<3x1x8x128xf32> -> vector<3x3x8x128xf32>
    %cst_10 = arith.constant 0.000000e+00 : f32
    %41 = vector.broadcast %cst_10 : f32 to vector<32x128xf32>
    %42 = vector.extract_strided_slice %28 {offsets = [0, 0, 0, 0], sizes = [2, 2, 8, 128], strides = [1, 1, 1, 1]} : vector<3x3x8x128xf32> to vector<2x2x8x128xf32>
    %43 = vector.shape_cast %42 : vector<2x2x8x128xf32> to vector<32x128xf32>
    %44 = arith.truncf %43 : vector<32x128xf32> to vector<32x128xbf16>
    %c0_11 = arith.constant 0 : index
    %c0_12 = arith.constant 0 : index
    %c0_13 = arith.constant 0 : index
    %45 = vector.load %arg4[%c0_11, %c0_12, %c0_13] : memref<16x128x128xbf16, #tpu.memory_space<vmem>>, vector<1x128x128xbf16>
    %46 = vector.shape_cast %45 : vector<1x128x128xbf16> to vector<128x128xbf16>
    %cst_14 = arith.constant dense<0.000000e+00> : vector<32x128xf32>
    %47 = tpu.matmul %44, %46, %cst_14 {dimension_numbers = #tpu.dot_dimension_numbers<[1], [0], [0], [1], [0, 0, 1, 1], [], []>} : vector<32x128xbf16>, vector<128x128xbf16>, vector<32x128xf32> -> vector<32x128xf32>
    %48 = arith.addf %41, %47 : vector<32x128xf32>
    %49 = vector.extract_strided_slice %32 {offsets = [0, 0, 0, 0], sizes = [2, 2, 8, 128], strides = [1, 1, 1, 1]} : vector<3x3x8x128xf32> to vector<2x2x8x128xf32>
    %50 = vector.shape_cast %49 : vector<2x2x8x128xf32> to vector<32x128xf32>
    %51 = arith.truncf %50 : vector<32x128xf32> to vector<32x128xbf16>
    %c1 = arith.constant 1 : index
    %c0_15 = arith.constant 0 : index
    %c0_16 = arith.constant 0 : index
    %52 = vector.load %arg4[%c1, %c0_15, %c0_16] : memref<16x128x128xbf16, #tpu.memory_space<vmem>>, vector<1x128x128xbf16>
    %53 = vector.shape_cast %52 : vector<1x128x128xbf16> to vector<128x128xbf16>
    %cst_17 = arith.constant dense<0.000000e+00> : vector<32x128xf32>
    %54 = tpu.matmul %51, %53, %cst_17 {dimension_numbers = #tpu.dot_dimension_numbers<[1], [0], [0], [1], [0, 0, 1, 1], [], []>} : vector<32x128xbf16>, vector<128x128xbf16>, vector<32x128xf32> -> vector<32x128xf32>
    %55 = arith.addf %48, %54 : vector<32x128xf32>
    %56 = vector.extract_strided_slice %28 {offsets = [0, 1, 0, 0], sizes = [2, 2, 8, 128], strides = [1, 1, 1, 1]} : vector<3x3x8x128xf32> to vector<2x2x8x128xf32>
    %57 = vector.shape_cast %56 : vector<2x2x8x128xf32> to vector<32x128xf32>
    %58 = arith.truncf %57 : vector<32x128xf32> to vector<32x128xbf16>
    %c2 = arith.constant 2 : index
    %c0_18 = arith.constant 0 : index
    %c0_19 = arith.constant 0 : index
    %59 = vector.load %arg4[%c2, %c0_18, %c0_19] : memref<16x128x128xbf16, #tpu.memory_space<vmem>>, vector<1x128x128xbf16>
    %60 = vector.shape_cast %59 : vector<1x128x128xbf16> to vector<128x128xbf16>
    %cst_20 = arith.constant dense<0.000000e+00> : vector<32x128xf32>
    %61 = tpu.matmul %58, %60, %cst_20 {dimension_numbers = #tpu.dot_dimension_numbers<[1], [0], [0], [1], [0, 0, 1, 1], [], []>} : vector<32x128xbf16>, vector<128x128xbf16>, vector<32x128xf32> -> vector<32x128xf32>
    %62 = arith.addf %55, %61 : vector<32x128xf32>
    %63 = vector.extract_strided_slice %32 {offsets = [0, 1, 0, 0], sizes = [2, 2, 8, 128], strides = [1, 1, 1, 1]} : vector<3x3x8x128xf32> to vector<2x2x8x128xf32>
    %64 = vector.shape_cast %63 : vector<2x2x8x128xf32> to vector<32x128xf32>
    %65 = arith.truncf %64 : vector<32x128xf32> to vector<32x128xbf16>
    %c3 = arith.constant 3 : index
    %c0_21 = arith.constant 0 : index
    %c0_22 = arith.constant 0 : index
    %66 = vector.load %arg4[%c3, %c0_21, %c0_22] : memref<16x128x128xbf16, #tpu.memory_space<vmem>>, vector<1x128x128xbf16>
    %67 = vector.shape_cast %66 : vector<1x128x128xbf16> to vector<128x128xbf16>
    %cst_23 = arith.constant dense<0.000000e+00> : vector<32x128xf32>
    %68 = tpu.matmul %65, %67, %cst_23 {dimension_numbers = #tpu.dot_dimension_numbers<[1], [0], [0], [1], [0, 0, 1, 1], [], []>} : vector<32x128xbf16>, vector<128x128xbf16>, vector<32x128xf32> -> vector<32x128xf32>
    %69 = arith.addf %62, %68 : vector<32x128xf32>
    %70 = vector.extract_strided_slice %36 {offsets = [0, 0, 0, 0], sizes = [2, 2, 8, 128], strides = [1, 1, 1, 1]} : vector<3x3x8x128xf32> to vector<2x2x8x128xf32>
    %71 = vector.shape_cast %70 : vector<2x2x8x128xf32> to vector<32x128xf32>
    %72 = arith.truncf %71 : vector<32x128xf32> to vector<32x128xbf16>
    %c4 = arith.constant 4 : index
    %c0_24 = arith.constant 0 : index
    %c0_25 = arith.constant 0 : index
    %73 = vector.load %arg4[%c4, %c0_24, %c0_25] : memref<16x128x128xbf16, #tpu.memory_space<vmem>>, vector<1x128x128xbf16>
    %74 = vector.shape_cast %73 : vector<1x128x128xbf16> to vector<128x128xbf16>
    %cst_26 = arith.constant dense<0.000000e+00> : vector<32x128xf32>
    %75 = tpu.matmul %72, %74, %cst_26 {dimension_numbers = #tpu.dot_dimension_numbers<[1], [0], [0], [1], [0, 0, 1, 1], [], []>} : vector<32x128xbf16>, vector<128x128xbf16>, vector<32x128xf32> -> vector<32x128xf32>
    %76 = arith.addf %69, %75 : vector<32x128xf32>
    %77 = vector.extract_strided_slice %40 {offsets = [0, 0, 0, 0], sizes = [2, 2, 8, 128], strides = [1, 1, 1, 1]} : vector<3x3x8x128xf32> to vector<2x2x8x128xf32>
    %78 = vector.shape_cast %77 : vector<2x2x8x128xf32> to vector<32x128xf32>
    %79 = arith.truncf %78 : vector<32x128xf32> to vector<32x128xbf16>
    %c5 = arith.constant 5 : index
    %c0_27 = arith.constant 0 : index
    %c0_28 = arith.constant 0 : index
    %80 = vector.load %arg4[%c5, %c0_27, %c0_28] : memref<16x128x128xbf16, #tpu.memory_space<vmem>>, vector<1x128x128xbf16>
    %81 = vector.shape_cast %80 : vector<1x128x128xbf16> to vector<128x128xbf16>
    %cst_29 = arith.constant dense<0.000000e+00> : vector<32x128xf32>
    %82 = tpu.matmul %79, %81, %cst_29 {dimension_numbers = #tpu.dot_dimension_numbers<[1], [0], [0], [1], [0, 0, 1, 1], [], []>} : vector<32x128xbf16>, vector<128x128xbf16>, vector<32x128xf32> -> vector<32x128xf32>
    %83 = arith.addf %76, %82 : vector<32x128xf32>
    %84 = vector.extract_strided_slice %36 {offsets = [0, 1, 0, 0], sizes = [2, 2, 8, 128], strides = [1, 1, 1, 1]} : vector<3x3x8x128xf32> to vector<2x2x8x128xf32>
    %85 = vector.shape_cast %84 : vector<2x2x8x128xf32> to vector<32x128xf32>
    %86 = arith.truncf %85 : vector<32x128xf32> to vector<32x128xbf16>
    %c6 = arith.constant 6 : index
    %c0_30 = arith.constant 0 : index
    %c0_31 = arith.constant 0 : index
    %87 = vector.load %arg4[%c6, %c0_30, %c0_31] : memref<16x128x128xbf16, #tpu.memory_space<vmem>>, vector<1x128x128xbf16>
    %88 = vector.shape_cast %87 : vector<1x128x128xbf16> to vector<128x128xbf16>
    %cst_32 = arith.constant dense<0.000000e+00> : vector<32x128xf32>
    %89 = tpu.matmul %86, %88, %cst_32 {dimension_numbers = #tpu.dot_dimension_numbers<[1], [0], [0], [1], [0, 0, 1, 1], [], []>} : vector<32x128xbf16>, vector<128x128xbf16>, vector<32x128xf32> -> vector<32x128xf32>
    %90 = arith.addf %83, %89 : vector<32x128xf32>
    %91 = vector.extract_strided_slice %40 {offsets = [0, 1, 0, 0], sizes = [2, 2, 8, 128], strides = [1, 1, 1, 1]} : vector<3x3x8x128xf32> to vector<2x2x8x128xf32>
    %92 = vector.shape_cast %91 : vector<2x2x8x128xf32> to vector<32x128xf32>
    %93 = arith.truncf %92 : vector<32x128xf32> to vector<32x128xbf16>
    %c7 = arith.constant 7 : index
    %c0_33 = arith.constant 0 : index
    %c0_34 = arith.constant 0 : index
    %94 = vector.load %arg4[%c7, %c0_33, %c0_34] : memref<16x128x128xbf16, #tpu.memory_space<vmem>>, vector<1x128x128xbf16>
    %95 = vector.shape_cast %94 : vector<1x128x128xbf16> to vector<128x128xbf16>
    %cst_35 = arith.constant dense<0.000000e+00> : vector<32x128xf32>
    %96 = tpu.matmul %93, %95, %cst_35 {dimension_numbers = #tpu.dot_dimension_numbers<[1], [0], [0], [1], [0, 0, 1, 1], [], []>} : vector<32x128xbf16>, vector<128x128xbf16>, vector<32x128xf32> -> vector<32x128xf32>
    %97 = arith.addf %90, %96 : vector<32x128xf32>
    %98 = vector.extract_strided_slice %28 {offsets = [1, 0, 0, 0], sizes = [2, 2, 8, 128], strides = [1, 1, 1, 1]} : vector<3x3x8x128xf32> to vector<2x2x8x128xf32>
    %99 = vector.shape_cast %98 : vector<2x2x8x128xf32> to vector<32x128xf32>
    %100 = arith.truncf %99 : vector<32x128xf32> to vector<32x128xbf16>
    %c8 = arith.constant 8 : index
    %c0_36 = arith.constant 0 : index
    %c0_37 = arith.constant 0 : index
    %101 = vector.load %arg4[%c8, %c0_36, %c0_37] : memref<16x128x128xbf16, #tpu.memory_space<vmem>>, vector<1x128x128xbf16>
    %102 = vector.shape_cast %101 : vector<1x128x128xbf16> to vector<128x128xbf16>
    %cst_38 = arith.constant dense<0.000000e+00> : vector<32x128xf32>
    %103 = tpu.matmul %100, %102, %cst_38 {dimension_numbers = #tpu.dot_dimension_numbers<[1], [0], [0], [1], [0, 0, 1, 1], [], []>} : vector<32x128xbf16>, vector<128x128xbf16>, vector<32x128xf32> -> vector<32x128xf32>
    %104 = arith.addf %97, %103 : vector<32x128xf32>
    %105 = vector.extract_strided_slice %32 {offsets = [1, 0, 0, 0], sizes = [2, 2, 8, 128], strides = [1, 1, 1, 1]} : vector<3x3x8x128xf32> to vector<2x2x8x128xf32>
    %106 = vector.shape_cast %105 : vector<2x2x8x128xf32> to vector<32x128xf32>
    %107 = arith.truncf %106 : vector<32x128xf32> to vector<32x128xbf16>
    %c9 = arith.constant 9 : index
    %c0_39 = arith.constant 0 : index
    %c0_40 = arith.constant 0 : index
    %108 = vector.load %arg4[%c9, %c0_39, %c0_40] : memref<16x128x128xbf16, #tpu.memory_space<vmem>>, vector<1x128x128xbf16>
    %109 = vector.shape_cast %108 : vector<1x128x128xbf16> to vector<128x128xbf16>
    %cst_41 = arith.constant dense<0.000000e+00> : vector<32x128xf32>
    %110 = tpu.matmul %107, %109, %cst_41 {dimension_numbers = #tpu.dot_dimension_numbers<[1], [0], [0], [1], [0, 0, 1, 1], [], []>} : vector<32x128xbf16>, vector<128x128xbf16>, vector<32x128xf32> -> vector<32x128xf32>
    %111 = arith.addf %104, %110 : vector<32x128xf32>
    %112 = vector.extract_strided_slice %28 {offsets = [1, 1, 0, 0], sizes = [2, 2, 8, 128], strides = [1, 1, 1, 1]} : vector<3x3x8x128xf32> to vector<2x2x8x128xf32>
    %113 = vector.shape_cast %112 : vector<2x2x8x128xf32> to vector<32x128xf32>
    %114 = arith.truncf %113 : vector<32x128xf32> to vector<32x128xbf16>
    %c10 = arith.constant 10 : index
    %c0_42 = arith.constant 0 : index
    %c0_43 = arith.constant 0 : index
    %115 = vector.load %arg4[%c10, %c0_42, %c0_43] : memref<16x128x128xbf16, #tpu.memory_space<vmem>>, vector<1x128x128xbf16>
    %116 = vector.shape_cast %115 : vector<1x128x128xbf16> to vector<128x128xbf16>
    %cst_44 = arith.constant dense<0.000000e+00> : vector<32x128xf32>
    %117 = tpu.matmul %114, %116, %cst_44 {dimension_numbers = #tpu.dot_dimension_numbers<[1], [0], [0], [1], [0, 0, 1, 1], [], []>} : vector<32x128xbf16>, vector<128x128xbf16>, vector<32x128xf32> -> vector<32x128xf32>
    %118 = arith.addf %111, %117 : vector<32x128xf32>
    %119 = vector.extract_strided_slice %32 {offsets = [1, 1, 0, 0], sizes = [2, 2, 8, 128], strides = [1, 1, 1, 1]} : vector<3x3x8x128xf32> to vector<2x2x8x128xf32>
    %120 = vector.shape_cast %119 : vector<2x2x8x128xf32> to vector<32x128xf32>
    %121 = arith.truncf %120 : vector<32x128xf32> to vector<32x128xbf16>
    %c11 = arith.constant 11 : index
    %c0_45 = arith.constant 0 : index
    %c0_46 = arith.constant 0 : index
    %122 = vector.load %arg4[%c11, %c0_45, %c0_46] : memref<16x128x128xbf16, #tpu.memory_space<vmem>>, vector<1x128x128xbf16>
    %123 = vector.shape_cast %122 : vector<1x128x128xbf16> to vector<128x128xbf16>
    %cst_47 = arith.constant dense<0.000000e+00> : vector<32x128xf32>
    %124 = tpu.matmul %121, %123, %cst_47 {dimension_numbers = #tpu.dot_dimension_numbers<[1], [0], [0], [1], [0, 0, 1, 1], [], []>} : vector<32x128xbf16>, vector<128x128xbf16>, vector<32x128xf32> -> vector<32x128xf32>
    %125 = arith.addf %118, %124 : vector<32x128xf32>
    %126 = vector.extract_strided_slice %36 {offsets = [1, 0, 0, 0], sizes = [2, 2, 8, 128], strides = [1, 1, 1, 1]} : vector<3x3x8x128xf32> to vector<2x2x8x128xf32>
    %127 = vector.shape_cast %126 : vector<2x2x8x128xf32> to vector<32x128xf32>
    %128 = arith.truncf %127 : vector<32x128xf32> to vector<32x128xbf16>
    %c12 = arith.constant 12 : index
    %c0_48 = arith.constant 0 : index
    %c0_49 = arith.constant 0 : index
    %129 = vector.load %arg4[%c12, %c0_48, %c0_49] : memref<16x128x128xbf16, #tpu.memory_space<vmem>>, vector<1x128x128xbf16>
    %130 = vector.shape_cast %129 : vector<1x128x128xbf16> to vector<128x128xbf16>
    %cst_50 = arith.constant dense<0.000000e+00> : vector<32x128xf32>
    %131 = tpu.matmul %128, %130, %cst_50 {dimension_numbers = #tpu.dot_dimension_numbers<[1], [0], [0], [1], [0, 0, 1, 1], [], []>} : vector<32x128xbf16>, vector<128x128xbf16>, vector<32x128xf32> -> vector<32x128xf32>
    %132 = arith.addf %125, %131 : vector<32x128xf32>
    %133 = vector.extract_strided_slice %40 {offsets = [1, 0, 0, 0], sizes = [2, 2, 8, 128], strides = [1, 1, 1, 1]} : vector<3x3x8x128xf32> to vector<2x2x8x128xf32>
    %134 = vector.shape_cast %133 : vector<2x2x8x128xf32> to vector<32x128xf32>
    %135 = arith.truncf %134 : vector<32x128xf32> to vector<32x128xbf16>
    %c13 = arith.constant 13 : index
    %c0_51 = arith.constant 0 : index
    %c0_52 = arith.constant 0 : index
    %136 = vector.load %arg4[%c13, %c0_51, %c0_52] : memref<16x128x128xbf16, #tpu.memory_space<vmem>>, vector<1x128x128xbf16>
    %137 = vector.shape_cast %136 : vector<1x128x128xbf16> to vector<128x128xbf16>
    %cst_53 = arith.constant dense<0.000000e+00> : vector<32x128xf32>
    %138 = tpu.matmul %135, %137, %cst_53 {dimension_numbers = #tpu.dot_dimension_numbers<[1], [0], [0], [1], [0, 0, 1, 1], [], []>} : vector<32x128xbf16>, vector<128x128xbf16>, vector<32x128xf32> -> vector<32x128xf32>
    %139 = arith.addf %132, %138 : vector<32x128xf32>
    %140 = vector.extract_strided_slice %36 {offsets = [1, 1, 0, 0], sizes = [2, 2, 8, 128], strides = [1, 1, 1, 1]} : vector<3x3x8x128xf32> to vector<2x2x8x128xf32>
    %141 = vector.shape_cast %140 : vector<2x2x8x128xf32> to vector<32x128xf32>
    %142 = arith.truncf %141 : vector<32x128xf32> to vector<32x128xbf16>
    %c14 = arith.constant 14 : index
    %c0_54 = arith.constant 0 : index
    %c0_55 = arith.constant 0 : index
    %143 = vector.load %arg4[%c14, %c0_54, %c0_55] : memref<16x128x128xbf16, #tpu.memory_space<vmem>>, vector<1x128x128xbf16>
    %144 = vector.shape_cast %143 : vector<1x128x128xbf16> to vector<128x128xbf16>
    %cst_56 = arith.constant dense<0.000000e+00> : vector<32x128xf32>
    %145 = tpu.matmul %142, %144, %cst_56 {dimension_numbers = #tpu.dot_dimension_numbers<[1], [0], [0], [1], [0, 0, 1, 1], [], []>} : vector<32x128xbf16>, vector<128x128xbf16>, vector<32x128xf32> -> vector<32x128xf32>
    %146 = arith.addf %139, %145 : vector<32x128xf32>
    %147 = vector.extract_strided_slice %40 {offsets = [1, 1, 0, 0], sizes = [2, 2, 8, 128], strides = [1, 1, 1, 1]} : vector<3x3x8x128xf32> to vector<2x2x8x128xf32>
    %148 = vector.shape_cast %147 : vector<2x2x8x128xf32> to vector<32x128xf32>
    %149 = arith.truncf %148 : vector<32x128xf32> to vector<32x128xbf16>
    %c15 = arith.constant 15 : index
    %c0_57 = arith.constant 0 : index
    %c0_58 = arith.constant 0 : index
    %150 = vector.load %arg4[%c15, %c0_57, %c0_58] : memref<16x128x128xbf16, #tpu.memory_space<vmem>>, vector<1x128x128xbf16>
    %151 = vector.shape_cast %150 : vector<1x128x128xbf16> to vector<128x128xbf16>
    %cst_59 = arith.constant dense<0.000000e+00> : vector<32x128xf32>
    %152 = tpu.matmul %149, %151, %cst_59 {dimension_numbers = #tpu.dot_dimension_numbers<[1], [0], [0], [1], [0, 0, 1, 1], [], []>} : vector<32x128xbf16>, vector<128x128xbf16>, vector<32x128xf32> -> vector<32x128xf32>
    %153 = arith.addf %146, %152 : vector<32x128xf32>
    %c0_60 = arith.constant 0 : index
    %c0_61 = arith.constant 0 : index
    %154 = vector.load %arg5[%c0_60, %c0_61] : memref<1x128xf32, #tpu.memory_space<vmem>>, vector<1x128xf32>
    %155 = vector.broadcast %154 : vector<1x128xf32> to vector<32x128xf32>
    %156 = arith.addf %153, %155 : vector<32x128xf32>
    %cst_62 = arith.constant 0.000000e+00 : f32
    %157 = vector.broadcast %cst_62 : f32 to vector<32x128xf32>
    %158 = arith.cmpf ogt, %156, %157 : vector<32x128xf32>
    %cst_63 = arith.constant 0.000000e+00 : f32
    %159 = vector.broadcast %cst_63 : f32 to vector<32x128xf32>
    %160 = arith.minimumf %156, %159 : vector<32x128xf32>
    %161 = math.exp %160 : vector<32x128xf32>
    %cst_64 = arith.constant 1.000000e+00 : f32
    %162 = vector.broadcast %cst_64 : f32 to vector<32x128xf32>
    %163 = arith.subf %161, %162 : vector<32x128xf32>
    %164 = arith.select %158, %156, %163 : vector<32x128xi1>, vector<32x128xf32>
    %165 = vector.shape_cast %164 : vector<32x128xf32> to vector<2x2x8x128xf32>
    %cst_65 = arith.constant 0.000000e+00 : f32
    %166 = vector.broadcast %cst_65 : f32 to vector<8x128xf32>
    %167 = vector.extract_strided_slice %165 {offsets = [0, 0, 0, 0], sizes = [1, 1, 8, 128], strides = [1, 1, 1, 1]} : vector<2x2x8x128xf32> to vector<1x1x8x128xf32>
    %168 = vector.shape_cast %167 : vector<1x1x8x128xf32> to vector<8x128xf32>
    %169 = arith.truncf %168 : vector<8x128xf32> to vector<8x128xbf16>
    %c0_66 = arith.constant 0 : index
    %c0_67 = arith.constant 0 : index
    %c0_68 = arith.constant 0 : index
    %170 = vector.load %arg6[%c0_66, %c0_67, %c0_68] : memref<4x128x128xbf16, #tpu.memory_space<vmem>>, vector<1x128x128xbf16>
    %171 = vector.shape_cast %170 : vector<1x128x128xbf16> to vector<128x128xbf16>
    %cst_69 = arith.constant dense<0.000000e+00> : vector<8x128xf32>
    %172 = tpu.matmul %169, %171, %cst_69 {dimension_numbers = #tpu.dot_dimension_numbers<[1], [0], [0], [1], [0, 0, 1, 1], [], []>} : vector<8x128xbf16>, vector<128x128xbf16>, vector<8x128xf32> -> vector<8x128xf32>
    %173 = arith.addf %166, %172 : vector<8x128xf32>
    %174 = vector.extract_strided_slice %165 {offsets = [0, 1, 0, 0], sizes = [1, 1, 8, 128], strides = [1, 1, 1, 1]} : vector<2x2x8x128xf32> to vector<1x1x8x128xf32>
    %175 = vector.shape_cast %174 : vector<1x1x8x128xf32> to vector<8x128xf32>
    %176 = arith.truncf %175 : vector<8x128xf32> to vector<8x128xbf16>
    %c1_70 = arith.constant 1 : index
    %c0_71 = arith.constant 0 : index
    %c0_72 = arith.constant 0 : index
    %177 = vector.load %arg6[%c1_70, %c0_71, %c0_72] : memref<4x128x128xbf16, #tpu.memory_space<vmem>>, vector<1x128x128xbf16>
    %178 = vector.shape_cast %177 : vector<1x128x128xbf16> to vector<128x128xbf16>
    %cst_73 = arith.constant dense<0.000000e+00> : vector<8x128xf32>
    %179 = tpu.matmul %176, %178, %cst_73 {dimension_numbers = #tpu.dot_dimension_numbers<[1], [0], [0], [1], [0, 0, 1, 1], [], []>} : vector<8x128xbf16>, vector<128x128xbf16>, vector<8x128xf32> -> vector<8x128xf32>
    %180 = arith.addf %173, %179 : vector<8x128xf32>
    %181 = vector.extract_strided_slice %165 {offsets = [1, 0, 0, 0], sizes = [1, 1, 8, 128], strides = [1, 1, 1, 1]} : vector<2x2x8x128xf32> to vector<1x1x8x128xf32>
    %182 = vector.shape_cast %181 : vector<1x1x8x128xf32> to vector<8x128xf32>
    %183 = arith.truncf %182 : vector<8x128xf32> to vector<8x128xbf16>
    %c2_74 = arith.constant 2 : index
    %c0_75 = arith.constant 0 : index
    %c0_76 = arith.constant 0 : index
    %184 = vector.load %arg6[%c2_74, %c0_75, %c0_76] : memref<4x128x128xbf16, #tpu.memory_space<vmem>>, vector<1x128x128xbf16>
    %185 = vector.shape_cast %184 : vector<1x128x128xbf16> to vector<128x128xbf16>
    %cst_77 = arith.constant dense<0.000000e+00> : vector<8x128xf32>
    %186 = tpu.matmul %183, %185, %cst_77 {dimension_numbers = #tpu.dot_dimension_numbers<[1], [0], [0], [1], [0, 0, 1, 1], [], []>} : vector<8x128xbf16>, vector<128x128xbf16>, vector<8x128xf32> -> vector<8x128xf32>
    %187 = arith.addf %180, %186 : vector<8x128xf32>
    %188 = vector.extract_strided_slice %165 {offsets = [1, 1, 0, 0], sizes = [1, 1, 8, 128], strides = [1, 1, 1, 1]} : vector<2x2x8x128xf32> to vector<1x1x8x128xf32>
    %189 = vector.shape_cast %188 : vector<1x1x8x128xf32> to vector<8x128xf32>
    %190 = arith.truncf %189 : vector<8x128xf32> to vector<8x128xbf16>
    %c3_78 = arith.constant 3 : index
    %c0_79 = arith.constant 0 : index
    %c0_80 = arith.constant 0 : index
    %191 = vector.load %arg6[%c3_78, %c0_79, %c0_80] : memref<4x128x128xbf16, #tpu.memory_space<vmem>>, vector<1x128x128xbf16>
    %192 = vector.shape_cast %191 : vector<1x128x128xbf16> to vector<128x128xbf16>
    %cst_81 = arith.constant dense<0.000000e+00> : vector<8x128xf32>
    %193 = tpu.matmul %190, %192, %cst_81 {dimension_numbers = #tpu.dot_dimension_numbers<[1], [0], [0], [1], [0, 0, 1, 1], [], []>} : vector<8x128xbf16>, vector<128x128xbf16>, vector<8x128xf32> -> vector<8x128xf32>
    %194 = arith.addf %187, %193 : vector<8x128xf32>
    %c0_82 = arith.constant 0 : index
    %c0_83 = arith.constant 0 : index
    %195 = vector.load %arg7[%c0_82, %c0_83] : memref<1x128xf32, #tpu.memory_space<vmem>>, vector<1x128xf32>
    %196 = vector.broadcast %195 : vector<1x128xf32> to vector<8x128xf32>
    %197 = arith.addf %194, %196 : vector<8x128xf32>
    %c0_84 = arith.constant 0 : index
    %c0_85 = arith.constant 0 : index
    %198 = vector.load %arg8[%c0_84, %c0_85] : memref<8x128xf32, #tpu.memory_space<vmem>>, vector<8x128xf32>
    tpu.vector_store %arg8[%c0_84, %c0_85], %197 {strides = array<i32>} : memref<8x128xf32, #tpu.memory_space<vmem>>, vector<8x128xf32>,
    return
  }
  func.func @transform_0(%arg0: i32) -> (i32, i32, i32, i32) {
    %c0_i32 = arith.constant 0 : i32
    %c0_i32_0 = arith.constant 0 : i32
    %c0_i32_1 = arith.constant 0 : i32
    %c0_i32_2 = arith.constant 0 : i32
    return %c0_i32, %c0_i32_0, %arg0, %c0_i32_1 : i32, i32, i32, i32
  }
  func.func @transform_1(%arg0: i32) -> (i32, i32) {
    %c0_i32 = arith.constant 0 : i32
    %c0_i32_0 = arith.constant 0 : i32
    %c0_i32_1 = arith.constant 0 : i32
    return %c0_i32, %c0_i32_0 : i32, i32
  }
  func.func @transform_2(%arg0: i32) -> (i32, i32) {
    %c0_i32 = arith.constant 0 : i32
    %c0_i32_0 = arith.constant 0 : i32
    %c0_i32_1 = arith.constant 0 : i32
    return %c0_i32, %c0_i32_0 : i32, i32
  }
  func.func @transform_3(%arg0: i32) -> (i32, i32, i32) {
    %c0_i32 = arith.constant 0 : i32
    %c0_i32_0 = arith.constant 0 : i32
    %c0_i32_1 = arith.constant 0 : i32
    %c0_i32_2 = arith.constant 0 : i32
    return %c0_i32, %c0_i32_0, %c0_i32_1 : i32, i32, i32
  }
  func.func @transform_4(%arg0: i32) -> (i32, i32) {
    %c0_i32 = arith.constant 0 : i32
    %c0_i32_0 = arith.constant 0 : i32
    %c0_i32_1 = arith.constant 0 : i32
    return %c0_i32, %c0_i32_0 : i32, i32
  }
  func.func @transform_5(%arg0: i32) -> (i32, i32, i32) {
    %c0_i32 = arith.constant 0 : i32
    %c0_i32_0 = arith.constant 0 : i32
    %c0_i32_1 = arith.constant 0 : i32
    %c0_i32_2 = arith.constant 0 : i32
    return %c0_i32, %c0_i32_0, %c0_i32_1 : i32, i32, i32
  }
  func.func @transform_6(%arg0: i32) -> (i32, i32) {
    %c0_i32 = arith.constant 0 : i32
    %c0_i32_0 = arith.constant 0 : i32
    %c0_i32_1 = arith.constant 0 : i32
    return %c0_i32, %c0_i32_0 : i32, i32
  }
  func.func @transform_7(%arg0: i32) -> (i32, i32) {
    %c0_i32 = arith.constant 0 : i32
    %c0_i32_0 = arith.constant 0 : i32
    return %arg0, %c0_i32 : i32, i32
  }
}

module attributes {stable_mosaic.version = 11 : i64} {
  func.func @_encoder_kernel(%arg0: i32, %arg1: memref<7x7x8x128xf32, #tpu.memory_space<vmem>>, %arg2: memref<128x128xbf16, #tpu.memory_space<vmem>>, %arg3: memref<1x128xf32, #tpu.memory_space<vmem>>, %arg4: memref<16x128x128xbf16, #tpu.memory_space<vmem>>, %arg5: memref<1x128xf32, #tpu.memory_space<vmem>>, %arg6: memref<4x128x128xbf16, #tpu.memory_space<vmem>>, %arg7: memref<1x128xf32, #tpu.memory_space<vmem>>, %arg8: memref<8x128xf32, #tpu.memory_space<vmem>>) attributes {dimension_semantics = [#tpu.dimension_semantics<parallel>], iteration_bounds = array<i64: 1>, scalar_prefetch = 0 : i64, scratch_operands = 0 : i64, tpu.core_type = #tpu.core_type<tc>, window_params = [{transform_indices = @transform_0, window_bounds = array<i64: 7, 7, 8, 128>}, {pipeline_mode = #tpu.pipeline_mode<synchronous>, transform_indices = @transform_1, window_bounds = array<i64: 128, 128>}, {pipeline_mode = #tpu.pipeline_mode<synchronous>, transform_indices = @transform_2, window_bounds = array<i64: 1, 128>}, {pipeline_mode = #tpu.pipeline_mode<synchronous>, transform_indices = @transform_3, window_bounds = array<i64: 16, 128, 128>}, {pipeline_mode = #tpu.pipeline_mode<synchronous>, transform_indices = @transform_4, window_bounds = array<i64: 1, 128>}, {pipeline_mode = #tpu.pipeline_mode<synchronous>, transform_indices = @transform_5, window_bounds = array<i64: 4, 128, 128>}, {pipeline_mode = #tpu.pipeline_mode<synchronous>, transform_indices = @transform_6, window_bounds = array<i64: 1, 128>}, {transform_indices = @transform_7, window_bounds = array<i64: 8, 128>}]} {
    %c0 = arith.constant 0 : index
    %c0_0 = arith.constant 0 : index
    %c0_1 = arith.constant 0 : index
    %c0_2 = arith.constant 0 : index
    %0 = vector.load %arg1[%c0, %c0_0, %c0_1, %c0_2] : memref<7x7x8x128xf32, #tpu.memory_space<vmem>>, vector<7x7x8x128xf32>
    %1 = vector.shape_cast %0 : vector<7x7x8x128xf32> to vector<392x128xf32>
    %2 = arith.truncf %1 : vector<392x128xf32> to vector<392x128xbf16>
    %c0_3 = arith.constant 0 : index
    %c0_4 = arith.constant 0 : index
    %3 = vector.load %arg2[%c0_3, %c0_4] : memref<128x128xbf16, #tpu.memory_space<vmem>>, vector<128x128xbf16>
    %cst = arith.constant dense<0.000000e+00> : vector<392x128xf32>
    %4 = tpu.matmul %2, %3, %cst {dimension_numbers = #tpu.dot_dimension_numbers<[1], [0], [0], [1], [0, 0, 1, 1], [], []>} : vector<392x128xbf16>, vector<128x128xbf16>, vector<392x128xf32> -> vector<392x128xf32>
    %c0_5 = arith.constant 0 : index
    %c0_6 = arith.constant 0 : index
    %5 = vector.load %arg3[%c0_5, %c0_6] : memref<1x128xf32, #tpu.memory_space<vmem>>, vector<1x128xf32>
    %6 = vector.broadcast %5 : vector<1x128xf32> to vector<392x128xf32>
    %7 = arith.addf %4, %6 : vector<392x128xf32>
    %cst_7 = arith.constant 0.000000e+00 : f32
    %8 = vector.broadcast %cst_7 : f32 to vector<392x128xf32>
    %9 = arith.cmpf ogt, %7, %8 : vector<392x128xf32>
    %cst_8 = arith.constant 0.000000e+00 : f32
    %10 = vector.broadcast %cst_8 : f32 to vector<392x128xf32>
    %11 = arith.minimumf %7, %10 : vector<392x128xf32>
    %12 = math.exp %11 : vector<392x128xf32>
    %cst_9 = arith.constant 1.000000e+00 : f32
    %13 = vector.broadcast %cst_9 : f32 to vector<392x128xf32>
    %14 = arith.subf %12, %13 : vector<392x128xf32>
    %15 = arith.select %9, %7, %14 : vector<392x128xi1>, vector<392x128xf32>
    %16 = vector.shape_cast %15 : vector<392x128xf32> to vector<7x7x8x128xf32>
    %17 = vector.extract_strided_slice %16 {offsets = [0, 0, 0, 0], sizes = [1, 7, 8, 128], strides = [1, 1, 1, 1]} : vector<7x7x8x128xf32> to vector<1x7x8x128xf32>
    %18 = vector.extract_strided_slice %16 {offsets = [2, 0, 0, 0], sizes = [1, 7, 8, 128], strides = [1, 1, 1, 1]} : vector<7x7x8x128xf32> to vector<1x7x8x128xf32>
    %19 = vector.extract_strided_slice %16 {offsets = [4, 0, 0, 0], sizes = [1, 7, 8, 128], strides = [1, 1, 1, 1]} : vector<7x7x8x128xf32> to vector<1x7x8x128xf32>
    %20 = tpu.concatenate %17, %18, %19 in 0 : vector<1x7x8x128xf32>, vector<1x7x8x128xf32>, vector<1x7x8x128xf32> -> vector<3x7x8x128xf32>
    %21 = vector.extract_strided_slice %16 {offsets = [1, 0, 0, 0], sizes = [1, 7, 8, 128], strides = [1, 1, 1, 1]} : vector<7x7x8x128xf32> to vector<1x7x8x128xf32>
    %22 = vector.extract_strided_slice %16 {offsets = [3, 0, 0, 0], sizes = [1, 7, 8, 128], strides = [1, 1, 1, 1]} : vector<7x7x8x128xf32> to vector<1x7x8x128xf32>
    %23 = vector.extract_strided_slice %16 {offsets = [5, 0, 0, 0], sizes = [1, 7, 8, 128], strides = [1, 1, 1, 1]} : vector<7x7x8x128xf32> to vector<1x7x8x128xf32>
    %24 = tpu.concatenate %21, %22, %23 in 0 : vector<1x7x8x128xf32>, vector<1x7x8x128xf32>, vector<1x7x8x128xf32> -> vector<3x7x8x128xf32>
    %25 = vector.extract_strided_slice %20 {offsets = [0, 0, 0, 0], sizes = [3, 1, 8, 128], strides = [1, 1, 1, 1]} : vector<3x7x8x128xf32> to vector<3x1x8x128xf32>
    %26 = vector.extract_strided_slice %20 {offsets = [0, 2, 0, 0], sizes = [3, 1, 8, 128], strides = [1, 1, 1, 1]} : vector<3x7x8x128xf32> to vector<3x1x8x128xf32>
    %27 = vector.extract_strided_slice %20 {offsets = [0, 4, 0, 0], sizes = [3, 1, 8, 128], strides = [1, 1, 1, 1]} : vector<3x7x8x128xf32> to vector<3x1x8x128xf32>
    %28 = tpu.concatenate %25, %26, %27 in 1 : vector<3x1x8x128xf32>, vector<3x1x8x128xf32>, vector<3x1x8x128xf32> -> vector<3x3x8x128xf32>
    %29 = vector.extract_strided_slice %20 {offsets = [0, 1, 0, 0], sizes = [3, 1, 8, 128], strides = [1, 1, 1, 1]} : vector<3x7x8x128xf32> to vector<3x1x8x128xf32>
    %30 = vector.extract_strided_slice %20 {offsets = [0, 3, 0, 0], sizes = [3, 1, 8, 128], strides = [1, 1, 1, 1]} : vector<3x7x8x128xf32> to vector<3x1x8x128xf32>
    %31 = vector.extract_strided_slice %20 {offsets = [0, 5, 0, 0], sizes = [3, 1, 8, 128], strides = [1, 1, 1, 1]} : vector<3x7x8x128xf32> to vector<3x1x8x128xf32>
    %32 = tpu.concatenate %29, %30, %31 in 1 : vector<3x1x8x128xf32>, vector<3x1x8x128xf32>, vector<3x1x8x128xf32> -> vector<3x3x8x128xf32>
    %33 = vector.extract_strided_slice %24 {offsets = [0, 0, 0, 0], sizes = [3, 1, 8, 128], strides = [1, 1, 1, 1]} : vector<3x7x8x128xf32> to vector<3x1x8x128xf32>
    %34 = vector.extract_strided_slice %24 {offsets = [0, 2, 0, 0], sizes = [3, 1, 8, 128], strides = [1, 1, 1, 1]} : vector<3x7x8x128xf32> to vector<3x1x8x128xf32>
    %35 = vector.extract_strided_slice %24 {offsets = [0, 4, 0, 0], sizes = [3, 1, 8, 128], strides = [1, 1, 1, 1]} : vector<3x7x8x128xf32> to vector<3x1x8x128xf32>
    %36 = tpu.concatenate %33, %34, %35 in 1 : vector<3x1x8x128xf32>, vector<3x1x8x128xf32>, vector<3x1x8x128xf32> -> vector<3x3x8x128xf32>
    %37 = vector.extract_strided_slice %24 {offsets = [0, 1, 0, 0], sizes = [3, 1, 8, 128], strides = [1, 1, 1, 1]} : vector<3x7x8x128xf32> to vector<3x1x8x128xf32>
    %38 = vector.extract_strided_slice %24 {offsets = [0, 3, 0, 0], sizes = [3, 1, 8, 128], strides = [1, 1, 1, 1]} : vector<3x7x8x128xf32> to vector<3x1x8x128xf32>
    %39 = vector.extract_strided_slice %24 {offsets = [0, 5, 0, 0], sizes = [3, 1, 8, 128], strides = [1, 1, 1, 1]} : vector<3x7x8x128xf32> to vector<3x1x8x128xf32>
    %40 = tpu.concatenate %37, %38, %39 in 1 : vector<3x1x8x128xf32>, vector<3x1x8x128xf32>, vector<3x1x8x128xf32> -> vector<3x3x8x128xf32>
    %cst_10 = arith.constant 0.000000e+00 : f32
    %41 = vector.broadcast %cst_10 : f32 to vector<32x128xf32>
    %42 = vector.extract_strided_slice %28 {offsets = [0, 0, 0, 0], sizes = [2, 2, 8, 128], strides = [1, 1, 1, 1]} : vector<3x3x8x128xf32> to vector<2x2x8x128xf32>
    %43 = vector.shape_cast %42 : vector<2x2x8x128xf32> to vector<32x128xf32>
    %44 = arith.truncf %43 : vector<32x128xf32> to vector<32x128xbf16>
    %c0_11 = arith.constant 0 : index
    %c0_12 = arith.constant 0 : index
    %c0_13 = arith.constant 0 : index
    %45 = vector.load %arg4[%c0_11, %c0_12, %c0_13] : memref<16x128x128xbf16, #tpu.memory_space<vmem>>, vector<1x128x128xbf16>
    %46 = vector.shape_cast %45 : vector<1x128x128xbf16> to vector<128x128xbf16>
    %cst_14 = arith.constant dense<0.000000e+00> : vector<32x128xf32>
    %47 = tpu.matmul %44, %46, %cst_14 {dimension_numbers = #tpu.dot_dimension_numbers<[1], [0], [0], [1], [0, 0, 1, 1], [], []>} : vector<32x128xbf16>, vector<128x128xbf16>, vector<32x128xf32> -> vector<32x128xf32>
    %48 = arith.addf %41, %47 : vector<32x128xf32>
    %49 = vector.extract_strided_slice %32 {offsets = [0, 0, 0, 0], sizes = [2, 2, 8, 128], strides = [1, 1, 1, 1]} : vector<3x3x8x128xf32> to vector<2x2x8x128xf32>
    %50 = vector.shape_cast %49 : vector<2x2x8x128xf32> to vector<32x128xf32>
    %51 = arith.truncf %50 : vector<32x128xf32> to vector<32x128xbf16>
    %c1 = arith.constant 1 : index
    %c0_15 = arith.constant 0 : index
    %c0_16 = arith.constant 0 : index
    %52 = vector.load %arg4[%c1, %c0_15, %c0_16] : memref<16x128x128xbf16, #tpu.memory_space<vmem>>, vector<1x128x128xbf16>
    %53 = vector.shape_cast %52 : vector<1x128x128xbf16> to vector<128x128xbf16>
    %cst_17 = arith.constant dense<0.000000e+00> : vector<32x128xf32>
    %54 = tpu.matmul %51, %53, %cst_17 {dimension_numbers = #tpu.dot_dimension_numbers<[1], [0], [0], [1], [0, 0, 1, 1], [], []>} : vector<32x128xbf16>, vector<128x128xbf16>, vector<32x128xf32> -> vector<32x128xf32>
    %55 = arith.addf %48, %54 : vector<32x128xf32>
    %56 = vector.extract_strided_slice %28 {offsets = [0, 1, 0, 0], sizes = [2, 2, 8, 128], strides = [1, 1, 1, 1]} : vector<3x3x8x128xf32> to vector<2x2x8x128xf32>
    %57 = vector.shape_cast %56 : vector<2x2x8x128xf32> to vector<32x128xf32>
    %58 = arith.truncf %57 : vector<32x128xf32> to vector<32x128xbf16>
    %c2 = arith.constant 2 : index
    %c0_18 = arith.constant 0 : index
    %c0_19 = arith.constant 0 : index
    %59 = vector.load %arg4[%c2, %c0_18, %c0_19] : memref<16x128x128xbf16, #tpu.memory_space<vmem>>, vector<1x128x128xbf16>
    %60 = vector.shape_cast %59 : vector<1x128x128xbf16> to vector<128x128xbf16>
    %cst_20 = arith.constant dense<0.000000e+00> : vector<32x128xf32>
    %61 = tpu.matmul %58, %60, %cst_20 {dimension_numbers = #tpu.dot_dimension_numbers<[1], [0], [0], [1], [0, 0, 1, 1], [], []>} : vector<32x128xbf16>, vector<128x128xbf16>, vector<32x128xf32> -> vector<32x128xf32>
    %62 = arith.addf %55, %61 : vector<32x128xf32>
    %63 = vector.extract_strided_slice %32 {offsets = [0, 1, 0, 0], sizes = [2, 2, 8, 128], strides = [1, 1, 1, 1]} : vector<3x3x8x128xf32> to vector<2x2x8x128xf32>
    %64 = vector.shape_cast %63 : vector<2x2x8x128xf32> to vector<32x128xf32>
    %65 = arith.truncf %64 : vector<32x128xf32> to vector<32x128xbf16>
    %c3 = arith.constant 3 : index
    %c0_21 = arith.constant 0 : index
    %c0_22 = arith.constant 0 : index
    %66 = vector.load %arg4[%c3, %c0_21, %c0_22] : memref<16x128x128xbf16, #tpu.memory_space<vmem>>, vector<1x128x128xbf16>
    %67 = vector.shape_cast %66 : vector<1x128x128xbf16> to vector<128x128xbf16>
    %cst_23 = arith.constant dense<0.000000e+00> : vector<32x128xf32>
    %68 = tpu.matmul %65, %67, %cst_23 {dimension_numbers = #tpu.dot_dimension_numbers<[1], [0], [0], [1], [0, 0, 1, 1], [], []>} : vector<32x128xbf16>, vector<128x128xbf16>, vector<32x128xf32> -> vector<32x128xf32>
    %69 = arith.addf %62, %68 : vector<32x128xf32>
    %70 = vector.extract_strided_slice %36 {offsets = [0, 0, 0, 0], sizes = [2, 2, 8, 128], strides = [1, 1, 1, 1]} : vector<3x3x8x128xf32> to vector<2x2x8x128xf32>
    %71 = vector.shape_cast %70 : vector<2x2x8x128xf32> to vector<32x128xf32>
    %72 = arith.truncf %71 : vector<32x128xf32> to vector<32x128xbf16>
    %c4 = arith.constant 4 : index
    %c0_24 = arith.constant 0 : index
    %c0_25 = arith.constant 0 : index
    %73 = vector.load %arg4[%c4, %c0_24, %c0_25] : memref<16x128x128xbf16, #tpu.memory_space<vmem>>, vector<1x128x128xbf16>
    %74 = vector.shape_cast %73 : vector<1x128x128xbf16> to vector<128x128xbf16>
    %cst_26 = arith.constant dense<0.000000e+00> : vector<32x128xf32>
    %75 = tpu.matmul %72, %74, %cst_26 {dimension_numbers = #tpu.dot_dimension_numbers<[1], [0], [0], [1], [0, 0, 1, 1], [], []>} : vector<32x128xbf16>, vector<128x128xbf16>, vector<32x128xf32> -> vector<32x128xf32>
    %76 = arith.addf %69, %75 : vector<32x128xf32>
    %77 = vector.extract_strided_slice %40 {offsets = [0, 0, 0, 0], sizes = [2, 2, 8, 128], strides = [1, 1, 1, 1]} : vector<3x3x8x128xf32> to vector<2x2x8x128xf32>
    %78 = vector.shape_cast %77 : vector<2x2x8x128xf32> to vector<32x128xf32>
    %79 = arith.truncf %78 : vector<32x128xf32> to vector<32x128xbf16>
    %c5 = arith.constant 5 : index
    %c0_27 = arith.constant 0 : index
    %c0_28 = arith.constant 0 : index
    %80 = vector.load %arg4[%c5, %c0_27, %c0_28] : memref<16x128x128xbf16, #tpu.memory_space<vmem>>, vector<1x128x128xbf16>
    %81 = vector.shape_cast %80 : vector<1x128x128xbf16> to vector<128x128xbf16>
    %cst_29 = arith.constant dense<0.000000e+00> : vector<32x128xf32>
    %82 = tpu.matmul %79, %81, %cst_29 {dimension_numbers = #tpu.dot_dimension_numbers<[1], [0], [0], [1], [0, 0, 1, 1], [], []>} : vector<32x128xbf16>, vector<128x128xbf16>, vector<32x128xf32> -> vector<32x128xf32>
    %83 = arith.addf %76, %82 : vector<32x128xf32>
    %84 = vector.extract_strided_slice %36 {offsets = [0, 1, 0, 0], sizes = [2, 2, 8, 128], strides = [1, 1, 1, 1]} : vector<3x3x8x128xf32> to vector<2x2x8x128xf32>
    %85 = vector.shape_cast %84 : vector<2x2x8x128xf32> to vector<32x128xf32>
    %86 = arith.truncf %85 : vector<32x128xf32> to vector<32x128xbf16>
    %c6 = arith.constant 6 : index
    %c0_30 = arith.constant 0 : index
    %c0_31 = arith.constant 0 : index
    %87 = vector.load %arg4[%c6, %c0_30, %c0_31] : memref<16x128x128xbf16, #tpu.memory_space<vmem>>, vector<1x128x128xbf16>
    %88 = vector.shape_cast %87 : vector<1x128x128xbf16> to vector<128x128xbf16>
    %cst_32 = arith.constant dense<0.000000e+00> : vector<32x128xf32>
    %89 = tpu.matmul %86, %88, %cst_32 {dimension_numbers = #tpu.dot_dimension_numbers<[1], [0], [0], [1], [0, 0, 1, 1], [], []>} : vector<32x128xbf16>, vector<128x128xbf16>, vector<32x128xf32> -> vector<32x128xf32>
    %90 = arith.addf %83, %89 : vector<32x128xf32>
    %91 = vector.extract_strided_slice %40 {offsets = [0, 1, 0, 0], sizes = [2, 2, 8, 128], strides = [1, 1, 1, 1]} : vector<3x3x8x128xf32> to vector<2x2x8x128xf32>
    %92 = vector.shape_cast %91 : vector<2x2x8x128xf32> to vector<32x128xf32>
    %93 = arith.truncf %92 : vector<32x128xf32> to vector<32x128xbf16>
    %c7 = arith.constant 7 : index
    %c0_33 = arith.constant 0 : index
    %c0_34 = arith.constant 0 : index
    %94 = vector.load %arg4[%c7, %c0_33, %c0_34] : memref<16x128x128xbf16, #tpu.memory_space<vmem>>, vector<1x128x128xbf16>
    %95 = vector.shape_cast %94 : vector<1x128x128xbf16> to vector<128x128xbf16>
    %cst_35 = arith.constant dense<0.000000e+00> : vector<32x128xf32>
    %96 = tpu.matmul %93, %95, %cst_35 {dimension_numbers = #tpu.dot_dimension_numbers<[1], [0], [0], [1], [0, 0, 1, 1], [], []>} : vector<32x128xbf16>, vector<128x128xbf16>, vector<32x128xf32> -> vector<32x128xf32>
    %97 = arith.addf %90, %96 : vector<32x128xf32>
    %98 = vector.extract_strided_slice %28 {offsets = [1, 0, 0, 0], sizes = [2, 2, 8, 128], strides = [1, 1, 1, 1]} : vector<3x3x8x128xf32> to vector<2x2x8x128xf32>
    %99 = vector.shape_cast %98 : vector<2x2x8x128xf32> to vector<32x128xf32>
    %100 = arith.truncf %99 : vector<32x128xf32> to vector<32x128xbf16>
    %c8 = arith.constant 8 : index
    %c0_36 = arith.constant 0 : index
    %c0_37 = arith.constant 0 : index
    %101 = vector.load %arg4[%c8, %c0_36, %c0_37] : memref<16x128x128xbf16, #tpu.memory_space<vmem>>, vector<1x128x128xbf16>
    %102 = vector.shape_cast %101 : vector<1x128x128xbf16> to vector<128x128xbf16>
    %cst_38 = arith.constant dense<0.000000e+00> : vector<32x128xf32>
    %103 = tpu.matmul %100, %102, %cst_38 {dimension_numbers = #tpu.dot_dimension_numbers<[1], [0], [0], [1], [0, 0, 1, 1], [], []>} : vector<32x128xbf16>, vector<128x128xbf16>, vector<32x128xf32> -> vector<32x128xf32>
    %104 = arith.addf %97, %103 : vector<32x128xf32>
    %105 = vector.extract_strided_slice %32 {offsets = [1, 0, 0, 0], sizes = [2, 2, 8, 128], strides = [1, 1, 1, 1]} : vector<3x3x8x128xf32> to vector<2x2x8x128xf32>
    %106 = vector.shape_cast %105 : vector<2x2x8x128xf32> to vector<32x128xf32>
    %107 = arith.truncf %106 : vector<32x128xf32> to vector<32x128xbf16>
    %c9 = arith.constant 9 : index
    %c0_39 = arith.constant 0 : index
    %c0_40 = arith.constant 0 : index
    %108 = vector.load %arg4[%c9, %c0_39, %c0_40] : memref<16x128x128xbf16, #tpu.memory_space<vmem>>, vector<1x128x128xbf16>
    %109 = vector.shape_cast %108 : vector<1x128x128xbf16> to vector<128x128xbf16>
    %cst_41 = arith.constant dense<0.000000e+00> : vector<32x128xf32>
    %110 = tpu.matmul %107, %109, %cst_41 {dimension_numbers = #tpu.dot_dimension_numbers<[1], [0], [0], [1], [0, 0, 1, 1], [], []>} : vector<32x128xbf16>, vector<128x128xbf16>, vector<32x128xf32> -> vector<32x128xf32>
    %111 = arith.addf %104, %110 : vector<32x128xf32>
    %112 = vector.extract_strided_slice %28 {offsets = [1, 1, 0, 0], sizes = [2, 2, 8, 128], strides = [1, 1, 1, 1]} : vector<3x3x8x128xf32> to vector<2x2x8x128xf32>
    %113 = vector.shape_cast %112 : vector<2x2x8x128xf32> to vector<32x128xf32>
    %114 = arith.truncf %113 : vector<32x128xf32> to vector<32x128xbf16>
    %c10 = arith.constant 10 : index
    %c0_42 = arith.constant 0 : index
    %c0_43 = arith.constant 0 : index
    %115 = vector.load %arg4[%c10, %c0_42, %c0_43] : memref<16x128x128xbf16, #tpu.memory_space<vmem>>, vector<1x128x128xbf16>
    %116 = vector.shape_cast %115 : vector<1x128x128xbf16> to vector<128x128xbf16>
    %cst_44 = arith.constant dense<0.000000e+00> : vector<32x128xf32>
    %117 = tpu.matmul %114, %116, %cst_44 {dimension_numbers = #tpu.dot_dimension_numbers<[1], [0], [0], [1], [0, 0, 1, 1], [], []>} : vector<32x128xbf16>, vector<128x128xbf16>, vector<32x128xf32> -> vector<32x128xf32>
    %118 = arith.addf %111, %117 : vector<32x128xf32>
    %119 = vector.extract_strided_slice %32 {offsets = [1, 1, 0, 0], sizes = [2, 2, 8, 128], strides = [1, 1, 1, 1]} : vector<3x3x8x128xf32> to vector<2x2x8x128xf32>
    %120 = vector.shape_cast %119 : vector<2x2x8x128xf32> to vector<32x128xf32>
    %121 = arith.truncf %120 : vector<32x128xf32> to vector<32x128xbf16>
    %c11 = arith.constant 11 : index
    %c0_45 = arith.constant 0 : index
    %c0_46 = arith.constant 0 : index
    %122 = vector.load %arg4[%c11, %c0_45, %c0_46] : memref<16x128x128xbf16, #tpu.memory_space<vmem>>, vector<1x128x128xbf16>
    %123 = vector.shape_cast %122 : vector<1x128x128xbf16> to vector<128x128xbf16>
    %cst_47 = arith.constant dense<0.000000e+00> : vector<32x128xf32>
    %124 = tpu.matmul %121, %123, %cst_47 {dimension_numbers = #tpu.dot_dimension_numbers<[1], [0], [0], [1], [0, 0, 1, 1], [], []>} : vector<32x128xbf16>, vector<128x128xbf16>, vector<32x128xf32> -> vector<32x128xf32>
    %125 = arith.addf %118, %124 : vector<32x128xf32>
    %126 = vector.extract_strided_slice %36 {offsets = [1, 0, 0, 0], sizes = [2, 2, 8, 128], strides = [1, 1, 1, 1]} : vector<3x3x8x128xf32> to vector<2x2x8x128xf32>
    %127 = vector.shape_cast %126 : vector<2x2x8x128xf32> to vector<32x128xf32>
    %128 = arith.truncf %127 : vector<32x128xf32> to vector<32x128xbf16>
    %c12 = arith.constant 12 : index
    %c0_48 = arith.constant 0 : index
    %c0_49 = arith.constant 0 : index
    %129 = vector.load %arg4[%c12, %c0_48, %c0_49] : memref<16x128x128xbf16, #tpu.memory_space<vmem>>, vector<1x128x128xbf16>
    %130 = vector.shape_cast %129 : vector<1x128x128xbf16> to vector<128x128xbf16>
    %cst_50 = arith.constant dense<0.000000e+00> : vector<32x128xf32>
    %131 = tpu.matmul %128, %130, %cst_50 {dimension_numbers = #tpu.dot_dimension_numbers<[1], [0], [0], [1], [0, 0, 1, 1], [], []>} : vector<32x128xbf16>, vector<128x128xbf16>, vector<32x128xf32> -> vector<32x128xf32>
    %132 = arith.addf %125, %131 : vector<32x128xf32>
    %133 = vector.extract_strided_slice %40 {offsets = [1, 0, 0, 0], sizes = [2, 2, 8, 128], strides = [1, 1, 1, 1]} : vector<3x3x8x128xf32> to vector<2x2x8x128xf32>
    %134 = vector.shape_cast %133 : vector<2x2x8x128xf32> to vector<32x128xf32>
    %135 = arith.truncf %134 : vector<32x128xf32> to vector<32x128xbf16>
    %c13 = arith.constant 13 : index
    %c0_51 = arith.constant 0 : index
    %c0_52 = arith.constant 0 : index
    %136 = vector.load %arg4[%c13, %c0_51, %c0_52] : memref<16x128x128xbf16, #tpu.memory_space<vmem>>, vector<1x128x128xbf16>
    %137 = vector.shape_cast %136 : vector<1x128x128xbf16> to vector<128x128xbf16>
    %cst_53 = arith.constant dense<0.000000e+00> : vector<32x128xf32>
    %138 = tpu.matmul %135, %137, %cst_53 {dimension_numbers = #tpu.dot_dimension_numbers<[1], [0], [0], [1], [0, 0, 1, 1], [], []>} : vector<32x128xbf16>, vector<128x128xbf16>, vector<32x128xf32> -> vector<32x128xf32>
    %139 = arith.addf %132, %138 : vector<32x128xf32>
    %140 = vector.extract_strided_slice %36 {offsets = [1, 1, 0, 0], sizes = [2, 2, 8, 128], strides = [1, 1, 1, 1]} : vector<3x3x8x128xf32> to vector<2x2x8x128xf32>
    %141 = vector.shape_cast %140 : vector<2x2x8x128xf32> to vector<32x128xf32>
    %142 = arith.truncf %141 : vector<32x128xf32> to vector<32x128xbf16>
    %c14 = arith.constant 14 : index
    %c0_54 = arith.constant 0 : index
    %c0_55 = arith.constant 0 : index
    %143 = vector.load %arg4[%c14, %c0_54, %c0_55] : memref<16x128x128xbf16, #tpu.memory_space<vmem>>, vector<1x128x128xbf16>
    %144 = vector.shape_cast %143 : vector<1x128x128xbf16> to vector<128x128xbf16>
    %cst_56 = arith.constant dense<0.000000e+00> : vector<32x128xf32>
    %145 = tpu.matmul %142, %144, %cst_56 {dimension_numbers = #tpu.dot_dimension_numbers<[1], [0], [0], [1], [0, 0, 1, 1], [], []>} : vector<32x128xbf16>, vector<128x128xbf16>, vector<32x128xf32> -> vector<32x128xf32>
    %146 = arith.addf %139, %145 : vector<32x128xf32>
    %147 = vector.extract_strided_slice %40 {offsets = [1, 1, 0, 0], sizes = [2, 2, 8, 128], strides = [1, 1, 1, 1]} : vector<3x3x8x128xf32> to vector<2x2x8x128xf32>
    %148 = vector.shape_cast %147 : vector<2x2x8x128xf32> to vector<32x128xf32>
    %149 = arith.truncf %148 : vector<32x128xf32> to vector<32x128xbf16>
    %c15 = arith.constant 15 : index
    %c0_57 = arith.constant 0 : index
    %c0_58 = arith.constant 0 : index
    %150 = vector.load %arg4[%c15, %c0_57, %c0_58] : memref<16x128x128xbf16, #tpu.memory_space<vmem>>, vector<1x128x128xbf16>
    %151 = vector.shape_cast %150 : vector<1x128x128xbf16> to vector<128x128xbf16>
    %cst_59 = arith.constant dense<0.000000e+00> : vector<32x128xf32>
    %152 = tpu.matmul %149, %151, %cst_59 {dimension_numbers = #tpu.dot_dimension_numbers<[1], [0], [0], [1], [0, 0, 1, 1], [], []>} : vector<32x128xbf16>, vector<128x128xbf16>, vector<32x128xf32> -> vector<32x128xf32>
    %153 = arith.addf %146, %152 : vector<32x128xf32>
    %c0_60 = arith.constant 0 : index
    %c0_61 = arith.constant 0 : index
    %154 = vector.load %arg5[%c0_60, %c0_61] : memref<1x128xf32, #tpu.memory_space<vmem>>, vector<1x128xf32>
    %155 = vector.broadcast %154 : vector<1x128xf32> to vector<32x128xf32>
    %156 = arith.addf %153, %155 : vector<32x128xf32>
    %cst_62 = arith.constant 0.000000e+00 : f32
    %157 = vector.broadcast %cst_62 : f32 to vector<32x128xf32>
    %158 = arith.cmpf ogt, %156, %157 : vector<32x128xf32>
    %cst_63 = arith.constant 0.000000e+00 : f32
    %159 = vector.broadcast %cst_63 : f32 to vector<32x128xf32>
    %160 = arith.minimumf %156, %159 : vector<32x128xf32>
    %161 = math.exp %160 : vector<32x128xf32>
    %cst_64 = arith.constant 1.000000e+00 : f32
    %162 = vector.broadcast %cst_64 : f32 to vector<32x128xf32>
    %163 = arith.subf %161, %162 : vector<32x128xf32>
    %164 = arith.select %158, %156, %163 : vector<32x128xi1>, vector<32x128xf32>
    %165 = vector.shape_cast %164 : vector<32x128xf32> to vector<2x2x8x128xf32>
    %cst_65 = arith.constant 0.000000e+00 : f32
    %166 = vector.broadcast %cst_65 : f32 to vector<8x128xf32>
    %167 = vector.extract_strided_slice %165 {offsets = [0, 0, 0, 0], sizes = [1, 1, 8, 128], strides = [1, 1, 1, 1]} : vector<2x2x8x128xf32> to vector<1x1x8x128xf32>
    %168 = vector.shape_cast %167 : vector<1x1x8x128xf32> to vector<8x128xf32>
    %169 = arith.truncf %168 : vector<8x128xf32> to vector<8x128xbf16>
    %c0_66 = arith.constant 0 : index
    %c0_67 = arith.constant 0 : index
    %c0_68 = arith.constant 0 : index
    %170 = vector.load %arg6[%c0_66, %c0_67, %c0_68] : memref<4x128x128xbf16, #tpu.memory_space<vmem>>, vector<1x128x128xbf16>
    %171 = vector.shape_cast %170 : vector<1x128x128xbf16> to vector<128x128xbf16>
    %cst_69 = arith.constant dense<0.000000e+00> : vector<8x128xf32>
    %172 = tpu.matmul %169, %171, %cst_69 {dimension_numbers = #tpu.dot_dimension_numbers<[1], [0], [0], [1], [0, 0, 1, 1], [], []>} : vector<8x128xbf16>, vector<128x128xbf16>, vector<8x128xf32> -> vector<8x128xf32>
    %173 = arith.addf %166, %172 : vector<8x128xf32>
    %174 = vector.extract_strided_slice %165 {offsets = [0, 1, 0, 0], sizes = [1, 1, 8, 128], strides = [1, 1, 1, 1]} : vector<2x2x8x128xf32> to vector<1x1x8x128xf32>
    %175 = vector.shape_cast %174 : vector<1x1x8x128xf32> to vector<8x128xf32>
    %176 = arith.truncf %175 : vector<8x128xf32> to vector<8x128xbf16>
    %c1_70 = arith.constant 1 : index
    %c0_71 = arith.constant 0 : index
    %c0_72 = arith.constant 0 : index
    %177 = vector.load %arg6[%c1_70, %c0_71, %c0_72] : memref<4x128x128xbf16, #tpu.memory_space<vmem>>, vector<1x128x128xbf16>
    %178 = vector.shape_cast %177 : vector<1x128x128xbf16> to vector<128x128xbf16>
    %cst_73 = arith.constant dense<0.000000e+00> : vector<8x128xf32>
    %179 = tpu.matmul %176, %178, %cst_73 {dimension_numbers = #tpu.dot_dimension_numbers<[1], [0], [0], [1], [0, 0, 1, 1], [], []>} : vector<8x128xbf16>, vector<128x128xbf16>, vector<8x128xf32> -> vector<8x128xf32>
    %180 = arith.addf %173, %179 : vector<8x128xf32>
    %181 = vector.extract_strided_slice %165 {offsets = [1, 0, 0, 0], sizes = [1, 1, 8, 128], strides = [1, 1, 1, 1]} : vector<2x2x8x128xf32> to vector<1x1x8x128xf32>
    %182 = vector.shape_cast %181 : vector<1x1x8x128xf32> to vector<8x128xf32>
    %183 = arith.truncf %182 : vector<8x128xf32> to vector<8x128xbf16>
    %c2_74 = arith.constant 2 : index
    %c0_75 = arith.constant 0 : index
    %c0_76 = arith.constant 0 : index
    %184 = vector.load %arg6[%c2_74, %c0_75, %c0_76] : memref<4x128x128xbf16, #tpu.memory_space<vmem>>, vector<1x128x128xbf16>
    %185 = vector.shape_cast %184 : vector<1x128x128xbf16> to vector<128x128xbf16>
    %cst_77 = arith.constant dense<0.000000e+00> : vector<8x128xf32>
    %186 = tpu.matmul %183, %185, %cst_77 {dimension_numbers = #tpu.dot_dimension_numbers<[1], [0], [0], [1], [0, 0, 1, 1], [], []>} : vector<8x128xbf16>, vector<128x128xbf16>, vector<8x128xf32> -> vector<8x128xf32>
    %187 = arith.addf %180, %186 : vector<8x128xf32>
    %188 = vector.extract_strided_slice %165 {offsets = [1, 1, 0, 0], sizes = [1, 1, 8, 128], strides = [1, 1, 1, 1]} : vector<2x2x8x128xf32> to vector<1x1x8x128xf32>
    %189 = vector.shape_cast %188 : vector<1x1x8x128xf32> to vector<8x128xf32>
    %190 = arith.truncf %189 : vector<8x128xf32> to vector<8x128xbf16>
    %c3_78 = arith.constant 3 : index
    %c0_79 = arith.constant 0 : index
    %c0_80 = arith.constant 0 : index
    %191 = vector.load %arg6[%c3_78, %c0_79, %c0_80] : memref<4x128x128xbf16, #tpu.memory_space<vmem>>, vector<1x128x128xbf16>
    %192 = vector.shape_cast %191 : vector<1x128x128xbf16> to vector<128x128xbf16>
    %cst_81 = arith.constant dense<0.000000e+00> : vector<8x128xf32>
    %193 = tpu.matmul %190, %192, %cst_81 {dimension_numbers = #tpu.dot_dimension_numbers<[1], [0], [0], [1], [0, 0, 1, 1], [], []>} : vector<8x128xbf16>, vector<128x128xbf16>, vector<8x128xf32> -> vector<8x128xf32>
    %194 = arith.addf %187, %193 : vector<8x128xf32>
    %c0_82 = arith.constant 0 : index
    %c0_83 = arith.constant 0 : index
    %195 = vector.load %arg7[%c0_82, %c0_83] : memref<1x128xf32, #tpu.memory_space<vmem>>, vector<1x128xf32>
    %196 = vector.broadcast %195 : vector<1x128xf32> to vector<8x128xf32>
    %197 = arith.addf %194, %196 : vector<8x128xf32>
    %c0_84 = arith.constant 0 : index
    %c0_85 = arith.constant 0 : index
    %198 = vector.load %arg8[%c0_84, %c0_85] : memref<8x128xf32, #tpu.memory_space<vmem>>, vector<8x128xf32>
    tpu.vector_store %arg8[%c0_84, %c0_85], %197 {strides = array<i32>} : memref<8x128xf32, #tpu.memory_space<vmem>>, vector<8x128xf32>,
    return
  }
  func.func @transform_0(%arg0: i32) -> (i32, i32, i32, i32) {
    %c0_i32 = arith.constant 0 : i32
    %c0_i32_0 = arith.constant 0 : i32
    %c0_i32_1 = arith.constant 0 : i32
    %c0_i32_2 = arith.constant 0 : i32
    return %c0_i32, %c0_i32_0, %arg0, %c0_i32_1 : i32, i32, i32, i32
  }
  func.func @transform_1(%arg0: i32) -> (i32, i32) {
    %c0_i32 = arith.constant 0 : i32
    %c0_i32_0 = arith.constant 0 : i32
    %c0_i32_1 = arith.constant 0 : i32
    return %c0_i32, %c0_i32_0 : i32, i32
  }
  func.func @transform_2(%arg0: i32) -> (i32, i32) {
    %c0_i32 = arith.constant 0 : i32
    %c0_i32_0 = arith.constant 0 : i32
    %c0_i32_1 = arith.constant 0 : i32
    return %c0_i32, %c0_i32_0 : i32, i32
  }
  func.func @transform_3(%arg0: i32) -> (i32, i32, i32) {
    %c0_i32 = arith.constant 0 : i32
    %c0_i32_0 = arith.constant 0 : i32
    %c0_i32_1 = arith.constant 0 : i32
    %c0_i32_2 = arith.constant 0 : i32
    return %c0_i32, %c0_i32_0, %c0_i32_1 : i32, i32, i32
  }
  func.func @transform_4(%arg0: i32) -> (i32, i32) {
    %c0_i32 = arith.constant 0 : i32
    %c0_i32_0 = arith.constant 0 : i32
    %c0_i32_1 = arith.constant 0 : i32
    return %c0_i32, %c0_i32_0 : i32, i32
  }
  func.func @transform_5(%arg0: i32) -> (i32, i32, i32) {
    %c0_i32 = arith.constant 0 : i32
    %c0_i32_0 = arith.constant 0 : i32
    %c0_i32_1 = arith.constant 0 : i32
    %c0_i32_2 = arith.constant 0 : i32
    return %c0_i32, %c0_i32_0, %c0_i32_1 : i32, i32, i32
  }
  func.func @transform_6(%arg0: i32) -> (i32, i32) {
    %c0_i32 = arith.constant 0 : i32
    %c0_i32_0 = arith.constant 0 : i32
    %c0_i32_1 = arith.constant 0 : i32
    return %c0_i32, %c0_i32_0 : i32, i32
  }
  func.func @transform_7(%arg0: i32) -> (i32, i32) {
    %c0_i32 = arith.constant 0 : i32
    %c0_i32_0 = arith.constant 0 : i32
    return %arg0, %c0_i32 : i32, i32
  }
}

</mosaic_0001>

<llo_original>
// kernel: tpu_custom_call.1
$region0: #{tpu_custom_call.1}
  #allocation0 [shape = 'u32[]', space=smem, size = 0x4, offset = 0x4, fixed_abs, tag = 'smem constant byte address 0x4 - core index']
  #allocation1 [shape = 'u32[144,128]{1,0:T(1,128)}', space=vmem, size = 0x12000, scoped, tag = 'internal scratch']
  %s0 = inlined_call_operand.hbm [shape: f32[7,7,8,128], index: 0, kind: input, shape index: {}]
  %s1 = inlined_call_operand.hbm [shape: bf16[128,128], index: 1, kind: input, shape index: {}]
  %s2 = inlined_call_operand.vmem [shape: f32[1,128], index: 2, kind: input, shape index: {}]
  %s3 = inlined_call_operand.hbm [shape: bf16[16,128,128], index: 3, kind: input, shape index: {}]
  %s4 = inlined_call_operand.vmem [shape: f32[1,128], index: 4, kind: input, shape index: {}]
  %s5 = inlined_call_operand.hbm [shape: bf16[4,128,128], index: 5, kind: input, shape index: {}]
  %s6 = inlined_call_operand.vmem [shape: f32[1,128], index: 6, kind: input, shape index: {}]
  %s7 = inlined_call_operand.hbm [shape: f32[8,128], index: 7, kind: output, shape index: {}]
  %s8 = sld [smem:[#allocation0]]
  $region54: #{tpu_custom_call.1} parent=0
    _
  %s10 = ssub.s32 1, %s8
  %s11 = scalar_select 0, %s10, %s8
  $region1: #{tpu_custom_call.1} parent=0
    #allocation2 [shape = 'u8[200704]{0}', space=vmem, size = 0x31000, scoped, tag = 'input window, operand 0, single buffered']
    #allocation3 [shape = 's32[1]{0}', space=sflag, size = 0x4, scoped, tag = 'scoped memory for tpu_custom_call.1']
    #allocation4 [shape = 's32[1]{0}', space=sflag, size = 0x4, scoped, tag = 'scoped memory for tpu_custom_call.1']
    #allocation5 [shape = 'u8[32768]{0}', space=vmem, size = 0x8000, scoped, tag = 'input window, operand 1, single buffered']
    #allocation6 [shape = 's32[1]{0}', space=sflag, size = 0x4, scoped, tag = 'scoped memory for tpu_custom_call.1']
    #allocation7 [shape = 'u8[524288]{0}', space=vmem, size = 0x80000, scoped, tag = 'input window, operand 3, single buffered']
    #allocation8 [shape = 'u8[131072]{0}', space=vmem, size = 0x20000, scoped, tag = 'input window, operand 5, single buffered']
    #allocation9 [shape = 's32[1]{0}', space=sflag, size = 0x4, scoped, tag = 'scoped memory for tpu_custom_call.1']
    #allocation10 [shape = 'u8[4096]{0}', space=vmem, size = 0x1000, scoped, tag = 'output window, operand 0, single buffered']
    %12 = vsyncpa [#allocation3], 0
    %13 = vsyncpa [#allocation6], 0
    %14 = vsyncpa [#allocation9], 0
    %15 = vsyncpa [#allocation4], 0
    // Predicated region
    $region2: #{tpu_custom_call.1} parent=1 // pred_check
      _
    $region3: #{tpu_custom_call.1} parent=1 // pred_check_branch
      %17 = sbr.rel (0) target = $region5
    $region4: #{tpu_custom_call.1} parent=1 // pred_region
      %s19 = ssub.s32 6272, 6272
      %20 = vsyncadd [#allocation3], %s19
      %s21 = sshll.u32 [#allocation2], 4
      %s22 = int_to_ptr.vmem [resolvable:$true] %s21
      %27 = dma.hbm_to_vmem [thread:$0]  %s0, 6272, %s22, [#allocation3], 128, 128, 8
    $region5: #{tpu_custom_call.1} parent=1 // pred_fallthru
      _
    // Predicated region
    $region6: #{tpu_custom_call.1} parent=1 // pred_check
      _
    $region7: #{tpu_custom_call.1} parent=1 // pred_check_branch
      %29 = sbr.rel (0) target = $region9
    $region8: #{tpu_custom_call.1} parent=1 // pred_region
      %s31 = ssub.s32 1024, 1024
      %32 = vsyncadd [#allocation6], %s31
      %s33 = sshll.u32 [#allocation5], 4
      %s34 = int_to_ptr.vmem [resolvable:$true] %s33
      %39 = dma.hbm_to_vmem [thread:$0]  %s1, 1024, %s34, [#allocation6], 64, 64, 4
    $region9: #{tpu_custom_call.1} parent=1 // pred_fallthru
      _
    // Predicated region
    $region10: #{tpu_custom_call.1} parent=1 // pred_check
      _
    $region11: #{tpu_custom_call.1} parent=1 // pred_check_branch
      %41 = sbr.rel (0) target = $region13
    $region12: #{tpu_custom_call.1} parent=1 // pred_region
      _
    $region13: #{tpu_custom_call.1} parent=1 // pred_fallthru
      _
    // Predicated region
    $region14: #{tpu_custom_call.1} parent=1 // pred_check
      _
    $region15: #{tpu_custom_call.1} parent=1 // pred_check_branch
      %43 = sbr.rel (0) target = $region17
    $region16: #{tpu_custom_call.1} parent=1 // pred_region
      %s45 = ssub.s32 16384, 16384
      %46 = vsyncadd [#allocation6], %s45
      %s47 = sshll.u32 [#allocation7], 4
      %s48 = int_to_ptr.vmem [resolvable:$true] %s47
      %53 = dma.hbm_to_vmem [thread:$0]  %s3, 16384, %s48, [#allocation6], 64, 64, 4
    $region17: #{tpu_custom_call.1} parent=1 // pred_fallthru
      _
    // Predicated region
    $region18: #{tpu_custom_call.1} parent=1 // pred_check
      _
    $region19: #{tpu_custom_call.1} parent=1 // pred_check_branch
      %55 = sbr.rel (0) target = $region21
    $region20: #{tpu_custom_call.1} parent=1 // pred_region
      _
    $region21: #{tpu_custom_call.1} parent=1 // pred_fallthru
      _
    // Predicated region
    $region22: #{tpu_custom_call.1} parent=1 // pred_check
      _
    $region23: #{tpu_custom_call.1} parent=1 // pred_check_branch
      %57 = sbr.rel (0) target = $region25
    $region24: #{tpu_custom_call.1} parent=1 // pred_region
      %s59 = ssub.s32 4096, 4096
      %60 = vsyncadd [#allocation9], %s59
      %s61 = sshll.u32 [#allocation8], 4
      %s62 = int_to_ptr.vmem [resolvable:$true] %s61
      %67 = dma.hbm_to_vmem [thread:$0]  %s5, 4096, %s62, [#allocation9], 64, 64, 4
    $region25: #{tpu_custom_call.1} parent=1 // pred_fallthru
      _
    // Predicated region
    $region26: #{tpu_custom_call.1} parent=1 // pred_check
      _
    $region27: #{tpu_custom_call.1} parent=1 // pred_check_branch
      %69 = sbr.rel (0) target = $region29
    $region28: #{tpu_custom_call.1} parent=1 // pred_region
      _
    $region29: #{tpu_custom_call.1} parent=1 // pred_fallthru
      _
    // Predicated region
    $region30: #{tpu_custom_call.1} parent=1 // pred_check
      _
    $region31: #{tpu_custom_call.1} parent=1 // pred_check_branch
      %71 = sbr.rel (0) target = $region33
    $region32: #{tpu_custom_call.1} parent=1 // pred_region
      %72 = dma.done [#allocation3], 6272
    $region33: #{tpu_custom_call.1} parent=1 // pred_fallthru
      _
    // Predicated region
    $region34: #{tpu_custom_call.1} parent=1 // pred_check
      _
    $region35: #{tpu_custom_call.1} parent=1 // pred_check_branch
      %74 = sbr.rel (0) target = $region37
    $region36: #{tpu_custom_call.1} parent=1 // pred_region
      %75 = dma.done [#allocation6], 1024
    $region37: #{tpu_custom_call.1} parent=1 // pred_fallthru
      _
    // Predicated region
    $region38: #{tpu_custom_call.1} parent=1 // pred_check
      _
    $region39: #{tpu_custom_call.1} parent=1 // pred_check_branch
      %77 = sbr.rel (0) target = $region41
    $region40: #{tpu_custom_call.1} parent=1 // pred_region
      %78 = dma.done [#allocation6], 16384
    $region41: #{tpu_custom_call.1} parent=1 // pred_fallthru
      _
    // Predicated region
    $region42: #{tpu_custom_call.1} parent=1 // pred_check
      _
    $region43: #{tpu_custom_call.1} parent=1 // pred_check_branch
      %80 = sbr.rel (0) target = $region45
    $region44: #{tpu_custom_call.1} parent=1 // pred_region
      %81 = dma.done [#allocation9], 4096
    $region45: #{tpu_custom_call.1} parent=1 // pred_fallthru
      _
    %v83 = vld [vmem:[#allocation2] sm:$0xff]
    %v84 = vld [vmem:[#allocation2 + $0x8] sm:$0xff]
    %v85 = vld [vmem:[#allocation2 + $0x10] sm:$0xff]
    %v86 = vld [vmem:[#allocation2 + $0x18] sm:$0xff]
    %v87 = vld [vmem:[#allocation2 + $0x20] sm:$0xff]
    %v88 = vld [vmem:[#allocation2 + $0x28] sm:$0xff]
    %v89 = vld [vmem:[#allocation2 + $0x30] sm:$0xff]
    %v90 = vld [vmem:[#allocation2 + $0x38] sm:$0xff]
    %v91 = vld [vmem:[#allocation2 + $0x40] sm:$0xff]
    %v92 = vld [vmem:[#allocation2 + $0x48] sm:$0xff]
    %v93 = vld [vmem:[#allocation2 + $0x50] sm:$0xff]
    %v94 = vld [vmem:[#allocation2 + $0x58] sm:$0xff]
    %v95 = vld [vmem:[#allocation2 + $0x60] sm:$0xff]
    %v96 = vld [vmem:[#allocation2 + $0x68] sm:$0xff]
    %v97 = vld [vmem:[#allocation2 + $0x70] sm:$0xff]
    %v98 = vld [vmem:[#allocation2 + $0x78] sm:$0xff]
    %v99 = vld [vmem:[#allocation2 + $0x80] sm:$0xff]
    %v100 = vld [vmem:[#allocation2 + $0x88] sm:$0xff]
    %v101 = vld [vmem:[#allocation2 + $0x90] sm:$0xff]
    %v102 = vld [vmem:[#allocation2 + $0x98] sm:$0xff]
    %v103 = vld [vmem:[#allocation2 + $0xa0] sm:$0xff]
    %v104 = vld [vmem:[#allocation2 + $0xa8] sm:$0xff]
    %v105 = vld [vmem:[#allocation2 + $0xb0] sm:$0xff]
    %v106 = vld [vmem:[#allocation2 + $0xb8] sm:$0xff]
    %v107 = vld [vmem:[#allocation2 + $0xc0] sm:$0xff]
    %v108 = vld [vmem:[#allocation2 + $0xc8] sm:$0xff]
    %v109 = vld [vmem:[#allocation2 + $0xd0] sm:$0xff]
    %v110 = vld [vmem:[#allocation2 + $0xd8] sm:$0xff]
    %v111 = vld [vmem:[#allocation2 + $0xe0] sm:$0xff]
    %v112 = vld [vmem:[#allocation2 + $0xe8] sm:$0xff]
    %v113 = vld [vmem:[#allocation2 + $0xf0] sm:$0xff]
    %v114 = vld [vmem:[#allocation2 + $0xf8] sm:$0xff]
    %v115 = vld [vmem:[#allocation2 + $0x100] sm:$0xff]
    %v116 = vld [vmem:[#allocation2 + $0x108] sm:$0xff]
    %v117 = vld [vmem:[#allocation2 + $0x110] sm:$0xff]
    %v118 = vld [vmem:[#allocation2 + $0x118] sm:$0xff]
    %v119 = vld [vmem:[#allocation2 + $0x120] sm:$0xff]
    %v120 = vld [vmem:[#allocation2 + $0x128] sm:$0xff]
    %v121 = vld [vmem:[#allocation2 + $0x130] sm:$0xff]
    %v122 = vld [vmem:[#allocation2 + $0x138] sm:$0xff]
    %v123 = vld [vmem:[#allocation2 + $0x140] sm:$0xff]
    %v124 = vld [vmem:[#allocation2 + $0x148] sm:$0xff]
    %v125 = vld [vmem:[#allocation2 + $0x150] sm:$0xff]
    %v126 = vld [vmem:[#allocation2 + $0x158] sm:$0xff]
    %v127 = vld [vmem:[#allocation2 + $0x160] sm:$0xff]
    %v128 = vld [vmem:[#allocation2 + $0x168] sm:$0xff]
    %v129 = vld [vmem:[#allocation2 + $0x170] sm:$0xff]
    %v130 = vld [vmem:[#allocation2 + $0x178] sm:$0xff]
    %v131 = vld [vmem:[#allocation2 + $0x180] sm:$0xff]
    %v132 = vpack.c.bf16 %v84, %v83
    %v133 = vpack.c.bf16 %v86, %v85
    %v134 = vpack.c.bf16 %v88, %v87
    %v135 = vpack.c.bf16 %v90, %v89
    %v136 = vpack.c.bf16 %v92, %v91
    %v137 = vpack.c.bf16 %v94, %v93
    %v138 = vpack.c.bf16 %v96, %v95
    %v139 = vpack.c.bf16 %v98, %v97
    %v140 = vpack.c.bf16 %v100, %v99
    %v141 = vpack.c.bf16 %v102, %v101
    %v142 = vpack.c.bf16 %v104, %v103
    %v143 = vpack.c.bf16 %v106, %v105
    %v144 = vpack.c.bf16 %v108, %v107
    %v145 = vpack.c.bf16 %v110, %v109
    %v146 = vpack.c.bf16 %v112, %v111
    %v147 = vpack.c.bf16 %v114, %v113
    %v148 = vpack.c.bf16 %v116, %v115
    %v149 = vpack.c.bf16 %v118, %v117
    %v150 = vpack.c.bf16 %v120, %v119
    %v151 = vpack.c.bf16 %v122, %v121
    %v152 = vpack.c.bf16 %v124, %v123
    %v153 = vpack.c.bf16 %v126, %v125
    %v154 = vpack.c.bf16 %v128, %v127
    %v155 = vpack.c.bf16 %v130, %v129
    %v156 = vpack.c.bf16 %v131, %v131
    %v157 = vld [vmem:[#allocation5] sm:$0xf]
    %v158 = vld [vmem:[#allocation5 + $0x4] sm:$0xf]
    %v159 = vld [vmem:[#allocation5 + $0x8] sm:$0xf]
    %v160 = vld [vmem:[#allocation5 + $0xc] sm:$0xf]
    %v161 = vld [vmem:[#allocation5 + $0x10] sm:$0xf]
    %v162 = vld [vmem:[#allocation5 + $0x14] sm:$0xf]
    %v163 = vld [vmem:[#allocation5 + $0x18] sm:$0xf]
    %v164 = vld [vmem:[#allocation5 + $0x1c] sm:$0xf]
    %v165 = vld [vmem:[#allocation5 + $0x20] sm:$0xf]
    %v166 = vld [vmem:[#allocation5 + $0x24] sm:$0xf]
    %v167 = vld [vmem:[#allocation5 + $0x28] sm:$0xf]
    %v168 = vld [vmem:[#allocation5 + $0x2c] sm:$0xf]
    %v169 = vld [vmem:[#allocation5 + $0x30] sm:$0xf]
    %v170 = vld [vmem:[#allocation5 + $0x34] sm:$0xf]
    %v171 = vld [vmem:[#allocation5 + $0x38] sm:$0xf]
    %v172 = vld [vmem:[#allocation5 + $0x3c] sm:$0xf]
    %v173 = vld [vmem:[%s2] sm:$0x1]
    %v175 = vlaneseq
    %v176 = vshrl.u32 %v175, 7
    %v177 = vsub.s32 0, %v176
    %v178 = vrot.slane %v173, %v177
    %v196 = vunpack.c.l.b16 %v157
    %v197 = vunpack.c.l.b16 %v158
    %v198 = vunpack.c.l.b16 %v159
    %v199 = vunpack.c.l.b16 %v160
    %v200 = vunpack.c.l.b16 %v161
    %v201 = vunpack.c.l.b16 %v162
    %v202 = vunpack.c.l.b16 %v163
    %v203 = vunpack.c.l.b16 %v164
    %v204 = vunpack.c.l.b16 %v165
    %v205 = vunpack.c.l.b16 %v166
    %v206 = vunpack.c.l.b16 %v167
    %v207 = vunpack.c.l.b16 %v168
    %v208 = vunpack.c.l.b16 %v169
    %v209 = vunpack.c.l.b16 %v170
    %v210 = vunpack.c.l.b16 %v171
    %v211 = vunpack.c.l.b16 %v172
    %v212 = vpack.c.b16 %v197, %v196
    %v213 = vpack.c.b16 %v199, %v198
    %v214 = vpack.c.b16 %v201, %v200
    %v215 = vpack.c.b16 %v203, %v202
    %v216 = vpack.c.b16 %v205, %v204
    %v217 = vpack.c.b16 %v207, %v206
    %v218 = vpack.c.b16 %v209, %v208
    %v219 = vpack.c.b16 %v211, %v210
    %228 = vmatprep.subr.bf16.mxu0 0
    %229 = vmatpush1.bf16.msra.mxu0 %v219
    %230 = vmatprep.subr.bf16.mxu0 0
    %231 = vmatpush1.bf16.msra.mxu0 %v218
    %232 = vmatprep.subr.bf16.mxu0 0
    %233 = vmatpush1.bf16.msra.mxu0 %v217
    %234 = vmatprep.subr.bf16.mxu0 0
    %235 = vmatpush1.bf16.msra.mxu0 %v216
    %236 = vmatprep.subr.bf16.mxu0 0
    %237 = vmatpush1.bf16.msra.mxu0 %v215
    %238 = vmatprep.subr.bf16.mxu0 0
    %239 = vmatpush1.bf16.msra.mxu0 %v214
    %240 = vmatprep.subr.bf16.mxu0 0
    %241 = vmatpush1.bf16.msra.mxu0 %v213
    %242 = vmatprep.subr.bf16.mxu0 0
    %243 = vmatpush1.bf16.msra.mxu0 %v212
    %244 = vmatprep.subr.bf16.mxu0 0
    %245 = vmatpush2.bf16.msra.mxu0 0
    %246 = vmatprep.subr.bf16.mxu0 0
    %247 = vmatpush2.bf16.msra.mxu0 0
    %248 = vmatprep.subr.bf16.mxu0 0
    %249 = vmatpush2.bf16.msra.mxu0 0
    %250 = vmatprep.subr.bf16.mxu0 0
    %251 = vmatpush2.bf16.msra.mxu0 0
    %252 = vmatprep.subr.bf16.mxu0 0
    %253 = vmatpush2.bf16.msra.mxu0 0
    %254 = vmatprep.subr.bf16.mxu0 0
    %255 = vmatpush2.bf16.msra.mxu0 0
    %256 = vmatprep.subr.bf16.mxu0 0
    %257 = vmatpush2.bf16.msra.mxu0 0
    %258 = vmatprep.subr.bf16.mxu0 0
    %259 = vmatpush2.bf16.msra.mxu0 0
    %260 = vmatprep.mubr.bf16.mxu0 0
    %261 = vmatmul.mubr.bf16.gmra.mxu0 %v132
    %v262 = vpop.f32.mrf.mxu0
    %v263 = vadd.f32 %v178, %v262
    %v264 = vpop.f32.mrf.mxu0
    %v265 = vpop.f32.mrf.mxu0
    %v266 = vadd.f32 %v178, %v265
    %v267 = vpop.f32.mrf.mxu0
    %268 = vmatprep.mubr.bf16.mxu0 0
    %269 = vmatmul.mubr.bf16.gmra.mxu0 %v133
    %v270 = vpop.f32.mrf.mxu0
    %v271 = vadd.f32 %v178, %v270
    %v272 = vpop.f32.mrf.mxu0
    %v273 = vpop.f32.mrf.mxu0
    %v274 = vadd.f32 %v178, %v273
    %v275 = vpop.f32.mrf.mxu0
    %276 = vmatprep.mubr.bf16.mxu0 0
    %277 = vmatmul.mubr.bf16.gmra.mxu0 %v134
    %v278 = vpop.f32.mrf.mxu0
    %v279 = vadd.f32 %v178, %v278
    %v280 = vpop.f32.mrf.mxu0
    %v281 = vpop.f32.mrf.mxu0
    %v282 = vadd.f32 %v178, %v281
    %v283 = vpop.f32.mrf.mxu0
    %284 = vmatprep.mubr.bf16.mxu0 0
    %285 = vmatmul.mubr.bf16.gmra.mxu0 %v135
    %v286 = vpop.f32.mrf.mxu0
    %v287 = vpop.f32.mrf.mxu0
    %v288 = vpop.f32.mrf.mxu0
    %v289 = vadd.f32 %v178, %v288
    %v290 = vpop.f32.mrf.mxu0
    %291 = vmatprep.mubr.bf16.mxu0 0
    %292 = vmatmul.mubr.bf16.gmra.mxu0 %v136
    %v293 = vpop.f32.mrf.mxu0
    %v294 = vadd.f32 %v178, %v293
    %v295 = vpop.f32.mrf.mxu0
    %v296 = vpop.f32.mrf.mxu0
    %v297 = vadd.f32 %v178, %v296
    %v298 = vpop.f32.mrf.mxu0
    %299 = vmatprep.mubr.bf16.mxu0 0
    %300 = vmatmul.mubr.bf16.gmra.mxu0 %v137
    %v301 = vpop.f32.mrf.mxu0
    %v302 = vadd.f32 %v178, %v301
    %v303 = vpop.f32.mrf.mxu0
    %v304 = vpop.f32.mrf.mxu0
    %v305 = vadd.f32 %v178, %v304
    %v306 = vpop.f32.mrf.mxu0
    %307 = vmatprep.mubr.bf16.mxu0 0
    %308 = vmatmul.mubr.bf16.gmra.mxu0 %v138
    %v309 = vpop.f32.mrf.mxu0
    %v310 = vadd.f32 %v178, %v309
    %v311 = vpop.f32.mrf.mxu0
    %v312 = vpop.f32.mrf.mxu0
    %v313 = vpop.f32.mrf.mxu0
    %314 = vmatprep.mubr.bf16.mxu0 0
    %315 = vmatmul.mubr.bf16.gmra.mxu0 %v139
    %v316 = vpop.f32.mrf.mxu0
    %v317 = vadd.f32 %v178, %v316
    %v318 = vpop.f32.mrf.mxu0
    %v319 = vpop.f32.mrf.mxu0
    %v320 = vadd.f32 %v178, %v319
    %v321 = vpop.f32.mrf.mxu0
    %322 = vmatprep.mubr.bf16.mxu0 0
    %323 = vmatmul.mubr.bf16.gmra.mxu0 %v140
    %v324 = vpop.f32.mrf.mxu0
    %v325 = vadd.f32 %v178, %v324
    %v326 = vpop.f32.mrf.mxu0
    %v327 = vpop.f32.mrf.mxu0
    %v328 = vadd.f32 %v178, %v327
    %v329 = vpop.f32.mrf.mxu0
    %330 = vmatprep.mubr.bf16.mxu0 0
    %331 = vmatmul.mubr.bf16.gmra.mxu0 %v141
    %v332 = vpop.f32.mrf.mxu0
    %v333 = vadd.f32 %v178, %v332
    %v334 = vpop.f32.mrf.mxu0
    %v335 = vpop.f32.mrf.mxu0
    %v336 = vadd.f32 %v178, %v335
    %v337 = vpop.f32.mrf.mxu0
    %338 = vmatprep.mubr.bf16.mxu0 0
    %339 = vmatmul.mubr.bf16.gmra.mxu0 %v142
    %v340 = vpop.f32.mrf.mxu0
    %v341 = vpop.f32.mrf.mxu0
    %v342 = vpop.f32.mrf.mxu0
    %v343 = vadd.f32 %v178, %v342
    %v344 = vpop.f32.mrf.mxu0
    %345 = vmatprep.mubr.bf16.mxu0 0
    %346 = vmatmul.mubr.bf16.gmra.mxu0 %v143
    %v347 = vpop.f32.mrf.mxu0
    %v348 = vadd.f32 %v178, %v347
    %v349 = vpop.f32.mrf.mxu0
    %v350 = vpop.f32.mrf.mxu0
    %v351 = vadd.f32 %v178, %v350
    %v352 = vpop.f32.mrf.mxu0
    %353 = vmatprep.mubr.bf16.mxu0 0
    %354 = vmatmul.mubr.bf16.gmra.mxu0 %v144
    %v355 = vpop.f32.mrf.mxu0
    %v356 = vadd.f32 %v178, %v355
    %v357 = vpop.f32.mrf.mxu0
    %v358 = vpop.f32.mrf.mxu0
    %v359 = vadd.f32 %v178, %v358
    %v360 = vpop.f32.mrf.mxu0
    %361 = vmatprep.mubr.bf16.mxu0 0
    %362 = vmatmul.mubr.bf16.gmra.mxu0 %v145
    %v363 = vpop.f32.mrf.mxu0
    %v364 = vadd.f32 %v178, %v363
    %v365 = vpop.f32.mrf.mxu0
    %v366 = vpop.f32.mrf.mxu0
    %v367 = vpop.f32.mrf.mxu0
    %368 = vmatprep.mubr.bf16.mxu0 0
    %369 = vmatmul.mubr.bf16.gmra.mxu0 %v146
    %v370 = vpop.f32.mrf.mxu0
    %v371 = vadd.f32 %v178, %v370
    %v372 = vpop.f32.mrf.mxu0
    %v373 = vpop.f32.mrf.mxu0
    %v374 = vadd.f32 %v178, %v373
    %v375 = vpop.f32.mrf.mxu0
    %376 = vmatprep.mubr.bf16.mxu0 0
    %377 = vmatmul.mubr.bf16.gmra.mxu0 %v147
    %v378 = vpop.f32.mrf.mxu0
    %v379 = vadd.f32 %v178, %v378
    %v380 = vpop.f32.mrf.mxu0
    %v381 = vpop.f32.mrf.mxu0
    %v382 = vadd.f32 %v178, %v381
    %v383 = vpop.f32.mrf.mxu0
    %384 = vmatprep.mubr.bf16.mxu0 0
    %385 = vmatmul.mubr.bf16.gmra.mxu0 %v148
    %v386 = vpop.f32.mrf.mxu0
    %v387 = vadd.f32 %v178, %v386
    %v388 = vpop.f32.mrf.mxu0
    %v389 = vpop.f32.mrf.mxu0
    %v390 = vadd.f32 %v178, %v389
    %v391 = vpop.f32.mrf.mxu0
    %392 = vmatprep.mubr.bf16.mxu0 0
    %393 = vmatmul.mubr.bf16.gmra.mxu0 %v149
    %v394 = vpop.f32.mrf.mxu0
    %v395 = vpop.f32.mrf.mxu0
    %v396 = vpop.f32.mrf.mxu0
    %v397 = vadd.f32 %v178, %v396
    %v398 = vpop.f32.mrf.mxu0
    %399 = vmatprep.mubr.bf16.mxu0 0
    %400 = vmatmul.mubr.bf16.gmra.mxu0 %v150
    %v401 = vpop.f32.mrf.mxu0
    %v402 = vadd.f32 %v178, %v401
    %v403 = vpop.f32.mrf.mxu0
    %v404 = vpop.f32.mrf.mxu0
    %v405 = vadd.f32 %v178, %v404
    %v406 = vpop.f32.mrf.mxu0
    %407 = vmatprep.mubr.bf16.mxu0 0
    %408 = vmatmul.mubr.bf16.gmra.mxu0 %v151
    %v409 = vpop.f32.mrf.mxu0
    %v410 = vadd.f32 %v178, %v409
    %v411 = vpop.f32.mrf.mxu0
    %v412 = vpop.f32.mrf.mxu0
    %v413 = vadd.f32 %v178, %v412
    %v414 = vpop.f32.mrf.mxu0
    %415 = vmatprep.mubr.bf16.mxu0 0
    %416 = vmatmul.mubr.bf16.gmra.mxu0 %v152
    %v417 = vpop.f32.mrf.mxu0
    %v418 = vadd.f32 %v178, %v417
    %v419 = vpop.f32.mrf.mxu0
    %v420 = vpop.f32.mrf.mxu0
    %v421 = vpop.f32.mrf.mxu0
    %422 = vmatprep.mubr.bf16.mxu0 0
    %423 = vmatmul.mubr.bf16.gmra.mxu0 %v153
    %v424 = vpop.f32.mrf.mxu0
    %v425 = vpop.f32.mrf.mxu0
    %v426 = vpop.f32.mrf.mxu0
    %v427 = vpop.f32.mrf.mxu0
    %428 = vmatprep.mubr.bf16.mxu0 0
    %429 = vmatmul.mubr.bf16.gmra.mxu0 %v154
    %v430 = vpop.f32.mrf.mxu0
    %v431 = vpop.f32.mrf.mxu0
    %v432 = vpop.f32.mrf.mxu0
    %v433 = vpop.f32.mrf.mxu0
    %434 = vmatprep.mubr.bf16.mxu0 0
    %435 = vmatmul.mubr.bf16.gmra.mxu0 %v155
    %v436 = vpop.f32.mrf.mxu0
    %v437 = vpop.f32.mrf.mxu0
    %v438 = vpop.f32.mrf.mxu0
    %v439 = vpop.f32.mrf.mxu0
    %440 = vmatprep.mubr.bf16.mxu0 0
    %441 = vmatmul.mubr.bf16.gmra.mxu0 %v156
    %v442 = vpop.f32.mrf.mxu0
    %v443 = vpop.f32.mrf.mxu0
    %v444 = vpop.f32.mrf.mxu0
    %v445 = vpop.f32.mrf.mxu0
    %446 = vdwg.mxu0
    %vm447 = vcmp.gt.f32.partialorder %v263, 0.0
    %vm448 = vcmp.gt.f32.partialorder %v266, 0.0
    %vm449 = vcmp.gt.f32.partialorder %v271, 0.0
    %vm450 = vcmp.gt.f32.partialorder %v274, 0.0
    %vm451 = vcmp.gt.f32.partialorder %v279, 0.0
    %vm452 = vcmp.gt.f32.partialorder %v282, 0.0
    %vm453 = vcmp.gt.f32.partialorder %v289, 0.0
    %vm454 = vcmp.gt.f32.partialorder %v294, 0.0
    %vm455 = vcmp.gt.f32.partialorder %v297, 0.0
    %vm456 = vcmp.gt.f32.partialorder %v302, 0.0
    %vm457 = vcmp.gt.f32.partialorder %v305, 0.0
    %vm458 = vcmp.gt.f32.partialorder %v310, 0.0
    %vm459 = vcmp.gt.f32.partialorder %v317, 0.0
    %vm460 = vcmp.gt.f32.partialorder %v320, 0.0
    %vm461 = vcmp.gt.f32.partialorder %v325, 0.0
    %vm462 = vcmp.gt.f32.partialorder %v328, 0.0
    %vm463 = vcmp.gt.f32.partialorder %v333, 0.0
    %vm464 = vcmp.gt.f32.partialorder %v336, 0.0
    %vm465 = vcmp.gt.f32.partialorder %v343, 0.0
    %vm466 = vcmp.gt.f32.partialorder %v348, 0.0
    %vm467 = vcmp.gt.f32.partialorder %v351, 0.0
    %vm468 = vcmp.gt.f32.partialorder %v356, 0.0
    %vm469 = vcmp.gt.f32.partialorder %v359, 0.0
    %vm470 = vcmp.gt.f32.partialorder %v364, 0.0
    %vm471 = vcmp.gt.f32.partialorder %v371, 0.0
    %vm472 = vcmp.gt.f32.partialorder %v374, 0.0
    %vm473 = vcmp.gt.f32.partialorder %v379, 0.0
    %vm474 = vcmp.gt.f32.partialorder %v382, 0.0
    %vm475 = vcmp.gt.f32.partialorder %v387, 0.0
    %vm476 = vcmp.gt.f32.partialorder %v390, 0.0
    %vm477 = vcmp.gt.f32.partialorder %v397, 0.0
    %vm478 = vcmp.gt.f32.partialorder %v402, 0.0
    %vm479 = vcmp.gt.f32.partialorder %v405, 0.0
    %vm480 = vcmp.gt.f32.partialorder %v410, 0.0
    %vm481 = vcmp.gt.f32.partialorder %v413, 0.0
    %vm482 = vcmp.gt.f32.partialorder %v418, 0.0
    %v483 = vmin.f32 %v263, 0.0
    %v484 = vmin.f32 %v266, 0.0
    %v485 = vmin.f32 %v271, 0.0
    %v486 = vmin.f32 %v274, 0.0
    %v487 = vmin.f32 %v279, 0.0
    %v488 = vmin.f32 %v282, 0.0
    %v489 = vmin.f32 %v289, 0.0
    %v490 = vmin.f32 %v294, 0.0
    %v491 = vmin.f32 %v297, 0.0
    %v492 = vmin.f32 %v302, 0.0
    %v493 = vmin.f32 %v305, 0.0
    %v494 = vmin.f32 %v310, 0.0
    %v495 = vmin.f32 %v317, 0.0
    %v496 = vmin.f32 %v320, 0.0
    %v497 = vmin.f32 %v325, 0.0
    %v498 = vmin.f32 %v328, 0.0
    %v499 = vmin.f32 %v333, 0.0
    %v500 = vmin.f32 %v336, 0.0
    %v501 = vmin.f32 %v343, 0.0
    %v502 = vmin.f32 %v348, 0.0
    %v503 = vmin.f32 %v351, 0.0
    %v504 = vmin.f32 %v356, 0.0
    %v505 = vmin.f32 %v359, 0.0
    %v506 = vmin.f32 %v364, 0.0
    %v507 = vmin.f32 %v371, 0.0
    %v508 = vmin.f32 %v374, 0.0
    %v509 = vmin.f32 %v379, 0.0
    %v510 = vmin.f32 %v382, 0.0
    %v511 = vmin.f32 %v387, 0.0
    %v512 = vmin.f32 %v390, 0.0
    %v513 = vmin.f32 %v397, 0.0
    %v514 = vmin.f32 %v402, 0.0
    %v515 = vmin.f32 %v405, 0.0
    %v516 = vmin.f32 %v410, 0.0
    %v517 = vmin.f32 %v413, 0.0
    %v518 = vmin.f32 %v418, 0.0
    %v519 = vmul.f32 %v483, 1.442695
    %v520 = vpow.pop %v519
    %v521 = vmul.f32 %v484, 1.442695
    %v522 = vpow.pop %v521
    %v523 = vmul.f32 %v485, 1.442695
    %v524 = vpow.pop %v523
    %v525 = vmul.f32 %v486, 1.442695
    %v526 = vpow.pop %v525
    %v527 = vmul.f32 %v487, 1.442695
    %v528 = vpow.pop %v527
    %v529 = vmul.f32 %v488, 1.442695
    %v530 = vpow.pop %v529
    %v531 = vmul.f32 %v489, 1.442695
    %v532 = vpow.pop %v531
    %v533 = vmul.f32 %v490, 1.442695
    %v534 = vpow.pop %v533
    %v535 = vmul.f32 %v491, 1.442695
    %v536 = vpow.pop %v535
    %v537 = vmul.f32 %v492, 1.442695
    %v538 = vpow.pop %v537
    %v539 = vmul.f32 %v493, 1.442695
    %v540 = vpow.pop %v539
    %v541 = vmul.f32 %v494, 1.442695
    %v542 = vpow.pop %v541
    %v543 = vmul.f32 %v495, 1.442695
    %v544 = vpow.pop %v543
    %v545 = vmul.f32 %v496, 1.442695
    %v546 = vpow.pop %v545
    %v547 = vmul.f32 %v497, 1.442695
    %v548 = vpow.pop %v547
    %v549 = vmul.f32 %v498, 1.442695
    %v550 = vpow.pop %v549
    %v551 = vmul.f32 %v499, 1.442695
    %v552 = vpow.pop %v551
    %v553 = vmul.f32 %v500, 1.442695
    %v554 = vpow.pop %v553
    %v555 = vmul.f32 %v501, 1.442695
    %v556 = vpow.pop %v555
    %v557 = vmul.f32 %v502, 1.442695
    %v558 = vpow.pop %v557
    %v559 = vmul.f32 %v503, 1.442695
    %v560 = vpow.pop %v559
    %v561 = vmul.f32 %v504, 1.442695
    %v562 = vpow.pop %v561
    %v563 = vmul.f32 %v505, 1.442695
    %v564 = vpow.pop %v563
    %v565 = vmul.f32 %v506, 1.442695
    %v566 = vpow.pop %v565
    %v567 = vmul.f32 %v507, 1.442695
    %v568 = vpow.pop %v567
    %v569 = vmul.f32 %v508, 1.442695
    %v570 = vpow.pop %v569
    %v571 = vmul.f32 %v509, 1.442695
    %v572 = vpow.pop %v571
    %v573 = vmul.f32 %v510, 1.442695
    %v574 = vpow.pop %v573
    %v575 = vmul.f32 %v511, 1.442695
    %v576 = vpow.pop %v575
    %v577 = vmul.f32 %v512, 1.442695
    %v578 = vpow.pop %v577
    %v579 = vmul.f32 %v513, 1.442695
    %v580 = vpow.pop %v579
    %v581 = vmul.f32 %v514, 1.442695
    %v582 = vpow.pop %v581
    %v583 = vmul.f32 %v515, 1.442695
    %v584 = vpow.pop %v583
    %v585 = vmul.f32 %v516, 1.442695
    %v586 = vpow.pop %v585
    %v587 = vmul.f32 %v517, 1.442695
    %v588 = vpow.pop %v587
    %v589 = vmul.f32 %v518, 1.442695
    %v590 = vpow.pop %v589
    %v591 = vsub.f32 %v520, 1.0
    %v592 = vsub.f32 %v522, 1.0
    %v593 = vsub.f32 %v524, 1.0
    %v594 = vsub.f32 %v526, 1.0
    %v595 = vsub.f32 %v528, 1.0
    %v596 = vsub.f32 %v530, 1.0
    %v597 = vsub.f32 %v532, 1.0
    %v598 = vsub.f32 %v534, 1.0
    %v599 = vsub.f32 %v536, 1.0
    %v600 = vsub.f32 %v538, 1.0
    %v601 = vsub.f32 %v540, 1.0
    %v602 = vsub.f32 %v542, 1.0
    %v603 = vsub.f32 %v544, 1.0
    %v604 = vsub.f32 %v546, 1.0
    %v605 = vsub.f32 %v548, 1.0
    %v606 = vsub.f32 %v550, 1.0
    %v607 = vsub.f32 %v552, 1.0
    %v608 = vsub.f32 %v554, 1.0
    %v609 = vsub.f32 %v556, 1.0
    %v610 = vsub.f32 %v558, 1.0
    %v611 = vsub.f32 %v560, 1.0
    %v612 = vsub.f32 %v562, 1.0
    %v613 = vsub.f32 %v564, 1.0
    %v614 = vsub.f32 %v566, 1.0
    %v615 = vsub.f32 %v568, 1.0
    %v616 = vsub.f32 %v570, 1.0
    %v617 = vsub.f32 %v572, 1.0
    %v618 = vsub.f32 %v574, 1.0
    %v619 = vsub.f32 %v576, 1.0
    %v620 = vsub.f32 %v578, 1.0
    %v621 = vsub.f32 %v580, 1.0
    %v622 = vsub.f32 %v582, 1.0
    %v623 = vsub.f32 %v584, 1.0
    %v624 = vsub.f32 %v586, 1.0
    %v625 = vsub.f32 %v588, 1.0
    %v626 = vsub.f32 %v590, 1.0
    %v627 = vsel %vm447, %v263, %v591
    %v628 = vsel %vm448, %v266, %v592
    %v629 = vsel %vm449, %v271, %v593
    %v630 = vsel %vm450, %v274, %v594
    %v631 = vsel %vm451, %v279, %v595
    %v632 = vsel %vm452, %v282, %v596
    %v633 = vsel %vm453, %v289, %v597
    %v634 = vsel %vm454, %v294, %v598
    %v635 = vsel %vm455, %v297, %v599
    %v636 = vsel %vm456, %v302, %v600
    %v637 = vsel %vm457, %v305, %v601
    %v638 = vsel %vm458, %v310, %v602
    %v639 = vsel %vm459, %v317, %v603
    %v640 = vsel %vm460, %v320, %v604
    %v641 = vsel %vm461, %v325, %v605
    %v642 = vsel %vm462, %v328, %v606
    %v643 = vsel %vm463, %v333, %v607
    %v644 = vsel %vm464, %v336, %v608
    %v645 = vsel %vm465, %v343, %v609
    %v646 = vsel %vm466, %v348, %v610
    %v647 = vsel %vm467, %v351, %v611
    %v648 = vsel %vm468, %v356, %v612
    %v649 = vsel %vm469, %v359, %v613
    %v650 = vsel %vm470, %v364, %v614
    %v651 = vsel %vm471, %v371, %v615
    %v652 = vsel %vm472, %v374, %v616
    %v653 = vsel %vm473, %v379, %v617
    %v654 = vsel %vm474, %v382, %v618
    %v655 = vsel %vm475, %v387, %v619
    %v656 = vsel %vm476, %v390, %v620
    %v657 = vsel %vm477, %v397, %v621
    %v658 = vsel %vm478, %v402, %v622
    %v659 = vsel %vm479, %v405, %v623
    %v660 = vsel %vm480, %v410, %v624
    %v661 = vsel %vm481, %v413, %v625
    %v662 = vsel %vm482, %v418, %v626
    %v663 = vpack.c.bf16 %v629, %v627
    %v664 = vpack.c.bf16 %v641, %v639
    %v665 = vld [vmem:[#allocation7] sm:$0xf]
    %v666 = vld [vmem:[#allocation7 + $0x4] sm:$0xf]
    %v667 = vld [vmem:[#allocation7 + $0x8] sm:$0xf]
    %v668 = vld [vmem:[#allocation7 + $0xc] sm:$0xf]
    %v669 = vld [vmem:[#allocation7 + $0x10] sm:$0xf]
    %v670 = vld [vmem:[#allocation7 + $0x14] sm:$0xf]
    %v671 = vld [vmem:[#allocation7 + $0x18] sm:$0xf]
    %v672 = vld [vmem:[#allocation7 + $0x1c] sm:$0xf]
    %v673 = vld [vmem:[#allocation7 + $0x20] sm:$0xf]
    %v674 = vld [vmem:[#allocation7 + $0x24] sm:$0xf]
    %v675 = vld [vmem:[#allocation7 + $0x28] sm:$0xf]
    %v676 = vld [vmem:[#allocation7 + $0x2c] sm:$0xf]
    %v677 = vld [vmem:[#allocation7 + $0x30] sm:$0xf]
    %v678 = vld [vmem:[#allocation7 + $0x34] sm:$0xf]
    %v679 = vld [vmem:[#allocation7 + $0x38] sm:$0xf]
    %v680 = vld [vmem:[#allocation7 + $0x3c] sm:$0xf]
    %v681 = vpack.c.bf16 %v630, %v628
    %v682 = vpack.c.bf16 %v642, %v640
    %s683 = scalar_lea.vmem [#allocation7], 64
    %v684 = vld [vmem:[%s683] sm:$0xf]
    %v685 = vld [vmem:[%s683 + $0x4] sm:$0xf]
    %v686 = vld [vmem:[%s683 + $0x8] sm:$0xf]
    %v687 = vld [vmem:[%s683 + $0xc] sm:$0xf]
    %v688 = vld [vmem:[%s683 + $0x10] sm:$0xf]
    %v689 = vld [vmem:[%s683 + $0x14] sm:$0xf]
    %v690 = vld [vmem:[%s683 + $0x18] sm:$0xf]
    %v691 = vld [vmem:[%s683 + $0x1c] sm:$0xf]
    %v692 = vld [vmem:[%s683 + $0x20] sm:$0xf]
    %v693 = vld [vmem:[%s683 + $0x24] sm:$0xf]
    %v694 = vld [vmem:[%s683 + $0x28] sm:$0xf]
    %v695 = vld [vmem:[%s683 + $0x2c] sm:$0xf]
    %v696 = vld [vmem:[%s683 + $0x30] sm:$0xf]
    %v697 = vld [vmem:[%s683 + $0x34] sm:$0xf]
    %v698 = vld [vmem:[%s683 + $0x38] sm:$0xf]
    %v699 = vld [vmem:[%s683 + $0x3c] sm:$0xf]
    %v716 = vunpack.c.l.b16 %v684
    %v717 = vunpack.c.l.b16 %v685
    %v718 = vunpack.c.l.b16 %v686
    %v719 = vunpack.c.l.b16 %v687
    %v720 = vunpack.c.l.b16 %v688
    %v721 = vunpack.c.l.b16 %v689
    %v722 = vunpack.c.l.b16 %v690
    %v723 = vunpack.c.l.b16 %v691
    %v724 = vunpack.c.l.b16 %v692
    %v725 = vunpack.c.l.b16 %v693
    %v726 = vunpack.c.l.b16 %v694
    %v727 = vunpack.c.l.b16 %v695
    %v728 = vunpack.c.l.b16 %v696
    %v729 = vunpack.c.l.b16 %v697
    %v730 = vunpack.c.l.b16 %v698
    %v731 = vunpack.c.l.b16 %v699
    %v732 = vpack.c.b16 %v717, %v716
    %v733 = vpack.c.b16 %v719, %v718
    %v734 = vpack.c.b16 %v721, %v720
    %v735 = vpack.c.b16 %v723, %v722
    %v736 = vpack.c.b16 %v725, %v724
    %v737 = vpack.c.b16 %v727, %v726
    %v738 = vpack.c.b16 %v729, %v728
    %v739 = vpack.c.b16 %v731, %v730
    %748 = vmatprep.subr.bf16.mxu0 0
    %749 = vmatpush1.bf16.msra.mxu0 %v739
    %750 = vmatprep.subr.bf16.mxu0 0
    %751 = vmatpush1.bf16.msra.mxu0 %v738
    %752 = vmatprep.subr.bf16.mxu0 0
    %753 = vmatpush1.bf16.msra.mxu0 %v737
    %754 = vmatprep.subr.bf16.mxu0 0
    %755 = vmatpush1.bf16.msra.mxu0 %v736
    %756 = vmatprep.subr.bf16.mxu0 0
    %757 = vmatpush1.bf16.msra.mxu0 %v735
    %758 = vmatprep.subr.bf16.mxu0 0
    %759 = vmatpush1.bf16.msra.mxu0 %v734
    %760 = vmatprep.subr.bf16.mxu0 0
    %761 = vmatpush1.bf16.msra.mxu0 %v733
    %762 = vmatprep.subr.bf16.mxu0 0
    %763 = vmatpush1.bf16.msra.mxu0 %v732
    %764 = vmatprep.subr.bf16.mxu0 0
    %765 = vmatpush2.bf16.msra.mxu0 0
    %766 = vmatprep.subr.bf16.mxu0 0
    %767 = vmatpush2.bf16.msra.mxu0 0
    %768 = vmatprep.subr.bf16.mxu0 0
    %769 = vmatpush2.bf16.msra.mxu0 0
    %770 = vmatprep.subr.bf16.mxu0 0
    %771 = vmatpush2.bf16.msra.mxu0 0
    %772 = vmatprep.subr.bf16.mxu0 0
    %773 = vmatpush2.bf16.msra.mxu0 0
    %774 = vmatprep.subr.bf16.mxu0 0
    %775 = vmatpush2.bf16.msra.mxu0 0
    %776 = vmatprep.subr.bf16.mxu0 0
    %777 = vmatpush2.bf16.msra.mxu0 0
    %778 = vmatprep.subr.bf16.mxu0 0
    %779 = vmatpush2.bf16.msra.mxu0 0
    %780 = vmatprep.mubr.bf16.mxu0 0
    %781 = vmatmul.mubr.bf16.gmra.mxu0 %v681
    %v782 = vpop.f32.mrf.mxu0
    %v783 = vadd.f32 0.0, %v782
    %v784 = vpop.f32.mrf.mxu0
    %v785 = vpop.f32.mrf.mxu0
    %v786 = vadd.f32 0.0, %v785
    %v787 = vpop.f32.mrf.mxu0
    %788 = vmatprep.mubr.bf16.mxu0 0
    %789 = vmatmul.mubr.bf16.gmra.mxu0 %v682
    %v790 = vpop.f32.mrf.mxu0
    %v791 = vadd.f32 0.0, %v790
    %v792 = vpop.f32.mrf.mxu0
    %v793 = vpop.f32.mrf.mxu0
    %v794 = vadd.f32 0.0, %v793
    %v795 = vpop.f32.mrf.mxu0
    %796 = vdwg.mxu0
    %v813 = vunpack.c.l.b16 %v665
    %v814 = vunpack.c.l.b16 %v666
    %v815 = vunpack.c.l.b16 %v667
    %v816 = vunpack.c.l.b16 %v668
    %v817 = vunpack.c.l.b16 %v669
    %v818 = vunpack.c.l.b16 %v670
    %v819 = vunpack.c.l.b16 %v671
    %v820 = vunpack.c.l.b16 %v672
    %v821 = vunpack.c.l.b16 %v673
    %v822 = vunpack.c.l.b16 %v674
    %v823 = vunpack.c.l.b16 %v675
    %v824 = vunpack.c.l.b16 %v676
    %v825 = vunpack.c.l.b16 %v677
    %v826 = vunpack.c.l.b16 %v678
    %v827 = vunpack.c.l.b16 %v679
    %v828 = vunpack.c.l.b16 %v680
    %v829 = vpack.c.b16 %v814, %v813
    %v830 = vpack.c.b16 %v816, %v815
    %v831 = vpack.c.b16 %v818, %v817
    %v832 = vpack.c.b16 %v820, %v819
    %v833 = vpack.c.b16 %v822, %v821
    %v834 = vpack.c.b16 %v824, %v823
    %v835 = vpack.c.b16 %v826, %v825
    %v836 = vpack.c.b16 %v828, %v827
    %845 = vmatprep.subr.bf16.mxu0 0
    %846 = vmatpush1.bf16.msra.mxu0 %v836
    %847 = vmatprep.subr.bf16.mxu0 0
    %848 = vmatpush1.bf16.msra.mxu0 %v835
    %849 = vmatprep.subr.bf16.mxu0 0
    %850 = vmatpush1.bf16.msra.mxu0 %v834
    %851 = vmatprep.subr.bf16.mxu0 0
    %852 = vmatpush1.bf16.msra.mxu0 %v833
    %853 = vmatprep.subr.bf16.mxu0 0
    %854 = vmatpush1.bf16.msra.mxu0 %v832
    %855 = vmatprep.subr.bf16.mxu0 0
    %856 = vmatpush1.bf16.msra.mxu0 %v831
    %857 = vmatprep.subr.bf16.mxu0 0
    %858 = vmatpush1.bf16.msra.mxu0 %v830
    %859 = vmatprep.subr.bf16.mxu0 0
    %860 = vmatpush1.bf16.msra.mxu0 %v829
    %861 = vmatprep.subr.bf16.mxu0 0
    %862 = vmatpush2.bf16.msra.mxu0 0
    %863 = vmatprep.subr.bf16.mxu0 0
    %864 = vmatpush2.bf16.msra.mxu0 0
    %865 = vmatprep.subr.bf16.mxu0 0
    %866 = vmatpush2.bf16.msra.mxu0 0
    %867 = vmatprep.subr.bf16.mxu0 0
    %868 = vmatpush2.bf16.msra.mxu0 0
    %869 = vmatprep.subr.bf16.mxu0 0
    %870 = vmatpush2.bf16.msra.mxu0 0
    %871 = vmatprep.subr.bf16.mxu0 0
    %872 = vmatpush2.bf16.msra.mxu0 0
    %873 = vmatprep.subr.bf16.mxu0 0
    %874 = vmatpush2.bf16.msra.mxu0 0
    %875 = vmatprep.subr.bf16.mxu0 0
    %876 = vmatpush2.bf16.msra.mxu0 0
    %877 = vmatprep.mubr.bf16.mxu0 0
    %878 = vmatmul.mubr.bf16.gmra.mxu0 %v663
    %v879 = vpop.f32.mrf.mxu0
    %v880 = vadd.f32 %v783, %v879
    %v881 = vpop.f32.mrf.mxu0
    %v882 = vpop.f32.mrf.mxu0
    %v883 = vadd.f32 %v786, %v882
    %v884 = vpop.f32.mrf.mxu0
    %885 = vmatprep.mubr.bf16.mxu0 0
    %886 = vmatmul.mubr.bf16.gmra.mxu0 %v664
    %v887 = vpop.f32.mrf.mxu0
    %v888 = vadd.f32 %v791, %v887
    %v889 = vpop.f32.mrf.mxu0
    %v890 = vpop.f32.mrf.mxu0
    %v891 = vadd.f32 %v794, %v890
    %v892 = vpop.f32.mrf.mxu0
    %893 = vdwg.mxu0
    %v894 = vpack.c.bf16 %v631, %v629
    %v895 = vpack.c.bf16 %v643, %v641
    %s896 = scalar_lea.vmem [#allocation7], 128
    %v897 = vld [vmem:[%s896] sm:$0xf]
    %v898 = vld [vmem:[%s896 + $0x4] sm:$0xf]
    %v899 = vld [vmem:[%s896 + $0x8] sm:$0xf]
    %v900 = vld [vmem:[%s896 + $0xc] sm:$0xf]
    %v901 = vld [vmem:[%s896 + $0x10] sm:$0xf]
    %v902 = vld [vmem:[%s896 + $0x14] sm:$0xf]
    %v903 = vld [vmem:[%s896 + $0x18] sm:$0xf]
    %v904 = vld [vmem:[%s896 + $0x1c] sm:$0xf]
    %v905 = vld [vmem:[%s896 + $0x20] sm:$0xf]
    %v906 = vld [vmem:[%s896 + $0x24] sm:$0xf]
    %v907 = vld [vmem:[%s896 + $0x28] sm:$0xf]
    %v908 = vld [vmem:[%s896 + $0x2c] sm:$0xf]
    %v909 = vld [vmem:[%s896 + $0x30] sm:$0xf]
    %v910 = vld [vmem:[%s896 + $0x34] sm:$0xf]
    %v911 = vld [vmem:[%s896 + $0x38] sm:$0xf]
    %v912 = vld [vmem:[%s896 + $0x3c] sm:$0xf]
    %v929 = vunpack.c.l.b16 %v897
    %v930 = vunpack.c.l.b16 %v898
    %v931 = vunpack.c.l.b16 %v899
    %v932 = vunpack.c.l.b16 %v900
    %v933 = vunpack.c.l.b16 %v901
    %v934 = vunpack.c.l.b16 %v902
    %v935 = vunpack.c.l.b16 %v903
    %v936 = vunpack.c.l.b16 %v904
    %v937 = vunpack.c.l.b16 %v905
    %v938 = vunpack.c.l.b16 %v906
    %v939 = vunpack.c.l.b16 %v907
    %v940 = vunpack.c.l.b16 %v908
    %v941 = vunpack.c.l.b16 %v909
    %v942 = vunpack.c.l.b16 %v910
    %v943 = vunpack.c.l.b16 %v911
    %v944 = vunpack.c.l.b16 %v912
    %v945 = vpack.c.b16 %v930, %v929
    %v946 = vpack.c.b16 %v932, %v931
    %v947 = vpack.c.b16 %v934, %v933
    %v948 = vpack.c.b16 %v936, %v935
    %v949 = vpack.c.b16 %v938, %v937
    %v950 = vpack.c.b16 %v940, %v939
    %v951 = vpack.c.b16 %v942, %v941
    %v952 = vpack.c.b16 %v944, %v943
    %961 = vmatprep.subr.bf16.mxu0 0
    %962 = vmatpush1.bf16.msra.mxu0 %v952
    %963 = vmatprep.subr.bf16.mxu0 0
    %964 = vmatpush1.bf16.msra.mxu0 %v951
    %965 = vmatprep.subr.bf16.mxu0 0
    %966 = vmatpush1.bf16.msra.mxu0 %v950
    %967 = vmatprep.subr.bf16.mxu0 0
    %968 = vmatpush1.bf16.msra.mxu0 %v949
    %969 = vmatprep.subr.bf16.mxu0 0
    %970 = vmatpush1.bf16.msra.mxu0 %v948
    %971 = vmatprep.subr.bf16.mxu0 0
    %972 = vmatpush1.bf16.msra.mxu0 %v947
    %973 = vmatprep.subr.bf16.mxu0 0
    %974 = vmatpush1.bf16.msra.mxu0 %v946
    %975 = vmatprep.subr.bf16.mxu0 0
    %976 = vmatpush1.bf16.msra.mxu0 %v945
    %977 = vmatprep.subr.bf16.mxu0 0
    %978 = vmatpush2.bf16.msra.mxu0 0
    %979 = vmatprep.subr.bf16.mxu0 0
    %980 = vmatpush2.bf16.msra.mxu0 0
    %981 = vmatprep.subr.bf16.mxu0 0
    %982 = vmatpush2.bf16.msra.mxu0 0
    %983 = vmatprep.subr.bf16.mxu0 0
    %984 = vmatpush2.bf16.msra.mxu0 0
    %985 = vmatprep.subr.bf16.mxu0 0
    %986 = vmatpush2.bf16.msra.mxu0 0
    %987 = vmatprep.subr.bf16.mxu0 0
    %988 = vmatpush2.bf16.msra.mxu0 0
    %989 = vmatprep.subr.bf16.mxu0 0
    %990 = vmatpush2.bf16.msra.mxu0 0
    %991 = vmatprep.subr.bf16.mxu0 0
    %992 = vmatpush2.bf16.msra.mxu0 0
    %993 = vmatprep.mubr.bf16.mxu0 0
    %994 = vmatmul.mubr.bf16.gmra.mxu0 %v894
    %v995 = vpop.f32.mrf.mxu0
    %v996 = vadd.f32 0.0, %v995
    %v997 = vpop.f32.mrf.mxu0
    %v998 = vpop.f32.mrf.mxu0
    %v999 = vadd.f32 0.0, %v998
    %v1000 = vpop.f32.mrf.mxu0
    %1001 = vmatprep.mubr.bf16.mxu0 0
    %1002 = vmatmul.mubr.bf16.gmra.mxu0 %v895
    %v1003 = vpop.f32.mrf.mxu0
    %v1004 = vadd.f32 0.0, %v1003
    %v1005 = vpop.f32.mrf.mxu0
    %v1006 = vpop.f32.mrf.mxu0
    %v1007 = vadd.f32 0.0, %v1006
    %v1008 = vpop.f32.mrf.mxu0
    %1009 = vdwg.mxu0
    %v1010 = vadd.f32 %v880, %v996
    %v1011 = vadd.f32 %v883, %v999
    %v1012 = vadd.f32 %v888, %v1004
    %v1013 = vadd.f32 %v891, %v1007
    %v1014 = vpack.c.bf16 %v632, %v630
    %v1015 = vpack.c.bf16 %v644, %v642
    %s1016 = scalar_lea.vmem [#allocation7], 192
    %v1017 = vld [vmem:[%s1016] sm:$0xf]
    %v1018 = vld [vmem:[%s1016 + $0x4] sm:$0xf]
    %v1019 = vld [vmem:[%s1016 + $0x8] sm:$0xf]
    %v1020 = vld [vmem:[%s1016 + $0xc] sm:$0xf]
    %v1021 = vld [vmem:[%s1016 + $0x10] sm:$0xf]
    %v1022 = vld [vmem:[%s1016 + $0x14] sm:$0xf]
    %v1023 = vld [vmem:[%s1016 + $0x18] sm:$0xf]
    %v1024 = vld [vmem:[%s1016 + $0x1c] sm:$0xf]
    %v1025 = vld [vmem:[%s1016 + $0x20] sm:$0xf]
    %v1026 = vld [vmem:[%s1016 + $0x24] sm:$0xf]
    %v1027 = vld [vmem:[%s1016 + $0x28] sm:$0xf]
    %v1028 = vld [vmem:[%s1016 + $0x2c] sm:$0xf]
    %v1029 = vld [vmem:[%s1016 + $0x30] sm:$0xf]
    %v1030 = vld [vmem:[%s1016 + $0x34] sm:$0xf]
    %v1031 = vld [vmem:[%s1016 + $0x38] sm:$0xf]
    %v1032 = vld [vmem:[%s1016 + $0x3c] sm:$0xf]
    %v1049 = vunpack.c.l.b16 %v1017
    %v1050 = vunpack.c.l.b16 %v1018
    %v1051 = vunpack.c.l.b16 %v1019
    %v1052 = vunpack.c.l.b16 %v1020
    %v1053 = vunpack.c.l.b16 %v1021
    %v1054 = vunpack.c.l.b16 %v1022
    %v1055 = vunpack.c.l.b16 %v1023
    %v1056 = vunpack.c.l.b16 %v1024
    %v1057 = vunpack.c.l.b16 %v1025
    %v1058 = vunpack.c.l.b16 %v1026
    %v1059 = vunpack.c.l.b16 %v1027
    %v1060 = vunpack.c.l.b16 %v1028
    %v1061 = vunpack.c.l.b16 %v1029
    %v1062 = vunpack.c.l.b16 %v1030
    %v1063 = vunpack.c.l.b16 %v1031
    %v1064 = vunpack.c.l.b16 %v1032
    %v1065 = vpack.c.b16 %v1050, %v1049
    %v1066 = vpack.c.b16 %v1052, %v1051
    %v1067 = vpack.c.b16 %v1054, %v1053
    %v1068 = vpack.c.b16 %v1056, %v1055
    %v1069 = vpack.c.b16 %v1058, %v1057
    %v1070 = vpack.c.b16 %v1060, %v1059
    %v1071 = vpack.c.b16 %v1062, %v1061
    %v1072 = vpack.c.b16 %v1064, %v1063
    %1081 = vmatprep.subr.bf16.mxu0 0
    %1082 = vmatpush1.bf16.msra.mxu0 %v1072
    %1083 = vmatprep.subr.bf16.mxu0 0
    %1084 = vmatpush1.bf16.msra.mxu0 %v1071
    %1085 = vmatprep.subr.bf16.mxu0 0
    %1086 = vmatpush1.bf16.msra.mxu0 %v1070
    %1087 = vmatprep.subr.bf16.mxu0 0
    %1088 = vmatpush1.bf16.msra.mxu0 %v1069
    %1089 = vmatprep.subr.bf16.mxu0 0
    %1090 = vmatpush1.bf16.msra.mxu0 %v1068
    %1091 = vmatprep.subr.bf16.mxu0 0
    %1092 = vmatpush1.bf16.msra.mxu0 %v1067
    %1093 = vmatprep.subr.bf16.mxu0 0
    %1094 = vmatpush1.bf16.msra.mxu0 %v1066
    %1095 = vmatprep.subr.bf16.mxu0 0
    %1096 = vmatpush1.bf16.msra.mxu0 %v1065
    %1097 = vmatprep.subr.bf16.mxu0 0
    %1098 = vmatpush2.bf16.msra.mxu0 0
    %1099 = vmatprep.subr.bf16.mxu0 0
    %1100 = vmatpush2.bf16.msra.mxu0 0
    %1101 = vmatprep.subr.bf16.mxu0 0
    %1102 = vmatpush2.bf16.msra.mxu0 0
    %1103 = vmatprep.subr.bf16.mxu0 0
    %1104 = vmatpush2.bf16.msra.mxu0 0
    %1105 = vmatprep.subr.bf16.mxu0 0
    %1106 = vmatpush2.bf16.msra.mxu0 0
    %1107 = vmatprep.subr.bf16.mxu0 0
    %1108 = vmatpush2.bf16.msra.mxu0 0
    %1109 = vmatprep.subr.bf16.mxu0 0
    %1110 = vmatpush2.bf16.msra.mxu0 0
    %1111 = vmatprep.subr.bf16.mxu0 0
    %1112 = vmatpush2.bf16.msra.mxu0 0
    %1113 = vmatprep.mubr.bf16.mxu0 0
    %1114 = vmatmul.mubr.bf16.gmra.mxu0 %v1014
    %v1115 = vpop.f32.mrf.mxu0
    %v1116 = vadd.f32 0.0, %v1115
    %v1117 = vpop.f32.mrf.mxu0
    %v1118 = vpop.f32.mrf.mxu0
    %v1119 = vadd.f32 0.0, %v1118
    %v1120 = vpop.f32.mrf.mxu0
    %1121 = vmatprep.mubr.bf16.mxu0 0
    %1122 = vmatmul.mubr.bf16.gmra.mxu0 %v1015
    %v1123 = vpop.f32.mrf.mxu0
    %v1124 = vadd.f32 0.0, %v1123
    %v1125 = vpop.f32.mrf.mxu0
    %v1126 = vpop.f32.mrf.mxu0
    %v1127 = vadd.f32 0.0, %v1126
    %v1128 = vpop.f32.mrf.mxu0
    %1129 = vdwg.mxu0
    %v1130 = vadd.f32 %v1010, %v1116
    %v1131 = vadd.f32 %v1011, %v1119
    %v1132 = vadd.f32 %v1012, %v1124
    %v1133 = vadd.f32 %v1013, %v1127
    %v1134 = vpack.c.bf16 %v635, %v633
    %v1135 = vpack.c.bf16 %v647, %v645
    %s1136 = scalar_lea.vmem [#allocation7], 256
    %v1137 = vld [vmem:[%s1136] sm:$0xf]
    %v1138 = vld [vmem:[%s1136 + $0x4] sm:$0xf]
    %v1139 = vld [vmem:[%s1136 + $0x8] sm:$0xf]
    %v1140 = vld [vmem:[%s1136 + $0xc] sm:$0xf]
    %v1141 = vld [vmem:[%s1136 + $0x10] sm:$0xf]
    %v1142 = vld [vmem:[%s1136 + $0x14] sm:$0xf]
    %v1143 = vld [vmem:[%s1136 + $0x18] sm:$0xf]
    %v1144 = vld [vmem:[%s1136 + $0x1c] sm:$0xf]
    %v1145 = vld [vmem:[%s1136 + $0x20] sm:$0xf]
    %v1146 = vld [vmem:[%s1136 + $0x24] sm:$0xf]
    %v1147 = vld [vmem:[%s1136 + $0x28] sm:$0xf]
    %v1148 = vld [vmem:[%s1136 + $0x2c] sm:$0xf]
    %v1149 = vld [vmem:[%s1136 + $0x30] sm:$0xf]
    %v1150 = vld [vmem:[%s1136 + $0x34] sm:$0xf]
    %v1151 = vld [vmem:[%s1136 + $0x38] sm:$0xf]
    %v1152 = vld [vmem:[%s1136 + $0x3c] sm:$0xf]
    %v1169 = vunpack.c.l.b16 %v1137
    %v1170 = vunpack.c.l.b16 %v1138
    %v1171 = vunpack.c.l.b16 %v1139
    %v1172 = vunpack.c.l.b16 %v1140
    %v1173 = vunpack.c.l.b16 %v1141
    %v1174 = vunpack.c.l.b16 %v1142
    %v1175 = vunpack.c.l.b16 %v1143
    %v1176 = vunpack.c.l.b16 %v1144
    %v1177 = vunpack.c.l.b16 %v1145
    %v1178 = vunpack.c.l.b16 %v1146
    %v1179 = vunpack.c.l.b16 %v1147
    %v1180 = vunpack.c.l.b16 %v1148
    %v1181 = vunpack.c.l.b16 %v1149
    %v1182 = vunpack.c.l.b16 %v1150
    %v1183 = vunpack.c.l.b16 %v1151
    %v1184 = vunpack.c.l.b16 %v1152
    %v1185 = vpack.c.b16 %v1170, %v1169
    %v1186 = vpack.c.b16 %v1172, %v1171
    %v1187 = vpack.c.b16 %v1174, %v1173
    %v1188 = vpack.c.b16 %v1176, %v1175
    %v1189 = vpack.c.b16 %v1178, %v1177
    %v1190 = vpack.c.b16 %v1180, %v1179
    %v1191 = vpack.c.b16 %v1182, %v1181
    %v1192 = vpack.c.b16 %v1184, %v1183
    %1201 = vmatprep.subr.bf16.mxu0 0
    %1202 = vmatpush1.bf16.msra.mxu0 %v1192
    %1203 = vmatprep.subr.bf16.mxu0 0
    %1204 = vmatpush1.bf16.msra.mxu0 %v1191
    %1205 = vmatprep.subr.bf16.mxu0 0
    %1206 = vmatpush1.bf16.msra.mxu0 %v1190
    %1207 = vmatprep.subr.bf16.mxu0 0
    %1208 = vmatpush1.bf16.msra.mxu0 %v1189
    %1209 = vmatprep.subr.bf16.mxu0 0
    %1210 = vmatpush1.bf16.msra.mxu0 %v1188
    %1211 = vmatprep.subr.bf16.mxu0 0
    %1212 = vmatpush1.bf16.msra.mxu0 %v1187
    %1213 = vmatprep.subr.bf16.mxu0 0
    %1214 = vmatpush1.bf16.msra.mxu0 %v1186
    %1215 = vmatprep.subr.bf16.mxu0 0
    %1216 = vmatpush1.bf16.msra.mxu0 %v1185
    %1217 = vmatprep.subr.bf16.mxu0 0
    %1218 = vmatpush2.bf16.msra.mxu0 0
    %1219 = vmatprep.subr.bf16.mxu0 0
    %1220 = vmatpush2.bf16.msra.mxu0 0
    %1221 = vmatprep.subr.bf16.mxu0 0
    %1222 = vmatpush2.bf16.msra.mxu0 0
    %1223 = vmatprep.subr.bf16.mxu0 0
    %1224 = vmatpush2.bf16.msra.mxu0 0
    %1225 = vmatprep.subr.bf16.mxu0 0
    %1226 = vmatpush2.bf16.msra.mxu0 0
    %1227 = vmatprep.subr.bf16.mxu0 0
    %1228 = vmatpush2.bf16.msra.mxu0 0
    %1229 = vmatprep.subr.bf16.mxu0 0
    %1230 = vmatpush2.bf16.msra.mxu0 0
    %1231 = vmatprep.subr.bf16.mxu0 0
    %1232 = vmatpush2.bf16.msra.mxu0 0
    %1233 = vmatprep.mubr.bf16.mxu0 0
    %1234 = vmatmul.mubr.bf16.gmra.mxu0 %v1134
    %v1235 = vpop.f32.mrf.mxu0
    %v1236 = vadd.f32 0.0, %v1235
    %v1237 = vpop.f32.mrf.mxu0
    %v1238 = vpop.f32.mrf.mxu0
    %v1239 = vadd.f32 0.0, %v1238
    %v1240 = vpop.f32.mrf.mxu0
    %1241 = vmatprep.mubr.bf16.mxu0 0
    %1242 = vmatmul.mubr.bf16.gmra.mxu0 %v1135
    %v1243 = vpop.f32.mrf.mxu0
    %v1244 = vadd.f32 0.0, %v1243
    %v1245 = vpop.f32.mrf.mxu0
    %v1246 = vpop.f32.mrf.mxu0
    %v1247 = vadd.f32 0.0, %v1246
    %v1248 = vpop.f32.mrf.mxu0
    %1249 = vdwg.mxu0
    %v1250 = vadd.f32 %v1130, %v1236
    %v1251 = vadd.f32 %v1131, %v1239
    %v1252 = vadd.f32 %v1132, %v1244
    %v1253 = vadd.f32 %v1133, %v1247
    %v1254 = vpack.c.bf16 %v636, %v634
    %v1255 = vpack.c.bf16 %v648, %v646
    %s1256 = scalar_lea.vmem [#allocation7], 320
    %v1257 = vld [vmem:[%s1256] sm:$0xf]
    %v1258 = vld [vmem:[%s1256 + $0x4] sm:$0xf]
    %v1259 = vld [vmem:[%s1256 + $0x8] sm:$0xf]
    %v1260 = vld [vmem:[%s1256 + $0xc] sm:$0xf]
    %v1261 = vld [vmem:[%s1256 + $0x10] sm:$0xf]
    %v1262 = vld [vmem:[%s1256 + $0x14] sm:$0xf]
    %v1263 = vld [vmem:[%s1256 + $0x18] sm:$0xf]
    %v1264 = vld [vmem:[%s1256 + $0x1c] sm:$0xf]
    %v1265 = vld [vmem:[%s1256 + $0x20] sm:$0xf]
    %v1266 = vld [vmem:[%s1256 + $0x24] sm:$0xf]
    %v1267 = vld [vmem:[%s1256 + $0x28] sm:$0xf]
    %v1268 = vld [vmem:[%s1256 + $0x2c] sm:$0xf]
    %v1269 = vld [vmem:[%s1256 + $0x30] sm:$0xf]
    %v1270 = vld [vmem:[%s1256 + $0x34] sm:$0xf]
    %v1271 = vld [vmem:[%s1256 + $0x38] sm:$0xf]
    %v1272 = vld [vmem:[%s1256 + $0x3c] sm:$0xf]
    %v1289 = vunpack.c.l.b16 %v1257
    %v1290 = vunpack.c.l.b16 %v1258
    %v1291 = vunpack.c.l.b16 %v1259
    %v1292 = vunpack.c.l.b16 %v1260
    %v1293 = vunpack.c.l.b16 %v1261
    %v1294 = vunpack.c.l.b16 %v1262
    %v1295 = vunpack.c.l.b16 %v1263
    %v1296 = vunpack.c.l.b16 %v1264
    %v1297 = vunpack.c.l.b16 %v1265
    %v1298 = vunpack.c.l.b16 %v1266
    %v1299 = vunpack.c.l.b16 %v1267
    %v1300 = vunpack.c.l.b16 %v1268
    %v1301 = vunpack.c.l.b16 %v1269
    %v1302 = vunpack.c.l.b16 %v1270
    %v1303 = vunpack.c.l.b16 %v1271
    %v1304 = vunpack.c.l.b16 %v1272
    %v1305 = vpack.c.b16 %v1290, %v1289
    %v1306 = vpack.c.b16 %v1292, %v1291
    %v1307 = vpack.c.b16 %v1294, %v1293
    %v1308 = vpack.c.b16 %v1296, %v1295
    %v1309 = vpack.c.b16 %v1298, %v1297
    %v1310 = vpack.c.b16 %v1300, %v1299
    %v1311 = vpack.c.b16 %v1302, %v1301
    %v1312 = vpack.c.b16 %v1304, %v1303
    %1321 = vmatprep.subr.bf16.mxu0 0
    %1322 = vmatpush1.bf16.msra.mxu0 %v1312
    %1323 = vmatprep.subr.bf16.mxu0 0
    %1324 = vmatpush1.bf16.msra.mxu0 %v1311
    %1325 = vmatprep.subr.bf16.mxu0 0
    %1326 = vmatpush1.bf16.msra.mxu0 %v1310
    %1327 = vmatprep.subr.bf16.mxu0 0
    %1328 = vmatpush1.bf16.msra.mxu0 %v1309
    %1329 = vmatprep.subr.bf16.mxu0 0
    %1330 = vmatpush1.bf16.msra.mxu0 %v1308
    %1331 = vmatprep.subr.bf16.mxu0 0
    %1332 = vmatpush1.bf16.msra.mxu0 %v1307
    %1333 = vmatprep.subr.bf16.mxu0 0
    %1334 = vmatpush1.bf16.msra.mxu0 %v1306
    %1335 = vmatprep.subr.bf16.mxu0 0
    %1336 = vmatpush1.bf16.msra.mxu0 %v1305
    %1337 = vmatprep.subr.bf16.mxu0 0
    %1338 = vmatpush2.bf16.msra.mxu0 0
    %1339 = vmatprep.subr.bf16.mxu0 0
    %1340 = vmatpush2.bf16.msra.mxu0 0
    %1341 = vmatprep.subr.bf16.mxu0 0
    %1342 = vmatpush2.bf16.msra.mxu0 0
    %1343 = vmatprep.subr.bf16.mxu0 0
    %1344 = vmatpush2.bf16.msra.mxu0 0
    %1345 = vmatprep.subr.bf16.mxu0 0
    %1346 = vmatpush2.bf16.msra.mxu0 0
    %1347 = vmatprep.subr.bf16.mxu0 0
    %1348 = vmatpush2.bf16.msra.mxu0 0
    %1349 = vmatprep.subr.bf16.mxu0 0
    %1350 = vmatpush2.bf16.msra.mxu0 0
    %1351 = vmatprep.subr.bf16.mxu0 0
    %1352 = vmatpush2.bf16.msra.mxu0 0
    %1353 = vmatprep.mubr.bf16.mxu0 0
    %1354 = vmatmul.mubr.bf16.gmra.mxu0 %v1254
    %v1355 = vpop.f32.mrf.mxu0
    %v1356 = vadd.f32 0.0, %v1355
    %v1357 = vpop.f32.mrf.mxu0
    %v1358 = vpop.f32.mrf.mxu0
    %v1359 = vadd.f32 0.0, %v1358
    %v1360 = vpop.f32.mrf.mxu0
    %1361 = vmatprep.mubr.bf16.mxu0 0
    %1362 = vmatmul.mubr.bf16.gmra.mxu0 %v1255
    %v1363 = vpop.f32.mrf.mxu0
    %v1364 = vadd.f32 0.0, %v1363
    %v1365 = vpop.f32.mrf.mxu0
    %v1366 = vpop.f32.mrf.mxu0
    %v1367 = vadd.f32 0.0, %v1366
    %v1368 = vpop.f32.mrf.mxu0
    %1369 = vdwg.mxu0
    %v1370 = vadd.f32 %v1250, %v1356
    %v1371 = vadd.f32 %v1251, %v1359
    %v1372 = vadd.f32 %v1252, %v1364
    %v1373 = vadd.f32 %v1253, %v1367
    %v1374 = vpack.c.bf16 %v637, %v635
    %v1375 = vpack.c.bf16 %v649, %v647
    %s1376 = scalar_lea.vmem [#allocation7], 384
    %v1377 = vld [vmem:[%s1376] sm:$0xf]
    %v1378 = vld [vmem:[%s1376 + $0x4] sm:$0xf]
    %v1379 = vld [vmem:[%s1376 + $0x8] sm:$0xf]
    %v1380 = vld [vmem:[%s1376 + $0xc] sm:$0xf]
    %v1381 = vld [vmem:[%s1376 + $0x10] sm:$0xf]
    %v1382 = vld [vmem:[%s1376 + $0x14] sm:$0xf]
    %v1383 = vld [vmem:[%s1376 + $0x18] sm:$0xf]
    %v1384 = vld [vmem:[%s1376 + $0x1c] sm:$0xf]
    %v1385 = vld [vmem:[%s1376 + $0x20] sm:$0xf]
    %v1386 = vld [vmem:[%s1376 + $0x24] sm:$0xf]
    %v1387 = vld [vmem:[%s1376 + $0x28] sm:$0xf]
    %v1388 = vld [vmem:[%s1376 + $0x2c] sm:$0xf]
    %v1389 = vld [vmem:[%s1376 + $0x30] sm:$0xf]
    %v1390 = vld [vmem:[%s1376 + $0x34] sm:$0xf]
    %v1391 = vld [vmem:[%s1376 + $0x38] sm:$0xf]
    %v1392 = vld [vmem:[%s1376 + $0x3c] sm:$0xf]
    %v1409 = vunpack.c.l.b16 %v1377
    %v1410 = vunpack.c.l.b16 %v1378
    %v1411 = vunpack.c.l.b16 %v1379
    %v1412 = vunpack.c.l.b16 %v1380
    %v1413 = vunpack.c.l.b16 %v1381
    %v1414 = vunpack.c.l.b16 %v1382
    %v1415 = vunpack.c.l.b16 %v1383
    %v1416 = vunpack.c.l.b16 %v1384
    %v1417 = vunpack.c.l.b16 %v1385
    %v1418 = vunpack.c.l.b16 %v1386
    %v1419 = vunpack.c.l.b16 %v1387
    %v1420 = vunpack.c.l.b16 %v1388
    %v1421 = vunpack.c.l.b16 %v1389
    %v1422 = vunpack.c.l.b16 %v1390
    %v1423 = vunpack.c.l.b16 %v1391
    %v1424 = vunpack.c.l.b16 %v1392
    %v1425 = vpack.c.b16 %v1410, %v1409
    %v1426 = vpack.c.b16 %v1412, %v1411
    %v1427 = vpack.c.b16 %v1414, %v1413
    %v1428 = vpack.c.b16 %v1416, %v1415
    %v1429 = vpack.c.b16 %v1418, %v1417
    %v1430 = vpack.c.b16 %v1420, %v1419
    %v1431 = vpack.c.b16 %v1422, %v1421
    %v1432 = vpack.c.b16 %v1424, %v1423
    %1441 = vmatprep.subr.bf16.mxu0 0
    %1442 = vmatpush1.bf16.msra.mxu0 %v1432
    %1443 = vmatprep.subr.bf16.mxu0 0
    %1444 = vmatpush1.bf16.msra.mxu0 %v1431
    %1445 = vmatprep.subr.bf16.mxu0 0
    %1446 = vmatpush1.bf16.msra.mxu0 %v1430
    %1447 = vmatprep.subr.bf16.mxu0 0
    %1448 = vmatpush1.bf16.msra.mxu0 %v1429
    %1449 = vmatprep.subr.bf16.mxu0 0
    %1450 = vmatpush1.bf16.msra.mxu0 %v1428
    %1451 = vmatprep.subr.bf16.mxu0 0
    %1452 = vmatpush1.bf16.msra.mxu0 %v1427
    %1453 = vmatprep.subr.bf16.mxu0 0
    %1454 = vmatpush1.bf16.msra.mxu0 %v1426
    %1455 = vmatprep.subr.bf16.mxu0 0
    %1456 = vmatpush1.bf16.msra.mxu0 %v1425
    %1457 = vmatprep.subr.bf16.mxu0 0
    %1458 = vmatpush2.bf16.msra.mxu0 0
    %1459 = vmatprep.subr.bf16.mxu0 0
    %1460 = vmatpush2.bf16.msra.mxu0 0
    %1461 = vmatprep.subr.bf16.mxu0 0
    %1462 = vmatpush2.bf16.msra.mxu0 0
    %1463 = vmatprep.subr.bf16.mxu0 0
    %1464 = vmatpush2.bf16.msra.mxu0 0
    %1465 = vmatprep.subr.bf16.mxu0 0
    %1466 = vmatpush2.bf16.msra.mxu0 0
    %1467 = vmatprep.subr.bf16.mxu0 0
    %1468 = vmatpush2.bf16.msra.mxu0 0
    %1469 = vmatprep.subr.bf16.mxu0 0
    %1470 = vmatpush2.bf16.msra.mxu0 0
    %1471 = vmatprep.subr.bf16.mxu0 0
    %1472 = vmatpush2.bf16.msra.mxu0 0
    %1473 = vmatprep.mubr.bf16.mxu0 0
    %1474 = vmatmul.mubr.bf16.gmra.mxu0 %v1374
    %v1475 = vpop.f32.mrf.mxu0
    %v1476 = vadd.f32 0.0, %v1475
    %v1477 = vpop.f32.mrf.mxu0
    %v1478 = vpop.f32.mrf.mxu0
    %v1479 = vadd.f32 0.0, %v1478
    %v1480 = vpop.f32.mrf.mxu0
    %1481 = vmatprep.mubr.bf16.mxu0 0
    %1482 = vmatmul.mubr.bf16.gmra.mxu0 %v1375
    %v1483 = vpop.f32.mrf.mxu0
    %v1484 = vadd.f32 0.0, %v1483
    %v1485 = vpop.f32.mrf.mxu0
    %v1486 = vpop.f32.mrf.mxu0
    %v1487 = vadd.f32 0.0, %v1486
    %v1488 = vpop.f32.mrf.mxu0
    %1489 = vdwg.mxu0
    %v1490 = vadd.f32 %v1370, %v1476
    %v1491 = vadd.f32 %v1371, %v1479
    %v1492 = vadd.f32 %v1372, %v1484
    %v1493 = vadd.f32 %v1373, %v1487
    %v1494 = vpack.c.bf16 %v638, %v636
    %v1495 = vpack.c.bf16 %v650, %v648
    %s1496 = scalar_lea.vmem [#allocation7], 448
    %v1497 = vld [vmem:[%s1496] sm:$0xf]
    %v1498 = vld [vmem:[%s1496 + $0x4] sm:$0xf]
    %v1499 = vld [vmem:[%s1496 + $0x8] sm:$0xf]
    %v1500 = vld [vmem:[%s1496 + $0xc] sm:$0xf]
    %v1501 = vld [vmem:[%s1496 + $0x10] sm:$0xf]
    %v1502 = vld [vmem:[%s1496 + $0x14] sm:$0xf]
    %v1503 = vld [vmem:[%s1496 + $0x18] sm:$0xf]
    %v1504 = vld [vmem:[%s1496 + $0x1c] sm:$0xf]
    %v1505 = vld [vmem:[%s1496 + $0x20] sm:$0xf]
    %v1506 = vld [vmem:[%s1496 + $0x24] sm:$0xf]
    %v1507 = vld [vmem:[%s1496 + $0x28] sm:$0xf]
    %v1508 = vld [vmem:[%s1496 + $0x2c] sm:$0xf]
    %v1509 = vld [vmem:[%s1496 + $0x30] sm:$0xf]
    %v1510 = vld [vmem:[%s1496 + $0x34] sm:$0xf]
    %v1511 = vld [vmem:[%s1496 + $0x38] sm:$0xf]
    %v1512 = vld [vmem:[%s1496 + $0x3c] sm:$0xf]
    %v1529 = vunpack.c.l.b16 %v1497
    %v1530 = vunpack.c.l.b16 %v1498
    %v1531 = vunpack.c.l.b16 %v1499
    %v1532 = vunpack.c.l.b16 %v1500
    %v1533 = vunpack.c.l.b16 %v1501
    %v1534 = vunpack.c.l.b16 %v1502
    %v1535 = vunpack.c.l.b16 %v1503
    %v1536 = vunpack.c.l.b16 %v1504
    %v1537 = vunpack.c.l.b16 %v1505
    %v1538 = vunpack.c.l.b16 %v1506
    %v1539 = vunpack.c.l.b16 %v1507
    %v1540 = vunpack.c.l.b16 %v1508
    %v1541 = vunpack.c.l.b16 %v1509
    %v1542 = vunpack.c.l.b16 %v1510
    %v1543 = vunpack.c.l.b16 %v1511
    %v1544 = vunpack.c.l.b16 %v1512
    %v1545 = vpack.c.b16 %v1530, %v1529
    %v1546 = vpack.c.b16 %v1532, %v1531
    %v1547 = vpack.c.b16 %v1534, %v1533
    %v1548 = vpack.c.b16 %v1536, %v1535
    %v1549 = vpack.c.b16 %v1538, %v1537
    %v1550 = vpack.c.b16 %v1540, %v1539
    %v1551 = vpack.c.b16 %v1542, %v1541
    %v1552 = vpack.c.b16 %v1544, %v1543
    %1561 = vmatprep.subr.bf16.mxu0 0
    %1562 = vmatpush1.bf16.msra.mxu0 %v1552
    %1563 = vmatprep.subr.bf16.mxu0 0
    %1564 = vmatpush1.bf16.msra.mxu0 %v1551
    %1565 = vmatprep.subr.bf16.mxu0 0
    %1566 = vmatpush1.bf16.msra.mxu0 %v1550
    %1567 = vmatprep.subr.bf16.mxu0 0
    %1568 = vmatpush1.bf16.msra.mxu0 %v1549
    %1569 = vmatprep.subr.bf16.mxu0 0
    %1570 = vmatpush1.bf16.msra.mxu0 %v1548
    %1571 = vmatprep.subr.bf16.mxu0 0
    %1572 = vmatpush1.bf16.msra.mxu0 %v1547
    %1573 = vmatprep.subr.bf16.mxu0 0
    %1574 = vmatpush1.bf16.msra.mxu0 %v1546
    %1575 = vmatprep.subr.bf16.mxu0 0
    %1576 = vmatpush1.bf16.msra.mxu0 %v1545
    %1577 = vmatprep.subr.bf16.mxu0 0
    %1578 = vmatpush2.bf16.msra.mxu0 0
    %1579 = vmatprep.subr.bf16.mxu0 0
    %1580 = vmatpush2.bf16.msra.mxu0 0
    %1581 = vmatprep.subr.bf16.mxu0 0
    %1582 = vmatpush2.bf16.msra.mxu0 0
    %1583 = vmatprep.subr.bf16.mxu0 0
    %1584 = vmatpush2.bf16.msra.mxu0 0
    %1585 = vmatprep.subr.bf16.mxu0 0
    %1586 = vmatpush2.bf16.msra.mxu0 0
    %1587 = vmatprep.subr.bf16.mxu0 0
    %1588 = vmatpush2.bf16.msra.mxu0 0
    %1589 = vmatprep.subr.bf16.mxu0 0
    %1590 = vmatpush2.bf16.msra.mxu0 0
    %1591 = vmatprep.subr.bf16.mxu0 0
    %1592 = vmatpush2.bf16.msra.mxu0 0
    %1593 = vmatprep.mubr.bf16.mxu0 0
    %1594 = vmatmul.mubr.bf16.gmra.mxu0 %v1494
    %v1595 = vpop.f32.mrf.mxu0
    %v1596 = vadd.f32 0.0, %v1595
    %v1597 = vpop.f32.mrf.mxu0
    %v1598 = vpop.f32.mrf.mxu0
    %v1599 = vadd.f32 0.0, %v1598
    %v1600 = vpop.f32.mrf.mxu0
    %1601 = vmatprep.mubr.bf16.mxu0 0
    %1602 = vmatmul.mubr.bf16.gmra.mxu0 %v1495
    %v1603 = vpop.f32.mrf.mxu0
    %v1604 = vadd.f32 0.0, %v1603
    %v1605 = vpop.f32.mrf.mxu0
    %v1606 = vpop.f32.mrf.mxu0
    %v1607 = vadd.f32 0.0, %v1606
    %v1608 = vpop.f32.mrf.mxu0
    %1609 = vdwg.mxu0
    %v1610 = vadd.f32 %v1490, %v1596
    %v1611 = vadd.f32 %v1491, %v1599
    %v1612 = vadd.f32 %v1492, %v1604
    %v1613 = vadd.f32 %v1493, %v1607
    %v1614 = vpack.c.bf16 %v653, %v651
    %s1615 = scalar_lea.vmem [#allocation7], 512
    %v1616 = vld [vmem:[%s1615] sm:$0xf]
    %v1617 = vld [vmem:[%s1615 + $0x4] sm:$0xf]
    %v1618 = vld [vmem:[%s1615 + $0x8] sm:$0xf]
    %v1619 = vld [vmem:[%s1615 + $0xc] sm:$0xf]
    %v1620 = vld [vmem:[%s1615 + $0x10] sm:$0xf]
    %v1621 = vld [vmem:[%s1615 + $0x14] sm:$0xf]
    %v1622 = vld [vmem:[%s1615 + $0x18] sm:$0xf]
    %v1623 = vld [vmem:[%s1615 + $0x1c] sm:$0xf]
    %v1624 = vld [vmem:[%s1615 + $0x20] sm:$0xf]
    %v1625 = vld [vmem:[%s1615 + $0x24] sm:$0xf]
    %v1626 = vld [vmem:[%s1615 + $0x28] sm:$0xf]
    %v1627 = vld [vmem:[%s1615 + $0x2c] sm:$0xf]
    %v1628 = vld [vmem:[%s1615 + $0x30] sm:$0xf]
    %v1629 = vld [vmem:[%s1615 + $0x34] sm:$0xf]
    %v1630 = vld [vmem:[%s1615 + $0x38] sm:$0xf]
    %v1631 = vld [vmem:[%s1615 + $0x3c] sm:$0xf]
    %v1648 = vunpack.c.l.b16 %v1616
    %v1649 = vunpack.c.l.b16 %v1617
    %v1650 = vunpack.c.l.b16 %v1618
    %v1651 = vunpack.c.l.b16 %v1619
    %v1652 = vunpack.c.l.b16 %v1620
    %v1653 = vunpack.c.l.b16 %v1621
    %v1654 = vunpack.c.l.b16 %v1622
    %v1655 = vunpack.c.l.b16 %v1623
    %v1656 = vunpack.c.l.b16 %v1624
    %v1657 = vunpack.c.l.b16 %v1625
    %v1658 = vunpack.c.l.b16 %v1626
    %v1659 = vunpack.c.l.b16 %v1627
    %v1660 = vunpack.c.l.b16 %v1628
    %v1661 = vunpack.c.l.b16 %v1629
    %v1662 = vunpack.c.l.b16 %v1630
    %v1663 = vunpack.c.l.b16 %v1631
    %v1664 = vpack.c.b16 %v1649, %v1648
    %v1665 = vpack.c.b16 %v1651, %v1650
    %v1666 = vpack.c.b16 %v1653, %v1652
    %v1667 = vpack.c.b16 %v1655, %v1654
    %v1668 = vpack.c.b16 %v1657, %v1656
    %v1669 = vpack.c.b16 %v1659, %v1658
    %v1670 = vpack.c.b16 %v1661, %v1660
    %v1671 = vpack.c.b16 %v1663, %v1662
    %1680 = vmatprep.subr.bf16.mxu0 0
    %1681 = vmatpush1.bf16.msra.mxu0 %v1671
    %1682 = vmatprep.subr.bf16.mxu0 0
    %1683 = vmatpush1.bf16.msra.mxu0 %v1670
    %1684 = vmatprep.subr.bf16.mxu0 0
    %1685 = vmatpush1.bf16.msra.mxu0 %v1669
    %1686 = vmatprep.subr.bf16.mxu0 0
    %1687 = vmatpush1.bf16.msra.mxu0 %v1668
    %1688 = vmatprep.subr.bf16.mxu0 0
    %1689 = vmatpush1.bf16.msra.mxu0 %v1667
    %1690 = vmatprep.subr.bf16.mxu0 0
    %1691 = vmatpush1.bf16.msra.mxu0 %v1666
    %1692 = vmatprep.subr.bf16.mxu0 0
    %1693 = vmatpush1.bf16.msra.mxu0 %v1665
    %1694 = vmatprep.subr.bf16.mxu0 0
    %1695 = vmatpush1.bf16.msra.mxu0 %v1664
    %1696 = vmatprep.subr.bf16.mxu0 0
    %1697 = vmatpush2.bf16.msra.mxu0 0
    %1698 = vmatprep.subr.bf16.mxu0 0
    %1699 = vmatpush2.bf16.msra.mxu0 0
    %1700 = vmatprep.subr.bf16.mxu0 0
    %1701 = vmatpush2.bf16.msra.mxu0 0
    %1702 = vmatprep.subr.bf16.mxu0 0
    %1703 = vmatpush2.bf16.msra.mxu0 0
    %1704 = vmatprep.subr.bf16.mxu0 0
    %1705 = vmatpush2.bf16.msra.mxu0 0
    %1706 = vmatprep.subr.bf16.mxu0 0
    %1707 = vmatpush2.bf16.msra.mxu0 0
    %1708 = vmatprep.subr.bf16.mxu0 0
    %1709 = vmatpush2.bf16.msra.mxu0 0
    %1710 = vmatprep.subr.bf16.mxu0 0
    %1711 = vmatpush2.bf16.msra.mxu0 0
    %1712 = vmatprep.mubr.bf16.mxu0 0
    %1713 = vmatmul.mubr.bf16.gmra.mxu0 %v664
    %v1714 = vpop.f32.mrf.mxu0
    %v1715 = vadd.f32 0.0, %v1714
    %v1716 = vpop.f32.mrf.mxu0
    %v1717 = vpop.f32.mrf.mxu0
    %v1718 = vadd.f32 0.0, %v1717
    %v1719 = vpop.f32.mrf.mxu0
    %1720 = vmatprep.mubr.bf16.mxu0 0
    %1721 = vmatmul.mubr.bf16.gmra.mxu0 %v1614
    %v1722 = vpop.f32.mrf.mxu0
    %v1723 = vadd.f32 0.0, %v1722
    %v1724 = vpop.f32.mrf.mxu0
    %v1725 = vpop.f32.mrf.mxu0
    %v1726 = vadd.f32 0.0, %v1725
    %v1727 = vpop.f32.mrf.mxu0
    %1728 = vdwg.mxu0
    %v1729 = vadd.f32 %v1610, %v1715
    %v1730 = vadd.f32 %v1611, %v1718
    %v1731 = vadd.f32 %v1612, %v1723
    %v1732 = vadd.f32 %v1613, %v1726
    %v1733 = vpack.c.bf16 %v654, %v652
    %s1734 = scalar_lea.vmem [#allocation7], 576
    %v1735 = vld [vmem:[%s1734] sm:$0xf]
    %v1736 = vld [vmem:[%s1734 + $0x4] sm:$0xf]
    %v1737 = vld [vmem:[%s1734 + $0x8] sm:$0xf]
    %v1738 = vld [vmem:[%s1734 + $0xc] sm:$0xf]
    %v1739 = vld [vmem:[%s1734 + $0x10] sm:$0xf]
    %v1740 = vld [vmem:[%s1734 + $0x14] sm:$0xf]
    %v1741 = vld [vmem:[%s1734 + $0x18] sm:$0xf]
    %v1742 = vld [vmem:[%s1734 + $0x1c] sm:$0xf]
    %v1743 = vld [vmem:[%s1734 + $0x20] sm:$0xf]
    %v1744 = vld [vmem:[%s1734 + $0x24] sm:$0xf]
    %v1745 = vld [vmem:[%s1734 + $0x28] sm:$0xf]
    %v1746 = vld [vmem:[%s1734 + $0x2c] sm:$0xf]
    %v1747 = vld [vmem:[%s1734 + $0x30] sm:$0xf]
    %v1748 = vld [vmem:[%s1734 + $0x34] sm:$0xf]
    %v1749 = vld [vmem:[%s1734 + $0x38] sm:$0xf]
    %v1750 = vld [vmem:[%s1734 + $0x3c] sm:$0xf]
    %v1767 = vunpack.c.l.b16 %v1735
    %v1768 = vunpack.c.l.b16 %v1736
    %v1769 = vunpack.c.l.b16 %v1737
    %v1770 = vunpack.c.l.b16 %v1738
    %v1771 = vunpack.c.l.b16 %v1739
    %v1772 = vunpack.c.l.b16 %v1740
    %v1773 = vunpack.c.l.b16 %v1741
    %v1774 = vunpack.c.l.b16 %v1742
    %v1775 = vunpack.c.l.b16 %v1743
    %v1776 = vunpack.c.l.b16 %v1744
    %v1777 = vunpack.c.l.b16 %v1745
    %v1778 = vunpack.c.l.b16 %v1746
    %v1779 = vunpack.c.l.b16 %v1747
    %v1780 = vunpack.c.l.b16 %v1748
    %v1781 = vunpack.c.l.b16 %v1749
    %v1782 = vunpack.c.l.b16 %v1750
    %v1783 = vpack.c.b16 %v1768, %v1767
    %v1784 = vpack.c.b16 %v1770, %v1769
    %v1785 = vpack.c.b16 %v1772, %v1771
    %v1786 = vpack.c.b16 %v1774, %v1773
    %v1787 = vpack.c.b16 %v1776, %v1775
    %v1788 = vpack.c.b16 %v1778, %v1777
    %v1789 = vpack.c.b16 %v1780, %v1779
    %v1790 = vpack.c.b16 %v1782, %v1781
    %1799 = vmatprep.subr.bf16.mxu0 0
    %1800 = vmatpush1.bf16.msra.mxu0 %v1790
    %1801 = vmatprep.subr.bf16.mxu0 0
    %1802 = vmatpush1.bf16.msra.mxu0 %v1789
    %1803 = vmatprep.subr.bf16.mxu0 0
    %1804 = vmatpush1.bf16.msra.mxu0 %v1788
    %1805 = vmatprep.subr.bf16.mxu0 0
    %1806 = vmatpush1.bf16.msra.mxu0 %v1787
    %1807 = vmatprep.subr.bf16.mxu0 0
    %1808 = vmatpush1.bf16.msra.mxu0 %v1786
    %1809 = vmatprep.subr.bf16.mxu0 0
    %1810 = vmatpush1.bf16.msra.mxu0 %v1785
    %1811 = vmatprep.subr.bf16.mxu0 0
    %1812 = vmatpush1.bf16.msra.mxu0 %v1784
    %1813 = vmatprep.subr.bf16.mxu0 0
    %1814 = vmatpush1.bf16.msra.mxu0 %v1783
    %1815 = vmatprep.subr.bf16.mxu0 0
    %1816 = vmatpush2.bf16.msra.mxu0 0
    %1817 = vmatprep.subr.bf16.mxu0 0
    %1818 = vmatpush2.bf16.msra.mxu0 0
    %1819 = vmatprep.subr.bf16.mxu0 0
    %1820 = vmatpush2.bf16.msra.mxu0 0
    %1821 = vmatprep.subr.bf16.mxu0 0
    %1822 = vmatpush2.bf16.msra.mxu0 0
    %1823 = vmatprep.subr.bf16.mxu0 0
    %1824 = vmatpush2.bf16.msra.mxu0 0
    %1825 = vmatprep.subr.bf16.mxu0 0
    %1826 = vmatpush2.bf16.msra.mxu0 0
    %1827 = vmatprep.subr.bf16.mxu0 0
    %1828 = vmatpush2.bf16.msra.mxu0 0
    %1829 = vmatprep.subr.bf16.mxu0 0
    %1830 = vmatpush2.bf16.msra.mxu0 0
    %1831 = vmatprep.mubr.bf16.mxu0 0
    %1832 = vmatmul.mubr.bf16.gmra.mxu0 %v682
    %v1833 = vpop.f32.mrf.mxu0
    %v1834 = vadd.f32 0.0, %v1833
    %v1835 = vpop.f32.mrf.mxu0
    %v1836 = vpop.f32.mrf.mxu0
    %v1837 = vadd.f32 0.0, %v1836
    %v1838 = vpop.f32.mrf.mxu0
    %1839 = vmatprep.mubr.bf16.mxu0 0
    %1840 = vmatmul.mubr.bf16.gmra.mxu0 %v1733
    %v1841 = vpop.f32.mrf.mxu0
    %v1842 = vadd.f32 0.0, %v1841
    %v1843 = vpop.f32.mrf.mxu0
    %v1844 = vpop.f32.mrf.mxu0
    %v1845 = vadd.f32 0.0, %v1844
    %v1846 = vpop.f32.mrf.mxu0
    %1847 = vdwg.mxu0
    %v1848 = vadd.f32 %v1729, %v1834
    %v1849 = vadd.f32 %v1730, %v1837
    %v1850 = vadd.f32 %v1731, %v1842
    %v1851 = vadd.f32 %v1732, %v1845
    %v1852 = vpack.c.bf16 %v655, %v653
    %s1853 = scalar_lea.vmem [#allocation7], 640
    %v1854 = vld [vmem:[%s1853] sm:$0xf]
    %v1855 = vld [vmem:[%s1853 + $0x4] sm:$0xf]
    %v1856 = vld [vmem:[%s1853 + $0x8] sm:$0xf]
    %v1857 = vld [vmem:[%s1853 + $0xc] sm:$0xf]
    %v1858 = vld [vmem:[%s1853 + $0x10] sm:$0xf]
    %v1859 = vld [vmem:[%s1853 + $0x14] sm:$0xf]
    %v1860 = vld [vmem:[%s1853 + $0x18] sm:$0xf]
    %v1861 = vld [vmem:[%s1853 + $0x1c] sm:$0xf]
    %v1862 = vld [vmem:[%s1853 + $0x20] sm:$0xf]
    %v1863 = vld [vmem:[%s1853 + $0x24] sm:$0xf]
    %v1864 = vld [vmem:[%s1853 + $0x28] sm:$0xf]
    %v1865 = vld [vmem:[%s1853 + $0x2c] sm:$0xf]
    %v1866 = vld [vmem:[%s1853 + $0x30] sm:$0xf]
    %v1867 = vld [vmem:[%s1853 + $0x34] sm:$0xf]
    %v1868 = vld [vmem:[%s1853 + $0x38] sm:$0xf]
    %v1869 = vld [vmem:[%s1853 + $0x3c] sm:$0xf]
    %v1886 = vunpack.c.l.b16 %v1854
    %v1887 = vunpack.c.l.b16 %v1855
    %v1888 = vunpack.c.l.b16 %v1856
    %v1889 = vunpack.c.l.b16 %v1857
    %v1890 = vunpack.c.l.b16 %v1858
    %v1891 = vunpack.c.l.b16 %v1859
    %v1892 = vunpack.c.l.b16 %v1860
    %v1893 = vunpack.c.l.b16 %v1861
    %v1894 = vunpack.c.l.b16 %v1862
    %v1895 = vunpack.c.l.b16 %v1863
    %v1896 = vunpack.c.l.b16 %v1864
    %v1897 = vunpack.c.l.b16 %v1865
    %v1898 = vunpack.c.l.b16 %v1866
    %v1899 = vunpack.c.l.b16 %v1867
    %v1900 = vunpack.c.l.b16 %v1868
    %v1901 = vunpack.c.l.b16 %v1869
    %v1902 = vpack.c.b16 %v1887, %v1886
    %v1903 = vpack.c.b16 %v1889, %v1888
    %v1904 = vpack.c.b16 %v1891, %v1890
    %v1905 = vpack.c.b16 %v1893, %v1892
    %v1906 = vpack.c.b16 %v1895, %v1894
    %v1907 = vpack.c.b16 %v1897, %v1896
    %v1908 = vpack.c.b16 %v1899, %v1898
    %v1909 = vpack.c.b16 %v1901, %v1900
    %1918 = vmatprep.subr.bf16.mxu0 0
    %1919 = vmatpush1.bf16.msra.mxu0 %v1909
    %1920 = vmatprep.subr.bf16.mxu0 0
    %1921 = vmatpush1.bf16.msra.mxu0 %v1908
    %1922 = vmatprep.subr.bf16.mxu0 0
    %1923 = vmatpush1.bf16.msra.mxu0 %v1907
    %1924 = vmatprep.subr.bf16.mxu0 0
    %1925 = vmatpush1.bf16.msra.mxu0 %v1906
    %1926 = vmatprep.subr.bf16.mxu0 0
    %1927 = vmatpush1.bf16.msra.mxu0 %v1905
    %1928 = vmatprep.subr.bf16.mxu0 0
    %1929 = vmatpush1.bf16.msra.mxu0 %v1904
    %1930 = vmatprep.subr.bf16.mxu0 0
    %1931 = vmatpush1.bf16.msra.mxu0 %v1903
    %1932 = vmatprep.subr.bf16.mxu0 0
    %1933 = vmatpush1.bf16.msra.mxu0 %v1902
    %1934 = vmatprep.subr.bf16.mxu0 0
    %1935 = vmatpush2.bf16.msra.mxu0 0
    %1936 = vmatprep.subr.bf16.mxu0 0
    %1937 = vmatpush2.bf16.msra.mxu0 0
    %1938 = vmatprep.subr.bf16.mxu0 0
    %1939 = vmatpush2.bf16.msra.mxu0 0
    %1940 = vmatprep.subr.bf16.mxu0 0
    %1941 = vmatpush2.bf16.msra.mxu0 0
    %1942 = vmatprep.subr.bf16.mxu0 0
    %1943 = vmatpush2.bf16.msra.mxu0 0
    %1944 = vmatprep.subr.bf16.mxu0 0
    %1945 = vmatpush2.bf16.msra.mxu0 0
    %1946 = vmatprep.subr.bf16.mxu0 0
    %1947 = vmatpush2.bf16.msra.mxu0 0
    %1948 = vmatprep.subr.bf16.mxu0 0
    %1949 = vmatpush2.bf16.msra.mxu0 0
    %1950 = vmatprep.mubr.bf16.mxu0 0
    %1951 = vmatmul.mubr.bf16.gmra.mxu0 %v895
    %v1952 = vpop.f32.mrf.mxu0
    %v1953 = vadd.f32 0.0, %v1952
    %v1954 = vpop.f32.mrf.mxu0
    %v1955 = vpop.f32.mrf.mxu0
    %v1956 = vadd.f32 0.0, %v1955
    %v1957 = vpop.f32.mrf.mxu0
    %1958 = vmatprep.mubr.bf16.mxu0 0
    %1959 = vmatmul.mubr.bf16.gmra.mxu0 %v1852
    %v1960 = vpop.f32.mrf.mxu0
    %v1961 = vadd.f32 0.0, %v1960
    %v1962 = vpop.f32.mrf.mxu0
    %v1963 = vpop.f32.mrf.mxu0
    %v1964 = vadd.f32 0.0, %v1963
    %v1965 = vpop.f32.mrf.mxu0
    %1966 = vdwg.mxu0
    %v1967 = vadd.f32 %v1848, %v1953
    %v1968 = vadd.f32 %v1849, %v1956
    %v1969 = vadd.f32 %v1850, %v1961
    %v1970 = vadd.f32 %v1851, %v1964
    %v1971 = vpack.c.bf16 %v656, %v654
    %s1972 = scalar_lea.vmem [#allocation7], 704
    %v1973 = vld [vmem:[%s1972] sm:$0xf]
    %v1974 = vld [vmem:[%s1972 + $0x4] sm:$0xf]
    %v1975 = vld [vmem:[%s1972 + $0x8] sm:$0xf]
    %v1976 = vld [vmem:[%s1972 + $0xc] sm:$0xf]
    %v1977 = vld [vmem:[%s1972 + $0x10] sm:$0xf]
    %v1978 = vld [vmem:[%s1972 + $0x14] sm:$0xf]
    %v1979 = vld [vmem:[%s1972 + $0x18] sm:$0xf]
    %v1980 = vld [vmem:[%s1972 + $0x1c] sm:$0xf]
    %v1981 = vld [vmem:[%s1972 + $0x20] sm:$0xf]
    %v1982 = vld [vmem:[%s1972 + $0x24] sm:$0xf]
    %v1983 = vld [vmem:[%s1972 + $0x28] sm:$0xf]
    %v1984 = vld [vmem:[%s1972 + $0x2c] sm:$0xf]
    %v1985 = vld [vmem:[%s1972 + $0x30] sm:$0xf]
    %v1986 = vld [vmem:[%s1972 + $0x34] sm:$0xf]
    %v1987 = vld [vmem:[%s1972 + $0x38] sm:$0xf]
    %v1988 = vld [vmem:[%s1972 + $0x3c] sm:$0xf]
    %v2005 = vunpack.c.l.b16 %v1973
    %v2006 = vunpack.c.l.b16 %v1974
    %v2007 = vunpack.c.l.b16 %v1975
    %v2008 = vunpack.c.l.b16 %v1976
    %v2009 = vunpack.c.l.b16 %v1977
    %v2010 = vunpack.c.l.b16 %v1978
    %v2011 = vunpack.c.l.b16 %v1979
    %v2012 = vunpack.c.l.b16 %v1980
    %v2013 = vunpack.c.l.b16 %v1981
    %v2014 = vunpack.c.l.b16 %v1982
    %v2015 = vunpack.c.l.b16 %v1983
    %v2016 = vunpack.c.l.b16 %v1984
    %v2017 = vunpack.c.l.b16 %v1985
    %v2018 = vunpack.c.l.b16 %v1986
    %v2019 = vunpack.c.l.b16 %v1987
    %v2020 = vunpack.c.l.b16 %v1988
    %v2021 = vpack.c.b16 %v2006, %v2005
    %v2022 = vpack.c.b16 %v2008, %v2007
    %v2023 = vpack.c.b16 %v2010, %v2009
    %v2024 = vpack.c.b16 %v2012, %v2011
    %v2025 = vpack.c.b16 %v2014, %v2013
    %v2026 = vpack.c.b16 %v2016, %v2015
    %v2027 = vpack.c.b16 %v2018, %v2017
    %v2028 = vpack.c.b16 %v2020, %v2019
    %2037 = vmatprep.subr.bf16.mxu0 0
    %2038 = vmatpush1.bf16.msra.mxu0 %v2028
    %2039 = vmatprep.subr.bf16.mxu0 0
    %2040 = vmatpush1.bf16.msra.mxu0 %v2027
    %2041 = vmatprep.subr.bf16.mxu0 0
    %2042 = vmatpush1.bf16.msra.mxu0 %v2026
    %2043 = vmatprep.subr.bf16.mxu0 0
    %2044 = vmatpush1.bf16.msra.mxu0 %v2025
    %2045 = vmatprep.subr.bf16.mxu0 0
    %2046 = vmatpush1.bf16.msra.mxu0 %v2024
    %2047 = vmatprep.subr.bf16.mxu0 0
    %2048 = vmatpush1.bf16.msra.mxu0 %v2023
    %2049 = vmatprep.subr.bf16.mxu0 0
    %2050 = vmatpush1.bf16.msra.mxu0 %v2022
    %2051 = vmatprep.subr.bf16.mxu0 0
    %2052 = vmatpush1.bf16.msra.mxu0 %v2021
    %2053 = vmatprep.subr.bf16.mxu0 0
    %2054 = vmatpush2.bf16.msra.mxu0 0
    %2055 = vmatprep.subr.bf16.mxu0 0
    %2056 = vmatpush2.bf16.msra.mxu0 0
    %2057 = vmatprep.subr.bf16.mxu0 0
    %2058 = vmatpush2.bf16.msra.mxu0 0
    %2059 = vmatprep.subr.bf16.mxu0 0
    %2060 = vmatpush2.bf16.msra.mxu0 0
    %2061 = vmatprep.subr.bf16.mxu0 0
    %2062 = vmatpush2.bf16.msra.mxu0 0
    %2063 = vmatprep.subr.bf16.mxu0 0
    %2064 = vmatpush2.bf16.msra.mxu0 0
    %2065 = vmatprep.subr.bf16.mxu0 0
    %2066 = vmatpush2.bf16.msra.mxu0 0
    %2067 = vmatprep.subr.bf16.mxu0 0
    %2068 = vmatpush2.bf16.msra.mxu0 0
    %2069 = vmatprep.mubr.bf16.mxu0 0
    %2070 = vmatmul.mubr.bf16.gmra.mxu0 %v1015
    %v2071 = vpop.f32.mrf.mxu0
    %v2072 = vadd.f32 0.0, %v2071
    %v2073 = vpop.f32.mrf.mxu0
    %v2074 = vpop.f32.mrf.mxu0
    %v2075 = vadd.f32 0.0, %v2074
    %v2076 = vpop.f32.mrf.mxu0
    %2077 = vmatprep.mubr.bf16.mxu0 0
    %2078 = vmatmul.mubr.bf16.gmra.mxu0 %v1971
    %v2079 = vpop.f32.mrf.mxu0
    %v2080 = vadd.f32 0.0, %v2079
    %v2081 = vpop.f32.mrf.mxu0
    %v2082 = vpop.f32.mrf.mxu0
    %v2083 = vadd.f32 0.0, %v2082
    %v2084 = vpop.f32.mrf.mxu0
    %2085 = vdwg.mxu0
    %v2086 = vadd.f32 %v1967, %v2072
    %v2087 = vadd.f32 %v1968, %v2075
    %v2088 = vadd.f32 %v1969, %v2080
    %v2089 = vadd.f32 %v1970, %v2083
    %v2090 = vpack.c.bf16 %v659, %v657
    %s2091 = scalar_lea.vmem [#allocation7], 768
    %v2092 = vld [vmem:[%s2091] sm:$0xf]
    %v2093 = vld [vmem:[%s2091 + $0x4] sm:$0xf]
    %v2094 = vld [vmem:[%s2091 + $0x8] sm:$0xf]
    %v2095 = vld [vmem:[%s2091 + $0xc] sm:$0xf]
    %v2096 = vld [vmem:[%s2091 + $0x10] sm:$0xf]
    %v2097 = vld [vmem:[%s2091 + $0x14] sm:$0xf]
    %v2098 = vld [vmem:[%s2091 + $0x18] sm:$0xf]
    %v2099 = vld [vmem:[%s2091 + $0x1c] sm:$0xf]
    %v2100 = vld [vmem:[%s2091 + $0x20] sm:$0xf]
    %v2101 = vld [vmem:[%s2091 + $0x24] sm:$0xf]
    %v2102 = vld [vmem:[%s2091 + $0x28] sm:$0xf]
    %v2103 = vld [vmem:[%s2091 + $0x2c] sm:$0xf]
    %v2104 = vld [vmem:[%s2091 + $0x30] sm:$0xf]
    %v2105 = vld [vmem:[%s2091 + $0x34] sm:$0xf]
    %v2106 = vld [vmem:[%s2091 + $0x38] sm:$0xf]
    %v2107 = vld [vmem:[%s2091 + $0x3c] sm:$0xf]
    %v2124 = vunpack.c.l.b16 %v2092
    %v2125 = vunpack.c.l.b16 %v2093
    %v2126 = vunpack.c.l.b16 %v2094
    %v2127 = vunpack.c.l.b16 %v2095
    %v2128 = vunpack.c.l.b16 %v2096
    %v2129 = vunpack.c.l.b16 %v2097
    %v2130 = vunpack.c.l.b16 %v2098
    %v2131 = vunpack.c.l.b16 %v2099
    %v2132 = vunpack.c.l.b16 %v2100
    %v2133 = vunpack.c.l.b16 %v2101
    %v2134 = vunpack.c.l.b16 %v2102
    %v2135 = vunpack.c.l.b16 %v2103
    %v2136 = vunpack.c.l.b16 %v2104
    %v2137 = vunpack.c.l.b16 %v2105
    %v2138 = vunpack.c.l.b16 %v2106
    %v2139 = vunpack.c.l.b16 %v2107
    %v2140 = vpack.c.b16 %v2125, %v2124
    %v2141 = vpack.c.b16 %v2127, %v2126
    %v2142 = vpack.c.b16 %v2129, %v2128
    %v2143 = vpack.c.b16 %v2131, %v2130
    %v2144 = vpack.c.b16 %v2133, %v2132
    %v2145 = vpack.c.b16 %v2135, %v2134
    %v2146 = vpack.c.b16 %v2137, %v2136
    %v2147 = vpack.c.b16 %v2139, %v2138
    %2156 = vmatprep.subr.bf16.mxu0 0
    %2157 = vmatpush1.bf16.msra.mxu0 %v2147
    %2158 = vmatprep.subr.bf16.mxu0 0
    %2159 = vmatpush1.bf16.msra.mxu0 %v2146
    %2160 = vmatprep.subr.bf16.mxu0 0
    %2161 = vmatpush1.bf16.msra.mxu0 %v2145
    %2162 = vmatprep.subr.bf16.mxu0 0
    %2163 = vmatpush1.bf16.msra.mxu0 %v2144
    %2164 = vmatprep.subr.bf16.mxu0 0
    %2165 = vmatpush1.bf16.msra.mxu0 %v2143
    %2166 = vmatprep.subr.bf16.mxu0 0
    %2167 = vmatpush1.bf16.msra.mxu0 %v2142
    %2168 = vmatprep.subr.bf16.mxu0 0
    %2169 = vmatpush1.bf16.msra.mxu0 %v2141
    %2170 = vmatprep.subr.bf16.mxu0 0
    %2171 = vmatpush1.bf16.msra.mxu0 %v2140
    %2172 = vmatprep.subr.bf16.mxu0 0
    %2173 = vmatpush2.bf16.msra.mxu0 0
    %2174 = vmatprep.subr.bf16.mxu0 0
    %2175 = vmatpush2.bf16.msra.mxu0 0
    %2176 = vmatprep.subr.bf16.mxu0 0
    %2177 = vmatpush2.bf16.msra.mxu0 0
    %2178 = vmatprep.subr.bf16.mxu0 0
    %2179 = vmatpush2.bf16.msra.mxu0 0
    %2180 = vmatprep.subr.bf16.mxu0 0
    %2181 = vmatpush2.bf16.msra.mxu0 0
    %2182 = vmatprep.subr.bf16.mxu0 0
    %2183 = vmatpush2.bf16.msra.mxu0 0
    %2184 = vmatprep.subr.bf16.mxu0 0
    %2185 = vmatpush2.bf16.msra.mxu0 0
    %2186 = vmatprep.subr.bf16.mxu0 0
    %2187 = vmatpush2.bf16.msra.mxu0 0
    %2188 = vmatprep.mubr.bf16.mxu0 0
    %2189 = vmatmul.mubr.bf16.gmra.mxu0 %v1135
    %v2190 = vpop.f32.mrf.mxu0
    %v2191 = vadd.f32 0.0, %v2190
    %v2192 = vpop.f32.mrf.mxu0
    %v2193 = vpop.f32.mrf.mxu0
    %v2194 = vadd.f32 0.0, %v2193
    %v2195 = vpop.f32.mrf.mxu0
    %2196 = vmatprep.mubr.bf16.mxu0 0
    %2197 = vmatmul.mubr.bf16.gmra.mxu0 %v2090
    %v2198 = vpop.f32.mrf.mxu0
    %v2199 = vadd.f32 0.0, %v2198
    %v2200 = vpop.f32.mrf.mxu0
    %v2201 = vpop.f32.mrf.mxu0
    %v2202 = vadd.f32 0.0, %v2201
    %v2203 = vpop.f32.mrf.mxu0
    %2204 = vdwg.mxu0
    %v2205 = vadd.f32 %v2086, %v2191
    %v2206 = vadd.f32 %v2087, %v2194
    %v2207 = vadd.f32 %v2088, %v2199
    %v2208 = vadd.f32 %v2089, %v2202
    %v2209 = vpack.c.bf16 %v660, %v658
    %s2210 = scalar_lea.vmem [#allocation7], 832
    %v2211 = vld [vmem:[%s2210] sm:$0xf]
    %v2212 = vld [vmem:[%s2210 + $0x4] sm:$0xf]
    %v2213 = vld [vmem:[%s2210 + $0x8] sm:$0xf]
    %v2214 = vld [vmem:[%s2210 + $0xc] sm:$0xf]
    %v2215 = vld [vmem:[%s2210 + $0x10] sm:$0xf]
    %v2216 = vld [vmem:[%s2210 + $0x14] sm:$0xf]
    %v2217 = vld [vmem:[%s2210 + $0x18] sm:$0xf]
    %v2218 = vld [vmem:[%s2210 + $0x1c] sm:$0xf]
    %v2219 = vld [vmem:[%s2210 + $0x20] sm:$0xf]
    %v2220 = vld [vmem:[%s2210 + $0x24] sm:$0xf]
    %v2221 = vld [vmem:[%s2210 + $0x28] sm:$0xf]
    %v2222 = vld [vmem:[%s2210 + $0x2c] sm:$0xf]
    %v2223 = vld [vmem:[%s2210 + $0x30] sm:$0xf]
    %v2224 = vld [vmem:[%s2210 + $0x34] sm:$0xf]
    %v2225 = vld [vmem:[%s2210 + $0x38] sm:$0xf]
    %v2226 = vld [vmem:[%s2210 + $0x3c] sm:$0xf]
    %v2243 = vunpack.c.l.b16 %v2211
    %v2244 = vunpack.c.l.b16 %v2212
    %v2245 = vunpack.c.l.b16 %v2213
    %v2246 = vunpack.c.l.b16 %v2214
    %v2247 = vunpack.c.l.b16 %v2215
    %v2248 = vunpack.c.l.b16 %v2216
    %v2249 = vunpack.c.l.b16 %v2217
    %v2250 = vunpack.c.l.b16 %v2218
    %v2251 = vunpack.c.l.b16 %v2219
    %v2252 = vunpack.c.l.b16 %v2220
    %v2253 = vunpack.c.l.b16 %v2221
    %v2254 = vunpack.c.l.b16 %v2222
    %v2255 = vunpack.c.l.b16 %v2223
    %v2256 = vunpack.c.l.b16 %v2224
    %v2257 = vunpack.c.l.b16 %v2225
    %v2258 = vunpack.c.l.b16 %v2226
    %v2259 = vpack.c.b16 %v2244, %v2243
    %v2260 = vpack.c.b16 %v2246, %v2245
    %v2261 = vpack.c.b16 %v2248, %v2247
    %v2262 = vpack.c.b16 %v2250, %v2249
    %v2263 = vpack.c.b16 %v2252, %v2251
    %v2264 = vpack.c.b16 %v2254, %v2253
    %v2265 = vpack.c.b16 %v2256, %v2255
    %v2266 = vpack.c.b16 %v2258, %v2257
    %2275 = vmatprep.subr.bf16.mxu0 0
    %2276 = vmatpush1.bf16.msra.mxu0 %v2266
    %2277 = vmatprep.subr.bf16.mxu0 0
    %2278 = vmatpush1.bf16.msra.mxu0 %v2265
    %2279 = vmatprep.subr.bf16.mxu0 0
    %2280 = vmatpush1.bf16.msra.mxu0 %v2264
    %2281 = vmatprep.subr.bf16.mxu0 0
    %2282 = vmatpush1.bf16.msra.mxu0 %v2263
    %2283 = vmatprep.subr.bf16.mxu0 0
    %2284 = vmatpush1.bf16.msra.mxu0 %v2262
    %2285 = vmatprep.subr.bf16.mxu0 0
    %2286 = vmatpush1.bf16.msra.mxu0 %v2261
    %2287 = vmatprep.subr.bf16.mxu0 0
    %2288 = vmatpush1.bf16.msra.mxu0 %v2260
    %2289 = vmatprep.subr.bf16.mxu0 0
    %2290 = vmatpush1.bf16.msra.mxu0 %v2259
    %2291 = vmatprep.subr.bf16.mxu0 0
    %2292 = vmatpush2.bf16.msra.mxu0 0
    %2293 = vmatprep.subr.bf16.mxu0 0
    %2294 = vmatpush2.bf16.msra.mxu0 0
    %2295 = vmatprep.subr.bf16.mxu0 0
    %2296 = vmatpush2.bf16.msra.mxu0 0
    %2297 = vmatprep.subr.bf16.mxu0 0
    %2298 = vmatpush2.bf16.msra.mxu0 0
    %2299 = vmatprep.subr.bf16.mxu0 0
    %2300 = vmatpush2.bf16.msra.mxu0 0
    %2301 = vmatprep.subr.bf16.mxu0 0
    %2302 = vmatpush2.bf16.msra.mxu0 0
    %2303 = vmatprep.subr.bf16.mxu0 0
    %2304 = vmatpush2.bf16.msra.mxu0 0
    %2305 = vmatprep.subr.bf16.mxu0 0
    %2306 = vmatpush2.bf16.msra.mxu0 0
    %2307 = vmatprep.mubr.bf16.mxu0 0
    %2308 = vmatmul.mubr.bf16.gmra.mxu0 %v1255
    %v2309 = vpop.f32.mrf.mxu0
    %v2310 = vadd.f32 0.0, %v2309
    %v2311 = vpop.f32.mrf.mxu0
    %v2312 = vpop.f32.mrf.mxu0
    %v2313 = vadd.f32 0.0, %v2312
    %v2314 = vpop.f32.mrf.mxu0
    %2315 = vmatprep.mubr.bf16.mxu0 0
    %2316 = vmatmul.mubr.bf16.gmra.mxu0 %v2209
    %v2317 = vpop.f32.mrf.mxu0
    %v2318 = vadd.f32 0.0, %v2317
    %v2319 = vpop.f32.mrf.mxu0
    %v2320 = vpop.f32.mrf.mxu0
    %v2321 = vadd.f32 0.0, %v2320
    %v2322 = vpop.f32.mrf.mxu0
    %2323 = vdwg.mxu0
    %v2324 = vadd.f32 %v2205, %v2310
    %v2325 = vadd.f32 %v2206, %v2313
    %v2326 = vadd.f32 %v2207, %v2318
    %v2327 = vadd.f32 %v2208, %v2321
    %v2328 = vpack.c.bf16 %v661, %v659
    %s2329 = scalar_lea.vmem [#allocation7], 896
    %v2330 = vld [vmem:[%s2329] sm:$0xf]
    %v2331 = vld [vmem:[%s2329 + $0x4] sm:$0xf]
    %v2332 = vld [vmem:[%s2329 + $0x8] sm:$0xf]
    %v2333 = vld [vmem:[%s2329 + $0xc] sm:$0xf]
    %v2334 = vld [vmem:[%s2329 + $0x10] sm:$0xf]
    %v2335 = vld [vmem:[%s2329 + $0x14] sm:$0xf]
    %v2336 = vld [vmem:[%s2329 + $0x18] sm:$0xf]
    %v2337 = vld [vmem:[%s2329 + $0x1c] sm:$0xf]
    %v2338 = vld [vmem:[%s2329 + $0x20] sm:$0xf]
    %v2339 = vld [vmem:[%s2329 + $0x24] sm:$0xf]
    %v2340 = vld [vmem:[%s2329 + $0x28] sm:$0xf]
    %v2341 = vld [vmem:[%s2329 + $0x2c] sm:$0xf]
    %v2342 = vld [vmem:[%s2329 + $0x30] sm:$0xf]
    %v2343 = vld [vmem:[%s2329 + $0x34] sm:$0xf]
    %v2344 = vld [vmem:[%s2329 + $0x38] sm:$0xf]
    %v2345 = vld [vmem:[%s2329 + $0x3c] sm:$0xf]
    %v2362 = vunpack.c.l.b16 %v2330
    %v2363 = vunpack.c.l.b16 %v2331
    %v2364 = vunpack.c.l.b16 %v2332
    %v2365 = vunpack.c.l.b16 %v2333
    %v2366 = vunpack.c.l.b16 %v2334
    %v2367 = vunpack.c.l.b16 %v2335
    %v2368 = vunpack.c.l.b16 %v2336
    %v2369 = vunpack.c.l.b16 %v2337
    %v2370 = vunpack.c.l.b16 %v2338
    %v2371 = vunpack.c.l.b16 %v2339
    %v2372 = vunpack.c.l.b16 %v2340
    %v2373 = vunpack.c.l.b16 %v2341
    %v2374 = vunpack.c.l.b16 %v2342
    %v2375 = vunpack.c.l.b16 %v2343
    %v2376 = vunpack.c.l.b16 %v2344
    %v2377 = vunpack.c.l.b16 %v2345
    %v2378 = vpack.c.b16 %v2363, %v2362
    %v2379 = vpack.c.b16 %v2365, %v2364
    %v2380 = vpack.c.b16 %v2367, %v2366
    %v2381 = vpack.c.b16 %v2369, %v2368
    %v2382 = vpack.c.b16 %v2371, %v2370
    %v2383 = vpack.c.b16 %v2373, %v2372
    %v2384 = vpack.c.b16 %v2375, %v2374
    %v2385 = vpack.c.b16 %v2377, %v2376
    %2394 = vmatprep.subr.bf16.mxu0 0
    %2395 = vmatpush1.bf16.msra.mxu0 %v2385
    %2396 = vmatprep.subr.bf16.mxu0 0
    %2397 = vmatpush1.bf16.msra.mxu0 %v2384
    %2398 = vmatprep.subr.bf16.mxu0 0
    %2399 = vmatpush1.bf16.msra.mxu0 %v2383
    %2400 = vmatprep.subr.bf16.mxu0 0
    %2401 = vmatpush1.bf16.msra.mxu0 %v2382
    %2402 = vmatprep.subr.bf16.mxu0 0
    %2403 = vmatpush1.bf16.msra.mxu0 %v2381
    %2404 = vmatprep.subr.bf16.mxu0 0
    %2405 = vmatpush1.bf16.msra.mxu0 %v2380
    %2406 = vmatprep.subr.bf16.mxu0 0
    %2407 = vmatpush1.bf16.msra.mxu0 %v2379
    %2408 = vmatprep.subr.bf16.mxu0 0
    %2409 = vmatpush1.bf16.msra.mxu0 %v2378
    %2410 = vmatprep.subr.bf16.mxu0 0
    %2411 = vmatpush2.bf16.msra.mxu0 0
    %2412 = vmatprep.subr.bf16.mxu0 0
    %2413 = vmatpush2.bf16.msra.mxu0 0
    %2414 = vmatprep.subr.bf16.mxu0 0
    %2415 = vmatpush2.bf16.msra.mxu0 0
    %2416 = vmatprep.subr.bf16.mxu0 0
    %2417 = vmatpush2.bf16.msra.mxu0 0
    %2418 = vmatprep.subr.bf16.mxu0 0
    %2419 = vmatpush2.bf16.msra.mxu0 0
    %2420 = vmatprep.subr.bf16.mxu0 0
    %2421 = vmatpush2.bf16.msra.mxu0 0
    %2422 = vmatprep.subr.bf16.mxu0 0
    %2423 = vmatpush2.bf16.msra.mxu0 0
    %2424 = vmatprep.subr.bf16.mxu0 0
    %2425 = vmatpush2.bf16.msra.mxu0 0
    %2426 = vmatprep.mubr.bf16.mxu0 0
    %2427 = vmatmul.mubr.bf16.gmra.mxu0 %v1375
    %v2428 = vpop.f32.mrf.mxu0
    %v2429 = vadd.f32 0.0, %v2428
    %v2430 = vpop.f32.mrf.mxu0
    %v2431 = vpop.f32.mrf.mxu0
    %v2432 = vadd.f32 0.0, %v2431
    %v2433 = vpop.f32.mrf.mxu0
    %2434 = vmatprep.mubr.bf16.mxu0 0
    %2435 = vmatmul.mubr.bf16.gmra.mxu0 %v2328
    %v2436 = vpop.f32.mrf.mxu0
    %v2437 = vadd.f32 0.0, %v2436
    %v2438 = vpop.f32.mrf.mxu0
    %v2439 = vpop.f32.mrf.mxu0
    %v2440 = vadd.f32 0.0, %v2439
    %v2441 = vpop.f32.mrf.mxu0
    %2442 = vdwg.mxu0
    %v2443 = vadd.f32 %v2324, %v2429
    %v2444 = vadd.f32 %v2325, %v2432
    %v2445 = vadd.f32 %v2326, %v2437
    %v2446 = vadd.f32 %v2327, %v2440
    %v2447 = vpack.c.bf16 %v662, %v660
    %s2448 = scalar_lea.vmem [#allocation7], 960
    %v2449 = vld [vmem:[%s2448] sm:$0xf]
    %v2450 = vld [vmem:[%s2448 + $0x4] sm:$0xf]
    %v2451 = vld [vmem:[%s2448 + $0x8] sm:$0xf]
    %v2452 = vld [vmem:[%s2448 + $0xc] sm:$0xf]
    %v2453 = vld [vmem:[%s2448 + $0x10] sm:$0xf]
    %v2454 = vld [vmem:[%s2448 + $0x14] sm:$0xf]
    %v2455 = vld [vmem:[%s2448 + $0x18] sm:$0xf]
    %v2456 = vld [vmem:[%s2448 + $0x1c] sm:$0xf]
    %v2457 = vld [vmem:[%s2448 + $0x20] sm:$0xf]
    %v2458 = vld [vmem:[%s2448 + $0x24] sm:$0xf]
    %v2459 = vld [vmem:[%s2448 + $0x28] sm:$0xf]
    %v2460 = vld [vmem:[%s2448 + $0x2c] sm:$0xf]
    %v2461 = vld [vmem:[%s2448 + $0x30] sm:$0xf]
    %v2462 = vld [vmem:[%s2448 + $0x34] sm:$0xf]
    %v2463 = vld [vmem:[%s2448 + $0x38] sm:$0xf]
    %v2464 = vld [vmem:[%s2448 + $0x3c] sm:$0xf]
    %v2481 = vunpack.c.l.b16 %v2449
    %v2482 = vunpack.c.l.b16 %v2450
    %v2483 = vunpack.c.l.b16 %v2451
    %v2484 = vunpack.c.l.b16 %v2452
    %v2485 = vunpack.c.l.b16 %v2453
    %v2486 = vunpack.c.l.b16 %v2454
    %v2487 = vunpack.c.l.b16 %v2455
    %v2488 = vunpack.c.l.b16 %v2456
    %v2489 = vunpack.c.l.b16 %v2457
    %v2490 = vunpack.c.l.b16 %v2458
    %v2491 = vunpack.c.l.b16 %v2459
    %v2492 = vunpack.c.l.b16 %v2460
    %v2493 = vunpack.c.l.b16 %v2461
    %v2494 = vunpack.c.l.b16 %v2462
    %v2495 = vunpack.c.l.b16 %v2463
    %v2496 = vunpack.c.l.b16 %v2464
    %v2497 = vpack.c.b16 %v2482, %v2481
    %v2498 = vpack.c.b16 %v2484, %v2483
    %v2499 = vpack.c.b16 %v2486, %v2485
    %v2500 = vpack.c.b16 %v2488, %v2487
    %v2501 = vpack.c.b16 %v2490, %v2489
    %v2502 = vpack.c.b16 %v2492, %v2491
    %v2503 = vpack.c.b16 %v2494, %v2493
    %v2504 = vpack.c.b16 %v2496, %v2495
    %2513 = vmatprep.subr.bf16.mxu0 0
    %2514 = vmatpush1.bf16.msra.mxu0 %v2504
    %2515 = vmatprep.subr.bf16.mxu0 0
    %2516 = vmatpush1.bf16.msra.mxu0 %v2503
    %2517 = vmatprep.subr.bf16.mxu0 0
    %2518 = vmatpush1.bf16.msra.mxu0 %v2502
    %2519 = vmatprep.subr.bf16.mxu0 0
    %2520 = vmatpush1.bf16.msra.mxu0 %v2501
    %2521 = vmatprep.subr.bf16.mxu0 0
    %2522 = vmatpush1.bf16.msra.mxu0 %v2500
    %2523 = vmatprep.subr.bf16.mxu0 0
    %2524 = vmatpush1.bf16.msra.mxu0 %v2499
    %2525 = vmatprep.subr.bf16.mxu0 0
    %2526 = vmatpush1.bf16.msra.mxu0 %v2498
    %2527 = vmatprep.subr.bf16.mxu0 0
    %2528 = vmatpush1.bf16.msra.mxu0 %v2497
    %2529 = vmatprep.subr.bf16.mxu0 0
    %2530 = vmatpush2.bf16.msra.mxu0 0
    %2531 = vmatprep.subr.bf16.mxu0 0
    %2532 = vmatpush2.bf16.msra.mxu0 0
    %2533 = vmatprep.subr.bf16.mxu0 0
    %2534 = vmatpush2.bf16.msra.mxu0 0
    %2535 = vmatprep.subr.bf16.mxu0 0
    %2536 = vmatpush2.bf16.msra.mxu0 0
    %2537 = vmatprep.subr.bf16.mxu0 0
    %2538 = vmatpush2.bf16.msra.mxu0 0
    %2539 = vmatprep.subr.bf16.mxu0 0
    %2540 = vmatpush2.bf16.msra.mxu0 0
    %2541 = vmatprep.subr.bf16.mxu0 0
    %2542 = vmatpush2.bf16.msra.mxu0 0
    %2543 = vmatprep.subr.bf16.mxu0 0
    %2544 = vmatpush2.bf16.msra.mxu0 0
    %2545 = vmatprep.mubr.bf16.mxu0 0
    %2546 = vmatmul.mubr.bf16.gmra.mxu0 %v1495
    %v2547 = vpop.f32.mrf.mxu0
    %v2548 = vadd.f32 0.0, %v2547
    %v2549 = vpop.f32.mrf.mxu0
    %v2550 = vpop.f32.mrf.mxu0
    %v2551 = vadd.f32 0.0, %v2550
    %v2552 = vpop.f32.mrf.mxu0
    %2553 = vmatprep.mubr.bf16.mxu0 0
    %2554 = vmatmul.mubr.bf16.gmra.mxu0 %v2447
    %v2555 = vpop.f32.mrf.mxu0
    %v2556 = vadd.f32 0.0, %v2555
    %v2557 = vpop.f32.mrf.mxu0
    %v2558 = vpop.f32.mrf.mxu0
    %v2559 = vadd.f32 0.0, %v2558
    %v2560 = vpop.f32.mrf.mxu0
    %2561 = vdwg.mxu0
    %v2562 = vadd.f32 %v2443, %v2548
    %v2563 = vadd.f32 %v2444, %v2551
    %v2564 = vadd.f32 %v2445, %v2556
    %v2565 = vadd.f32 %v2446, %v2559
    %v2566 = vld [vmem:[%s4] sm:$0x1]
    %v2568 = vlaneseq
    %v2569 = vshrl.u32 %v2568, 7
    %v2570 = vsub.s32 0, %v2569
    %v2571 = vrot.slane %v2566, %v2570
    %v2573 = vadd.f32 %v2562, %v2571
    %v2574 = vadd.f32 %v2563, %v2571
    %v2575 = vadd.f32 %v2564, %v2571
    %v2576 = vadd.f32 %v2565, %v2571
    %vm2577 = vcmp.gt.f32.partialorder %v2573, 0.0
    %vm2578 = vcmp.gt.f32.partialorder %v2574, 0.0
    %vm2579 = vcmp.gt.f32.partialorder %v2575, 0.0
    %vm2580 = vcmp.gt.f32.partialorder %v2576, 0.0
    %v2581 = vmin.f32 %v2573, 0.0
    %v2582 = vmin.f32 %v2574, 0.0
    %v2583 = vmin.f32 %v2575, 0.0
    %v2584 = vmin.f32 %v2576, 0.0
    %v2585 = vmul.f32 %v2581, 1.442695
    %v2586 = vpow.pop %v2585
    %v2587 = vmul.f32 %v2582, 1.442695
    %v2588 = vpow.pop %v2587
    %v2589 = vmul.f32 %v2583, 1.442695
    %v2590 = vpow.pop %v2589
    %v2591 = vmul.f32 %v2584, 1.442695
    %v2592 = vpow.pop %v2591
    %v2593 = vsub.f32 %v2586, 1.0
    %v2594 = vsub.f32 %v2588, 1.0
    %v2595 = vsub.f32 %v2590, 1.0
    %v2596 = vsub.f32 %v2592, 1.0
    %v2597 = vsel %vm2577, %v2573, %v2593
    %v2598 = vsel %vm2578, %v2574, %v2594
    %v2599 = vsel %vm2579, %v2575, %v2595
    %v2600 = vsel %vm2580, %v2576, %v2596
    %v2601 = vpack.c.bf16 %v2597, %v2597
    %v2602 = vld [vmem:[#allocation8] sm:$0xf]
    %v2603 = vld [vmem:[#allocation8 + $0x4] sm:$0xf]
    %v2604 = vld [vmem:[#allocation8 + $0x8] sm:$0xf]
    %v2605 = vld [vmem:[#allocation8 + $0xc] sm:$0xf]
    %v2606 = vld [vmem:[#allocation8 + $0x10] sm:$0xf]
    %v2607 = vld [vmem:[#allocation8 + $0x14] sm:$0xf]
    %v2608 = vld [vmem:[#allocation8 + $0x18] sm:$0xf]
    %v2609 = vld [vmem:[#allocation8 + $0x1c] sm:$0xf]
    %v2610 = vld [vmem:[#allocation8 + $0x20] sm:$0xf]
    %v2611 = vld [vmem:[#allocation8 + $0x24] sm:$0xf]
    %v2612 = vld [vmem:[#allocation8 + $0x28] sm:$0xf]
    %v2613 = vld [vmem:[#allocation8 + $0x2c] sm:$0xf]
    %v2614 = vld [vmem:[#allocation8 + $0x30] sm:$0xf]
    %v2615 = vld [vmem:[#allocation8 + $0x34] sm:$0xf]
    %v2616 = vld [vmem:[#allocation8 + $0x38] sm:$0xf]
    %v2617 = vld [vmem:[#allocation8 + $0x3c] sm:$0xf]
    %v2618 = vpack.c.bf16 %v2598, %v2598
    %s2619 = scalar_lea.vmem [#allocation8], 64
    %v2620 = vld [vmem:[%s2619] sm:$0xf]
    %v2621 = vld [vmem:[%s2619 + $0x4] sm:$0xf]
    %v2622 = vld [vmem:[%s2619 + $0x8] sm:$0xf]
    %v2623 = vld [vmem:[%s2619 + $0xc] sm:$0xf]
    %v2624 = vld [vmem:[%s2619 + $0x10] sm:$0xf]
    %v2625 = vld [vmem:[%s2619 + $0x14] sm:$0xf]
    %v2626 = vld [vmem:[%s2619 + $0x18] sm:$0xf]
    %v2627 = vld [vmem:[%s2619 + $0x1c] sm:$0xf]
    %v2628 = vld [vmem:[%s2619 + $0x20] sm:$0xf]
    %v2629 = vld [vmem:[%s2619 + $0x24] sm:$0xf]
    %v2630 = vld [vmem:[%s2619 + $0x28] sm:$0xf]
    %v2631 = vld [vmem:[%s2619 + $0x2c] sm:$0xf]
    %v2632 = vld [vmem:[%s2619 + $0x30] sm:$0xf]
    %v2633 = vld [vmem:[%s2619 + $0x34] sm:$0xf]
    %v2634 = vld [vmem:[%s2619 + $0x38] sm:$0xf]
    %v2635 = vld [vmem:[%s2619 + $0x3c] sm:$0xf]
    %v2652 = vunpack.c.l.b16 %v2620
    %v2653 = vunpack.c.l.b16 %v2621
    %v2654 = vunpack.c.l.b16 %v2622
    %v2655 = vunpack.c.l.b16 %v2623
    %v2656 = vunpack.c.l.b16 %v2624
    %v2657 = vunpack.c.l.b16 %v2625
    %v2658 = vunpack.c.l.b16 %v2626
    %v2659 = vunpack.c.l.b16 %v2627
    %v2660 = vunpack.c.l.b16 %v2628
    %v2661 = vunpack.c.l.b16 %v2629
    %v2662 = vunpack.c.l.b16 %v2630
    %v2663 = vunpack.c.l.b16 %v2631
    %v2664 = vunpack.c.l.b16 %v2632
    %v2665 = vunpack.c.l.b16 %v2633
    %v2666 = vunpack.c.l.b16 %v2634
    %v2667 = vunpack.c.l.b16 %v2635
    %v2668 = vpack.c.b16 %v2653, %v2652
    %v2669 = vpack.c.b16 %v2655, %v2654
    %v2670 = vpack.c.b16 %v2657, %v2656
    %v2671 = vpack.c.b16 %v2659, %v2658
    %v2672 = vpack.c.b16 %v2661, %v2660
    %v2673 = vpack.c.b16 %v2663, %v2662
    %v2674 = vpack.c.b16 %v2665, %v2664
    %v2675 = vpack.c.b16 %v2667, %v2666
    %2684 = vmatprep.subr.bf16.mxu0 0
    %2685 = vmatpush1.bf16.msra.mxu0 %v2675
    %2686 = vmatprep.subr.bf16.mxu0 0
    %2687 = vmatpush1.bf16.msra.mxu0 %v2674
    %2688 = vmatprep.subr.bf16.mxu0 0
    %2689 = vmatpush1.bf16.msra.mxu0 %v2673
    %2690 = vmatprep.subr.bf16.mxu0 0
    %2691 = vmatpush1.bf16.msra.mxu0 %v2672
    %2692 = vmatprep.subr.bf16.mxu0 0
    %2693 = vmatpush1.bf16.msra.mxu0 %v2671
    %2694 = vmatprep.subr.bf16.mxu0 0
    %2695 = vmatpush1.bf16.msra.mxu0 %v2670
    %2696 = vmatprep.subr.bf16.mxu0 0
    %2697 = vmatpush1.bf16.msra.mxu0 %v2669
    %2698 = vmatprep.subr.bf16.mxu0 0
    %2699 = vmatpush1.bf16.msra.mxu0 %v2668
    %2700 = vmatprep.subr.bf16.mxu0 0
    %2701 = vmatpush2.bf16.msra.mxu0 0
    %2702 = vmatprep.subr.bf16.mxu0 0
    %2703 = vmatpush2.bf16.msra.mxu0 0
    %2704 = vmatprep.subr.bf16.mxu0 0
    %2705 = vmatpush2.bf16.msra.mxu0 0
    %2706 = vmatprep.subr.bf16.mxu0 0
    %2707 = vmatpush2.bf16.msra.mxu0 0
    %2708 = vmatprep.subr.bf16.mxu0 0
    %2709 = vmatpush2.bf16.msra.mxu0 0
    %2710 = vmatprep.subr.bf16.mxu0 0
    %2711 = vmatpush2.bf16.msra.mxu0 0
    %2712 = vmatprep.subr.bf16.mxu0 0
    %2713 = vmatpush2.bf16.msra.mxu0 0
    %2714 = vmatprep.subr.bf16.mxu0 0
    %2715 = vmatpush2.bf16.msra.mxu0 0
    %2716 = vmatprep.mubr.bf16.mxu0 0
    %2717 = vmatmul.mubr.bf16.gmra.mxu0 %v2618
    %v2718 = vpop.f32.mrf.mxu0
    %v2719 = vadd.f32 0.0, %v2718
    %v2720 = vpop.f32.mrf.mxu0
    %v2721 = vpop.f32.mrf.mxu0
    %v2722 = vpop.f32.mrf.mxu0
    %2723 = vdwg.mxu0
    %v2740 = vunpack.c.l.b16 %v2602
    %v2741 = vunpack.c.l.b16 %v2603
    %v2742 = vunpack.c.l.b16 %v2604
    %v2743 = vunpack.c.l.b16 %v2605
    %v2744 = vunpack.c.l.b16 %v2606
    %v2745 = vunpack.c.l.b16 %v2607
    %v2746 = vunpack.c.l.b16 %v2608
    %v2747 = vunpack.c.l.b16 %v2609
    %v2748 = vunpack.c.l.b16 %v2610
    %v2749 = vunpack.c.l.b16 %v2611
    %v2750 = vunpack.c.l.b16 %v2612
    %v2751 = vunpack.c.l.b16 %v2613
    %v2752 = vunpack.c.l.b16 %v2614
    %v2753 = vunpack.c.l.b16 %v2615
    %v2754 = vunpack.c.l.b16 %v2616
    %v2755 = vunpack.c.l.b16 %v2617
    %v2756 = vpack.c.b16 %v2741, %v2740
    %v2757 = vpack.c.b16 %v2743, %v2742
    %v2758 = vpack.c.b16 %v2745, %v2744
    %v2759 = vpack.c.b16 %v2747, %v2746
    %v2760 = vpack.c.b16 %v2749, %v2748
    %v2761 = vpack.c.b16 %v2751, %v2750
    %v2762 = vpack.c.b16 %v2753, %v2752
    %v2763 = vpack.c.b16 %v2755, %v2754
    %2772 = vmatprep.subr.bf16.mxu0 0
    %2773 = vmatpush1.bf16.msra.mxu0 %v2763
    %2774 = vmatprep.subr.bf16.mxu0 0
    %2775 = vmatpush1.bf16.msra.mxu0 %v2762
    %2776 = vmatprep.subr.bf16.mxu0 0
    %2777 = vmatpush1.bf16.msra.mxu0 %v2761
    %2778 = vmatprep.subr.bf16.mxu0 0
    %2779 = vmatpush1.bf16.msra.mxu0 %v2760
    %2780 = vmatprep.subr.bf16.mxu0 0
    %2781 = vmatpush1.bf16.msra.mxu0 %v2759
    %2782 = vmatprep.subr.bf16.mxu0 0
    %2783 = vmatpush1.bf16.msra.mxu0 %v2758
    %2784 = vmatprep.subr.bf16.mxu0 0
    %2785 = vmatpush1.bf16.msra.mxu0 %v2757
    %2786 = vmatprep.subr.bf16.mxu0 0
    %2787 = vmatpush1.bf16.msra.mxu0 %v2756
    %2788 = vmatprep.subr.bf16.mxu0 0
    %2789 = vmatpush2.bf16.msra.mxu0 0
    %2790 = vmatprep.subr.bf16.mxu0 0
    %2791 = vmatpush2.bf16.msra.mxu0 0
    %2792 = vmatprep.subr.bf16.mxu0 0
    %2793 = vmatpush2.bf16.msra.mxu0 0
    %2794 = vmatprep.subr.bf16.mxu0 0
    %2795 = vmatpush2.bf16.msra.mxu0 0
    %2796 = vmatprep.subr.bf16.mxu0 0
    %2797 = vmatpush2.bf16.msra.mxu0 0
    %2798 = vmatprep.subr.bf16.mxu0 0
    %2799 = vmatpush2.bf16.msra.mxu0 0
    %2800 = vmatprep.subr.bf16.mxu0 0
    %2801 = vmatpush2.bf16.msra.mxu0 0
    %2802 = vmatprep.subr.bf16.mxu0 0
    %2803 = vmatpush2.bf16.msra.mxu0 0
    %2804 = vmatprep.mubr.bf16.mxu0 0
    %2805 = vmatmul.mubr.bf16.gmra.mxu0 %v2601
    %v2806 = vpop.f32.mrf.mxu0
    %v2807 = vadd.f32 %v2719, %v2806
    %v2808 = vpop.f32.mrf.mxu0
    %v2809 = vpop.f32.mrf.mxu0
    %v2810 = vpop.f32.mrf.mxu0
    %2811 = vdwg.mxu0
    %v2812 = vpack.c.bf16 %v2599, %v2599
    %s2813 = scalar_lea.vmem [#allocation8], 128
    %v2814 = vld [vmem:[%s2813] sm:$0xf]
    %v2815 = vld [vmem:[%s2813 + $0x4] sm:$0xf]
    %v2816 = vld [vmem:[%s2813 + $0x8] sm:$0xf]
    %v2817 = vld [vmem:[%s2813 + $0xc] sm:$0xf]
    %v2818 = vld [vmem:[%s2813 + $0x10] sm:$0xf]
    %v2819 = vld [vmem:[%s2813 + $0x14] sm:$0xf]
    %v2820 = vld [vmem:[%s2813 + $0x18] sm:$0xf]
    %v2821 = vld [vmem:[%s2813 + $0x1c] sm:$0xf]
    %v2822 = vld [vmem:[%s2813 + $0x20] sm:$0xf]
    %v2823 = vld [vmem:[%s2813 + $0x24] sm:$0xf]
    %v2824 = vld [vmem:[%s2813 + $0x28] sm:$0xf]
    %v2825 = vld [vmem:[%s2813 + $0x2c] sm:$0xf]
    %v2826 = vld [vmem:[%s2813 + $0x30] sm:$0xf]
    %v2827 = vld [vmem:[%s2813 + $0x34] sm:$0xf]
    %v2828 = vld [vmem:[%s2813 + $0x38] sm:$0xf]
    %v2829 = vld [vmem:[%s2813 + $0x3c] sm:$0xf]
    %v2846 = vunpack.c.l.b16 %v2814
    %v2847 = vunpack.c.l.b16 %v2815
    %v2848 = vunpack.c.l.b16 %v2816
    %v2849 = vunpack.c.l.b16 %v2817
    %v2850 = vunpack.c.l.b16 %v2818
    %v2851 = vunpack.c.l.b16 %v2819
    %v2852 = vunpack.c.l.b16 %v2820
    %v2853 = vunpack.c.l.b16 %v2821
    %v2854 = vunpack.c.l.b16 %v2822
    %v2855 = vunpack.c.l.b16 %v2823
    %v2856 = vunpack.c.l.b16 %v2824
    %v2857 = vunpack.c.l.b16 %v2825
    %v2858 = vunpack.c.l.b16 %v2826
    %v2859 = vunpack.c.l.b16 %v2827
    %v2860 = vunpack.c.l.b16 %v2828
    %v2861 = vunpack.c.l.b16 %v2829
    %v2862 = vpack.c.b16 %v2847, %v2846
    %v2863 = vpack.c.b16 %v2849, %v2848
    %v2864 = vpack.c.b16 %v2851, %v2850
    %v2865 = vpack.c.b16 %v2853, %v2852
    %v2866 = vpack.c.b16 %v2855, %v2854
    %v2867 = vpack.c.b16 %v2857, %v2856
    %v2868 = vpack.c.b16 %v2859, %v2858
    %v2869 = vpack.c.b16 %v2861, %v2860
    %2878 = vmatprep.subr.bf16.mxu0 0
    %2879 = vmatpush1.bf16.msra.mxu0 %v2869
    %2880 = vmatprep.subr.bf16.mxu0 0
    %2881 = vmatpush1.bf16.msra.mxu0 %v2868
    %2882 = vmatprep.subr.bf16.mxu0 0
    %2883 = vmatpush1.bf16.msra.mxu0 %v2867
    %2884 = vmatprep.subr.bf16.mxu0 0
    %2885 = vmatpush1.bf16.msra.mxu0 %v2866
    %2886 = vmatprep.subr.bf16.mxu0 0
    %2887 = vmatpush1.bf16.msra.mxu0 %v2865
    %2888 = vmatprep.subr.bf16.mxu0 0
    %2889 = vmatpush1.bf16.msra.mxu0 %v2864
    %2890 = vmatprep.subr.bf16.mxu0 0
    %2891 = vmatpush1.bf16.msra.mxu0 %v2863
    %2892 = vmatprep.subr.bf16.mxu0 0
    %2893 = vmatpush1.bf16.msra.mxu0 %v2862
    %2894 = vmatprep.subr.bf16.mxu0 0
    %2895 = vmatpush2.bf16.msra.mxu0 0
    %2896 = vmatprep.subr.bf16.mxu0 0
    %2897 = vmatpush2.bf16.msra.mxu0 0
    %2898 = vmatprep.subr.bf16.mxu0 0
    %2899 = vmatpush2.bf16.msra.mxu0 0
    %2900 = vmatprep.subr.bf16.mxu0 0
    %2901 = vmatpush2.bf16.msra.mxu0 0
    %2902 = vmatprep.subr.bf16.mxu0 0
    %2903 = vmatpush2.bf16.msra.mxu0 0
    %2904 = vmatprep.subr.bf16.mxu0 0
    %2905 = vmatpush2.bf16.msra.mxu0 0
    %2906 = vmatprep.subr.bf16.mxu0 0
    %2907 = vmatpush2.bf16.msra.mxu0 0
    %2908 = vmatprep.subr.bf16.mxu0 0
    %2909 = vmatpush2.bf16.msra.mxu0 0
    %2910 = vmatprep.mubr.bf16.mxu0 0
    %2911 = vmatmul.mubr.bf16.gmra.mxu0 %v2812
    %v2912 = vpop.f32.mrf.mxu0
    %v2913 = vadd.f32 0.0, %v2912
    %v2914 = vpop.f32.mrf.mxu0
    %v2915 = vpop.f32.mrf.mxu0
    %v2916 = vpop.f32.mrf.mxu0
    %2917 = vdwg.mxu0
    %v2918 = vadd.f32 %v2807, %v2913
    %v2919 = vpack.c.bf16 %v2600, %v2600
    %s2920 = scalar_lea.vmem [#allocation8], 192
    %v2921 = vld [vmem:[%s2920] sm:$0xf]
    %v2922 = vld [vmem:[%s2920 + $0x4] sm:$0xf]
    %v2923 = vld [vmem:[%s2920 + $0x8] sm:$0xf]
    %v2924 = vld [vmem:[%s2920 + $0xc] sm:$0xf]
    %v2925 = vld [vmem:[%s2920 + $0x10] sm:$0xf]
    %v2926 = vld [vmem:[%s2920 + $0x14] sm:$0xf]
    %v2927 = vld [vmem:[%s2920 + $0x18] sm:$0xf]
    %v2928 = vld [vmem:[%s2920 + $0x1c] sm:$0xf]
    %v2929 = vld [vmem:[%s2920 + $0x20] sm:$0xf]
    %v2930 = vld [vmem:[%s2920 + $0x24] sm:$0xf]
    %v2931 = vld [vmem:[%s2920 + $0x28] sm:$0xf]
    %v2932 = vld [vmem:[%s2920 + $0x2c] sm:$0xf]
    %v2933 = vld [vmem:[%s2920 + $0x30] sm:$0xf]
    %v2934 = vld [vmem:[%s2920 + $0x34] sm:$0xf]
    %v2935 = vld [vmem:[%s2920 + $0x38] sm:$0xf]
    %v2936 = vld [vmem:[%s2920 + $0x3c] sm:$0xf]
    %v2953 = vunpack.c.l.b16 %v2921
    %v2954 = vunpack.c.l.b16 %v2922
    %v2955 = vunpack.c.l.b16 %v2923
    %v2956 = vunpack.c.l.b16 %v2924
    %v2957 = vunpack.c.l.b16 %v2925
    %v2958 = vunpack.c.l.b16 %v2926
    %v2959 = vunpack.c.l.b16 %v2927
    %v2960 = vunpack.c.l.b16 %v2928
    %v2961 = vunpack.c.l.b16 %v2929
    %v2962 = vunpack.c.l.b16 %v2930
    %v2963 = vunpack.c.l.b16 %v2931
    %v2964 = vunpack.c.l.b16 %v2932
    %v2965 = vunpack.c.l.b16 %v2933
    %v2966 = vunpack.c.l.b16 %v2934
    %v2967 = vunpack.c.l.b16 %v2935
    %v2968 = vunpack.c.l.b16 %v2936
    %v2969 = vpack.c.b16 %v2954, %v2953
    %v2970 = vpack.c.b16 %v2956, %v2955
    %v2971 = vpack.c.b16 %v2958, %v2957
    %v2972 = vpack.c.b16 %v2960, %v2959
    %v2973 = vpack.c.b16 %v2962, %v2961
    %v2974 = vpack.c.b16 %v2964, %v2963
    %v2975 = vpack.c.b16 %v2966, %v2965
    %v2976 = vpack.c.b16 %v2968, %v2967
    %2985 = vmatprep.subr.bf16.mxu0 0
    %2986 = vmatpush1.bf16.msra.mxu0 %v2976
    %2987 = vmatprep.subr.bf16.mxu0 0
    %2988 = vmatpush1.bf16.msra.mxu0 %v2975
    %2989 = vmatprep.subr.bf16.mxu0 0
    %2990 = vmatpush1.bf16.msra.mxu0 %v2974
    %2991 = vmatprep.subr.bf16.mxu0 0
    %2992 = vmatpush1.bf16.msra.mxu0 %v2973
    %2993 = vmatprep.subr.bf16.mxu0 0
    %2994 = vmatpush1.bf16.msra.mxu0 %v2972
    %2995 = vmatprep.subr.bf16.mxu0 0
    %2996 = vmatpush1.bf16.msra.mxu0 %v2971
    %2997 = vmatprep.subr.bf16.mxu0 0
    %2998 = vmatpush1.bf16.msra.mxu0 %v2970
    %2999 = vmatprep.subr.bf16.mxu0 0
    %3000 = vmatpush1.bf16.msra.mxu0 %v2969
    %3001 = vmatprep.subr.bf16.mxu0 0
    %3002 = vmatpush2.bf16.msra.mxu0 0
    %3003 = vmatprep.subr.bf16.mxu0 0
    %3004 = vmatpush2.bf16.msra.mxu0 0
    %3005 = vmatprep.subr.bf16.mxu0 0
    %3006 = vmatpush2.bf16.msra.mxu0 0
    %3007 = vmatprep.subr.bf16.mxu0 0
    %3008 = vmatpush2.bf16.msra.mxu0 0
    %3009 = vmatprep.subr.bf16.mxu0 0
    %3010 = vmatpush2.bf16.msra.mxu0 0
    %3011 = vmatprep.subr.bf16.mxu0 0
    %3012 = vmatpush2.bf16.msra.mxu0 0
    %3013 = vmatprep.subr.bf16.mxu0 0
    %3014 = vmatpush2.bf16.msra.mxu0 0
    %3015 = vmatprep.subr.bf16.mxu0 0
    %3016 = vmatpush2.bf16.msra.mxu0 0
    %3017 = vmatprep.mubr.bf16.mxu0 0
    %3018 = vmatmul.mubr.bf16.gmra.mxu0 %v2919
    %v3019 = vpop.f32.mrf.mxu0
    %v3020 = vadd.f32 0.0, %v3019
    %v3021 = vpop.f32.mrf.mxu0
    %v3022 = vpop.f32.mrf.mxu0
    %v3023 = vpop.f32.mrf.mxu0
    %3024 = vdwg.mxu0
    %v3025 = vadd.f32 %v2918, %v3020
    %v3026 = vld [vmem:[%s6] sm:$0x1]
    %v3028 = vlaneseq
    %v3029 = vshrl.u32 %v3028, 7
    %v3030 = vsub.s32 0, %v3029
    %v3031 = vrot.slane %v3026, %v3030
    %v3033 = vadd.f32 %v3025, %v3031
    %3034 = vst [vmem:[#allocation10] sm:$0xff] %v3033
    // Predicated region
    $region46: #{tpu_custom_call.1} parent=1 // pred_check
      _
    $region47: #{tpu_custom_call.1} parent=1 // pred_check_branch
      %3036 = sbr.rel (0) target = $region49
    $region48: #{tpu_custom_call.1} parent=1 // pred_region
      %s3038 = ssub.s32 128, 128
      %3039 = vsyncadd [#allocation4], %s3038
      %s3041 = sshll.u32 [#allocation10], 4
      %s3042 = int_to_ptr.vmem [resolvable:$true] %s3041
      %3044 = dma.vmem_to_hbm [thread:$0]  %s3042, 128, %s7, [#allocation4]
    $region49: #{tpu_custom_call.1} parent=1 // pred_fallthru
      _
    // Predicated region
    $region50: #{tpu_custom_call.1} parent=1 // pred_check
      _
    $region51: #{tpu_custom_call.1} parent=1 // pred_check_branch
      %3046 = sbr.rel (0) target = $region53
    $region52: #{tpu_custom_call.1} parent=1 // pred_region
      %3047 = dma.done [#allocation4], 128
    $region53: #{tpu_custom_call.1} parent=1 // pred_fallthru
      _
    %3048 = vsyncpa [#allocation3], 1
    %3049 = vsyncpa [#allocation6], 1
    %3050 = vsyncpa [#allocation9], 1
    %3051 = vsyncpa [#allocation4], 1

// kernel: tpu_custom_call.1
$region0: #{tpu_custom_call.1}
  #allocation0 [shape = 'u32[]', space=smem, size = 0x4, offset = 0x4, fixed_abs, tag = 'smem constant byte address 0x4 - core index']
  #allocation1 [shape = 'u32[144,128]{1,0:T(1,128)}', space=vmem, size = 0x12000, scoped, tag = 'internal scratch']
  %s0 = inlined_call_operand.hbm [shape: f32[7,7,8,128], index: 0, kind: input, shape index: {}]
  %s1 = inlined_call_operand.hbm [shape: bf16[128,128], index: 1, kind: input, shape index: {}]
  %s2 = inlined_call_operand.vmem [shape: f32[1,128], index: 2, kind: input, shape index: {}]
  %s3 = inlined_call_operand.hbm [shape: bf16[16,128,128], index: 3, kind: input, shape index: {}]
  %s4 = inlined_call_operand.vmem [shape: f32[1,128], index: 4, kind: input, shape index: {}]
  %s5 = inlined_call_operand.hbm [shape: bf16[4,128,128], index: 5, kind: input, shape index: {}]
  %s6 = inlined_call_operand.vmem [shape: f32[1,128], index: 6, kind: input, shape index: {}]
  %s7 = inlined_call_operand.hbm [shape: f32[8,128], index: 7, kind: output, shape index: {}]
  %s8 = sld [smem:[#allocation0]]
  $region54: #{tpu_custom_call.1} parent=0
    _
  %s10 = ssub.s32 1, %s8
  %s11 = scalar_select 0, %s10, %s8
  $region1: #{tpu_custom_call.1} parent=0
    #allocation2 [shape = 'u8[200704]{0}', space=vmem, size = 0x31000, scoped, tag = 'input window, operand 0, single buffered']
    #allocation3 [shape = 's32[1]{0}', space=sflag, size = 0x4, scoped, tag = 'scoped memory for tpu_custom_call.1']
    #allocation4 [shape = 's32[1]{0}', space=sflag, size = 0x4, scoped, tag = 'scoped memory for tpu_custom_call.1']
    #allocation5 [shape = 'u8[32768]{0}', space=vmem, size = 0x8000, scoped, tag = 'input window, operand 1, single buffered']
    #allocation6 [shape = 's32[1]{0}', space=sflag, size = 0x4, scoped, tag = 'scoped memory for tpu_custom_call.1']
    #allocation7 [shape = 'u8[524288]{0}', space=vmem, size = 0x80000, scoped, tag = 'input window, operand 3, single buffered']
    #allocation8 [shape = 'u8[131072]{0}', space=vmem, size = 0x20000, scoped, tag = 'input window, operand 5, single buffered']
    #allocation9 [shape = 's32[1]{0}', space=sflag, size = 0x4, scoped, tag = 'scoped memory for tpu_custom_call.1']
    #allocation10 [shape = 'u8[4096]{0}', space=vmem, size = 0x1000, scoped, tag = 'output window, operand 0, single buffered']
    %12 = vsyncpa [#allocation3], 0
    %13 = vsyncpa [#allocation6], 0
    %14 = vsyncpa [#allocation9], 0
    %15 = vsyncpa [#allocation4], 0
    // Predicated region
    $region2: #{tpu_custom_call.1} parent=1 // pred_check
      _
    $region3: #{tpu_custom_call.1} parent=1 // pred_check_branch
      %17 = sbr.rel (0) target = $region5
    $region4: #{tpu_custom_call.1} parent=1 // pred_region
      %s19 = ssub.s32 6272, 6272
      %20 = vsyncadd [#allocation3], %s19
      %s21 = sshll.u32 [#allocation2], 4
      %s22 = int_to_ptr.vmem [resolvable:$true] %s21
      %27 = dma.hbm_to_vmem [thread:$0]  %s0, 6272, %s22, [#allocation3], 128, 128, 8
    $region5: #{tpu_custom_call.1} parent=1 // pred_fallthru
      _
    // Predicated region
    $region6: #{tpu_custom_call.1} parent=1 // pred_check
      _
    $region7: #{tpu_custom_call.1} parent=1 // pred_check_branch
      %29 = sbr.rel (0) target = $region9
    $region8: #{tpu_custom_call.1} parent=1 // pred_region
      %s31 = ssub.s32 1024, 1024
      %32 = vsyncadd [#allocation6], %s31
      %s33 = sshll.u32 [#allocation5], 4
      %s34 = int_to_ptr.vmem [resolvable:$true] %s33
      %39 = dma.hbm_to_vmem [thread:$0]  %s1, 1024, %s34, [#allocation6], 64, 64, 4
    $region9: #{tpu_custom_call.1} parent=1 // pred_fallthru
      _
    // Predicated region
    $region10: #{tpu_custom_call.1} parent=1 // pred_check
      _
    $region11: #{tpu_custom_call.1} parent=1 // pred_check_branch
      %41 = sbr.rel (0) target = $region13
    $region12: #{tpu_custom_call.1} parent=1 // pred_region
      _
    $region13: #{tpu_custom_call.1} parent=1 // pred_fallthru
      _
    // Predicated region
    $region14: #{tpu_custom_call.1} parent=1 // pred_check
      _
    $region15: #{tpu_custom_call.1} parent=1 // pred_check_branch
      %43 = sbr.rel (0) target = $region17
    $region16: #{tpu_custom_call.1} parent=1 // pred_region
      %s45 = ssub.s32 16384, 16384
      %46 = vsyncadd [#allocation6], %s45
      %s47 = sshll.u32 [#allocation7], 4
      %s48 = int_to_ptr.vmem [resolvable:$true] %s47
      %53 = dma.hbm_to_vmem [thread:$0]  %s3, 16384, %s48, [#allocation6], 64, 64, 4
    $region17: #{tpu_custom_call.1} parent=1 // pred_fallthru
      _
    // Predicated region
    $region18: #{tpu_custom_call.1} parent=1 // pred_check
      _
    $region19: #{tpu_custom_call.1} parent=1 // pred_check_branch
      %55 = sbr.rel (0) target = $region21
    $region20: #{tpu_custom_call.1} parent=1 // pred_region
      _
    $region21: #{tpu_custom_call.1} parent=1 // pred_fallthru
      _
    // Predicated region
    $region22: #{tpu_custom_call.1} parent=1 // pred_check
      _
    $region23: #{tpu_custom_call.1} parent=1 // pred_check_branch
      %57 = sbr.rel (0) target = $region25
    $region24: #{tpu_custom_call.1} parent=1 // pred_region
      %s59 = ssub.s32 4096, 4096
      %60 = vsyncadd [#allocation9], %s59
      %s61 = sshll.u32 [#allocation8], 4
      %s62 = int_to_ptr.vmem [resolvable:$true] %s61
      %67 = dma.hbm_to_vmem [thread:$0]  %s5, 4096, %s62, [#allocation9], 64, 64, 4
    $region25: #{tpu_custom_call.1} parent=1 // pred_fallthru
      _
    // Predicated region
    $region26: #{tpu_custom_call.1} parent=1 // pred_check
      _
    $region27: #{tpu_custom_call.1} parent=1 // pred_check_branch
      %69 = sbr.rel (0) target = $region29
    $region28: #{tpu_custom_call.1} parent=1 // pred_region
      _
    $region29: #{tpu_custom_call.1} parent=1 // pred_fallthru
      _
    // Predicated region
    $region30: #{tpu_custom_call.1} parent=1 // pred_check
      _
    $region31: #{tpu_custom_call.1} parent=1 // pred_check_branch
      %71 = sbr.rel (0) target = $region33
    $region32: #{tpu_custom_call.1} parent=1 // pred_region
      %72 = dma.done [#allocation3], 6272
    $region33: #{tpu_custom_call.1} parent=1 // pred_fallthru
      _
    // Predicated region
    $region34: #{tpu_custom_call.1} parent=1 // pred_check
      _
    $region35: #{tpu_custom_call.1} parent=1 // pred_check_branch
      %74 = sbr.rel (0) target = $region37
    $region36: #{tpu_custom_call.1} parent=1 // pred_region
      %75 = dma.done [#allocation6], 1024
    $region37: #{tpu_custom_call.1} parent=1 // pred_fallthru
      _
    // Predicated region
    $region38: #{tpu_custom_call.1} parent=1 // pred_check
      _
    $region39: #{tpu_custom_call.1} parent=1 // pred_check_branch
      %77 = sbr.rel (0) target = $region41
    $region40: #{tpu_custom_call.1} parent=1 // pred_region
      %78 = dma.done [#allocation6], 16384
    $region41: #{tpu_custom_call.1} parent=1 // pred_fallthru
      _
    // Predicated region
    $region42: #{tpu_custom_call.1} parent=1 // pred_check
      _
    $region43: #{tpu_custom_call.1} parent=1 // pred_check_branch
      %80 = sbr.rel (0) target = $region45
    $region44: #{tpu_custom_call.1} parent=1 // pred_region
      %81 = dma.done [#allocation9], 4096
    $region45: #{tpu_custom_call.1} parent=1 // pred_fallthru
      _
    %v83 = vld [vmem:[#allocation2] sm:$0xff]
    %v84 = vld [vmem:[#allocation2 + $0x8] sm:$0xff]
    %v85 = vld [vmem:[#allocation2 + $0x10] sm:$0xff]
    %v86 = vld [vmem:[#allocation2 + $0x18] sm:$0xff]
    %v87 = vld [vmem:[#allocation2 + $0x20] sm:$0xff]
    %v88 = vld [vmem:[#allocation2 + $0x28] sm:$0xff]
    %v89 = vld [vmem:[#allocation2 + $0x30] sm:$0xff]
    %v90 = vld [vmem:[#allocation2 + $0x38] sm:$0xff]
    %v91 = vld [vmem:[#allocation2 + $0x40] sm:$0xff]
    %v92 = vld [vmem:[#allocation2 + $0x48] sm:$0xff]
    %v93 = vld [vmem:[#allocation2 + $0x50] sm:$0xff]
    %v94 = vld [vmem:[#allocation2 + $0x58] sm:$0xff]
    %v95 = vld [vmem:[#allocation2 + $0x60] sm:$0xff]
    %v96 = vld [vmem:[#allocation2 + $0x68] sm:$0xff]
    %v97 = vld [vmem:[#allocation2 + $0x70] sm:$0xff]
    %v98 = vld [vmem:[#allocation2 + $0x78] sm:$0xff]
    %v99 = vld [vmem:[#allocation2 + $0x80] sm:$0xff]
    %v100 = vld [vmem:[#allocation2 + $0x88] sm:$0xff]
    %v101 = vld [vmem:[#allocation2 + $0x90] sm:$0xff]
    %v102 = vld [vmem:[#allocation2 + $0x98] sm:$0xff]
    %v103 = vld [vmem:[#allocation2 + $0xa0] sm:$0xff]
    %v104 = vld [vmem:[#allocation2 + $0xa8] sm:$0xff]
    %v105 = vld [vmem:[#allocation2 + $0xb0] sm:$0xff]
    %v106 = vld [vmem:[#allocation2 + $0xb8] sm:$0xff]
    %v107 = vld [vmem:[#allocation2 + $0xc0] sm:$0xff]
    %v108 = vld [vmem:[#allocation2 + $0xc8] sm:$0xff]
    %v109 = vld [vmem:[#allocation2 + $0xd0] sm:$0xff]
    %v110 = vld [vmem:[#allocation2 + $0xd8] sm:$0xff]
    %v111 = vld [vmem:[#allocation2 + $0xe0] sm:$0xff]
    %v112 = vld [vmem:[#allocation2 + $0xe8] sm:$0xff]
    %v113 = vld [vmem:[#allocation2 + $0xf0] sm:$0xff]
    %v114 = vld [vmem:[#allocation2 + $0xf8] sm:$0xff]
    %v115 = vld [vmem:[#allocation2 + $0x100] sm:$0xff]
    %v116 = vld [vmem:[#allocation2 + $0x108] sm:$0xff]
    %v117 = vld [vmem:[#allocation2 + $0x110] sm:$0xff]
    %v118 = vld [vmem:[#allocation2 + $0x118] sm:$0xff]
    %v119 = vld [vmem:[#allocation2 + $0x120] sm:$0xff]
    %v120 = vld [vmem:[#allocation2 + $0x128] sm:$0xff]
    %v121 = vld [vmem:[#allocation2 + $0x130] sm:$0xff]
    %v122 = vld [vmem:[#allocation2 + $0x138] sm:$0xff]
    %v123 = vld [vmem:[#allocation2 + $0x140] sm:$0xff]
    %v124 = vld [vmem:[#allocation2 + $0x148] sm:$0xff]
    %v125 = vld [vmem:[#allocation2 + $0x150] sm:$0xff]
    %v126 = vld [vmem:[#allocation2 + $0x158] sm:$0xff]
    %v127 = vld [vmem:[#allocation2 + $0x160] sm:$0xff]
    %v128 = vld [vmem:[#allocation2 + $0x168] sm:$0xff]
    %v129 = vld [vmem:[#allocation2 + $0x170] sm:$0xff]
    %v130 = vld [vmem:[#allocation2 + $0x178] sm:$0xff]
    %v131 = vld [vmem:[#allocation2 + $0x180] sm:$0xff]
    %v132 = vpack.c.bf16 %v84, %v83
    %v133 = vpack.c.bf16 %v86, %v85
    %v134 = vpack.c.bf16 %v88, %v87
    %v135 = vpack.c.bf16 %v90, %v89
    %v136 = vpack.c.bf16 %v92, %v91
    %v137 = vpack.c.bf16 %v94, %v93
    %v138 = vpack.c.bf16 %v96, %v95
    %v139 = vpack.c.bf16 %v98, %v97
    %v140 = vpack.c.bf16 %v100, %v99
    %v141 = vpack.c.bf16 %v102, %v101
    %v142 = vpack.c.bf16 %v104, %v103
    %v143 = vpack.c.bf16 %v106, %v105
    %v144 = vpack.c.bf16 %v108, %v107
    %v145 = vpack.c.bf16 %v110, %v109
    %v146 = vpack.c.bf16 %v112, %v111
    %v147 = vpack.c.bf16 %v114, %v113
    %v148 = vpack.c.bf16 %v116, %v115
    %v149 = vpack.c.bf16 %v118, %v117
    %v150 = vpack.c.bf16 %v120, %v119
    %v151 = vpack.c.bf16 %v122, %v121
    %v152 = vpack.c.bf16 %v124, %v123
    %v153 = vpack.c.bf16 %v126, %v125
    %v154 = vpack.c.bf16 %v128, %v127
    %v155 = vpack.c.bf16 %v130, %v129
    %v156 = vpack.c.bf16 %v131, %v131
    %v157 = vld [vmem:[#allocation5] sm:$0xf]
    %v158 = vld [vmem:[#allocation5 + $0x4] sm:$0xf]
    %v159 = vld [vmem:[#allocation5 + $0x8] sm:$0xf]
    %v160 = vld [vmem:[#allocation5 + $0xc] sm:$0xf]
    %v161 = vld [vmem:[#allocation5 + $0x10] sm:$0xf]
    %v162 = vld [vmem:[#allocation5 + $0x14] sm:$0xf]
    %v163 = vld [vmem:[#allocation5 + $0x18] sm:$0xf]
    %v164 = vld [vmem:[#allocation5 + $0x1c] sm:$0xf]
    %v165 = vld [vmem:[#allocation5 + $0x20] sm:$0xf]
    %v166 = vld [vmem:[#allocation5 + $0x24] sm:$0xf]
    %v167 = vld [vmem:[#allocation5 + $0x28] sm:$0xf]
    %v168 = vld [vmem:[#allocation5 + $0x2c] sm:$0xf]
    %v169 = vld [vmem:[#allocation5 + $0x30] sm:$0xf]
    %v170 = vld [vmem:[#allocation5 + $0x34] sm:$0xf]
    %v171 = vld [vmem:[#allocation5 + $0x38] sm:$0xf]
    %v172 = vld [vmem:[#allocation5 + $0x3c] sm:$0xf]
    %v173 = vld [vmem:[%s2] sm:$0x1]
    %v175 = vlaneseq
    %v176 = vshrl.u32 %v175, 7
    %v177 = vsub.s32 0, %v176
    %v178 = vrot.slane %v173, %v177
    %v196 = vunpack.c.l.b16 %v157
    %v197 = vunpack.c.l.b16 %v158
    %v198 = vunpack.c.l.b16 %v159
    %v199 = vunpack.c.l.b16 %v160
    %v200 = vunpack.c.l.b16 %v161
    %v201 = vunpack.c.l.b16 %v162
    %v202 = vunpack.c.l.b16 %v163
    %v203 = vunpack.c.l.b16 %v164
    %v204 = vunpack.c.l.b16 %v165
    %v205 = vunpack.c.l.b16 %v166
    %v206 = vunpack.c.l.b16 %v167
    %v207 = vunpack.c.l.b16 %v168
    %v208 = vunpack.c.l.b16 %v169
    %v209 = vunpack.c.l.b16 %v170
    %v210 = vunpack.c.l.b16 %v171
    %v211 = vunpack.c.l.b16 %v172
    %v212 = vpack.c.b16 %v197, %v196
    %v213 = vpack.c.b16 %v199, %v198
    %v214 = vpack.c.b16 %v201, %v200
    %v215 = vpack.c.b16 %v203, %v202
    %v216 = vpack.c.b16 %v205, %v204
    %v217 = vpack.c.b16 %v207, %v206
    %v218 = vpack.c.b16 %v209, %v208
    %v219 = vpack.c.b16 %v211, %v210
    %228 = vmatprep.subr.bf16.mxu0 0
    %229 = vmatpush1.bf16.msra.mxu0 %v219
    %230 = vmatprep.subr.bf16.mxu0 0
    %231 = vmatpush1.bf16.msra.mxu0 %v218
    %232 = vmatprep.subr.bf16.mxu0 0
    %233 = vmatpush1.bf16.msra.mxu0 %v217
    %234 = vmatprep.subr.bf16.mxu0 0
    %235 = vmatpush1.bf16.msra.mxu0 %v216
    %236 = vmatprep.subr.bf16.mxu0 0
    %237 = vmatpush1.bf16.msra.mxu0 %v215
    %238 = vmatprep.subr.bf16.mxu0 0
    %239 = vmatpush1.bf16.msra.mxu0 %v214
    %240 = vmatprep.subr.bf16.mxu0 0
    %241 = vmatpush1.bf16.msra.mxu0 %v213
    %242 = vmatprep.subr.bf16.mxu0 0
    %243 = vmatpush1.bf16.msra.mxu0 %v212
    %244 = vmatprep.subr.bf16.mxu0 0
    %245 = vmatpush2.bf16.msra.mxu0 0
    %246 = vmatprep.subr.bf16.mxu0 0
    %247 = vmatpush2.bf16.msra.mxu0 0
    %248 = vmatprep.subr.bf16.mxu0 0
    %249 = vmatpush2.bf16.msra.mxu0 0
    %250 = vmatprep.subr.bf16.mxu0 0
    %251 = vmatpush2.bf16.msra.mxu0 0
    %252 = vmatprep.subr.bf16.mxu0 0
    %253 = vmatpush2.bf16.msra.mxu0 0
    %254 = vmatprep.subr.bf16.mxu0 0
    %255 = vmatpush2.bf16.msra.mxu0 0
    %256 = vmatprep.subr.bf16.mxu0 0
    %257 = vmatpush2.bf16.msra.mxu0 0
    %258 = vmatprep.subr.bf16.mxu0 0
    %259 = vmatpush2.bf16.msra.mxu0 0
    %260 = vmatprep.mubr.bf16.mxu0 0
    %261 = vmatmul.mubr.bf16.gmra.mxu0 %v132
    %v262 = vpop.f32.mrf.mxu0
    %v263 = vadd.f32 %v178, %v262
    %v264 = vpop.f32.mrf.mxu0
    %v265 = vpop.f32.mrf.mxu0
    %v266 = vadd.f32 %v178, %v265
    %v267 = vpop.f32.mrf.mxu0
    %268 = vmatprep.mubr.bf16.mxu0 0
    %269 = vmatmul.mubr.bf16.gmra.mxu0 %v133
    %v270 = vpop.f32.mrf.mxu0
    %v271 = vadd.f32 %v178, %v270
    %v272 = vpop.f32.mrf.mxu0
    %v273 = vpop.f32.mrf.mxu0
    %v274 = vadd.f32 %v178, %v273
    %v275 = vpop.f32.mrf.mxu0
    %276 = vmatprep.mubr.bf16.mxu0 0
    %277 = vmatmul.mubr.bf16.gmra.mxu0 %v134
    %v278 = vpop.f32.mrf.mxu0
    %v279 = vadd.f32 %v178, %v278
    %v280 = vpop.f32.mrf.mxu0
    %v281 = vpop.f32.mrf.mxu0
    %v282 = vadd.f32 %v178, %v281
    %v283 = vpop.f32.mrf.mxu0
    %284 = vmatprep.mubr.bf16.mxu0 0
    %285 = vmatmul.mubr.bf16.gmra.mxu0 %v135
    %v286 = vpop.f32.mrf.mxu0
    %v287 = vpop.f32.mrf.mxu0
    %v288 = vpop.f32.mrf.mxu0
    %v289 = vadd.f32 %v178, %v288
    %v290 = vpop.f32.mrf.mxu0
    %291 = vmatprep.mubr.bf16.mxu0 0
    %292 = vmatmul.mubr.bf16.gmra.mxu0 %v136
    %v293 = vpop.f32.mrf.mxu0
    %v294 = vadd.f32 %v178, %v293
    %v295 = vpop.f32.mrf.mxu0
    %v296 = vpop.f32.mrf.mxu0
    %v297 = vadd.f32 %v178, %v296
    %v298 = vpop.f32.mrf.mxu0
    %299 = vmatprep.mubr.bf16.mxu0 0
    %300 = vmatmul.mubr.bf16.gmra.mxu0 %v137
    %v301 = vpop.f32.mrf.mxu0
    %v302 = vadd.f32 %v178, %v301
    %v303 = vpop.f32.mrf.mxu0
    %v304 = vpop.f32.mrf.mxu0
    %v305 = vadd.f32 %v178, %v304
    %v306 = vpop.f32.mrf.mxu0
    %307 = vmatprep.mubr.bf16.mxu0 0
    %308 = vmatmul.mubr.bf16.gmra.mxu0 %v138
    %v309 = vpop.f32.mrf.mxu0
    %v310 = vadd.f32 %v178, %v309
    %v311 = vpop.f32.mrf.mxu0
    %v312 = vpop.f32.mrf.mxu0
    %v313 = vpop.f32.mrf.mxu0
    %314 = vmatprep.mubr.bf16.mxu0 0
    %315 = vmatmul.mubr.bf16.gmra.mxu0 %v139
    %v316 = vpop.f32.mrf.mxu0
    %v317 = vadd.f32 %v178, %v316
    %v318 = vpop.f32.mrf.mxu0
    %v319 = vpop.f32.mrf.mxu0
    %v320 = vadd.f32 %v178, %v319
    %v321 = vpop.f32.mrf.mxu0
    %322 = vmatprep.mubr.bf16.mxu0 0
    %323 = vmatmul.mubr.bf16.gmra.mxu0 %v140
    %v324 = vpop.f32.mrf.mxu0
    %v325 = vadd.f32 %v178, %v324
    %v326 = vpop.f32.mrf.mxu0
    %v327 = vpop.f32.mrf.mxu0
    %v328 = vadd.f32 %v178, %v327
    %v329 = vpop.f32.mrf.mxu0
    %330 = vmatprep.mubr.bf16.mxu0 0
    %331 = vmatmul.mubr.bf16.gmra.mxu0 %v141
    %v332 = vpop.f32.mrf.mxu0
    %v333 = vadd.f32 %v178, %v332
    %v334 = vpop.f32.mrf.mxu0
    %v335 = vpop.f32.mrf.mxu0
    %v336 = vadd.f32 %v178, %v335
    %v337 = vpop.f32.mrf.mxu0
    %338 = vmatprep.mubr.bf16.mxu0 0
    %339 = vmatmul.mubr.bf16.gmra.mxu0 %v142
    %v340 = vpop.f32.mrf.mxu0
    %v341 = vpop.f32.mrf.mxu0
    %v342 = vpop.f32.mrf.mxu0
    %v343 = vadd.f32 %v178, %v342
    %v344 = vpop.f32.mrf.mxu0
    %345 = vmatprep.mubr.bf16.mxu0 0
    %346 = vmatmul.mubr.bf16.gmra.mxu0 %v143
    %v347 = vpop.f32.mrf.mxu0
    %v348 = vadd.f32 %v178, %v347
    %v349 = vpop.f32.mrf.mxu0
    %v350 = vpop.f32.mrf.mxu0
    %v351 = vadd.f32 %v178, %v350
    %v352 = vpop.f32.mrf.mxu0
    %353 = vmatprep.mubr.bf16.mxu0 0
    %354 = vmatmul.mubr.bf16.gmra.mxu0 %v144
    %v355 = vpop.f32.mrf.mxu0
    %v356 = vadd.f32 %v178, %v355
    %v357 = vpop.f32.mrf.mxu0
    %v358 = vpop.f32.mrf.mxu0
    %v359 = vadd.f32 %v178, %v358
    %v360 = vpop.f32.mrf.mxu0
    %361 = vmatprep.mubr.bf16.mxu0 0
    %362 = vmatmul.mubr.bf16.gmra.mxu0 %v145
    %v363 = vpop.f32.mrf.mxu0
    %v364 = vadd.f32 %v178, %v363
    %v365 = vpop.f32.mrf.mxu0
    %v366 = vpop.f32.mrf.mxu0
    %v367 = vpop.f32.mrf.mxu0
    %368 = vmatprep.mubr.bf16.mxu0 0
    %369 = vmatmul.mubr.bf16.gmra.mxu0 %v146
    %v370 = vpop.f32.mrf.mxu0
    %v371 = vadd.f32 %v178, %v370
    %v372 = vpop.f32.mrf.mxu0
    %v373 = vpop.f32.mrf.mxu0
    %v374 = vadd.f32 %v178, %v373
    %v375 = vpop.f32.mrf.mxu0
    %376 = vmatprep.mubr.bf16.mxu0 0
    %377 = vmatmul.mubr.bf16.gmra.mxu0 %v147
    %v378 = vpop.f32.mrf.mxu0
    %v379 = vadd.f32 %v178, %v378
    %v380 = vpop.f32.mrf.mxu0
    %v381 = vpop.f32.mrf.mxu0
    %v382 = vadd.f32 %v178, %v381
    %v383 = vpop.f32.mrf.mxu0
    %384 = vmatprep.mubr.bf16.mxu0 0
    %385 = vmatmul.mubr.bf16.gmra.mxu0 %v148
    %v386 = vpop.f32.mrf.mxu0
    %v387 = vadd.f32 %v178, %v386
    %v388 = vpop.f32.mrf.mxu0
    %v389 = vpop.f32.mrf.mxu0
    %v390 = vadd.f32 %v178, %v389
    %v391 = vpop.f32.mrf.mxu0
    %392 = vmatprep.mubr.bf16.mxu0 0
    %393 = vmatmul.mubr.bf16.gmra.mxu0 %v149
    %v394 = vpop.f32.mrf.mxu0
    %v395 = vpop.f32.mrf.mxu0
    %v396 = vpop.f32.mrf.mxu0
    %v397 = vadd.f32 %v178, %v396
    %v398 = vpop.f32.mrf.mxu0
    %399 = vmatprep.mubr.bf16.mxu0 0
    %400 = vmatmul.mubr.bf16.gmra.mxu0 %v150
    %v401 = vpop.f32.mrf.mxu0
    %v402 = vadd.f32 %v178, %v401
    %v403 = vpop.f32.mrf.mxu0
    %v404 = vpop.f32.mrf.mxu0
    %v405 = vadd.f32 %v178, %v404
    %v406 = vpop.f32.mrf.mxu0
    %407 = vmatprep.mubr.bf16.mxu0 0
    %408 = vmatmul.mubr.bf16.gmra.mxu0 %v151
    %v409 = vpop.f32.mrf.mxu0
    %v410 = vadd.f32 %v178, %v409
    %v411 = vpop.f32.mrf.mxu0
    %v412 = vpop.f32.mrf.mxu0
    %v413 = vadd.f32 %v178, %v412
    %v414 = vpop.f32.mrf.mxu0
    %415 = vmatprep.mubr.bf16.mxu0 0
    %416 = vmatmul.mubr.bf16.gmra.mxu0 %v152
    %v417 = vpop.f32.mrf.mxu0
    %v418 = vadd.f32 %v178, %v417
    %v419 = vpop.f32.mrf.mxu0
    %v420 = vpop.f32.mrf.mxu0
    %v421 = vpop.f32.mrf.mxu0
    %422 = vmatprep.mubr.bf16.mxu0 0
    %423 = vmatmul.mubr.bf16.gmra.mxu0 %v153
    %v424 = vpop.f32.mrf.mxu0
    %v425 = vpop.f32.mrf.mxu0
    %v426 = vpop.f32.mrf.mxu0
    %v427 = vpop.f32.mrf.mxu0
    %428 = vmatprep.mubr.bf16.mxu0 0
    %429 = vmatmul.mubr.bf16.gmra.mxu0 %v154
    %v430 = vpop.f32.mrf.mxu0
    %v431 = vpop.f32.mrf.mxu0
    %v432 = vpop.f32.mrf.mxu0
    %v433 = vpop.f32.mrf.mxu0
    %434 = vmatprep.mubr.bf16.mxu0 0
    %435 = vmatmul.mubr.bf16.gmra.mxu0 %v155
    %v436 = vpop.f32.mrf.mxu0
    %v437 = vpop.f32.mrf.mxu0
    %v438 = vpop.f32.mrf.mxu0
    %v439 = vpop.f32.mrf.mxu0
    %440 = vmatprep.mubr.bf16.mxu0 0
    %441 = vmatmul.mubr.bf16.gmra.mxu0 %v156
    %v442 = vpop.f32.mrf.mxu0
    %v443 = vpop.f32.mrf.mxu0
    %v444 = vpop.f32.mrf.mxu0
    %v445 = vpop.f32.mrf.mxu0
    %446 = vdwg.mxu0
    %vm447 = vcmp.gt.f32.partialorder %v263, 0.0
    %vm448 = vcmp.gt.f32.partialorder %v266, 0.0
    %vm449 = vcmp.gt.f32.partialorder %v271, 0.0
    %vm450 = vcmp.gt.f32.partialorder %v274, 0.0
    %vm451 = vcmp.gt.f32.partialorder %v279, 0.0
    %vm452 = vcmp.gt.f32.partialorder %v282, 0.0
    %vm453 = vcmp.gt.f32.partialorder %v289, 0.0
    %vm454 = vcmp.gt.f32.partialorder %v294, 0.0
    %vm455 = vcmp.gt.f32.partialorder %v297, 0.0
    %vm456 = vcmp.gt.f32.partialorder %v302, 0.0
    %vm457 = vcmp.gt.f32.partialorder %v305, 0.0
    %vm458 = vcmp.gt.f32.partialorder %v310, 0.0
    %vm459 = vcmp.gt.f32.partialorder %v317, 0.0
    %vm460 = vcmp.gt.f32.partialorder %v320, 0.0
    %vm461 = vcmp.gt.f32.partialorder %v325, 0.0
    %vm462 = vcmp.gt.f32.partialorder %v328, 0.0
    %vm463 = vcmp.gt.f32.partialorder %v333, 0.0
    %vm464 = vcmp.gt.f32.partialorder %v336, 0.0
    %vm465 = vcmp.gt.f32.partialorder %v343, 0.0
    %vm466 = vcmp.gt.f32.partialorder %v348, 0.0
    %vm467 = vcmp.gt.f32.partialorder %v351, 0.0
    %vm468 = vcmp.gt.f32.partialorder %v356, 0.0
    %vm469 = vcmp.gt.f32.partialorder %v359, 0.0
    %vm470 = vcmp.gt.f32.partialorder %v364, 0.0
    %vm471 = vcmp.gt.f32.partialorder %v371, 0.0
    %vm472 = vcmp.gt.f32.partialorder %v374, 0.0
    %vm473 = vcmp.gt.f32.partialorder %v379, 0.0
    %vm474 = vcmp.gt.f32.partialorder %v382, 0.0
    %vm475 = vcmp.gt.f32.partialorder %v387, 0.0
    %vm476 = vcmp.gt.f32.partialorder %v390, 0.0
    %vm477 = vcmp.gt.f32.partialorder %v397, 0.0
    %vm478 = vcmp.gt.f32.partialorder %v402, 0.0
    %vm479 = vcmp.gt.f32.partialorder %v405, 0.0
    %vm480 = vcmp.gt.f32.partialorder %v410, 0.0
    %vm481 = vcmp.gt.f32.partialorder %v413, 0.0
    %vm482 = vcmp.gt.f32.partialorder %v418, 0.0
    %v483 = vmin.f32 %v263, 0.0
    %v484 = vmin.f32 %v266, 0.0
    %v485 = vmin.f32 %v271, 0.0
    %v486 = vmin.f32 %v274, 0.0
    %v487 = vmin.f32 %v279, 0.0
    %v488 = vmin.f32 %v282, 0.0
    %v489 = vmin.f32 %v289, 0.0
    %v490 = vmin.f32 %v294, 0.0
    %v491 = vmin.f32 %v297, 0.0
    %v492 = vmin.f32 %v302, 0.0
    %v493 = vmin.f32 %v305, 0.0
    %v494 = vmin.f32 %v310, 0.0
    %v495 = vmin.f32 %v317, 0.0
    %v496 = vmin.f32 %v320, 0.0
    %v497 = vmin.f32 %v325, 0.0
    %v498 = vmin.f32 %v328, 0.0
    %v499 = vmin.f32 %v333, 0.0
    %v500 = vmin.f32 %v336, 0.0
    %v501 = vmin.f32 %v343, 0.0
    %v502 = vmin.f32 %v348, 0.0
    %v503 = vmin.f32 %v351, 0.0
    %v504 = vmin.f32 %v356, 0.0
    %v505 = vmin.f32 %v359, 0.0
    %v506 = vmin.f32 %v364, 0.0
    %v507 = vmin.f32 %v371, 0.0
    %v508 = vmin.f32 %v374, 0.0
    %v509 = vmin.f32 %v379, 0.0
    %v510 = vmin.f32 %v382, 0.0
    %v511 = vmin.f32 %v387, 0.0
    %v512 = vmin.f32 %v390, 0.0
    %v513 = vmin.f32 %v397, 0.0
    %v514 = vmin.f32 %v402, 0.0
    %v515 = vmin.f32 %v405, 0.0
    %v516 = vmin.f32 %v410, 0.0
    %v517 = vmin.f32 %v413, 0.0
    %v518 = vmin.f32 %v418, 0.0
    %v519 = vmul.f32 %v483, 1.442695
    %v520 = vpow.pop %v519
    %v521 = vmul.f32 %v484, 1.442695
    %v522 = vpow.pop %v521
    %v523 = vmul.f32 %v485, 1.442695
    %v524 = vpow.pop %v523
    %v525 = vmul.f32 %v486, 1.442695
    %v526 = vpow.pop %v525
    %v527 = vmul.f32 %v487, 1.442695
    %v528 = vpow.pop %v527
    %v529 = vmul.f32 %v488, 1.442695
    %v530 = vpow.pop %v529
    %v531 = vmul.f32 %v489, 1.442695
    %v532 = vpow.pop %v531
    %v533 = vmul.f32 %v490, 1.442695
    %v534 = vpow.pop %v533
    %v535 = vmul.f32 %v491, 1.442695
    %v536 = vpow.pop %v535
    %v537 = vmul.f32 %v492, 1.442695
    %v538 = vpow.pop %v537
    %v539 = vmul.f32 %v493, 1.442695
    %v540 = vpow.pop %v539
    %v541 = vmul.f32 %v494, 1.442695
    %v542 = vpow.pop %v541
    %v543 = vmul.f32 %v495, 1.442695
    %v544 = vpow.pop %v543
    %v545 = vmul.f32 %v496, 1.442695
    %v546 = vpow.pop %v545
    %v547 = vmul.f32 %v497, 1.442695
    %v548 = vpow.pop %v547
    %v549 = vmul.f32 %v498, 1.442695
    %v550 = vpow.pop %v549
    %v551 = vmul.f32 %v499, 1.442695
    %v552 = vpow.pop %v551
    %v553 = vmul.f32 %v500, 1.442695
    %v554 = vpow.pop %v553
    %v555 = vmul.f32 %v501, 1.442695
    %v556 = vpow.pop %v555
    %v557 = vmul.f32 %v502, 1.442695
    %v558 = vpow.pop %v557
    %v559 = vmul.f32 %v503, 1.442695
    %v560 = vpow.pop %v559
    %v561 = vmul.f32 %v504, 1.442695
    %v562 = vpow.pop %v561
    %v563 = vmul.f32 %v505, 1.442695
    %v564 = vpow.pop %v563
    %v565 = vmul.f32 %v506, 1.442695
    %v566 = vpow.pop %v565
    %v567 = vmul.f32 %v507, 1.442695
    %v568 = vpow.pop %v567
    %v569 = vmul.f32 %v508, 1.442695
    %v570 = vpow.pop %v569
    %v571 = vmul.f32 %v509, 1.442695
    %v572 = vpow.pop %v571
    %v573 = vmul.f32 %v510, 1.442695
    %v574 = vpow.pop %v573
    %v575 = vmul.f32 %v511, 1.442695
    %v576 = vpow.pop %v575
    %v577 = vmul.f32 %v512, 1.442695
    %v578 = vpow.pop %v577
    %v579 = vmul.f32 %v513, 1.442695
    %v580 = vpow.pop %v579
    %v581 = vmul.f32 %v514, 1.442695
    %v582 = vpow.pop %v581
    %v583 = vmul.f32 %v515, 1.442695
    %v584 = vpow.pop %v583
    %v585 = vmul.f32 %v516, 1.442695
    %v586 = vpow.pop %v585
    %v587 = vmul.f32 %v517, 1.442695
    %v588 = vpow.pop %v587
    %v589 = vmul.f32 %v518, 1.442695
    %v590 = vpow.pop %v589
    %v591 = vsub.f32 %v520, 1.0
    %v592 = vsub.f32 %v522, 1.0
    %v593 = vsub.f32 %v524, 1.0
    %v594 = vsub.f32 %v526, 1.0
    %v595 = vsub.f32 %v528, 1.0
    %v596 = vsub.f32 %v530, 1.0
    %v597 = vsub.f32 %v532, 1.0
    %v598 = vsub.f32 %v534, 1.0
    %v599 = vsub.f32 %v536, 1.0
    %v600 = vsub.f32 %v538, 1.0
    %v601 = vsub.f32 %v540, 1.0
    %v602 = vsub.f32 %v542, 1.0
    %v603 = vsub.f32 %v544, 1.0
    %v604 = vsub.f32 %v546, 1.0
    %v605 = vsub.f32 %v548, 1.0
    %v606 = vsub.f32 %v550, 1.0
    %v607 = vsub.f32 %v552, 1.0
    %v608 = vsub.f32 %v554, 1.0
    %v609 = vsub.f32 %v556, 1.0
    %v610 = vsub.f32 %v558, 1.0
    %v611 = vsub.f32 %v560, 1.0
    %v612 = vsub.f32 %v562, 1.0
    %v613 = vsub.f32 %v564, 1.0
    %v614 = vsub.f32 %v566, 1.0
    %v615 = vsub.f32 %v568, 1.0
    %v616 = vsub.f32 %v570, 1.0
    %v617 = vsub.f32 %v572, 1.0
    %v618 = vsub.f32 %v574, 1.0
    %v619 = vsub.f32 %v576, 1.0
    %v620 = vsub.f32 %v578, 1.0
    %v621 = vsub.f32 %v580, 1.0
    %v622 = vsub.f32 %v582, 1.0
    %v623 = vsub.f32 %v584, 1.0
    %v624 = vsub.f32 %v586, 1.0
    %v625 = vsub.f32 %v588, 1.0
    %v626 = vsub.f32 %v590, 1.0
    %v627 = vsel %vm447, %v263, %v591
    %v628 = vsel %vm448, %v266, %v592
    %v629 = vsel %vm449, %v271, %v593
    %v630 = vsel %vm450, %v274, %v594
    %v631 = vsel %vm451, %v279, %v595
    %v632 = vsel %vm452, %v282, %v596
    %v633 = vsel %vm453, %v289, %v597
    %v634 = vsel %vm454, %v294, %v598
    %v635 = vsel %vm455, %v297, %v599
    %v636 = vsel %vm456, %v302, %v600
    %v637 = vsel %vm457, %v305, %v601
    %v638 = vsel %vm458, %v310, %v602
    %v639 = vsel %vm459, %v317, %v603
    %v640 = vsel %vm460, %v320, %v604
    %v641 = vsel %vm461, %v325, %v605
    %v642 = vsel %vm462, %v328, %v606
    %v643 = vsel %vm463, %v333, %v607
    %v644 = vsel %vm464, %v336, %v608
    %v645 = vsel %vm465, %v343, %v609
    %v646 = vsel %vm466, %v348, %v610
    %v647 = vsel %vm467, %v351, %v611
    %v648 = vsel %vm468, %v356, %v612
    %v649 = vsel %vm469, %v359, %v613
    %v650 = vsel %vm470, %v364, %v614
    %v651 = vsel %vm471, %v371, %v615
    %v652 = vsel %vm472, %v374, %v616
    %v653 = vsel %vm473, %v379, %v617
    %v654 = vsel %vm474, %v382, %v618
    %v655 = vsel %vm475, %v387, %v619
    %v656 = vsel %vm476, %v390, %v620
    %v657 = vsel %vm477, %v397, %v621
    %v658 = vsel %vm478, %v402, %v622
    %v659 = vsel %vm479, %v405, %v623
    %v660 = vsel %vm480, %v410, %v624
    %v661 = vsel %vm481, %v413, %v625
    %v662 = vsel %vm482, %v418, %v626
    %v663 = vpack.c.bf16 %v629, %v627
    %v664 = vpack.c.bf16 %v641, %v639
    %v665 = vld [vmem:[#allocation7] sm:$0xf]
    %v666 = vld [vmem:[#allocation7 + $0x4] sm:$0xf]
    %v667 = vld [vmem:[#allocation7 + $0x8] sm:$0xf]
    %v668 = vld [vmem:[#allocation7 + $0xc] sm:$0xf]
    %v669 = vld [vmem:[#allocation7 + $0x10] sm:$0xf]
    %v670 = vld [vmem:[#allocation7 + $0x14] sm:$0xf]
    %v671 = vld [vmem:[#allocation7 + $0x18] sm:$0xf]
    %v672 = vld [vmem:[#allocation7 + $0x1c] sm:$0xf]
    %v673 = vld [vmem:[#allocation7 + $0x20] sm:$0xf]
    %v674 = vld [vmem:[#allocation7 + $0x24] sm:$0xf]
    %v675 = vld [vmem:[#allocation7 + $0x28] sm:$0xf]
    %v676 = vld [vmem:[#allocation7 + $0x2c] sm:$0xf]
    %v677 = vld [vmem:[#allocation7 + $0x30] sm:$0xf]
    %v678 = vld [vmem:[#allocation7 + $0x34] sm:$0xf]
    %v679 = vld [vmem:[#allocation7 + $0x38] sm:$0xf]
    %v680 = vld [vmem:[#allocation7 + $0x3c] sm:$0xf]
    %v681 = vpack.c.bf16 %v630, %v628
    %v682 = vpack.c.bf16 %v642, %v640
    %s683 = scalar_lea.vmem [#allocation7], 64
    %v684 = vld [vmem:[%s683] sm:$0xf]
    %v685 = vld [vmem:[%s683 + $0x4] sm:$0xf]
    %v686 = vld [vmem:[%s683 + $0x8] sm:$0xf]
    %v687 = vld [vmem:[%s683 + $0xc] sm:$0xf]
    %v688 = vld [vmem:[%s683 + $0x10] sm:$0xf]
    %v689 = vld [vmem:[%s683 + $0x14] sm:$0xf]
    %v690 = vld [vmem:[%s683 + $0x18] sm:$0xf]
    %v691 = vld [vmem:[%s683 + $0x1c] sm:$0xf]
    %v692 = vld [vmem:[%s683 + $0x20] sm:$0xf]
    %v693 = vld [vmem:[%s683 + $0x24] sm:$0xf]
    %v694 = vld [vmem:[%s683 + $0x28] sm:$0xf]
    %v695 = vld [vmem:[%s683 + $0x2c] sm:$0xf]
    %v696 = vld [vmem:[%s683 + $0x30] sm:$0xf]
    %v697 = vld [vmem:[%s683 + $0x34] sm:$0xf]
    %v698 = vld [vmem:[%s683 + $0x38] sm:$0xf]
    %v699 = vld [vmem:[%s683 + $0x3c] sm:$0xf]
    %v716 = vunpack.c.l.b16 %v684
    %v717 = vunpack.c.l.b16 %v685
    %v718 = vunpack.c.l.b16 %v686
    %v719 = vunpack.c.l.b16 %v687
    %v720 = vunpack.c.l.b16 %v688
    %v721 = vunpack.c.l.b16 %v689
    %v722 = vunpack.c.l.b16 %v690
    %v723 = vunpack.c.l.b16 %v691
    %v724 = vunpack.c.l.b16 %v692
    %v725 = vunpack.c.l.b16 %v693
    %v726 = vunpack.c.l.b16 %v694
    %v727 = vunpack.c.l.b16 %v695
    %v728 = vunpack.c.l.b16 %v696
    %v729 = vunpack.c.l.b16 %v697
    %v730 = vunpack.c.l.b16 %v698
    %v731 = vunpack.c.l.b16 %v699
    %v732 = vpack.c.b16 %v717, %v716
    %v733 = vpack.c.b16 %v719, %v718
    %v734 = vpack.c.b16 %v721, %v720
    %v735 = vpack.c.b16 %v723, %v722
    %v736 = vpack.c.b16 %v725, %v724
    %v737 = vpack.c.b16 %v727, %v726
    %v738 = vpack.c.b16 %v729, %v728
    %v739 = vpack.c.b16 %v731, %v730
    %748 = vmatprep.subr.bf16.mxu0 0
    %749 = vmatpush1.bf16.msra.mxu0 %v739
    %750 = vmatprep.subr.bf16.mxu0 0
    %751 = vmatpush1.bf16.msra.mxu0 %v738
    %752 = vmatprep.subr.bf16.mxu0 0
    %753 = vmatpush1.bf16.msra.mxu0 %v737
    %754 = vmatprep.subr.bf16.mxu0 0
    %755 = vmatpush1.bf16.msra.mxu0 %v736
    %756 = vmatprep.subr.bf16.mxu0 0
    %757 = vmatpush1.bf16.msra.mxu0 %v735
    %758 = vmatprep.subr.bf16.mxu0 0
    %759 = vmatpush1.bf16.msra.mxu0 %v734
    %760 = vmatprep.subr.bf16.mxu0 0
    %761 = vmatpush1.bf16.msra.mxu0 %v733
    %762 = vmatprep.subr.bf16.mxu0 0
    %763 = vmatpush1.bf16.msra.mxu0 %v732
    %764 = vmatprep.subr.bf16.mxu0 0
    %765 = vmatpush2.bf16.msra.mxu0 0
    %766 = vmatprep.subr.bf16.mxu0 0
    %767 = vmatpush2.bf16.msra.mxu0 0
    %768 = vmatprep.subr.bf16.mxu0 0
    %769 = vmatpush2.bf16.msra.mxu0 0
    %770 = vmatprep.subr.bf16.mxu0 0
    %771 = vmatpush2.bf16.msra.mxu0 0
    %772 = vmatprep.subr.bf16.mxu0 0
    %773 = vmatpush2.bf16.msra.mxu0 0
    %774 = vmatprep.subr.bf16.mxu0 0
    %775 = vmatpush2.bf16.msra.mxu0 0
    %776 = vmatprep.subr.bf16.mxu0 0
    %777 = vmatpush2.bf16.msra.mxu0 0
    %778 = vmatprep.subr.bf16.mxu0 0
    %779 = vmatpush2.bf16.msra.mxu0 0
    %780 = vmatprep.mubr.bf16.mxu0 0
    %781 = vmatmul.mubr.bf16.gmra.mxu0 %v681
    %v782 = vpop.f32.mrf.mxu0
    %v783 = vadd.f32 0.0, %v782
    %v784 = vpop.f32.mrf.mxu0
    %v785 = vpop.f32.mrf.mxu0
    %v786 = vadd.f32 0.0, %v785
    %v787 = vpop.f32.mrf.mxu0
    %788 = vmatprep.mubr.bf16.mxu0 0
    %789 = vmatmul.mubr.bf16.gmra.mxu0 %v682
    %v790 = vpop.f32.mrf.mxu0
    %v791 = vadd.f32 0.0, %v790
    %v792 = vpop.f32.mrf.mxu0
    %v793 = vpop.f32.mrf.mxu0
    %v794 = vadd.f32 0.0, %v793
    %v795 = vpop.f32.mrf.mxu0
    %796 = vdwg.mxu0
    %v813 = vunpack.c.l.b16 %v665
    %v814 = vunpack.c.l.b16 %v666
    %v815 = vunpack.c.l.b16 %v667
    %v816 = vunpack.c.l.b16 %v668
    %v817 = vunpack.c.l.b16 %v669
    %v818 = vunpack.c.l.b16 %v670
    %v819 = vunpack.c.l.b16 %v671
    %v820 = vunpack.c.l.b16 %v672
    %v821 = vunpack.c.l.b16 %v673
    %v822 = vunpack.c.l.b16 %v674
    %v823 = vunpack.c.l.b16 %v675
    %v824 = vunpack.c.l.b16 %v676
    %v825 = vunpack.c.l.b16 %v677
    %v826 = vunpack.c.l.b16 %v678
    %v827 = vunpack.c.l.b16 %v679
    %v828 = vunpack.c.l.b16 %v680
    %v829 = vpack.c.b16 %v814, %v813
    %v830 = vpack.c.b16 %v816, %v815
    %v831 = vpack.c.b16 %v818, %v817
    %v832 = vpack.c.b16 %v820, %v819
    %v833 = vpack.c.b16 %v822, %v821
    %v834 = vpack.c.b16 %v824, %v823
    %v835 = vpack.c.b16 %v826, %v825
    %v836 = vpack.c.b16 %v828, %v827
    %845 = vmatprep.subr.bf16.mxu0 0
    %846 = vmatpush1.bf16.msra.mxu0 %v836
    %847 = vmatprep.subr.bf16.mxu0 0
    %848 = vmatpush1.bf16.msra.mxu0 %v835
    %849 = vmatprep.subr.bf16.mxu0 0
    %850 = vmatpush1.bf16.msra.mxu0 %v834
    %851 = vmatprep.subr.bf16.mxu0 0
    %852 = vmatpush1.bf16.msra.mxu0 %v833
    %853 = vmatprep.subr.bf16.mxu0 0
    %854 = vmatpush1.bf16.msra.mxu0 %v832
    %855 = vmatprep.subr.bf16.mxu0 0
    %856 = vmatpush1.bf16.msra.mxu0 %v831
    %857 = vmatprep.subr.bf16.mxu0 0
    %858 = vmatpush1.bf16.msra.mxu0 %v830
    %859 = vmatprep.subr.bf16.mxu0 0
    %860 = vmatpush1.bf16.msra.mxu0 %v829
    %861 = vmatprep.subr.bf16.mxu0 0
    %862 = vmatpush2.bf16.msra.mxu0 0
    %863 = vmatprep.subr.bf16.mxu0 0
    %864 = vmatpush2.bf16.msra.mxu0 0
    %865 = vmatprep.subr.bf16.mxu0 0
    %866 = vmatpush2.bf16.msra.mxu0 0
    %867 = vmatprep.subr.bf16.mxu0 0
    %868 = vmatpush2.bf16.msra.mxu0 0
    %869 = vmatprep.subr.bf16.mxu0 0
    %870 = vmatpush2.bf16.msra.mxu0 0
    %871 = vmatprep.subr.bf16.mxu0 0
    %872 = vmatpush2.bf16.msra.mxu0 0
    %873 = vmatprep.subr.bf16.mxu0 0
    %874 = vmatpush2.bf16.msra.mxu0 0
    %875 = vmatprep.subr.bf16.mxu0 0
    %876 = vmatpush2.bf16.msra.mxu0 0
    %877 = vmatprep.mubr.bf16.mxu0 0
    %878 = vmatmul.mubr.bf16.gmra.mxu0 %v663
    %v879 = vpop.f32.mrf.mxu0
    %v880 = vadd.f32 %v783, %v879
    %v881 = vpop.f32.mrf.mxu0
    %v882 = vpop.f32.mrf.mxu0
    %v883 = vadd.f32 %v786, %v882
    %v884 = vpop.f32.mrf.mxu0
    %885 = vmatprep.mubr.bf16.mxu0 0
    %886 = vmatmul.mubr.bf16.gmra.mxu0 %v664
    %v887 = vpop.f32.mrf.mxu0
    %v888 = vadd.f32 %v791, %v887
    %v889 = vpop.f32.mrf.mxu0
    %v890 = vpop.f32.mrf.mxu0
    %v891 = vadd.f32 %v794, %v890
    %v892 = vpop.f32.mrf.mxu0
    %893 = vdwg.mxu0
    %v894 = vpack.c.bf16 %v631, %v629
    %v895 = vpack.c.bf16 %v643, %v641
    %s896 = scalar_lea.vmem [#allocation7], 128
    %v897 = vld [vmem:[%s896] sm:$0xf]
    %v898 = vld [vmem:[%s896 + $0x4] sm:$0xf]
    %v899 = vld [vmem:[%s896 + $0x8] sm:$0xf]
    %v900 = vld [vmem:[%s896 + $0xc] sm:$0xf]
    %v901 = vld [vmem:[%s896 + $0x10] sm:$0xf]
    %v902 = vld [vmem:[%s896 + $0x14] sm:$0xf]
    %v903 = vld [vmem:[%s896 + $0x18] sm:$0xf]
    %v904 = vld [vmem:[%s896 + $0x1c] sm:$0xf]
    %v905 = vld [vmem:[%s896 + $0x20] sm:$0xf]
    %v906 = vld [vmem:[%s896 + $0x24] sm:$0xf]
    %v907 = vld [vmem:[%s896 + $0x28] sm:$0xf]
    %v908 = vld [vmem:[%s896 + $0x2c] sm:$0xf]
    %v909 = vld [vmem:[%s896 + $0x30] sm:$0xf]
    %v910 = vld [vmem:[%s896 + $0x34] sm:$0xf]
    %v911 = vld [vmem:[%s896 + $0x38] sm:$0xf]
    %v912 = vld [vmem:[%s896 + $0x3c] sm:$0xf]
    %v929 = vunpack.c.l.b16 %v897
    %v930 = vunpack.c.l.b16 %v898
    %v931 = vunpack.c.l.b16 %v899
    %v932 = vunpack.c.l.b16 %v900
    %v933 = vunpack.c.l.b16 %v901
    %v934 = vunpack.c.l.b16 %v902
    %v935 = vunpack.c.l.b16 %v903
    %v936 = vunpack.c.l.b16 %v904
    %v937 = vunpack.c.l.b16 %v905
    %v938 = vunpack.c.l.b16 %v906
    %v939 = vunpack.c.l.b16 %v907
    %v940 = vunpack.c.l.b16 %v908
    %v941 = vunpack.c.l.b16 %v909
    %v942 = vunpack.c.l.b16 %v910
    %v943 = vunpack.c.l.b16 %v911
    %v944 = vunpack.c.l.b16 %v912
    %v945 = vpack.c.b16 %v930, %v929
    %v946 = vpack.c.b16 %v932, %v931
    %v947 = vpack.c.b16 %v934, %v933
    %v948 = vpack.c.b16 %v936, %v935
    %v949 = vpack.c.b16 %v938, %v937
    %v950 = vpack.c.b16 %v940, %v939
    %v951 = vpack.c.b16 %v942, %v941
    %v952 = vpack.c.b16 %v944, %v943
    %961 = vmatprep.subr.bf16.mxu0 0
    %962 = vmatpush1.bf16.msra.mxu0 %v952
    %963 = vmatprep.subr.bf16.mxu0 0
    %964 = vmatpush1.bf16.msra.mxu0 %v951
    %965 = vmatprep.subr.bf16.mxu0 0
    %966 = vmatpush1.bf16.msra.mxu0 %v950
    %967 = vmatprep.subr.bf16.mxu0 0
    %968 = vmatpush1.bf16.msra.mxu0 %v949
    %969 = vmatprep.subr.bf16.mxu0 0
    %970 = vmatpush1.bf16.msra.mxu0 %v948
    %971 = vmatprep.subr.bf16.mxu0 0
    %972 = vmatpush1.bf16.msra.mxu0 %v947
    %973 = vmatprep.subr.bf16.mxu0 0
    %974 = vmatpush1.bf16.msra.mxu0 %v946
    %975 = vmatprep.subr.bf16.mxu0 0
    %976 = vmatpush1.bf16.msra.mxu0 %v945
    %977 = vmatprep.subr.bf16.mxu0 0
    %978 = vmatpush2.bf16.msra.mxu0 0
    %979 = vmatprep.subr.bf16.mxu0 0
    %980 = vmatpush2.bf16.msra.mxu0 0
    %981 = vmatprep.subr.bf16.mxu0 0
    %982 = vmatpush2.bf16.msra.mxu0 0
    %983 = vmatprep.subr.bf16.mxu0 0
    %984 = vmatpush2.bf16.msra.mxu0 0
    %985 = vmatprep.subr.bf16.mxu0 0
    %986 = vmatpush2.bf16.msra.mxu0 0
    %987 = vmatprep.subr.bf16.mxu0 0
    %988 = vmatpush2.bf16.msra.mxu0 0
    %989 = vmatprep.subr.bf16.mxu0 0
    %990 = vmatpush2.bf16.msra.mxu0 0
    %991 = vmatprep.subr.bf16.mxu0 0
    %992 = vmatpush2.bf16.msra.mxu0 0
    %993 = vmatprep.mubr.bf16.mxu0 0
    %994 = vmatmul.mubr.bf16.gmra.mxu0 %v894
    %v995 = vpop.f32.mrf.mxu0
    %v996 = vadd.f32 0.0, %v995
    %v997 = vpop.f32.mrf.mxu0
    %v998 = vpop.f32.mrf.mxu0
    %v999 = vadd.f32 0.0, %v998
    %v1000 = vpop.f32.mrf.mxu0
    %1001 = vmatprep.mubr.bf16.mxu0 0
    %1002 = vmatmul.mubr.bf16.gmra.mxu0 %v895
    %v1003 = vpop.f32.mrf.mxu0
    %v1004 = vadd.f32 0.0, %v1003
    %v1005 = vpop.f32.mrf.mxu0
    %v1006 = vpop.f32.mrf.mxu0
    %v1007 = vadd.f32 0.0, %v1006
    %v1008 = vpop.f32.mrf.mxu0
    %1009 = vdwg.mxu0
    %v1010 = vadd.f32 %v880, %v996
    %v1011 = vadd.f32 %v883, %v999
    %v1012 = vadd.f32 %v888, %v1004
    %v1013 = vadd.f32 %v891, %v1007
    %v1014 = vpack.c.bf16 %v632, %v630
    %v1015 = vpack.c.bf16 %v644, %v642
    %s1016 = scalar_lea.vmem [#allocation7], 192
    %v1017 = vld [vmem:[%s1016] sm:$0xf]
    %v1018 = vld [vmem:[%s1016 + $0x4] sm:$0xf]
    %v1019 = vld [vmem:[%s1016 + $0x8] sm:$0xf]
    %v1020 = vld [vmem:[%s1016 + $0xc] sm:$0xf]
    %v1021 = vld [vmem:[%s1016 + $0x10] sm:$0xf]
    %v1022 = vld [vmem:[%s1016 + $0x14] sm:$0xf]
    %v1023 = vld [vmem:[%s1016 + $0x18] sm:$0xf]
    %v1024 = vld [vmem:[%s1016 + $0x1c] sm:$0xf]
    %v1025 = vld [vmem:[%s1016 + $0x20] sm:$0xf]
    %v1026 = vld [vmem:[%s1016 + $0x24] sm:$0xf]
    %v1027 = vld [vmem:[%s1016 + $0x28] sm:$0xf]
    %v1028 = vld [vmem:[%s1016 + $0x2c] sm:$0xf]
    %v1029 = vld [vmem:[%s1016 + $0x30] sm:$0xf]
    %v1030 = vld [vmem:[%s1016 + $0x34] sm:$0xf]
    %v1031 = vld [vmem:[%s1016 + $0x38] sm:$0xf]
    %v1032 = vld [vmem:[%s1016 + $0x3c] sm:$0xf]
    %v1049 = vunpack.c.l.b16 %v1017
    %v1050 = vunpack.c.l.b16 %v1018
    %v1051 = vunpack.c.l.b16 %v1019
    %v1052 = vunpack.c.l.b16 %v1020
    %v1053 = vunpack.c.l.b16 %v1021
    %v1054 = vunpack.c.l.b16 %v1022
    %v1055 = vunpack.c.l.b16 %v1023
    %v1056 = vunpack.c.l.b16 %v1024
    %v1057 = vunpack.c.l.b16 %v1025
    %v1058 = vunpack.c.l.b16 %v1026
    %v1059 = vunpack.c.l.b16 %v1027
    %v1060 = vunpack.c.l.b16 %v1028
    %v1061 = vunpack.c.l.b16 %v1029
    %v1062 = vunpack.c.l.b16 %v1030
    %v1063 = vunpack.c.l.b16 %v1031
    %v1064 = vunpack.c.l.b16 %v1032
    %v1065 = vpack.c.b16 %v1050, %v1049
    %v1066 = vpack.c.b16 %v1052, %v1051
    %v1067 = vpack.c.b16 %v1054, %v1053
    %v1068 = vpack.c.b16 %v1056, %v1055
    %v1069 = vpack.c.b16 %v1058, %v1057
    %v1070 = vpack.c.b16 %v1060, %v1059
    %v1071 = vpack.c.b16 %v1062, %v1061
    %v1072 = vpack.c.b16 %v1064, %v1063
    %1081 = vmatprep.subr.bf16.mxu0 0
    %1082 = vmatpush1.bf16.msra.mxu0 %v1072
    %1083 = vmatprep.subr.bf16.mxu0 0
    %1084 = vmatpush1.bf16.msra.mxu0 %v1071
    %1085 = vmatprep.subr.bf16.mxu0 0
    %1086 = vmatpush1.bf16.msra.mxu0 %v1070
    %1087 = vmatprep.subr.bf16.mxu0 0
    %1088 = vmatpush1.bf16.msra.mxu0 %v1069
    %1089 = vmatprep.subr.bf16.mxu0 0
    %1090 = vmatpush1.bf16.msra.mxu0 %v1068
    %1091 = vmatprep.subr.bf16.mxu0 0
    %1092 = vmatpush1.bf16.msra.mxu0 %v1067
    %1093 = vmatprep.subr.bf16.mxu0 0
    %1094 = vmatpush1.bf16.msra.mxu0 %v1066
    %1095 = vmatprep.subr.bf16.mxu0 0
    %1096 = vmatpush1.bf16.msra.mxu0 %v1065
    %1097 = vmatprep.subr.bf16.mxu0 0
    %1098 = vmatpush2.bf16.msra.mxu0 0
    %1099 = vmatprep.subr.bf16.mxu0 0
    %1100 = vmatpush2.bf16.msra.mxu0 0
    %1101 = vmatprep.subr.bf16.mxu0 0
    %1102 = vmatpush2.bf16.msra.mxu0 0
    %1103 = vmatprep.subr.bf16.mxu0 0
    %1104 = vmatpush2.bf16.msra.mxu0 0
    %1105 = vmatprep.subr.bf16.mxu0 0
    %1106 = vmatpush2.bf16.msra.mxu0 0
    %1107 = vmatprep.subr.bf16.mxu0 0
    %1108 = vmatpush2.bf16.msra.mxu0 0
    %1109 = vmatprep.subr.bf16.mxu0 0
    %1110 = vmatpush2.bf16.msra.mxu0 0
    %1111 = vmatprep.subr.bf16.mxu0 0
    %1112 = vmatpush2.bf16.msra.mxu0 0
    %1113 = vmatprep.mubr.bf16.mxu0 0
    %1114 = vmatmul.mubr.bf16.gmra.mxu0 %v1014
    %v1115 = vpop.f32.mrf.mxu0
    %v1116 = vadd.f32 0.0, %v1115
    %v1117 = vpop.f32.mrf.mxu0
    %v1118 = vpop.f32.mrf.mxu0
    %v1119 = vadd.f32 0.0, %v1118
    %v1120 = vpop.f32.mrf.mxu0
    %1121 = vmatprep.mubr.bf16.mxu0 0
    %1122 = vmatmul.mubr.bf16.gmra.mxu0 %v1015
    %v1123 = vpop.f32.mrf.mxu0
    %v1124 = vadd.f32 0.0, %v1123
    %v1125 = vpop.f32.mrf.mxu0
    %v1126 = vpop.f32.mrf.mxu0
    %v1127 = vadd.f32 0.0, %v1126
    %v1128 = vpop.f32.mrf.mxu0
    %1129 = vdwg.mxu0
    %v1130 = vadd.f32 %v1010, %v1116
    %v1131 = vadd.f32 %v1011, %v1119
    %v1132 = vadd.f32 %v1012, %v1124
    %v1133 = vadd.f32 %v1013, %v1127
    %v1134 = vpack.c.bf16 %v635, %v633
    %v1135 = vpack.c.bf16 %v647, %v645
    %s1136 = scalar_lea.vmem [#allocation7], 256
    %v1137 = vld [vmem:[%s1136] sm:$0xf]
    %v1138 = vld [vmem:[%s1136 + $0x4] sm:$0xf]
    %v1139 = vld [vmem:[%s1136 + $0x8] sm:$0xf]
    %v1140 = vld [vmem:[%s1136 + $0xc] sm:$0xf]
    %v1141 = vld [vmem:[%s1136 + $0x10] sm:$0xf]
    %v1142 = vld [vmem:[%s1136 + $0x14] sm:$0xf]
    %v1143 = vld [vmem:[%s1136 + $0x18] sm:$0xf]
    %v1144 = vld [vmem:[%s1136 + $0x1c] sm:$0xf]
    %v1145 = vld [vmem:[%s1136 + $0x20] sm:$0xf]
    %v1146 = vld [vmem:[%s1136 + $0x24] sm:$0xf]
    %v1147 = vld [vmem:[%s1136 + $0x28] sm:$0xf]
    %v1148 = vld [vmem:[%s1136 + $0x2c] sm:$0xf]
    %v1149 = vld [vmem:[%s1136 + $0x30] sm:$0xf]
    %v1150 = vld [vmem:[%s1136 + $0x34] sm:$0xf]
    %v1151 = vld [vmem:[%s1136 + $0x38] sm:$0xf]
    %v1152 = vld [vmem:[%s1136 + $0x3c] sm:$0xf]
    %v1169 = vunpack.c.l.b16 %v1137
    %v1170 = vunpack.c.l.b16 %v1138
    %v1171 = vunpack.c.l.b16 %v1139
    %v1172 = vunpack.c.l.b16 %v1140
    %v1173 = vunpack.c.l.b16 %v1141
    %v1174 = vunpack.c.l.b16 %v1142
    %v1175 = vunpack.c.l.b16 %v1143
    %v1176 = vunpack.c.l.b16 %v1144
    %v1177 = vunpack.c.l.b16 %v1145
    %v1178 = vunpack.c.l.b16 %v1146
    %v1179 = vunpack.c.l.b16 %v1147
    %v1180 = vunpack.c.l.b16 %v1148
    %v1181 = vunpack.c.l.b16 %v1149
    %v1182 = vunpack.c.l.b16 %v1150
    %v1183 = vunpack.c.l.b16 %v1151
    %v1184 = vunpack.c.l.b16 %v1152
    %v1185 = vpack.c.b16 %v1170, %v1169
    %v1186 = vpack.c.b16 %v1172, %v1171
    %v1187 = vpack.c.b16 %v1174, %v1173
    %v1188 = vpack.c.b16 %v1176, %v1175
    %v1189 = vpack.c.b16 %v1178, %v1177
    %v1190 = vpack.c.b16 %v1180, %v1179
    %v1191 = vpack.c.b16 %v1182, %v1181
    %v1192 = vpack.c.b16 %v1184, %v1183
    %1201 = vmatprep.subr.bf16.mxu0 0
    %1202 = vmatpush1.bf16.msra.mxu0 %v1192
    %1203 = vmatprep.subr.bf16.mxu0 0
    %1204 = vmatpush1.bf16.msra.mxu0 %v1191
    %1205 = vmatprep.subr.bf16.mxu0 0
    %1206 = vmatpush1.bf16.msra.mxu0 %v1190
    %1207 = vmatprep.subr.bf16.mxu0 0
    %1208 = vmatpush1.bf16.msra.mxu0 %v1189
    %1209 = vmatprep.subr.bf16.mxu0 0
    %1210 = vmatpush1.bf16.msra.mxu0 %v1188
    %1211 = vmatprep.subr.bf16.mxu0 0
    %1212 = vmatpush1.bf16.msra.mxu0 %v1187
    %1213 = vmatprep.subr.bf16.mxu0 0
    %1214 = vmatpush1.bf16.msra.mxu0 %v1186
    %1215 = vmatprep.subr.bf16.mxu0 0
    %1216 = vmatpush1.bf16.msra.mxu0 %v1185
    %1217 = vmatprep.subr.bf16.mxu0 0
    %1218 = vmatpush2.bf16.msra.mxu0 0
    %1219 = vmatprep.subr.bf16.mxu0 0
    %1220 = vmatpush2.bf16.msra.mxu0 0
    %1221 = vmatprep.subr.bf16.mxu0 0
    %1222 = vmatpush2.bf16.msra.mxu0 0
    %1223 = vmatprep.subr.bf16.mxu0 0
    %1224 = vmatpush2.bf16.msra.mxu0 0
    %1225 = vmatprep.subr.bf16.mxu0 0
    %1226 = vmatpush2.bf16.msra.mxu0 0
    %1227 = vmatprep.subr.bf16.mxu0 0
    %1228 = vmatpush2.bf16.msra.mxu0 0
    %1229 = vmatprep.subr.bf16.mxu0 0
    %1230 = vmatpush2.bf16.msra.mxu0 0
    %1231 = vmatprep.subr.bf16.mxu0 0
    %1232 = vmatpush2.bf16.msra.mxu0 0
    %1233 = vmatprep.mubr.bf16.mxu0 0
    %1234 = vmatmul.mubr.bf16.gmra.mxu0 %v1134
    %v1235 = vpop.f32.mrf.mxu0
    %v1236 = vadd.f32 0.0, %v1235
    %v1237 = vpop.f32.mrf.mxu0
    %v1238 = vpop.f32.mrf.mxu0
    %v1239 = vadd.f32 0.0, %v1238
    %v1240 = vpop.f32.mrf.mxu0
    %1241 = vmatprep.mubr.bf16.mxu0 0
    %1242 = vmatmul.mubr.bf16.gmra.mxu0 %v1135
    %v1243 = vpop.f32.mrf.mxu0
    %v1244 = vadd.f32 0.0, %v1243
    %v1245 = vpop.f32.mrf.mxu0
    %v1246 = vpop.f32.mrf.mxu0
    %v1247 = vadd.f32 0.0, %v1246
    %v1248 = vpop.f32.mrf.mxu0
    %1249 = vdwg.mxu0
    %v1250 = vadd.f32 %v1130, %v1236
    %v1251 = vadd.f32 %v1131, %v1239
    %v1252 = vadd.f32 %v1132, %v1244
    %v1253 = vadd.f32 %v1133, %v1247
    %v1254 = vpack.c.bf16 %v636, %v634
    %v1255 = vpack.c.bf16 %v648, %v646
    %s1256 = scalar_lea.vmem [#allocation7], 320
    %v1257 = vld [vmem:[%s1256] sm:$0xf]
    %v1258 = vld [vmem:[%s1256 + $0x4] sm:$0xf]
    %v1259 = vld [vmem:[%s1256 + $0x8] sm:$0xf]
    %v1260 = vld [vmem:[%s1256 + $0xc] sm:$0xf]
    %v1261 = vld [vmem:[%s1256 + $0x10] sm:$0xf]
    %v1262 = vld [vmem:[%s1256 + $0x14] sm:$0xf]
    %v1263 = vld [vmem:[%s1256 + $0x18] sm:$0xf]
    %v1264 = vld [vmem:[%s1256 + $0x1c] sm:$0xf]
    %v1265 = vld [vmem:[%s1256 + $0x20] sm:$0xf]
    %v1266 = vld [vmem:[%s1256 + $0x24] sm:$0xf]
    %v1267 = vld [vmem:[%s1256 + $0x28] sm:$0xf]
    %v1268 = vld [vmem:[%s1256 + $0x2c] sm:$0xf]
    %v1269 = vld [vmem:[%s1256 + $0x30] sm:$0xf]
    %v1270 = vld [vmem:[%s1256 + $0x34] sm:$0xf]
    %v1271 = vld [vmem:[%s1256 + $0x38] sm:$0xf]
    %v1272 = vld [vmem:[%s1256 + $0x3c] sm:$0xf]
    %v1289 = vunpack.c.l.b16 %v1257
    %v1290 = vunpack.c.l.b16 %v1258
    %v1291 = vunpack.c.l.b16 %v1259
    %v1292 = vunpack.c.l.b16 %v1260
    %v1293 = vunpack.c.l.b16 %v1261
    %v1294 = vunpack.c.l.b16 %v1262
    %v1295 = vunpack.c.l.b16 %v1263
    %v1296 = vunpack.c.l.b16 %v1264
    %v1297 = vunpack.c.l.b16 %v1265
    %v1298 = vunpack.c.l.b16 %v1266
    %v1299 = vunpack.c.l.b16 %v1267
    %v1300 = vunpack.c.l.b16 %v1268
    %v1301 = vunpack.c.l.b16 %v1269
    %v1302 = vunpack.c.l.b16 %v1270
    %v1303 = vunpack.c.l.b16 %v1271
    %v1304 = vunpack.c.l.b16 %v1272
    %v1305 = vpack.c.b16 %v1290, %v1289
    %v1306 = vpack.c.b16 %v1292, %v1291
    %v1307 = vpack.c.b16 %v1294, %v1293
    %v1308 = vpack.c.b16 %v1296, %v1295
    %v1309 = vpack.c.b16 %v1298, %v1297
    %v1310 = vpack.c.b16 %v1300, %v1299
    %v1311 = vpack.c.b16 %v1302, %v1301
    %v1312 = vpack.c.b16 %v1304, %v1303
    %1321 = vmatprep.subr.bf16.mxu0 0
    %1322 = vmatpush1.bf16.msra.mxu0 %v1312
    %1323 = vmatprep.subr.bf16.mxu0 0
    %1324 = vmatpush1.bf16.msra.mxu0 %v1311
    %1325 = vmatprep.subr.bf16.mxu0 0
    %1326 = vmatpush1.bf16.msra.mxu0 %v1310
    %1327 = vmatprep.subr.bf16.mxu0 0
    %1328 = vmatpush1.bf16.msra.mxu0 %v1309
    %1329 = vmatprep.subr.bf16.mxu0 0
    %1330 = vmatpush1.bf16.msra.mxu0 %v1308
    %1331 = vmatprep.subr.bf16.mxu0 0
    %1332 = vmatpush1.bf16.msra.mxu0 %v1307
    %1333 = vmatprep.subr.bf16.mxu0 0
    %1334 = vmatpush1.bf16.msra.mxu0 %v1306
    %1335 = vmatprep.subr.bf16.mxu0 0
    %1336 = vmatpush1.bf16.msra.mxu0 %v1305
    %1337 = vmatprep.subr.bf16.mxu0 0
    %1338 = vmatpush2.bf16.msra.mxu0 0
    %1339 = vmatprep.subr.bf16.mxu0 0
    %1340 = vmatpush2.bf16.msra.mxu0 0
    %1341 = vmatprep.subr.bf16.mxu0 0
    %1342 = vmatpush2.bf16.msra.mxu0 0
    %1343 = vmatprep.subr.bf16.mxu0 0
    %1344 = vmatpush2.bf16.msra.mxu0 0
    %1345 = vmatprep.subr.bf16.mxu0 0
    %1346 = vmatpush2.bf16.msra.mxu0 0
    %1347 = vmatprep.subr.bf16.mxu0 0
    %1348 = vmatpush2.bf16.msra.mxu0 0
    %1349 = vmatprep.subr.bf16.mxu0 0
    %1350 = vmatpush2.bf16.msra.mxu0 0
    %1351 = vmatprep.subr.bf16.mxu0 0
    %1352 = vmatpush2.bf16.msra.mxu0 0
    %1353 = vmatprep.mubr.bf16.mxu0 0
    %1354 = vmatmul.mubr.bf16.gmra.mxu0 %v1254
    %v1355 = vpop.f32.mrf.mxu0
    %v1356 = vadd.f32 0.0, %v1355
    %v1357 = vpop.f32.mrf.mxu0
    %v1358 = vpop.f32.mrf.mxu0
    %v1359 = vadd.f32 0.0, %v1358
    %v1360 = vpop.f32.mrf.mxu0
    %1361 = vmatprep.mubr.bf16.mxu0 0
    %1362 = vmatmul.mubr.bf16.gmra.mxu0 %v1255
    %v1363 = vpop.f32.mrf.mxu0
    %v1364 = vadd.f32 0.0, %v1363
    %v1365 = vpop.f32.mrf.mxu0
    %v1366 = vpop.f32.mrf.mxu0
    %v1367 = vadd.f32 0.0, %v1366
    %v1368 = vpop.f32.mrf.mxu0
    %1369 = vdwg.mxu0
    %v1370 = vadd.f32 %v1250, %v1356
    %v1371 = vadd.f32 %v1251, %v1359
    %v1372 = vadd.f32 %v1252, %v1364
    %v1373 = vadd.f32 %v1253, %v1367
    %v1374 = vpack.c.bf16 %v637, %v635
    %v1375 = vpack.c.bf16 %v649, %v647
    %s1376 = scalar_lea.vmem [#allocation7], 384
    %v1377 = vld [vmem:[%s1376] sm:$0xf]
    %v1378 = vld [vmem:[%s1376 + $0x4] sm:$0xf]
    %v1379 = vld [vmem:[%s1376 + $0x8] sm:$0xf]
    %v1380 = vld [vmem:[%s1376 + $0xc] sm:$0xf]
    %v1381 = vld [vmem:[%s1376 + $0x10] sm:$0xf]
    %v1382 = vld [vmem:[%s1376 + $0x14] sm:$0xf]
    %v1383 = vld [vmem:[%s1376 + $0x18] sm:$0xf]
    %v1384 = vld [vmem:[%s1376 + $0x1c] sm:$0xf]
    %v1385 = vld [vmem:[%s1376 + $0x20] sm:$0xf]
    %v1386 = vld [vmem:[%s1376 + $0x24] sm:$0xf]
    %v1387 = vld [vmem:[%s1376 + $0x28] sm:$0xf]
    %v1388 = vld [vmem:[%s1376 + $0x2c] sm:$0xf]
    %v1389 = vld [vmem:[%s1376 + $0x30] sm:$0xf]
    %v1390 = vld [vmem:[%s1376 + $0x34] sm:$0xf]
    %v1391 = vld [vmem:[%s1376 + $0x38] sm:$0xf]
    %v1392 = vld [vmem:[%s1376 + $0x3c] sm:$0xf]
    %v1409 = vunpack.c.l.b16 %v1377
    %v1410 = vunpack.c.l.b16 %v1378
    %v1411 = vunpack.c.l.b16 %v1379
    %v1412 = vunpack.c.l.b16 %v1380
    %v1413 = vunpack.c.l.b16 %v1381
    %v1414 = vunpack.c.l.b16 %v1382
    %v1415 = vunpack.c.l.b16 %v1383
    %v1416 = vunpack.c.l.b16 %v1384
    %v1417 = vunpack.c.l.b16 %v1385
    %v1418 = vunpack.c.l.b16 %v1386
    %v1419 = vunpack.c.l.b16 %v1387
    %v1420 = vunpack.c.l.b16 %v1388
    %v1421 = vunpack.c.l.b16 %v1389
    %v1422 = vunpack.c.l.b16 %v1390
    %v1423 = vunpack.c.l.b16 %v1391
    %v1424 = vunpack.c.l.b16 %v1392
    %v1425 = vpack.c.b16 %v1410, %v1409
    %v1426 = vpack.c.b16 %v1412, %v1411
    %v1427 = vpack.c.b16 %v1414, %v1413
    %v1428 = vpack.c.b16 %v1416, %v1415
    %v1429 = vpack.c.b16 %v1418, %v1417
    %v1430 = vpack.c.b16 %v1420, %v1419
    %v1431 = vpack.c.b16 %v1422, %v1421
    %v1432 = vpack.c.b16 %v1424, %v1423
    %1441 = vmatprep.subr.bf16.mxu0 0
    %1442 = vmatpush1.bf16.msra.mxu0 %v1432
    %1443 = vmatprep.subr.bf16.mxu0 0
    %1444 = vmatpush1.bf16.msra.mxu0 %v1431
    %1445 = vmatprep.subr.bf16.mxu0 0
    %1446 = vmatpush1.bf16.msra.mxu0 %v1430
    %1447 = vmatprep.subr.bf16.mxu0 0
    %1448 = vmatpush1.bf16.msra.mxu0 %v1429
    %1449 = vmatprep.subr.bf16.mxu0 0
    %1450 = vmatpush1.bf16.msra.mxu0 %v1428
    %1451 = vmatprep.subr.bf16.mxu0 0
    %1452 = vmatpush1.bf16.msra.mxu0 %v1427
    %1453 = vmatprep.subr.bf16.mxu0 0
    %1454 = vmatpush1.bf16.msra.mxu0 %v1426
    %1455 = vmatprep.subr.bf16.mxu0 0
    %1456 = vmatpush1.bf16.msra.mxu0 %v1425
    %1457 = vmatprep.subr.bf16.mxu0 0
    %1458 = vmatpush2.bf16.msra.mxu0 0
    %1459 = vmatprep.subr.bf16.mxu0 0
    %1460 = vmatpush2.bf16.msra.mxu0 0
    %1461 = vmatprep.subr.bf16.mxu0 0
    %1462 = vmatpush2.bf16.msra.mxu0 0
    %1463 = vmatprep.subr.bf16.mxu0 0
    %1464 = vmatpush2.bf16.msra.mxu0 0
    %1465 = vmatprep.subr.bf16.mxu0 0
    %1466 = vmatpush2.bf16.msra.mxu0 0
    %1467 = vmatprep.subr.bf16.mxu0 0
    %1468 = vmatpush2.bf16.msra.mxu0 0
    %1469 = vmatprep.subr.bf16.mxu0 0
    %1470 = vmatpush2.bf16.msra.mxu0 0
    %1471 = vmatprep.subr.bf16.mxu0 0
    %1472 = vmatpush2.bf16.msra.mxu0 0
    %1473 = vmatprep.mubr.bf16.mxu0 0
    %1474 = vmatmul.mubr.bf16.gmra.mxu0 %v1374
    %v1475 = vpop.f32.mrf.mxu0
    %v1476 = vadd.f32 0.0, %v1475
    %v1477 = vpop.f32.mrf.mxu0
    %v1478 = vpop.f32.mrf.mxu0
    %v1479 = vadd.f32 0.0, %v1478
    %v1480 = vpop.f32.mrf.mxu0
    %1481 = vmatprep.mubr.bf16.mxu0 0
    %1482 = vmatmul.mubr.bf16.gmra.mxu0 %v1375
    %v1483 = vpop.f32.mrf.mxu0
    %v1484 = vadd.f32 0.0, %v1483
    %v1485 = vpop.f32.mrf.mxu0
    %v1486 = vpop.f32.mrf.mxu0
    %v1487 = vadd.f32 0.0, %v1486
    %v1488 = vpop.f32.mrf.mxu0
    %1489 = vdwg.mxu0
    %v1490 = vadd.f32 %v1370, %v1476
    %v1491 = vadd.f32 %v1371, %v1479
    %v1492 = vadd.f32 %v1372, %v1484
    %v1493 = vadd.f32 %v1373, %v1487
    %v1494 = vpack.c.bf16 %v638, %v636
    %v1495 = vpack.c.bf16 %v650, %v648
    %s1496 = scalar_lea.vmem [#allocation7], 448
    %v1497 = vld [vmem:[%s1496] sm:$0xf]
    %v1498 = vld [vmem:[%s1496 + $0x4] sm:$0xf]
    %v1499 = vld [vmem:[%s1496 + $0x8] sm:$0xf]
    %v1500 = vld [vmem:[%s1496 + $0xc] sm:$0xf]
    %v1501 = vld [vmem:[%s1496 + $0x10] sm:$0xf]
    %v1502 = vld [vmem:[%s1496 + $0x14] sm:$0xf]
    %v1503 = vld [vmem:[%s1496 + $0x18] sm:$0xf]
    %v1504 = vld [vmem:[%s1496 + $0x1c] sm:$0xf]
    %v1505 = vld [vmem:[%s1496 + $0x20] sm:$0xf]
    %v1506 = vld [vmem:[%s1496 + $0x24] sm:$0xf]
    %v1507 = vld [vmem:[%s1496 + $0x28] sm:$0xf]
    %v1508 = vld [vmem:[%s1496 + $0x2c] sm:$0xf]
    %v1509 = vld [vmem:[%s1496 + $0x30] sm:$0xf]
    %v1510 = vld [vmem:[%s1496 + $0x34] sm:$0xf]
    %v1511 = vld [vmem:[%s1496 + $0x38] sm:$0xf]
    %v1512 = vld [vmem:[%s1496 + $0x3c] sm:$0xf]
    %v1529 = vunpack.c.l.b16 %v1497
    %v1530 = vunpack.c.l.b16 %v1498
    %v1531 = vunpack.c.l.b16 %v1499
    %v1532 = vunpack.c.l.b16 %v1500
    %v1533 = vunpack.c.l.b16 %v1501
    %v1534 = vunpack.c.l.b16 %v1502
    %v1535 = vunpack.c.l.b16 %v1503
    %v1536 = vunpack.c.l.b16 %v1504
    %v1537 = vunpack.c.l.b16 %v1505
    %v1538 = vunpack.c.l.b16 %v1506
    %v1539 = vunpack.c.l.b16 %v1507
    %v1540 = vunpack.c.l.b16 %v1508
    %v1541 = vunpack.c.l.b16 %v1509
    %v1542 = vunpack.c.l.b16 %v1510
    %v1543 = vunpack.c.l.b16 %v1511
    %v1544 = vunpack.c.l.b16 %v1512
    %v1545 = vpack.c.b16 %v1530, %v1529
    %v1546 = vpack.c.b16 %v1532, %v1531
    %v1547 = vpack.c.b16 %v1534, %v1533
    %v1548 = vpack.c.b16 %v1536, %v1535
    %v1549 = vpack.c.b16 %v1538, %v1537
    %v1550 = vpack.c.b16 %v1540, %v1539
    %v1551 = vpack.c.b16 %v1542, %v1541
    %v1552 = vpack.c.b16 %v1544, %v1543
    %1561 = vmatprep.subr.bf16.mxu0 0
    %1562 = vmatpush1.bf16.msra.mxu0 %v1552
    %1563 = vmatprep.subr.bf16.mxu0 0
    %1564 = vmatpush1.bf16.msra.mxu0 %v1551
    %1565 = vmatprep.subr.bf16.mxu0 0
    %1566 = vmatpush1.bf16.msra.mxu0 %v1550
    %1567 = vmatprep.subr.bf16.mxu0 0
    %1568 = vmatpush1.bf16.msra.mxu0 %v1549
    %1569 = vmatprep.subr.bf16.mxu0 0
    %1570 = vmatpush1.bf16.msra.mxu0 %v1548
    %1571 = vmatprep.subr.bf16.mxu0 0
    %1572 = vmatpush1.bf16.msra.mxu0 %v1547
    %1573 = vmatprep.subr.bf16.mxu0 0
    %1574 = vmatpush1.bf16.msra.mxu0 %v1546
    %1575 = vmatprep.subr.bf16.mxu0 0
    %1576 = vmatpush1.bf16.msra.mxu0 %v1545
    %1577 = vmatprep.subr.bf16.mxu0 0
    %1578 = vmatpush2.bf16.msra.mxu0 0
    %1579 = vmatprep.subr.bf16.mxu0 0
    %1580 = vmatpush2.bf16.msra.mxu0 0
    %1581 = vmatprep.subr.bf16.mxu0 0
    %1582 = vmatpush2.bf16.msra.mxu0 0
    %1583 = vmatprep.subr.bf16.mxu0 0
    %1584 = vmatpush2.bf16.msra.mxu0 0
    %1585 = vmatprep.subr.bf16.mxu0 0
    %1586 = vmatpush2.bf16.msra.mxu0 0
    %1587 = vmatprep.subr.bf16.mxu0 0
    %1588 = vmatpush2.bf16.msra.mxu0 0
    %1589 = vmatprep.subr.bf16.mxu0 0
    %1590 = vmatpush2.bf16.msra.mxu0 0
    %1591 = vmatprep.subr.bf16.mxu0 0
    %1592 = vmatpush2.bf16.msra.mxu0 0
    %1593 = vmatprep.mubr.bf16.mxu0 0
    %1594 = vmatmul.mubr.bf16.gmra.mxu0 %v1494
    %v1595 = vpop.f32.mrf.mxu0
    %v1596 = vadd.f32 0.0, %v1595
    %v1597 = vpop.f32.mrf.mxu0
    %v1598 = vpop.f32.mrf.mxu0
    %v1599 = vadd.f32 0.0, %v1598
    %v1600 = vpop.f32.mrf.mxu0
    %1601 = vmatprep.mubr.bf16.mxu0 0
    %1602 = vmatmul.mubr.bf16.gmra.mxu0 %v1495
    %v1603 = vpop.f32.mrf.mxu0
    %v1604 = vadd.f32 0.0, %v1603
    %v1605 = vpop.f32.mrf.mxu0
    %v1606 = vpop.f32.mrf.mxu0
    %v1607 = vadd.f32 0.0, %v1606
    %v1608 = vpop.f32.mrf.mxu0
    %1609 = vdwg.mxu0
    %v1610 = vadd.f32 %v1490, %v1596
    %v1611 = vadd.f32 %v1491, %v1599
    %v1612 = vadd.f32 %v1492, %v1604
    %v1613 = vadd.f32 %v1493, %v1607
    %v1614 = vpack.c.bf16 %v653, %v651
    %s1615 = scalar_lea.vmem [#allocation7], 512
    %v1616 = vld [vmem:[%s1615] sm:$0xf]
    %v1617 = vld [vmem:[%s1615 + $0x4] sm:$0xf]
    %v1618 = vld [vmem:[%s1615 + $0x8] sm:$0xf]
    %v1619 = vld [vmem:[%s1615 + $0xc] sm:$0xf]
    %v1620 = vld [vmem:[%s1615 + $0x10] sm:$0xf]
    %v1621 = vld [vmem:[%s1615 + $0x14] sm:$0xf]
    %v1622 = vld [vmem:[%s1615 + $0x18] sm:$0xf]
    %v1623 = vld [vmem:[%s1615 + $0x1c] sm:$0xf]
    %v1624 = vld [vmem:[%s1615 + $0x20] sm:$0xf]
    %v1625 = vld [vmem:[%s1615 + $0x24] sm:$0xf]
    %v1626 = vld [vmem:[%s1615 + $0x28] sm:$0xf]
    %v1627 = vld [vmem:[%s1615 + $0x2c] sm:$0xf]
    %v1628 = vld [vmem:[%s1615 + $0x30] sm:$0xf]
    %v1629 = vld [vmem:[%s1615 + $0x34] sm:$0xf]
    %v1630 = vld [vmem:[%s1615 + $0x38] sm:$0xf]
    %v1631 = vld [vmem:[%s1615 + $0x3c] sm:$0xf]
    %v1648 = vunpack.c.l.b16 %v1616
    %v1649 = vunpack.c.l.b16 %v1617
    %v1650 = vunpack.c.l.b16 %v1618
    %v1651 = vunpack.c.l.b16 %v1619
    %v1652 = vunpack.c.l.b16 %v1620
    %v1653 = vunpack.c.l.b16 %v1621
    %v1654 = vunpack.c.l.b16 %v1622
    %v1655 = vunpack.c.l.b16 %v1623
    %v1656 = vunpack.c.l.b16 %v1624
    %v1657 = vunpack.c.l.b16 %v1625
    %v1658 = vunpack.c.l.b16 %v1626
    %v1659 = vunpack.c.l.b16 %v1627
    %v1660 = vunpack.c.l.b16 %v1628
    %v1661 = vunpack.c.l.b16 %v1629
    %v1662 = vunpack.c.l.b16 %v1630
    %v1663 = vunpack.c.l.b16 %v1631
    %v1664 = vpack.c.b16 %v1649, %v1648
    %v1665 = vpack.c.b16 %v1651, %v1650
    %v1666 = vpack.c.b16 %v1653, %v1652
    %v1667 = vpack.c.b16 %v1655, %v1654
    %v1668 = vpack.c.b16 %v1657, %v1656
    %v1669 = vpack.c.b16 %v1659, %v1658
    %v1670 = vpack.c.b16 %v1661, %v1660
    %v1671 = vpack.c.b16 %v1663, %v1662
    %1680 = vmatprep.subr.bf16.mxu0 0
    %1681 = vmatpush1.bf16.msra.mxu0 %v1671
    %1682 = vmatprep.subr.bf16.mxu0 0
    %1683 = vmatpush1.bf16.msra.mxu0 %v1670
    %1684 = vmatprep.subr.bf16.mxu0 0
    %1685 = vmatpush1.bf16.msra.mxu0 %v1669
    %1686 = vmatprep.subr.bf16.mxu0 0
    %1687 = vmatpush1.bf16.msra.mxu0 %v1668
    %1688 = vmatprep.subr.bf16.mxu0 0
    %1689 = vmatpush1.bf16.msra.mxu0 %v1667
    %1690 = vmatprep.subr.bf16.mxu0 0
    %1691 = vmatpush1.bf16.msra.mxu0 %v1666
    %1692 = vmatprep.subr.bf16.mxu0 0
    %1693 = vmatpush1.bf16.msra.mxu0 %v1665
    %1694 = vmatprep.subr.bf16.mxu0 0
    %1695 = vmatpush1.bf16.msra.mxu0 %v1664
    %1696 = vmatprep.subr.bf16.mxu0 0
    %1697 = vmatpush2.bf16.msra.mxu0 0
    %1698 = vmatprep.subr.bf16.mxu0 0
    %1699 = vmatpush2.bf16.msra.mxu0 0
    %1700 = vmatprep.subr.bf16.mxu0 0
    %1701 = vmatpush2.bf16.msra.mxu0 0
    %1702 = vmatprep.subr.bf16.mxu0 0
    %1703 = vmatpush2.bf16.msra.mxu0 0
    %1704 = vmatprep.subr.bf16.mxu0 0
    %1705 = vmatpush2.bf16.msra.mxu0 0
    %1706 = vmatprep.subr.bf16.mxu0 0
    %1707 = vmatpush2.bf16.msra.mxu0 0
    %1708 = vmatprep.subr.bf16.mxu0 0
    %1709 = vmatpush2.bf16.msra.mxu0 0
    %1710 = vmatprep.subr.bf16.mxu0 0
    %1711 = vmatpush2.bf16.msra.mxu0 0
    %1712 = vmatprep.mubr.bf16.mxu0 0
    %1713 = vmatmul.mubr.bf16.gmra.mxu0 %v664
    %v1714 = vpop.f32.mrf.mxu0
    %v1715 = vadd.f32 0.0, %v1714
    %v1716 = vpop.f32.mrf.mxu0
    %v1717 = vpop.f32.mrf.mxu0
    %v1718 = vadd.f32 0.0, %v1717
    %v1719 = vpop.f32.mrf.mxu0
    %1720 = vmatprep.mubr.bf16.mxu0 0
    %1721 = vmatmul.mubr.bf16.gmra.mxu0 %v1614
    %v1722 = vpop.f32.mrf.mxu0
    %v1723 = vadd.f32 0.0, %v1722
    %v1724 = vpop.f32.mrf.mxu0
    %v1725 = vpop.f32.mrf.mxu0
    %v1726 = vadd.f32 0.0, %v1725
    %v1727 = vpop.f32.mrf.mxu0
    %1728 = vdwg.mxu0
    %v1729 = vadd.f32 %v1610, %v1715
    %v1730 = vadd.f32 %v1611, %v1718
    %v1731 = vadd.f32 %v1612, %v1723
    %v1732 = vadd.f32 %v1613, %v1726
    %v1733 = vpack.c.bf16 %v654, %v652
    %s1734 = scalar_lea.vmem [#allocation7], 576
    %v1735 = vld [vmem:[%s1734] sm:$0xf]
    %v1736 = vld [vmem:[%s1734 + $0x4] sm:$0xf]
    %v1737 = vld [vmem:[%s1734 + $0x8] sm:$0xf]
    %v1738 = vld [vmem:[%s1734 + $0xc] sm:$0xf]
    %v1739 = vld [vmem:[%s1734 + $0x10] sm:$0xf]
    %v1740 = vld [vmem:[%s1734 + $0x14] sm:$0xf]
    %v1741 = vld [vmem:[%s1734 + $0x18] sm:$0xf]
    %v1742 = vld [vmem:[%s1734 + $0x1c] sm:$0xf]
    %v1743 = vld [vmem:[%s1734 + $0x20] sm:$0xf]
    %v1744 = vld [vmem:[%s1734 + $0x24] sm:$0xf]
    %v1745 = vld [vmem:[%s1734 + $0x28] sm:$0xf]
    %v1746 = vld [vmem:[%s1734 + $0x2c] sm:$0xf]
    %v1747 = vld [vmem:[%s1734 + $0x30] sm:$0xf]
    %v1748 = vld [vmem:[%s1734 + $0x34] sm:$0xf]
    %v1749 = vld [vmem:[%s1734 + $0x38] sm:$0xf]
    %v1750 = vld [vmem:[%s1734 + $0x3c] sm:$0xf]
    %v1767 = vunpack.c.l.b16 %v1735
    %v1768 = vunpack.c.l.b16 %v1736
    %v1769 = vunpack.c.l.b16 %v1737
    %v1770 = vunpack.c.l.b16 %v1738
    %v1771 = vunpack.c.l.b16 %v1739
    %v1772 = vunpack.c.l.b16 %v1740
    %v1773 = vunpack.c.l.b16 %v1741
    %v1774 = vunpack.c.l.b16 %v1742
    %v1775 = vunpack.c.l.b16 %v1743
    %v1776 = vunpack.c.l.b16 %v1744
    %v1777 = vunpack.c.l.b16 %v1745
    %v1778 = vunpack.c.l.b16 %v1746
    %v1779 = vunpack.c.l.b16 %v1747
    %v1780 = vunpack.c.l.b16 %v1748
    %v1781 = vunpack.c.l.b16 %v1749
    %v1782 = vunpack.c.l.b16 %v1750
    %v1783 = vpack.c.b16 %v1768, %v1767
    %v1784 = vpack.c.b16 %v1770, %v1769
    %v1785 = vpack.c.b16 %v1772, %v1771
    %v1786 = vpack.c.b16 %v1774, %v1773
    %v1787 = vpack.c.b16 %v1776, %v1775
    %v1788 = vpack.c.b16 %v1778, %v1777
    %v1789 = vpack.c.b16 %v1780, %v1779
    %v1790 = vpack.c.b16 %v1782, %v1781
    %1799 = vmatprep.subr.bf16.mxu0 0
    %1800 = vmatpush1.bf16.msra.mxu0 %v1790
    %1801 = vmatprep.subr.bf16.mxu0 0
    %1802 = vmatpush1.bf16.msra.mxu0 %v1789
    %1803 = vmatprep.subr.bf16.mxu0 0
    %1804 = vmatpush1.bf16.msra.mxu0 %v1788
    %1805 = vmatprep.subr.bf16.mxu0 0
    %1806 = vmatpush1.bf16.msra.mxu0 %v1787
    %1807 = vmatprep.subr.bf16.mxu0 0
    %1808 = vmatpush1.bf16.msra.mxu0 %v1786
    %1809 = vmatprep.subr.bf16.mxu0 0
    %1810 = vmatpush1.bf16.msra.mxu0 %v1785
    %1811 = vmatprep.subr.bf16.mxu0 0
    %1812 = vmatpush1.bf16.msra.mxu0 %v1784
    %1813 = vmatprep.subr.bf16.mxu0 0
    %1814 = vmatpush1.bf16.msra.mxu0 %v1783
    %1815 = vmatprep.subr.bf16.mxu0 0
    %1816 = vmatpush2.bf16.msra.mxu0 0
    %1817 = vmatprep.subr.bf16.mxu0 0
    %1818 = vmatpush2.bf16.msra.mxu0 0
    %1819 = vmatprep.subr.bf16.mxu0 0
    %1820 = vmatpush2.bf16.msra.mxu0 0
    %1821 = vmatprep.subr.bf16.mxu0 0
    %1822 = vmatpush2.bf16.msra.mxu0 0
    %1823 = vmatprep.subr.bf16.mxu0 0
    %1824 = vmatpush2.bf16.msra.mxu0 0
    %1825 = vmatprep.subr.bf16.mxu0 0
    %1826 = vmatpush2.bf16.msra.mxu0 0
    %1827 = vmatprep.subr.bf16.mxu0 0
    %1828 = vmatpush2.bf16.msra.mxu0 0
    %1829 = vmatprep.subr.bf16.mxu0 0
    %1830 = vmatpush2.bf16.msra.mxu0 0
    %1831 = vmatprep.mubr.bf16.mxu0 0
    %1832 = vmatmul.mubr.bf16.gmra.mxu0 %v682
    %v1833 = vpop.f32.mrf.mxu0
    %v1834 = vadd.f32 0.0, %v1833
    %v1835 = vpop.f32.mrf.mxu0
    %v1836 = vpop.f32.mrf.mxu0
    %v1837 = vadd.f32 0.0, %v1836
    %v1838 = vpop.f32.mrf.mxu0
    %1839 = vmatprep.mubr.bf16.mxu0 0
    %1840 = vmatmul.mubr.bf16.gmra.mxu0 %v1733
    %v1841 = vpop.f32.mrf.mxu0
    %v1842 = vadd.f32 0.0, %v1841
    %v1843 = vpop.f32.mrf.mxu0
    %v1844 = vpop.f32.mrf.mxu0
    %v1845 = vadd.f32 0.0, %v1844
    %v1846 = vpop.f32.mrf.mxu0
    %1847 = vdwg.mxu0
    %v1848 = vadd.f32 %v1729, %v1834
    %v1849 = vadd.f32 %v1730, %v1837
    %v1850 = vadd.f32 %v1731, %v1842
    %v1851 = vadd.f32 %v1732, %v1845
    %v1852 = vpack.c.bf16 %v655, %v653
    %s1853 = scalar_lea.vmem [#allocation7], 640
    %v1854 = vld [vmem:[%s1853] sm:$0xf]
    %v1855 = vld [vmem:[%s1853 + $0x4] sm:$0xf]
    %v1856 = vld [vmem:[%s1853 + $0x8] sm:$0xf]
    %v1857 = vld [vmem:[%s1853 + $0xc] sm:$0xf]
    %v1858 = vld [vmem:[%s1853 + $0x10] sm:$0xf]
    %v1859 = vld [vmem:[%s1853 + $0x14] sm:$0xf]
    %v1860 = vld [vmem:[%s1853 + $0x18] sm:$0xf]
    %v1861 = vld [vmem:[%s1853 + $0x1c] sm:$0xf]
    %v1862 = vld [vmem:[%s1853 + $0x20] sm:$0xf]
    %v1863 = vld [vmem:[%s1853 + $0x24] sm:$0xf]
    %v1864 = vld [vmem:[%s1853 + $0x28] sm:$0xf]
    %v1865 = vld [vmem:[%s1853 + $0x2c] sm:$0xf]
    %v1866 = vld [vmem:[%s1853 + $0x30] sm:$0xf]
    %v1867 = vld [vmem:[%s1853 + $0x34] sm:$0xf]
    %v1868 = vld [vmem:[%s1853 + $0x38] sm:$0xf]
    %v1869 = vld [vmem:[%s1853 + $0x3c] sm:$0xf]
    %v1886 = vunpack.c.l.b16 %v1854
    %v1887 = vunpack.c.l.b16 %v1855
    %v1888 = vunpack.c.l.b16 %v1856
    %v1889 = vunpack.c.l.b16 %v1857
    %v1890 = vunpack.c.l.b16 %v1858
    %v1891 = vunpack.c.l.b16 %v1859
    %v1892 = vunpack.c.l.b16 %v1860
    %v1893 = vunpack.c.l.b16 %v1861
    %v1894 = vunpack.c.l.b16 %v1862
    %v1895 = vunpack.c.l.b16 %v1863
    %v1896 = vunpack.c.l.b16 %v1864
    %v1897 = vunpack.c.l.b16 %v1865
    %v1898 = vunpack.c.l.b16 %v1866
    %v1899 = vunpack.c.l.b16 %v1867
    %v1900 = vunpack.c.l.b16 %v1868
    %v1901 = vunpack.c.l.b16 %v1869
    %v1902 = vpack.c.b16 %v1887, %v1886
    %v1903 = vpack.c.b16 %v1889, %v1888
    %v1904 = vpack.c.b16 %v1891, %v1890
    %v1905 = vpack.c.b16 %v1893, %v1892
    %v1906 = vpack.c.b16 %v1895, %v1894
    %v1907 = vpack.c.b16 %v1897, %v1896
    %v1908 = vpack.c.b16 %v1899, %v1898
    %v1909 = vpack.c.b16 %v1901, %v1900
    %1918 = vmatprep.subr.bf16.mxu0 0
    %1919 = vmatpush1.bf16.msra.mxu0 %v1909
    %1920 = vmatprep.subr.bf16.mxu0 0
    %1921 = vmatpush1.bf16.msra.mxu0 %v1908
    %1922 = vmatprep.subr.bf16.mxu0 0
    %1923 = vmatpush1.bf16.msra.mxu0 %v1907
    %1924 = vmatprep.subr.bf16.mxu0 0
    %1925 = vmatpush1.bf16.msra.mxu0 %v1906
    %1926 = vmatprep.subr.bf16.mxu0 0
    %1927 = vmatpush1.bf16.msra.mxu0 %v1905
    %1928 = vmatprep.subr.bf16.mxu0 0
    %1929 = vmatpush1.bf16.msra.mxu0 %v1904
    %1930 = vmatprep.subr.bf16.mxu0 0
    %1931 = vmatpush1.bf16.msra.mxu0 %v1903
    %1932 = vmatprep.subr.bf16.mxu0 0
    %1933 = vmatpush1.bf16.msra.mxu0 %v1902
    %1934 = vmatprep.subr.bf16.mxu0 0
    %1935 = vmatpush2.bf16.msra.mxu0 0
    %1936 = vmatprep.subr.bf16.mxu0 0
    %1937 = vmatpush2.bf16.msra.mxu0 0
    %1938 = vmatprep.subr.bf16.mxu0 0
    %1939 = vmatpush2.bf16.msra.mxu0 0
    %1940 = vmatprep.subr.bf16.mxu0 0
    %1941 = vmatpush2.bf16.msra.mxu0 0
    %1942 = vmatprep.subr.bf16.mxu0 0
    %1943 = vmatpush2.bf16.msra.mxu0 0
    %1944 = vmatprep.subr.bf16.mxu0 0
    %1945 = vmatpush2.bf16.msra.mxu0 0
    %1946 = vmatprep.subr.bf16.mxu0 0
    %1947 = vmatpush2.bf16.msra.mxu0 0
    %1948 = vmatprep.subr.bf16.mxu0 0
    %1949 = vmatpush2.bf16.msra.mxu0 0
    %1950 = vmatprep.mubr.bf16.mxu0 0
    %1951 = vmatmul.mubr.bf16.gmra.mxu0 %v895
    %v1952 = vpop.f32.mrf.mxu0
    %v1953 = vadd.f32 0.0, %v1952
    %v1954 = vpop.f32.mrf.mxu0
    %v1955 = vpop.f32.mrf.mxu0
    %v1956 = vadd.f32 0.0, %v1955
    %v1957 = vpop.f32.mrf.mxu0
    %1958 = vmatprep.mubr.bf16.mxu0 0
    %1959 = vmatmul.mubr.bf16.gmra.mxu0 %v1852
    %v1960 = vpop.f32.mrf.mxu0
    %v1961 = vadd.f32 0.0, %v1960
    %v1962 = vpop.f32.mrf.mxu0
    %v1963 = vpop.f32.mrf.mxu0
    %v1964 = vadd.f32 0.0, %v1963
    %v1965 = vpop.f32.mrf.mxu0
    %1966 = vdwg.mxu0
    %v1967 = vadd.f32 %v1848, %v1953
    %v1968 = vadd.f32 %v1849, %v1956
    %v1969 = vadd.f32 %v1850, %v1961
    %v1970 = vadd.f32 %v1851, %v1964
    %v1971 = vpack.c.bf16 %v656, %v654
    %s1972 = scalar_lea.vmem [#allocation7], 704
    %v1973 = vld [vmem:[%s1972] sm:$0xf]
    %v1974 = vld [vmem:[%s1972 + $0x4] sm:$0xf]
    %v1975 = vld [vmem:[%s1972 + $0x8] sm:$0xf]
    %v1976 = vld [vmem:[%s1972 + $0xc] sm:$0xf]
    %v1977 = vld [vmem:[%s1972 + $0x10] sm:$0xf]
    %v1978 = vld [vmem:[%s1972 + $0x14] sm:$0xf]
    %v1979 = vld [vmem:[%s1972 + $0x18] sm:$0xf]
    %v1980 = vld [vmem:[%s1972 + $0x1c] sm:$0xf]
    %v1981 = vld [vmem:[%s1972 + $0x20] sm:$0xf]
    %v1982 = vld [vmem:[%s1972 + $0x24] sm:$0xf]
    %v1983 = vld [vmem:[%s1972 + $0x28] sm:$0xf]
    %v1984 = vld [vmem:[%s1972 + $0x2c] sm:$0xf]
    %v1985 = vld [vmem:[%s1972 + $0x30] sm:$0xf]
    %v1986 = vld [vmem:[%s1972 + $0x34] sm:$0xf]
    %v1987 = vld [vmem:[%s1972 + $0x38] sm:$0xf]
    %v1988 = vld [vmem:[%s1972 + $0x3c] sm:$0xf]
    %v2005 = vunpack.c.l.b16 %v1973
    %v2006 = vunpack.c.l.b16 %v1974
    %v2007 = vunpack.c.l.b16 %v1975
    %v2008 = vunpack.c.l.b16 %v1976
    %v2009 = vunpack.c.l.b16 %v1977
    %v2010 = vunpack.c.l.b16 %v1978
    %v2011 = vunpack.c.l.b16 %v1979
    %v2012 = vunpack.c.l.b16 %v1980
    %v2013 = vunpack.c.l.b16 %v1981
    %v2014 = vunpack.c.l.b16 %v1982
    %v2015 = vunpack.c.l.b16 %v1983
    %v2016 = vunpack.c.l.b16 %v1984
    %v2017 = vunpack.c.l.b16 %v1985
    %v2018 = vunpack.c.l.b16 %v1986
    %v2019 = vunpack.c.l.b16 %v1987
    %v2020 = vunpack.c.l.b16 %v1988
    %v2021 = vpack.c.b16 %v2006, %v2005
    %v2022 = vpack.c.b16 %v2008, %v2007
    %v2023 = vpack.c.b16 %v2010, %v2009
    %v2024 = vpack.c.b16 %v2012, %v2011
    %v2025 = vpack.c.b16 %v2014, %v2013
    %v2026 = vpack.c.b16 %v2016, %v2015
    %v2027 = vpack.c.b16 %v2018, %v2017
    %v2028 = vpack.c.b16 %v2020, %v2019
    %2037 = vmatprep.subr.bf16.mxu0 0
    %2038 = vmatpush1.bf16.msra.mxu0 %v2028
    %2039 = vmatprep.subr.bf16.mxu0 0
    %2040 = vmatpush1.bf16.msra.mxu0 %v2027
    %2041 = vmatprep.subr.bf16.mxu0 0
    %2042 = vmatpush1.bf16.msra.mxu0 %v2026
    %2043 = vmatprep.subr.bf16.mxu0 0
    %2044 = vmatpush1.bf16.msra.mxu0 %v2025
    %2045 = vmatprep.subr.bf16.mxu0 0
    %2046 = vmatpush1.bf16.msra.mxu0 %v2024
    %2047 = vmatprep.subr.bf16.mxu0 0
    %2048 = vmatpush1.bf16.msra.mxu0 %v2023
    %2049 = vmatprep.subr.bf16.mxu0 0
    %2050 = vmatpush1.bf16.msra.mxu0 %v2022
    %2051 = vmatprep.subr.bf16.mxu0 0
    %2052 = vmatpush1.bf16.msra.mxu0 %v2021
    %2053 = vmatprep.subr.bf16.mxu0 0
    %2054 = vmatpush2.bf16.msra.mxu0 0
    %2055 = vmatprep.subr.bf16.mxu0 0
    %2056 = vmatpush2.bf16.msra.mxu0 0
    %2057 = vmatprep.subr.bf16.mxu0 0
    %2058 = vmatpush2.bf16.msra.mxu0 0
    %2059 = vmatprep.subr.bf16.mxu0 0
    %2060 = vmatpush2.bf16.msra.mxu0 0
    %2061 = vmatprep.subr.bf16.mxu0 0
    %2062 = vmatpush2.bf16.msra.mxu0 0
    %2063 = vmatprep.subr.bf16.mxu0 0
    %2064 = vmatpush2.bf16.msra.mxu0 0
    %2065 = vmatprep.subr.bf16.mxu0 0
    %2066 = vmatpush2.bf16.msra.mxu0 0
    %2067 = vmatprep.subr.bf16.mxu0 0
    %2068 = vmatpush2.bf16.msra.mxu0 0
    %2069 = vmatprep.mubr.bf16.mxu0 0
    %2070 = vmatmul.mubr.bf16.gmra.mxu0 %v1015
    %v2071 = vpop.f32.mrf.mxu0
    %v2072 = vadd.f32 0.0, %v2071
    %v2073 = vpop.f32.mrf.mxu0
    %v2074 = vpop.f32.mrf.mxu0
    %v2075 = vadd.f32 0.0, %v2074
    %v2076 = vpop.f32.mrf.mxu0
    %2077 = vmatprep.mubr.bf16.mxu0 0
    %2078 = vmatmul.mubr.bf16.gmra.mxu0 %v1971
    %v2079 = vpop.f32.mrf.mxu0
    %v2080 = vadd.f32 0.0, %v2079
    %v2081 = vpop.f32.mrf.mxu0
    %v2082 = vpop.f32.mrf.mxu0
    %v2083 = vadd.f32 0.0, %v2082
    %v2084 = vpop.f32.mrf.mxu0
    %2085 = vdwg.mxu0
    %v2086 = vadd.f32 %v1967, %v2072
    %v2087 = vadd.f32 %v1968, %v2075
    %v2088 = vadd.f32 %v1969, %v2080
    %v2089 = vadd.f32 %v1970, %v2083
    %v2090 = vpack.c.bf16 %v659, %v657
    %s2091 = scalar_lea.vmem [#allocation7], 768
    %v2092 = vld [vmem:[%s2091] sm:$0xf]
    %v2093 = vld [vmem:[%s2091 + $0x4] sm:$0xf]
    %v2094 = vld [vmem:[%s2091 + $0x8] sm:$0xf]
    %v2095 = vld [vmem:[%s2091 + $0xc] sm:$0xf]
    %v2096 = vld [vmem:[%s2091 + $0x10] sm:$0xf]
    %v2097 = vld [vmem:[%s2091 + $0x14] sm:$0xf]
    %v2098 = vld [vmem:[%s2091 + $0x18] sm:$0xf]
    %v2099 = vld [vmem:[%s2091 + $0x1c] sm:$0xf]
    %v2100 = vld [vmem:[%s2091 + $0x20] sm:$0xf]
    %v2101 = vld [vmem:[%s2091 + $0x24] sm:$0xf]
    %v2102 = vld [vmem:[%s2091 + $0x28] sm:$0xf]
    %v2103 = vld [vmem:[%s2091 + $0x2c] sm:$0xf]
    %v2104 = vld [vmem:[%s2091 + $0x30] sm:$0xf]
    %v2105 = vld [vmem:[%s2091 + $0x34] sm:$0xf]
    %v2106 = vld [vmem:[%s2091 + $0x38] sm:$0xf]
    %v2107 = vld [vmem:[%s2091 + $0x3c] sm:$0xf]
    %v2124 = vunpack.c.l.b16 %v2092
    %v2125 = vunpack.c.l.b16 %v2093
    %v2126 = vunpack.c.l.b16 %v2094
    %v2127 = vunpack.c.l.b16 %v2095
    %v2128 = vunpack.c.l.b16 %v2096
    %v2129 = vunpack.c.l.b16 %v2097
    %v2130 = vunpack.c.l.b16 %v2098
    %v2131 = vunpack.c.l.b16 %v2099
    %v2132 = vunpack.c.l.b16 %v2100
    %v2133 = vunpack.c.l.b16 %v2101
    %v2134 = vunpack.c.l.b16 %v2102
    %v2135 = vunpack.c.l.b16 %v2103
    %v2136 = vunpack.c.l.b16 %v2104
    %v2137 = vunpack.c.l.b16 %v2105
    %v2138 = vunpack.c.l.b16 %v2106
    %v2139 = vunpack.c.l.b16 %v2107
    %v2140 = vpack.c.b16 %v2125, %v2124
    %v2141 = vpack.c.b16 %v2127, %v2126
    %v2142 = vpack.c.b16 %v2129, %v2128
    %v2143 = vpack.c.b16 %v2131, %v2130
    %v2144 = vpack.c.b16 %v2133, %v2132
    %v2145 = vpack.c.b16 %v2135, %v2134
    %v2146 = vpack.c.b16 %v2137, %v2136
    %v2147 = vpack.c.b16 %v2139, %v2138
    %2156 = vmatprep.subr.bf16.mxu0 0
    %2157 = vmatpush1.bf16.msra.mxu0 %v2147
    %2158 = vmatprep.subr.bf16.mxu0 0
    %2159 = vmatpush1.bf16.msra.mxu0 %v2146
    %2160 = vmatprep.subr.bf16.mxu0 0
    %2161 = vmatpush1.bf16.msra.mxu0 %v2145
    %2162 = vmatprep.subr.bf16.mxu0 0
    %2163 = vmatpush1.bf16.msra.mxu0 %v2144
    %2164 = vmatprep.subr.bf16.mxu0 0
    %2165 = vmatpush1.bf16.msra.mxu0 %v2143
    %2166 = vmatprep.subr.bf16.mxu0 0
    %2167 = vmatpush1.bf16.msra.mxu0 %v2142
    %2168 = vmatprep.subr.bf16.mxu0 0
    %2169 = vmatpush1.bf16.msra.mxu0 %v2141
    %2170 = vmatprep.subr.bf16.mxu0 0
    %2171 = vmatpush1.bf16.msra.mxu0 %v2140
    %2172 = vmatprep.subr.bf16.mxu0 0
    %2173 = vmatpush2.bf16.msra.mxu0 0
    %2174 = vmatprep.subr.bf16.mxu0 0
    %2175 = vmatpush2.bf16.msra.mxu0 0
    %2176 = vmatprep.subr.bf16.mxu0 0
    %2177 = vmatpush2.bf16.msra.mxu0 0
    %2178 = vmatprep.subr.bf16.mxu0 0
    %2179 = vmatpush2.bf16.msra.mxu0 0
    %2180 = vmatprep.subr.bf16.mxu0 0
    %2181 = vmatpush2.bf16.msra.mxu0 0
    %2182 = vmatprep.subr.bf16.mxu0 0
    %2183 = vmatpush2.bf16.msra.mxu0 0
    %2184 = vmatprep.subr.bf16.mxu0 0
    %2185 = vmatpush2.bf16.msra.mxu0 0
    %2186 = vmatprep.subr.bf16.mxu0 0
    %2187 = vmatpush2.bf16.msra.mxu0 0
    %2188 = vmatprep.mubr.bf16.mxu0 0
    %2189 = vmatmul.mubr.bf16.gmra.mxu0 %v1135
    %v2190 = vpop.f32.mrf.mxu0
    %v2191 = vadd.f32 0.0, %v2190
    %v2192 = vpop.f32.mrf.mxu0
    %v2193 = vpop.f32.mrf.mxu0
    %v2194 = vadd.f32 0.0, %v2193
    %v2195 = vpop.f32.mrf.mxu0
    %2196 = vmatprep.mubr.bf16.mxu0 0
    %2197 = vmatmul.mubr.bf16.gmra.mxu0 %v2090
    %v2198 = vpop.f32.mrf.mxu0
    %v2199 = vadd.f32 0.0, %v2198
    %v2200 = vpop.f32.mrf.mxu0
    %v2201 = vpop.f32.mrf.mxu0
    %v2202 = vadd.f32 0.0, %v2201
    %v2203 = vpop.f32.mrf.mxu0
    %2204 = vdwg.mxu0
    %v2205 = vadd.f32 %v2086, %v2191
    %v2206 = vadd.f32 %v2087, %v2194
    %v2207 = vadd.f32 %v2088, %v2199
    %v2208 = vadd.f32 %v2089, %v2202
    %v2209 = vpack.c.bf16 %v660, %v658
    %s2210 = scalar_lea.vmem [#allocation7], 832
    %v2211 = vld [vmem:[%s2210] sm:$0xf]
    %v2212 = vld [vmem:[%s2210 + $0x4] sm:$0xf]
    %v2213 = vld [vmem:[%s2210 + $0x8] sm:$0xf]
    %v2214 = vld [vmem:[%s2210 + $0xc] sm:$0xf]
    %v2215 = vld [vmem:[%s2210 + $0x10] sm:$0xf]
    %v2216 = vld [vmem:[%s2210 + $0x14] sm:$0xf]
    %v2217 = vld [vmem:[%s2210 + $0x18] sm:$0xf]
    %v2218 = vld [vmem:[%s2210 + $0x1c] sm:$0xf]
    %v2219 = vld [vmem:[%s2210 + $0x20] sm:$0xf]
    %v2220 = vld [vmem:[%s2210 + $0x24] sm:$0xf]
    %v2221 = vld [vmem:[%s2210 + $0x28] sm:$0xf]
    %v2222 = vld [vmem:[%s2210 + $0x2c] sm:$0xf]
    %v2223 = vld [vmem:[%s2210 + $0x30] sm:$0xf]
    %v2224 = vld [vmem:[%s2210 + $0x34] sm:$0xf]
    %v2225 = vld [vmem:[%s2210 + $0x38] sm:$0xf]
    %v2226 = vld [vmem:[%s2210 + $0x3c] sm:$0xf]
    %v2243 = vunpack.c.l.b16 %v2211
    %v2244 = vunpack.c.l.b16 %v2212
    %v2245 = vunpack.c.l.b16 %v2213
    %v2246 = vunpack.c.l.b16 %v2214
    %v2247 = vunpack.c.l.b16 %v2215
    %v2248 = vunpack.c.l.b16 %v2216
    %v2249 = vunpack.c.l.b16 %v2217
    %v2250 = vunpack.c.l.b16 %v2218
    %v2251 = vunpack.c.l.b16 %v2219
    %v2252 = vunpack.c.l.b16 %v2220
    %v2253 = vunpack.c.l.b16 %v2221
    %v2254 = vunpack.c.l.b16 %v2222
    %v2255 = vunpack.c.l.b16 %v2223
    %v2256 = vunpack.c.l.b16 %v2224
    %v2257 = vunpack.c.l.b16 %v2225
    %v2258 = vunpack.c.l.b16 %v2226
    %v2259 = vpack.c.b16 %v2244, %v2243
    %v2260 = vpack.c.b16 %v2246, %v2245
    %v2261 = vpack.c.b16 %v2248, %v2247
    %v2262 = vpack.c.b16 %v2250, %v2249
    %v2263 = vpack.c.b16 %v2252, %v2251
    %v2264 = vpack.c.b16 %v2254, %v2253
    %v2265 = vpack.c.b16 %v2256, %v2255
    %v2266 = vpack.c.b16 %v2258, %v2257
    %2275 = vmatprep.subr.bf16.mxu0 0
    %2276 = vmatpush1.bf16.msra.mxu0 %v2266
    %2277 = vmatprep.subr.bf16.mxu0 0
    %2278 = vmatpush1.bf16.msra.mxu0 %v2265
    %2279 = vmatprep.subr.bf16.mxu0 0
    %2280 = vmatpush1.bf16.msra.mxu0 %v2264
    %2281 = vmatprep.subr.bf16.mxu0 0
    %2282 = vmatpush1.bf16.msra.mxu0 %v2263
    %2283 = vmatprep.subr.bf16.mxu0 0
    %2284 = vmatpush1.bf16.msra.mxu0 %v2262
    %2285 = vmatprep.subr.bf16.mxu0 0
    %2286 = vmatpush1.bf16.msra.mxu0 %v2261
    %2287 = vmatprep.subr.bf16.mxu0 0
    %2288 = vmatpush1.bf16.msra.mxu0 %v2260
    %2289 = vmatprep.subr.bf16.mxu0 0
    %2290 = vmatpush1.bf16.msra.mxu0 %v2259
    %2291 = vmatprep.subr.bf16.mxu0 0
    %2292 = vmatpush2.bf16.msra.mxu0 0
    %2293 = vmatprep.subr.bf16.mxu0 0
    %2294 = vmatpush2.bf16.msra.mxu0 0
    %2295 = vmatprep.subr.bf16.mxu0 0
    %2296 = vmatpush2.bf16.msra.mxu0 0
    %2297 = vmatprep.subr.bf16.mxu0 0
    %2298 = vmatpush2.bf16.msra.mxu0 0
    %2299 = vmatprep.subr.bf16.mxu0 0
    %2300 = vmatpush2.bf16.msra.mxu0 0
    %2301 = vmatprep.subr.bf16.mxu0 0
    %2302 = vmatpush2.bf16.msra.mxu0 0
    %2303 = vmatprep.subr.bf16.mxu0 0
    %2304 = vmatpush2.bf16.msra.mxu0 0
    %2305 = vmatprep.subr.bf16.mxu0 0
    %2306 = vmatpush2.bf16.msra.mxu0 0
    %2307 = vmatprep.mubr.bf16.mxu0 0
    %2308 = vmatmul.mubr.bf16.gmra.mxu0 %v1255
    %v2309 = vpop.f32.mrf.mxu0
    %v2310 = vadd.f32 0.0, %v2309
    %v2311 = vpop.f32.mrf.mxu0
    %v2312 = vpop.f32.mrf.mxu0
    %v2313 = vadd.f32 0.0, %v2312
    %v2314 = vpop.f32.mrf.mxu0
    %2315 = vmatprep.mubr.bf16.mxu0 0
    %2316 = vmatmul.mubr.bf16.gmra.mxu0 %v2209
    %v2317 = vpop.f32.mrf.mxu0
    %v2318 = vadd.f32 0.0, %v2317
    %v2319 = vpop.f32.mrf.mxu0
    %v2320 = vpop.f32.mrf.mxu0
    %v2321 = vadd.f32 0.0, %v2320
    %v2322 = vpop.f32.mrf.mxu0
    %2323 = vdwg.mxu0
    %v2324 = vadd.f32 %v2205, %v2310
    %v2325 = vadd.f32 %v2206, %v2313
    %v2326 = vadd.f32 %v2207, %v2318
    %v2327 = vadd.f32 %v2208, %v2321
    %v2328 = vpack.c.bf16 %v661, %v659
    %s2329 = scalar_lea.vmem [#allocation7], 896
    %v2330 = vld [vmem:[%s2329] sm:$0xf]
    %v2331 = vld [vmem:[%s2329 + $0x4] sm:$0xf]
    %v2332 = vld [vmem:[%s2329 + $0x8] sm:$0xf]
    %v2333 = vld [vmem:[%s2329 + $0xc] sm:$0xf]
    %v2334 = vld [vmem:[%s2329 + $0x10] sm:$0xf]
    %v2335 = vld [vmem:[%s2329 + $0x14] sm:$0xf]
    %v2336 = vld [vmem:[%s2329 + $0x18] sm:$0xf]
    %v2337 = vld [vmem:[%s2329 + $0x1c] sm:$0xf]
    %v2338 = vld [vmem:[%s2329 + $0x20] sm:$0xf]
    %v2339 = vld [vmem:[%s2329 + $0x24] sm:$0xf]
    %v2340 = vld [vmem:[%s2329 + $0x28] sm:$0xf]
    %v2341 = vld [vmem:[%s2329 + $0x2c] sm:$0xf]
    %v2342 = vld [vmem:[%s2329 + $0x30] sm:$0xf]
    %v2343 = vld [vmem:[%s2329 + $0x34] sm:$0xf]
    %v2344 = vld [vmem:[%s2329 + $0x38] sm:$0xf]
    %v2345 = vld [vmem:[%s2329 + $0x3c] sm:$0xf]
    %v2362 = vunpack.c.l.b16 %v2330
    %v2363 = vunpack.c.l.b16 %v2331
    %v2364 = vunpack.c.l.b16 %v2332
    %v2365 = vunpack.c.l.b16 %v2333
    %v2366 = vunpack.c.l.b16 %v2334
    %v2367 = vunpack.c.l.b16 %v2335
    %v2368 = vunpack.c.l.b16 %v2336
    %v2369 = vunpack.c.l.b16 %v2337
    %v2370 = vunpack.c.l.b16 %v2338
    %v2371 = vunpack.c.l.b16 %v2339
    %v2372 = vunpack.c.l.b16 %v2340
    %v2373 = vunpack.c.l.b16 %v2341
    %v2374 = vunpack.c.l.b16 %v2342
    %v2375 = vunpack.c.l.b16 %v2343
    %v2376 = vunpack.c.l.b16 %v2344
    %v2377 = vunpack.c.l.b16 %v2345
    %v2378 = vpack.c.b16 %v2363, %v2362
    %v2379 = vpack.c.b16 %v2365, %v2364
    %v2380 = vpack.c.b16 %v2367, %v2366
    %v2381 = vpack.c.b16 %v2369, %v2368
    %v2382 = vpack.c.b16 %v2371, %v2370
    %v2383 = vpack.c.b16 %v2373, %v2372
    %v2384 = vpack.c.b16 %v2375, %v2374
    %v2385 = vpack.c.b16 %v2377, %v2376
    %2394 = vmatprep.subr.bf16.mxu0 0
    %2395 = vmatpush1.bf16.msra.mxu0 %v2385
    %2396 = vmatprep.subr.bf16.mxu0 0
    %2397 = vmatpush1.bf16.msra.mxu0 %v2384
    %2398 = vmatprep.subr.bf16.mxu0 0
    %2399 = vmatpush1.bf16.msra.mxu0 %v2383
    %2400 = vmatprep.subr.bf16.mxu0 0
    %2401 = vmatpush1.bf16.msra.mxu0 %v2382
    %2402 = vmatprep.subr.bf16.mxu0 0
    %2403 = vmatpush1.bf16.msra.mxu0 %v2381
    %2404 = vmatprep.subr.bf16.mxu0 0
    %2405 = vmatpush1.bf16.msra.mxu0 %v2380
    %2406 = vmatprep.subr.bf16.mxu0 0
    %2407 = vmatpush1.bf16.msra.mxu0 %v2379
    %2408 = vmatprep.subr.bf16.mxu0 0
    %2409 = vmatpush1.bf16.msra.mxu0 %v2378
    %2410 = vmatprep.subr.bf16.mxu0 0
    %2411 = vmatpush2.bf16.msra.mxu0 0
    %2412 = vmatprep.subr.bf16.mxu0 0
    %2413 = vmatpush2.bf16.msra.mxu0 0
    %2414 = vmatprep.subr.bf16.mxu0 0
    %2415 = vmatpush2.bf16.msra.mxu0 0
    %2416 = vmatprep.subr.bf16.mxu0 0
    %2417 = vmatpush2.bf16.msra.mxu0 0
    %2418 = vmatprep.subr.bf16.mxu0 0
    %2419 = vmatpush2.bf16.msra.mxu0 0
    %2420 = vmatprep.subr.bf16.mxu0 0
    %2421 = vmatpush2.bf16.msra.mxu0 0
    %2422 = vmatprep.subr.bf16.mxu0 0
    %2423 = vmatpush2.bf16.msra.mxu0 0
    %2424 = vmatprep.subr.bf16.mxu0 0
    %2425 = vmatpush2.bf16.msra.mxu0 0
    %2426 = vmatprep.mubr.bf16.mxu0 0
    %2427 = vmatmul.mubr.bf16.gmra.mxu0 %v1375
    %v2428 = vpop.f32.mrf.mxu0
    %v2429 = vadd.f32 0.0, %v2428
    %v2430 = vpop.f32.mrf.mxu0
    %v2431 = vpop.f32.mrf.mxu0
    %v2432 = vadd.f32 0.0, %v2431
    %v2433 = vpop.f32.mrf.mxu0
    %2434 = vmatprep.mubr.bf16.mxu0 0
    %2435 = vmatmul.mubr.bf16.gmra.mxu0 %v2328
    %v2436 = vpop.f32.mrf.mxu0
    %v2437 = vadd.f32 0.0, %v2436
    %v2438 = vpop.f32.mrf.mxu0
    %v2439 = vpop.f32.mrf.mxu0
    %v2440 = vadd.f32 0.0, %v2439
    %v2441 = vpop.f32.mrf.mxu0
    %2442 = vdwg.mxu0
    %v2443 = vadd.f32 %v2324, %v2429
    %v2444 = vadd.f32 %v2325, %v2432
    %v2445 = vadd.f32 %v2326, %v2437
    %v2446 = vadd.f32 %v2327, %v2440
    %v2447 = vpack.c.bf16 %v662, %v660
    %s2448 = scalar_lea.vmem [#allocation7], 960
    %v2449 = vld [vmem:[%s2448] sm:$0xf]
    %v2450 = vld [vmem:[%s2448 + $0x4] sm:$0xf]
    %v2451 = vld [vmem:[%s2448 + $0x8] sm:$0xf]
    %v2452 = vld [vmem:[%s2448 + $0xc] sm:$0xf]
    %v2453 = vld [vmem:[%s2448 + $0x10] sm:$0xf]
    %v2454 = vld [vmem:[%s2448 + $0x14] sm:$0xf]
    %v2455 = vld [vmem:[%s2448 + $0x18] sm:$0xf]
    %v2456 = vld [vmem:[%s2448 + $0x1c] sm:$0xf]
    %v2457 = vld [vmem:[%s2448 + $0x20] sm:$0xf]
    %v2458 = vld [vmem:[%s2448 + $0x24] sm:$0xf]
    %v2459 = vld [vmem:[%s2448 + $0x28] sm:$0xf]
    %v2460 = vld [vmem:[%s2448 + $0x2c] sm:$0xf]
    %v2461 = vld [vmem:[%s2448 + $0x30] sm:$0xf]
    %v2462 = vld [vmem:[%s2448 + $0x34] sm:$0xf]
    %v2463 = vld [vmem:[%s2448 + $0x38] sm:$0xf]
    %v2464 = vld [vmem:[%s2448 + $0x3c] sm:$0xf]
    %v2481 = vunpack.c.l.b16 %v2449
    %v2482 = vunpack.c.l.b16 %v2450
    %v2483 = vunpack.c.l.b16 %v2451
    %v2484 = vunpack.c.l.b16 %v2452
    %v2485 = vunpack.c.l.b16 %v2453
    %v2486 = vunpack.c.l.b16 %v2454
    %v2487 = vunpack.c.l.b16 %v2455
    %v2488 = vunpack.c.l.b16 %v2456
    %v2489 = vunpack.c.l.b16 %v2457
    %v2490 = vunpack.c.l.b16 %v2458
    %v2491 = vunpack.c.l.b16 %v2459
    %v2492 = vunpack.c.l.b16 %v2460
    %v2493 = vunpack.c.l.b16 %v2461
    %v2494 = vunpack.c.l.b16 %v2462
    %v2495 = vunpack.c.l.b16 %v2463
    %v2496 = vunpack.c.l.b16 %v2464
    %v2497 = vpack.c.b16 %v2482, %v2481
    %v2498 = vpack.c.b16 %v2484, %v2483
    %v2499 = vpack.c.b16 %v2486, %v2485
    %v2500 = vpack.c.b16 %v2488, %v2487
    %v2501 = vpack.c.b16 %v2490, %v2489
    %v2502 = vpack.c.b16 %v2492, %v2491
    %v2503 = vpack.c.b16 %v2494, %v2493
    %v2504 = vpack.c.b16 %v2496, %v2495
    %2513 = vmatprep.subr.bf16.mxu0 0
    %2514 = vmatpush1.bf16.msra.mxu0 %v2504
    %2515 = vmatprep.subr.bf16.mxu0 0
    %2516 = vmatpush1.bf16.msra.mxu0 %v2503
    %2517 = vmatprep.subr.bf16.mxu0 0
    %2518 = vmatpush1.bf16.msra.mxu0 %v2502
    %2519 = vmatprep.subr.bf16.mxu0 0
    %2520 = vmatpush1.bf16.msra.mxu0 %v2501
    %2521 = vmatprep.subr.bf16.mxu0 0
    %2522 = vmatpush1.bf16.msra.mxu0 %v2500
    %2523 = vmatprep.subr.bf16.mxu0 0
    %2524 = vmatpush1.bf16.msra.mxu0 %v2499
    %2525 = vmatprep.subr.bf16.mxu0 0
    %2526 = vmatpush1.bf16.msra.mxu0 %v2498
    %2527 = vmatprep.subr.bf16.mxu0 0
    %2528 = vmatpush1.bf16.msra.mxu0 %v2497
    %2529 = vmatprep.subr.bf16.mxu0 0
    %2530 = vmatpush2.bf16.msra.mxu0 0
    %2531 = vmatprep.subr.bf16.mxu0 0
    %2532 = vmatpush2.bf16.msra.mxu0 0
    %2533 = vmatprep.subr.bf16.mxu0 0
    %2534 = vmatpush2.bf16.msra.mxu0 0
    %2535 = vmatprep.subr.bf16.mxu0 0
    %2536 = vmatpush2.bf16.msra.mxu0 0
    %2537 = vmatprep.subr.bf16.mxu0 0
    %2538 = vmatpush2.bf16.msra.mxu0 0
    %2539 = vmatprep.subr.bf16.mxu0 0
    %2540 = vmatpush2.bf16.msra.mxu0 0
    %2541 = vmatprep.subr.bf16.mxu0 0
    %2542 = vmatpush2.bf16.msra.mxu0 0
    %2543 = vmatprep.subr.bf16.mxu0 0
    %2544 = vmatpush2.bf16.msra.mxu0 0
    %2545 = vmatprep.mubr.bf16.mxu0 0
    %2546 = vmatmul.mubr.bf16.gmra.mxu0 %v1495
    %v2547 = vpop.f32.mrf.mxu0
    %v2548 = vadd.f32 0.0, %v2547
    %v2549 = vpop.f32.mrf.mxu0
    %v2550 = vpop.f32.mrf.mxu0
    %v2551 = vadd.f32 0.0, %v2550
    %v2552 = vpop.f32.mrf.mxu0
    %2553 = vmatprep.mubr.bf16.mxu0 0
    %2554 = vmatmul.mubr.bf16.gmra.mxu0 %v2447
    %v2555 = vpop.f32.mrf.mxu0
    %v2556 = vadd.f32 0.0, %v2555
    %v2557 = vpop.f32.mrf.mxu0
    %v2558 = vpop.f32.mrf.mxu0
    %v2559 = vadd.f32 0.0, %v2558
    %v2560 = vpop.f32.mrf.mxu0
    %2561 = vdwg.mxu0
    %v2562 = vadd.f32 %v2443, %v2548
    %v2563 = vadd.f32 %v2444, %v2551
    %v2564 = vadd.f32 %v2445, %v2556
    %v2565 = vadd.f32 %v2446, %v2559
    %v2566 = vld [vmem:[%s4] sm:$0x1]
    %v2568 = vlaneseq
    %v2569 = vshrl.u32 %v2568, 7
    %v2570 = vsub.s32 0, %v2569
    %v2571 = vrot.slane %v2566, %v2570
    %v2573 = vadd.f32 %v2562, %v2571
    %v2574 = vadd.f32 %v2563, %v2571
    %v2575 = vadd.f32 %v2564, %v2571
    %v2576 = vadd.f32 %v2565, %v2571
    %vm2577 = vcmp.gt.f32.partialorder %v2573, 0.0
    %vm2578 = vcmp.gt.f32.partialorder %v2574, 0.0
    %vm2579 = vcmp.gt.f32.partialorder %v2575, 0.0
    %vm2580 = vcmp.gt.f32.partialorder %v2576, 0.0
    %v2581 = vmin.f32 %v2573, 0.0
    %v2582 = vmin.f32 %v2574, 0.0
    %v2583 = vmin.f32 %v2575, 0.0
    %v2584 = vmin.f32 %v2576, 0.0
    %v2585 = vmul.f32 %v2581, 1.442695
    %v2586 = vpow.pop %v2585
    %v2587 = vmul.f32 %v2582, 1.442695
    %v2588 = vpow.pop %v2587
    %v2589 = vmul.f32 %v2583, 1.442695
    %v2590 = vpow.pop %v2589
    %v2591 = vmul.f32 %v2584, 1.442695
    %v2592 = vpow.pop %v2591
    %v2593 = vsub.f32 %v2586, 1.0
    %v2594 = vsub.f32 %v2588, 1.0
    %v2595 = vsub.f32 %v2590, 1.0
    %v2596 = vsub.f32 %v2592, 1.0
    %v2597 = vsel %vm2577, %v2573, %v2593
    %v2598 = vsel %vm2578, %v2574, %v2594
    %v2599 = vsel %vm2579, %v2575, %v2595
    %v2600 = vsel %vm2580, %v2576, %v2596
    %v2601 = vpack.c.bf16 %v2597, %v2597
    %v2602 = vld [vmem:[#allocation8] sm:$0xf]
    %v2603 = vld [vmem:[#allocation8 + $0x4] sm:$0xf]
    %v2604 = vld [vmem:[#allocation8 + $0x8] sm:$0xf]
    %v2605 = vld [vmem:[#allocation8 + $0xc] sm:$0xf]
    %v2606 = vld [vmem:[#allocation8 + $0x10] sm:$0xf]
    %v2607 = vld [vmem:[#allocation8 + $0x14] sm:$0xf]
    %v2608 = vld [vmem:[#allocation8 + $0x18] sm:$0xf]
    %v2609 = vld [vmem:[#allocation8 + $0x1c] sm:$0xf]
    %v2610 = vld [vmem:[#allocation8 + $0x20] sm:$0xf]
    %v2611 = vld [vmem:[#allocation8 + $0x24] sm:$0xf]
    %v2612 = vld [vmem:[#allocation8 + $0x28] sm:$0xf]
    %v2613 = vld [vmem:[#allocation8 + $0x2c] sm:$0xf]
    %v2614 = vld [vmem:[#allocation8 + $0x30] sm:$0xf]
    %v2615 = vld [vmem:[#allocation8 + $0x34] sm:$0xf]
    %v2616 = vld [vmem:[#allocation8 + $0x38] sm:$0xf]
    %v2617 = vld [vmem:[#allocation8 + $0x3c] sm:$0xf]
    %v2618 = vpack.c.bf16 %v2598, %v2598
    %s2619 = scalar_lea.vmem [#allocation8], 64
    %v2620 = vld [vmem:[%s2619] sm:$0xf]
    %v2621 = vld [vmem:[%s2619 + $0x4] sm:$0xf]
    %v2622 = vld [vmem:[%s2619 + $0x8] sm:$0xf]
    %v2623 = vld [vmem:[%s2619 + $0xc] sm:$0xf]
    %v2624 = vld [vmem:[%s2619 + $0x10] sm:$0xf]
    %v2625 = vld [vmem:[%s2619 + $0x14] sm:$0xf]
    %v2626 = vld [vmem:[%s2619 + $0x18] sm:$0xf]
    %v2627 = vld [vmem:[%s2619 + $0x1c] sm:$0xf]
    %v2628 = vld [vmem:[%s2619 + $0x20] sm:$0xf]
    %v2629 = vld [vmem:[%s2619 + $0x24] sm:$0xf]
    %v2630 = vld [vmem:[%s2619 + $0x28] sm:$0xf]
    %v2631 = vld [vmem:[%s2619 + $0x2c] sm:$0xf]
    %v2632 = vld [vmem:[%s2619 + $0x30] sm:$0xf]
    %v2633 = vld [vmem:[%s2619 + $0x34] sm:$0xf]
    %v2634 = vld [vmem:[%s2619 + $0x38] sm:$0xf]
    %v2635 = vld [vmem:[%s2619 + $0x3c] sm:$0xf]
    %v2652 = vunpack.c.l.b16 %v2620
    %v2653 = vunpack.c.l.b16 %v2621
    %v2654 = vunpack.c.l.b16 %v2622
    %v2655 = vunpack.c.l.b16 %v2623
    %v2656 = vunpack.c.l.b16 %v2624
    %v2657 = vunpack.c.l.b16 %v2625
    %v2658 = vunpack.c.l.b16 %v2626
    %v2659 = vunpack.c.l.b16 %v2627
    %v2660 = vunpack.c.l.b16 %v2628
    %v2661 = vunpack.c.l.b16 %v2629
    %v2662 = vunpack.c.l.b16 %v2630
    %v2663 = vunpack.c.l.b16 %v2631
    %v2664 = vunpack.c.l.b16 %v2632
    %v2665 = vunpack.c.l.b16 %v2633
    %v2666 = vunpack.c.l.b16 %v2634
    %v2667 = vunpack.c.l.b16 %v2635
    %v2668 = vpack.c.b16 %v2653, %v2652
    %v2669 = vpack.c.b16 %v2655, %v2654
    %v2670 = vpack.c.b16 %v2657, %v2656
    %v2671 = vpack.c.b16 %v2659, %v2658
    %v2672 = vpack.c.b16 %v2661, %v2660
    %v2673 = vpack.c.b16 %v2663, %v2662
    %v2674 = vpack.c.b16 %v2665, %v2664
    %v2675 = vpack.c.b16 %v2667, %v2666
    %2684 = vmatprep.subr.bf16.mxu0 0
    %2685 = vmatpush1.bf16.msra.mxu0 %v2675
    %2686 = vmatprep.subr.bf16.mxu0 0
    %2687 = vmatpush1.bf16.msra.mxu0 %v2674
    %2688 = vmatprep.subr.bf16.mxu0 0
    %2689 = vmatpush1.bf16.msra.mxu0 %v2673
    %2690 = vmatprep.subr.bf16.mxu0 0
    %2691 = vmatpush1.bf16.msra.mxu0 %v2672
    %2692 = vmatprep.subr.bf16.mxu0 0
    %2693 = vmatpush1.bf16.msra.mxu0 %v2671
    %2694 = vmatprep.subr.bf16.mxu0 0
    %2695 = vmatpush1.bf16.msra.mxu0 %v2670
    %2696 = vmatprep.subr.bf16.mxu0 0
    %2697 = vmatpush1.bf16.msra.mxu0 %v2669
    %2698 = vmatprep.subr.bf16.mxu0 0
    %2699 = vmatpush1.bf16.msra.mxu0 %v2668
    %2700 = vmatprep.subr.bf16.mxu0 0
    %2701 = vmatpush2.bf16.msra.mxu0 0
    %2702 = vmatprep.subr.bf16.mxu0 0
    %2703 = vmatpush2.bf16.msra.mxu0 0
    %2704 = vmatprep.subr.bf16.mxu0 0
    %2705 = vmatpush2.bf16.msra.mxu0 0
    %2706 = vmatprep.subr.bf16.mxu0 0
    %2707 = vmatpush2.bf16.msra.mxu0 0
    %2708 = vmatprep.subr.bf16.mxu0 0
    %2709 = vmatpush2.bf16.msra.mxu0 0
    %2710 = vmatprep.subr.bf16.mxu0 0
    %2711 = vmatpush2.bf16.msra.mxu0 0
    %2712 = vmatprep.subr.bf16.mxu0 0
    %2713 = vmatpush2.bf16.msra.mxu0 0
    %2714 = vmatprep.subr.bf16.mxu0 0
    %2715 = vmatpush2.bf16.msra.mxu0 0
    %2716 = vmatprep.mubr.bf16.mxu0 0
    %2717 = vmatmul.mubr.bf16.gmra.mxu0 %v2618
    %v2718 = vpop.f32.mrf.mxu0
    %v2719 = vadd.f32 0.0, %v2718
    %v2720 = vpop.f32.mrf.mxu0
    %v2721 = vpop.f32.mrf.mxu0
    %v2722 = vpop.f32.mrf.mxu0
    %2723 = vdwg.mxu0
    %v2740 = vunpack.c.l.b16 %v2602
    %v2741 = vunpack.c.l.b16 %v2603
    %v2742 = vunpack.c.l.b16 %v2604
    %v2743 = vunpack.c.l.b16 %v2605
    %v2744 = vunpack.c.l.b16 %v2606
    %v2745 = vunpack.c.l.b16 %v2607
    %v2746 = vunpack.c.l.b16 %v2608
    %v2747 = vunpack.c.l.b16 %v2609
    %v2748 = vunpack.c.l.b16 %v2610
    %v2749 = vunpack.c.l.b16 %v2611
    %v2750 = vunpack.c.l.b16 %v2612
    %v2751 = vunpack.c.l.b16 %v2613
    %v2752 = vunpack.c.l.b16 %v2614
    %v2753 = vunpack.c.l.b16 %v2615
    %v2754 = vunpack.c.l.b16 %v2616
    %v2755 = vunpack.c.l.b16 %v2617
    %v2756 = vpack.c.b16 %v2741, %v2740
    %v2757 = vpack.c.b16 %v2743, %v2742
    %v2758 = vpack.c.b16 %v2745, %v2744
    %v2759 = vpack.c.b16 %v2747, %v2746
    %v2760 = vpack.c.b16 %v2749, %v2748
    %v2761 = vpack.c.b16 %v2751, %v2750
    %v2762 = vpack.c.b16 %v2753, %v2752
    %v2763 = vpack.c.b16 %v2755, %v2754
    %2772 = vmatprep.subr.bf16.mxu0 0
    %2773 = vmatpush1.bf16.msra.mxu0 %v2763
    %2774 = vmatprep.subr.bf16.mxu0 0
    %2775 = vmatpush1.bf16.msra.mxu0 %v2762
    %2776 = vmatprep.subr.bf16.mxu0 0
    %2777 = vmatpush1.bf16.msra.mxu0 %v2761
    %2778 = vmatprep.subr.bf16.mxu0 0
    %2779 = vmatpush1.bf16.msra.mxu0 %v2760
    %2780 = vmatprep.subr.bf16.mxu0 0
    %2781 = vmatpush1.bf16.msra.mxu0 %v2759
    %2782 = vmatprep.subr.bf16.mxu0 0
    %2783 = vmatpush1.bf16.msra.mxu0 %v2758
    %2784 = vmatprep.subr.bf16.mxu0 0
    %2785 = vmatpush1.bf16.msra.mxu0 %v2757
    %2786 = vmatprep.subr.bf16.mxu0 0
    %2787 = vmatpush1.bf16.msra.mxu0 %v2756
    %2788 = vmatprep.subr.bf16.mxu0 0
    %2789 = vmatpush2.bf16.msra.mxu0 0
    %2790 = vmatprep.subr.bf16.mxu0 0
    %2791 = vmatpush2.bf16.msra.mxu0 0
    %2792 = vmatprep.subr.bf16.mxu0 0
    %2793 = vmatpush2.bf16.msra.mxu0 0
    %2794 = vmatprep.subr.bf16.mxu0 0
    %2795 = vmatpush2.bf16.msra.mxu0 0
    %2796 = vmatprep.subr.bf16.mxu0 0
    %2797 = vmatpush2.bf16.msra.mxu0 0
    %2798 = vmatprep.subr.bf16.mxu0 0
    %2799 = vmatpush2.bf16.msra.mxu0 0
    %2800 = vmatprep.subr.bf16.mxu0 0
    %2801 = vmatpush2.bf16.msra.mxu0 0
    %2802 = vmatprep.subr.bf16.mxu0 0
    %2803 = vmatpush2.bf16.msra.mxu0 0
    %2804 = vmatprep.mubr.bf16.mxu0 0
    %2805 = vmatmul.mubr.bf16.gmra.mxu0 %v2601
    %v2806 = vpop.f32.mrf.mxu0
    %v2807 = vadd.f32 %v2719, %v2806
    %v2808 = vpop.f32.mrf.mxu0
    %v2809 = vpop.f32.mrf.mxu0
    %v2810 = vpop.f32.mrf.mxu0
    %2811 = vdwg.mxu0
    %v2812 = vpack.c.bf16 %v2599, %v2599
    %s2813 = scalar_lea.vmem [#allocation8], 128
    %v2814 = vld [vmem:[%s2813] sm:$0xf]
    %v2815 = vld [vmem:[%s2813 + $0x4] sm:$0xf]
    %v2816 = vld [vmem:[%s2813 + $0x8] sm:$0xf]
    %v2817 = vld [vmem:[%s2813 + $0xc] sm:$0xf]
    %v2818 = vld [vmem:[%s2813 + $0x10] sm:$0xf]
    %v2819 = vld [vmem:[%s2813 + $0x14] sm:$0xf]
    %v2820 = vld [vmem:[%s2813 + $0x18] sm:$0xf]
    %v2821 = vld [vmem:[%s2813 + $0x1c] sm:$0xf]
    %v2822 = vld [vmem:[%s2813 + $0x20] sm:$0xf]
    %v2823 = vld [vmem:[%s2813 + $0x24] sm:$0xf]
    %v2824 = vld [vmem:[%s2813 + $0x28] sm:$0xf]
    %v2825 = vld [vmem:[%s2813 + $0x2c] sm:$0xf]
    %v2826 = vld [vmem:[%s2813 + $0x30] sm:$0xf]
    %v2827 = vld [vmem:[%s2813 + $0x34] sm:$0xf]
    %v2828 = vld [vmem:[%s2813 + $0x38] sm:$0xf]
    %v2829 = vld [vmem:[%s2813 + $0x3c] sm:$0xf]
    %v2846 = vunpack.c.l.b16 %v2814
    %v2847 = vunpack.c.l.b16 %v2815
    %v2848 = vunpack.c.l.b16 %v2816
    %v2849 = vunpack.c.l.b16 %v2817
    %v2850 = vunpack.c.l.b16 %v2818
    %v2851 = vunpack.c.l.b16 %v2819
    %v2852 = vunpack.c.l.b16 %v2820
    %v2853 = vunpack.c.l.b16 %v2821
    %v2854 = vunpack.c.l.b16 %v2822
    %v2855 = vunpack.c.l.b16 %v2823
    %v2856 = vunpack.c.l.b16 %v2824
    %v2857 = vunpack.c.l.b16 %v2825
    %v2858 = vunpack.c.l.b16 %v2826
    %v2859 = vunpack.c.l.b16 %v2827
    %v2860 = vunpack.c.l.b16 %v2828
    %v2861 = vunpack.c.l.b16 %v2829
    %v2862 = vpack.c.b16 %v2847, %v2846
    %v2863 = vpack.c.b16 %v2849, %v2848
    %v2864 = vpack.c.b16 %v2851, %v2850
    %v2865 = vpack.c.b16 %v2853, %v2852
    %v2866 = vpack.c.b16 %v2855, %v2854
    %v2867 = vpack.c.b16 %v2857, %v2856
    %v2868 = vpack.c.b16 %v2859, %v2858
    %v2869 = vpack.c.b16 %v2861, %v2860
    %2878 = vmatprep.subr.bf16.mxu0 0
    %2879 = vmatpush1.bf16.msra.mxu0 %v2869
    %2880 = vmatprep.subr.bf16.mxu0 0
    %2881 = vmatpush1.bf16.msra.mxu0 %v2868
    %2882 = vmatprep.subr.bf16.mxu0 0
    %2883 = vmatpush1.bf16.msra.mxu0 %v2867
    %2884 = vmatprep.subr.bf16.mxu0 0
    %2885 = vmatpush1.bf16.msra.mxu0 %v2866
    %2886 = vmatprep.subr.bf16.mxu0 0
    %2887 = vmatpush1.bf16.msra.mxu0 %v2865
    %2888 = vmatprep.subr.bf16.mxu0 0
    %2889 = vmatpush1.bf16.msra.mxu0 %v2864
    %2890 = vmatprep.subr.bf16.mxu0 0
    %2891 = vmatpush1.bf16.msra.mxu0 %v2863
    %2892 = vmatprep.subr.bf16.mxu0 0
    %2893 = vmatpush1.bf16.msra.mxu0 %v2862
    %2894 = vmatprep.subr.bf16.mxu0 0
    %2895 = vmatpush2.bf16.msra.mxu0 0
    %2896 = vmatprep.subr.bf16.mxu0 0
    %2897 = vmatpush2.bf16.msra.mxu0 0
    %2898 = vmatprep.subr.bf16.mxu0 0
    %2899 = vmatpush2.bf16.msra.mxu0 0
    %2900 = vmatprep.subr.bf16.mxu0 0
    %2901 = vmatpush2.bf16.msra.mxu0 0
    %2902 = vmatprep.subr.bf16.mxu0 0
    %2903 = vmatpush2.bf16.msra.mxu0 0
    %2904 = vmatprep.subr.bf16.mxu0 0
    %2905 = vmatpush2.bf16.msra.mxu0 0
    %2906 = vmatprep.subr.bf16.mxu0 0
    %2907 = vmatpush2.bf16.msra.mxu0 0
    %2908 = vmatprep.subr.bf16.mxu0 0
    %2909 = vmatpush2.bf16.msra.mxu0 0
    %2910 = vmatprep.mubr.bf16.mxu0 0
    %2911 = vmatmul.mubr.bf16.gmra.mxu0 %v2812
    %v2912 = vpop.f32.mrf.mxu0
    %v2913 = vadd.f32 0.0, %v2912
    %v2914 = vpop.f32.mrf.mxu0
    %v2915 = vpop.f32.mrf.mxu0
    %v2916 = vpop.f32.mrf.mxu0
    %2917 = vdwg.mxu0
    %v2918 = vadd.f32 %v2807, %v2913
    %v2919 = vpack.c.bf16 %v2600, %v2600
    %s2920 = scalar_lea.vmem [#allocation8], 192
    %v2921 = vld [vmem:[%s2920] sm:$0xf]
    %v2922 = vld [vmem:[%s2920 + $0x4] sm:$0xf]
    %v2923 = vld [vmem:[%s2920 + $0x8] sm:$0xf]
    %v2924 = vld [vmem:[%s2920 + $0xc] sm:$0xf]
    %v2925 = vld [vmem:[%s2920 + $0x10] sm:$0xf]
    %v2926 = vld [vmem:[%s2920 + $0x14] sm:$0xf]
    %v2927 = vld [vmem:[%s2920 + $0x18] sm:$0xf]
    %v2928 = vld [vmem:[%s2920 + $0x1c] sm:$0xf]
    %v2929 = vld [vmem:[%s2920 + $0x20] sm:$0xf]
    %v2930 = vld [vmem:[%s2920 + $0x24] sm:$0xf]
    %v2931 = vld [vmem:[%s2920 + $0x28] sm:$0xf]
    %v2932 = vld [vmem:[%s2920 + $0x2c] sm:$0xf]
    %v2933 = vld [vmem:[%s2920 + $0x30] sm:$0xf]
    %v2934 = vld [vmem:[%s2920 + $0x34] sm:$0xf]
    %v2935 = vld [vmem:[%s2920 + $0x38] sm:$0xf]
    %v2936 = vld [vmem:[%s2920 + $0x3c] sm:$0xf]
    %v2953 = vunpack.c.l.b16 %v2921
    %v2954 = vunpack.c.l.b16 %v2922
    %v2955 = vunpack.c.l.b16 %v2923
    %v2956 = vunpack.c.l.b16 %v2924
    %v2957 = vunpack.c.l.b16 %v2925
    %v2958 = vunpack.c.l.b16 %v2926
    %v2959 = vunpack.c.l.b16 %v2927
    %v2960 = vunpack.c.l.b16 %v2928
    %v2961 = vunpack.c.l.b16 %v2929
    %v2962 = vunpack.c.l.b16 %v2930
    %v2963 = vunpack.c.l.b16 %v2931
    %v2964 = vunpack.c.l.b16 %v2932
    %v2965 = vunpack.c.l.b16 %v2933
    %v2966 = vunpack.c.l.b16 %v2934
    %v2967 = vunpack.c.l.b16 %v2935
    %v2968 = vunpack.c.l.b16 %v2936
    %v2969 = vpack.c.b16 %v2954, %v2953
    %v2970 = vpack.c.b16 %v2956, %v2955
    %v2971 = vpack.c.b16 %v2958, %v2957
    %v2972 = vpack.c.b16 %v2960, %v2959
    %v2973 = vpack.c.b16 %v2962, %v2961
    %v2974 = vpack.c.b16 %v2964, %v2963
    %v2975 = vpack.c.b16 %v2966, %v2965
    %v2976 = vpack.c.b16 %v2968, %v2967
    %2985 = vmatprep.subr.bf16.mxu0 0
    %2986 = vmatpush1.bf16.msra.mxu0 %v2976
    %2987 = vmatprep.subr.bf16.mxu0 0
    %2988 = vmatpush1.bf16.msra.mxu0 %v2975
    %2989 = vmatprep.subr.bf16.mxu0 0
    %2990 = vmatpush1.bf16.msra.mxu0 %v2974
    %2991 = vmatprep.subr.bf16.mxu0 0
    %2992 = vmatpush1.bf16.msra.mxu0 %v2973
    %2993 = vmatprep.subr.bf16.mxu0 0
    %2994 = vmatpush1.bf16.msra.mxu0 %v2972
    %2995 = vmatprep.subr.bf16.mxu0 0
    %2996 = vmatpush1.bf16.msra.mxu0 %v2971
    %2997 = vmatprep.subr.bf16.mxu0 0
    %2998 = vmatpush1.bf16.msra.mxu0 %v2970
    %2999 = vmatprep.subr.bf16.mxu0 0
    %3000 = vmatpush1.bf16.msra.mxu0 %v2969
    %3001 = vmatprep.subr.bf16.mxu0 0
    %3002 = vmatpush2.bf16.msra.mxu0 0
    %3003 = vmatprep.subr.bf16.mxu0 0
    %3004 = vmatpush2.bf16.msra.mxu0 0
    %3005 = vmatprep.subr.bf16.mxu0 0
    %3006 = vmatpush2.bf16.msra.mxu0 0
    %3007 = vmatprep.subr.bf16.mxu0 0
    %3008 = vmatpush2.bf16.msra.mxu0 0
    %3009 = vmatprep.subr.bf16.mxu0 0
    %3010 = vmatpush2.bf16.msra.mxu0 0
    %3011 = vmatprep.subr.bf16.mxu0 0
    %3012 = vmatpush2.bf16.msra.mxu0 0
    %3013 = vmatprep.subr.bf16.mxu0 0
    %3014 = vmatpush2.bf16.msra.mxu0 0
    %3015 = vmatprep.subr.bf16.mxu0 0
    %3016 = vmatpush2.bf16.msra.mxu0 0
    %3017 = vmatprep.mubr.bf16.mxu0 0
    %3018 = vmatmul.mubr.bf16.gmra.mxu0 %v2919
    %v3019 = vpop.f32.mrf.mxu0
    %v3020 = vadd.f32 0.0, %v3019
    %v3021 = vpop.f32.mrf.mxu0
    %v3022 = vpop.f32.mrf.mxu0
    %v3023 = vpop.f32.mrf.mxu0
    %3024 = vdwg.mxu0
    %v3025 = vadd.f32 %v2918, %v3020
    %v3026 = vld [vmem:[%s6] sm:$0x1]
    %v3028 = vlaneseq
    %v3029 = vshrl.u32 %v3028, 7
    %v3030 = vsub.s32 0, %v3029
    %v3031 = vrot.slane %v3026, %v3030
    %v3033 = vadd.f32 %v3025, %v3031
    %3034 = vst [vmem:[#allocation10] sm:$0xff] %v3033
    // Predicated region
    $region46: #{tpu_custom_call.1} parent=1 // pred_check
      _
    $region47: #{tpu_custom_call.1} parent=1 // pred_check_branch
      %3036 = sbr.rel (0) target = $region49
    $region48: #{tpu_custom_call.1} parent=1 // pred_region
      %s3038 = ssub.s32 128, 128
      %3039 = vsyncadd [#allocation4], %s3038
      %s3041 = sshll.u32 [#allocation10], 4
      %s3042 = int_to_ptr.vmem [resolvable:$true] %s3041
      %3044 = dma.vmem_to_hbm [thread:$0]  %s3042, 128, %s7, [#allocation4]
    $region49: #{tpu_custom_call.1} parent=1 // pred_fallthru
      _
    // Predicated region
    $region50: #{tpu_custom_call.1} parent=1 // pred_check
      _
    $region51: #{tpu_custom_call.1} parent=1 // pred_check_branch
      %3046 = sbr.rel (0) target = $region53
    $region52: #{tpu_custom_call.1} parent=1 // pred_region
      %3047 = dma.done [#allocation4], 128
    $region53: #{tpu_custom_call.1} parent=1 // pred_fallthru
      _
    %3048 = vsyncpa [#allocation3], 1
    %3049 = vsyncpa [#allocation6], 1
    %3050 = vsyncpa [#allocation9], 1
    %3051 = vsyncpa [#allocation4], 1

</llo_original>
